<compile_context>
chip_gen: v7x
topology: tpu7x:2x2x1
jax: 0.10.0
libtpu: 0.0.40
codegen_flags: <defaults>
</compile_context>

<pallas_src>
import functools
import math

import jax
import jax.numpy as jnp
from jax.experimental import pallas as pl
from jax.experimental.pallas import tpu as pltpu


# -----------------------------------------------------------------------------
# Tiling helpers (generation-keyed)
# -----------------------------------------------------------------------------

@functools.lru_cache(maxsize=None)
def _hw_config():
    """Tile caps / VMEM limit keyed on the TPU generation's VMEM capacity."""
    try:
        info = pltpu.get_tpu_info()
        vmem = int(getattr(info, "vmem_capacity_bytes", 64 << 20))
    except Exception:  # pragma: no cover - conservative fallback
        vmem = 64 << 20
    if vmem >= (100 << 20):  # v5e / v6e: 128 MiB physical VMEM -> fat tiles
        return dict(tm=(1024, 512, 256, 128), tn=(1024, 512, 256, 128),
                    tk=(2048, 1024, 512, 256), vmem_limit=96 << 20)
    # v7x: 64 MiB physical / 32 MiB scoped -> conservative caps
    return dict(tm=(512, 256, 128), tn=(512, 256, 128),
                tk=(1024, 512, 256), vmem_limit=None)


def _pick_tile(dim, candidates):
    """Largest candidate tile that evenly divides `dim`, else the full dim."""
    for t in candidates:
        if dim > t and dim % t == 0:
            return t
    return dim


# -----------------------------------------------------------------------------
# Linear kernels
# -----------------------------------------------------------------------------

def _mm_single_kernel(x_ref, w_ref, b_ref, o_ref, *, relu):
    """y = act(x @ w + b), whole K in one tile (no scratch accumulator)."""
    y = jnp.dot(x_ref[...], w_ref[...], preferred_element_type=jnp.float32)
    y = y + b_ref[...]
    if relu:
        y = jnp.maximum(y, 0.0)
    o_ref[...] = y.astype(o_ref.dtype)


def _mm_acc_kernel(x_ref, w_ref, b_ref, o_ref, acc_ref, *, relu):
    """Tiled y = act(x @ w + b) with f32 VMEM accumulation over the K grid."""
    @pl.when(pl.program_id(2) == 0)
    def _():
        acc_ref[...] = jnp.zeros_like(acc_ref)

    acc_ref[...] += jnp.dot(x_ref[...], w_ref[...],
                            preferred_element_type=jnp.float32)

    @pl.when(pl.program_id(2) == pl.num_programs(2) - 1)
    def _():
        y = acc_ref[...] + b_ref[...]
        if relu:
            y = jnp.maximum(y, 0.0)
        o_ref[...] = y.astype(o_ref.dtype)


def pallas_linear(x, w, bias, relu=False, out_dtype=jnp.float32):
    """y = act(x @ w + b).  x:(M,K), w:(K,N), bias:(N,).  MXU bf16, f32 acc."""
    M, K = x.shape
    K2, N = w.shape
    assert K == K2
    cfg = _hw_config()
    tm = _pick_tile(M, cfg['tm'])
    tn = _pick_tile(N, cfg['tn'])
    tk = _pick_tile(K, cfg['tk'])
    nk = K // tk

    xb = x.astype(jnp.bfloat16)
    wb = w.astype(jnp.bfloat16)
    b = bias.reshape(1, N).astype(jnp.float32)

    if nk == 1:
        return pl.pallas_call(
            functools.partial(_mm_single_kernel, relu=relu),
            out_shape=jax.ShapeDtypeStruct((M, N), out_dtype),
            grid=(M // tm, N // tn),
            in_specs=[
                pl.BlockSpec((tm, K), lambda i, j: (i, 0)),
                pl.BlockSpec((K, tn), lambda i, j: (0, j)),
                pl.BlockSpec((1, tn), lambda i, j: (0, j)),
            ],
            out_specs=pl.BlockSpec((tm, tn), lambda i, j: (i, j)),
            compiler_params=pltpu.CompilerParams(
                dimension_semantics=("parallel", "parallel"),
                vmem_limit_bytes=cfg['vmem_limit']),
        )(xb, wb, b)

    return pl.pallas_call(
        functools.partial(_mm_acc_kernel, relu=relu),
        out_shape=jax.ShapeDtypeStruct((M, N), out_dtype),
        grid=(M // tm, N // tn, nk),
        in_specs=[
            pl.BlockSpec((tm, tk), lambda i, j, k: (i, k)),
            pl.BlockSpec((tk, tn), lambda i, j, k: (k, j)),
            pl.BlockSpec((1, tn), lambda i, j, k: (0, j)),
        ],
        out_specs=pl.BlockSpec((tm, tn), lambda i, j, k: (i, j)),
        scratch_shapes=[pltpu.VMEM((tm, tn), jnp.float32)],
        compiler_params=pltpu.CompilerParams(
            dimension_semantics=("parallel", "parallel", "arbitrary"),
            vmem_limit_bytes=cfg['vmem_limit']),
    )(xb, wb, b)


def _mm_add_ln_kernel(x_ref, w_ref, b_ref, r_ref, g_ref, bb_ref, o_ref, *, eps):
    """Fused  LayerNorm((x @ w + b) + residual) * gamma + beta  (full N per tile)."""
    y = jnp.dot(x_ref[...], w_ref[...], preferred_element_type=jnp.float32)
    y = y + b_ref[...] + r_ref[...]
    mu = jnp.mean(y, axis=-1, keepdims=True)
    d = y - mu
    var = jnp.mean(d * d, axis=-1, keepdims=True)
    o_ref[...] = d * jax.lax.rsqrt(var + eps) * g_ref[...] + bb_ref[...]


def pallas_linear_add_ln(x, w, bias, residual, gamma, beta, eps=1e-5):
    """Matmul + bias + residual add + LayerNorm fused (post-norm epilogue)."""
    M, K = x.shape
    N = w.shape[1]
    cfg = _hw_config()
    tm = _pick_tile(M, (256, 128))
    return pl.pallas_call(
        functools.partial(_mm_add_ln_kernel, eps=eps),
        out_shape=jax.ShapeDtypeStruct((M, N), jnp.float32),
        grid=(M // tm,),
        in_specs=[
            pl.BlockSpec((tm, K), lambda i: (i, 0)),
            pl.BlockSpec((K, N), lambda i: (0, 0)),
            pl.BlockSpec((1, N), lambda i: (0, 0)),
            pl.BlockSpec((tm, N), lambda i: (i, 0)),
            pl.BlockSpec((1, N), lambda i: (0, 0)),
            pl.BlockSpec((1, N), lambda i: (0, 0)),
        ],
        out_specs=pl.BlockSpec((tm, N), lambda i: (i, 0)),
        compiler_params=pltpu.CompilerParams(
            dimension_semantics=("parallel",),
            vmem_limit_bytes=cfg['vmem_limit']),
    )(x.astype(jnp.bfloat16), w.astype(jnp.bfloat16),
      bias.reshape(1, N).astype(jnp.float32),
      residual.astype(jnp.float32),
      gamma.reshape(1, N).astype(jnp.float32),
      beta.reshape(1, N).astype(jnp.float32))


# -----------------------------------------------------------------------------
# Conv1d(k=3, pad=1) + BatchNorm(eval) + ReLU, channels-last, bf16 in/out
# -----------------------------------------------------------------------------

def _conv3_bn_relu_kernel(xp_ref, w_ref, scale_ref, shift_ref, o_ref):
    """One batch row; 3 shifted-tap matmuls on a single bf16 buffer."""
    T = o_ref.shape[1]
    xp = xp_ref[0]                                           # (T+2, Cin) bf16
    w = w_ref[...]                                           # (3, Cin, Cout) bf16
    acc = jnp.dot(xp[0:T], w[0], preferred_element_type=jnp.float32)
    acc = acc + jnp.dot(xp[1:T + 1], w[1], preferred_element_type=jnp.float32)
    acc = acc + jnp.dot(xp[2:T + 2], w[2], preferred_element_type=jnp.float32)
    y = jnp.maximum(acc * scale_ref[...] + shift_ref[...], 0.0)
    o_ref[0] = y.astype(o_ref.dtype)


def conv_bn_relu(x, cp):
    """x: (B, T, Cin) channels-last; returns (B, T, Cout) bf16 with BN+ReLU fused."""
    B, T, Cin = x.shape
    Cout = cp['w'].shape[2]
    xp = jnp.pad(x.astype(jnp.bfloat16), ((0, 0), (1, 1), (0, 0)))
    # TODO(synk): pad tiny Cin/Cout to 128 and fuse the 3 taps along K for full
    # MXU depth; also tile the T axis with halos for >1 pipeline step per batch.
    return pl.pallas_call(
        _conv3_bn_relu_kernel,
        out_shape=jax.ShapeDtypeStruct((B, T, Cout), jnp.bfloat16),
        grid=(B,),
        in_specs=[
            pl.BlockSpec((1, T + 2, Cin), lambda b: (b, 0, 0)),
            pl.BlockSpec((3, Cin, Cout), lambda b: (0, 0, 0)),
            pl.BlockSpec((1, Cout), lambda b: (0, 0)),
            pl.BlockSpec((1, Cout), lambda b: (0, 0)),
        ],
        out_specs=pl.BlockSpec((1, T, Cout), lambda b: (b, 0, 0)),
        compiler_params=pltpu.CompilerParams(dimension_semantics=("parallel",)),
    )(xp, cp['w'], cp['scale'].reshape(1, Cout), cp['shift'].reshape(1, Cout))


def maxpool1d(x):
    B, T, C = x.shape
    return x.reshape(B, T // 2, 2, C).max(axis=2)


# -----------------------------------------------------------------------------
# LSTM: hoisted input projection + time-chunked streamed recurrence
# -----------------------------------------------------------------------------

def _lstm_rec_kernel(zx_ref, whh_ref, o_ref, h_scr, c_scr, *, hidden, steps):
    """Recurrence over one time chunk.

    zx_ref: (tt, B, 4H) f32   whh_ref: (H, 4H) bf16   o_ref: (tt, B, H)
    h_scr / c_scr persist across grid steps (time chunks).
    """
    @pl.when(pl.program_id(0) == 0)
    def _():
        h_scr[...] = jnp.zeros_like(h_scr)
        c_scr[...] = jnp.zeros_like(c_scr)

    whh = whh_ref[...]
    H = hidden

    def body(t, carry):
        # one fused (B,H)@(H,4H) matmul per step; gates sliced on the lane axis
        z = zx_ref[t] + jnp.dot(h_scr[...].astype(jnp.bfloat16), whh,
                                preferred_element_type=jnp.float32)     # (B, 4H)
        i = jax.nn.sigmoid(z[:, 0:H])
        f = jax.nn.sigmoid(z[:, H:2 * H])
        g = jnp.tanh(z[:, 2 * H:3 * H])
        o = jax.nn.sigmoid(z[:, 3 * H:4 * H])
        c = f * c_scr[...] + i * g
        h = o * jnp.tanh(c)
        c_scr[...] = c
        h_scr[...] = h
        o_ref[t] = h.astype(o_ref.dtype)
        return carry

    jax.lax.fori_loop(0, steps, body, 0, unroll=min(4, steps))


def pallas_lstm_layer(x_tbd, lp, out_dtype=jnp.float32):
    """One LSTM layer, time-major input (T, B, Din) -> (T, B, H)."""
    T, B, Din = x_tbd.shape
    H = lp['whh'].shape[0]
    # Hoisted input projection: one well-shaped matmul instead of T tiny ones.
    zx = pallas_linear(x_tbd.reshape(T * B, Din), lp['wih'], lp['bias'])   # (T*B, 4H)
    zx = zx.reshape(T, B, 4 * H)                 # free reshape, no relayout
    tt = _pick_tile(T, (64, 32, 16, 8))          # time chunk streamed per grid step
    return pl.pallas_call(
        functools.partial(_lstm_rec_kernel, hidden=H, steps=tt),
        out_shape=jax.ShapeDtypeStruct((T, B, H), out_dtype),
        grid=(T // tt,),
        in_specs=[
            pl.BlockSpec((tt, B, 4 * H), lambda i: (i, 0, 0)),
            pl.BlockSpec((H, 4 * H), lambda i: (0, 0)),
        ],
        out_specs=pl.BlockSpec((tt, B, H), lambda i: (i, 0, 0)),
        scratch_shapes=[pltpu.VMEM((B, H), jnp.float32),
                        pltpu.VMEM((B, H), jnp.float32)],
        compiler_params=pltpu.CompilerParams(dimension_semantics=("arbitrary",)),
    )(zx, lp['whh'])


# -----------------------------------------------------------------------------
# Attention
# -----------------------------------------------------------------------------

def _sdpa_kernel(qkv_ref, o_ref, *, num_heads, dh, scale):
    """All heads of one attention problem; heads sliced on the lane axis in VMEM.

    qkv_ref: (1, L, 3E) bf16   o_ref: (1, L, E) bf16 (lane-dense, head h at h*dh).
    """
    qkv = qkv_ref[0]                                         # (L, 3E) bf16
    E = num_heads * dh
    outs = []
    for h in range(num_heads):
        q = qkv[:, h * dh:(h + 1) * dh]
        k = qkv[:, E + h * dh:E + (h + 1) * dh]
        v = qkv[:, 2 * E + h * dh:2 * E + (h + 1) * dh]
        s = jax.lax.dot_general(q, k, (((1,), (1,)), ((), ())),
                                preferred_element_type=jnp.float32) * scale
        s = s - jnp.max(s, axis=-1, keepdims=True)
        p = jnp.exp(s)
        p = p * pl.reciprocal(jnp.sum(p, axis=-1, keepdims=True), approx=True)
        outs.append(jnp.dot(p.astype(jnp.bfloat16), v,
                            preferred_element_type=jnp.float32))
    o_ref[0] = jnp.concatenate(outs, axis=-1).astype(o_ref.dtype)


def pallas_sdpa(qkv, num_heads):
    """qkv: (N, L, 3E) bf16 -> (N, L, E) bf16."""
    N, L, threeE = qkv.shape
    E = threeE // 3
    dh = E // num_heads
    # TODO(synk): flash-style KV tiling (grid over L chunks + running max/sum)
    # once L is large enough that the (L, L) score matrix pressures v7x VMEM.
    spec_in = pl.BlockSpec((1, L, threeE), lambda b: (b, 0, 0))
    spec_out = pl.BlockSpec((1, L, E), lambda b: (b, 0, 0))
    return pl.pallas_call(
        functools.partial(_sdpa_kernel, num_heads=num_heads, dh=dh,
                          scale=1.0 / math.sqrt(dh)),
        out_shape=jax.ShapeDtypeStruct((N, L, E), jnp.bfloat16),
        grid=(N,),
        in_specs=[spec_in],
        out_specs=spec_out,
        compiler_params=pltpu.CompilerParams(dimension_semantics=("parallel",)),
    )(qkv)


def mha(x, ap, num_heads, residual_ln=None):
    """Self-attention on (N, L, E); fused bf16 QKV; optional fused add+LayerNorm."""
    N, L, E = x.shape
    x2 = x.reshape(N * L, E)
    qkv = pallas_linear(x2, ap['wqkv'], ap['bqkv'], out_dtype=jnp.bfloat16)  # bf16
    o = pallas_sdpa(qkv.reshape(N, L, 3 * E), num_heads)                     # (N,L,E) bf16
    o2 = o.reshape(N * L, E)
    if residual_ln is None:
        out = pallas_linear(o2, ap['wo'], ap['bo'])
    else:
        res, g, b = residual_ln
        out = pallas_linear_add_ln(o2, ap['wo'], ap['bo'], res, g, b)
    return out.reshape(N, L, E)


def transformer_encoder_layer(x, p, num_heads):
    """Post-norm (PyTorch default) encoder layer, batch_first, relu, dropout=0."""
    N, L, E = x.shape
    x2 = x.reshape(N * L, E)
    # attention + out-proj + residual + LayerNorm1, fused epilogue
    h1 = mha(x, p['attn'], num_heads, residual_ln=(x2, p['ln1_g'], p['ln1_b']))
    h1f = h1.reshape(N * L, E)
    # feed-forward: lin1+relu (bf16 out), lin2 + residual + LayerNorm2 fused
    ff = pallas_linear(h1f, p['lin1_w'], p['lin1_b'], relu=True,
                       out_dtype=jnp.bfloat16)
    h2 = pallas_linear_add_ln(ff, p['lin2_w'], p['lin2_b'], h1f,
                              p['ln2_g'], p['ln2_b'])
    return h2.reshape(N, L, E)


# -----------------------------------------------------------------------------
# Full forward
# -----------------------------------------------------------------------------

def forward(x, p, *, num_layers, num_heads):
    # conv stack: relu(bn1(conv1)) -> maxpool -> relu(bn2(conv2)) -> maxpool
    h = conv_bn_relu(x, p['conv1'])                          # (B, T, 64)   bf16
    h = maxpool1d(h)
    h = conv_bn_relu(h, p['conv2'])                          # (B, T/2,128) bf16
    h = maxpool1d(h)                                         # (B, T/4,128) bf16

    # LSTM runs time-major; inner layers stay bf16, last layer f32.
    xs = h.transpose(1, 0, 2)                                # (T', B, 128)
    for l in range(num_layers):
        last = l == num_layers - 1
        xs = pallas_lstm_layer(xs, p['lstm'][l],
                               out_dtype=jnp.float32 if last else jnp.bfloat16)
    lstm_tm = xs                                             # (T', B, H) time-major

    # nn.MultiheadAttention has batch_first=False: given (B, T', H) it treats
    # dim0 (=B) as sequence and dim1 (=T') as batch — exactly our time-major
    # layout, so no transposes are needed here.
    attn_tm = mha(lstm_tm, p['attn'], num_heads)             # (T', B, H)

    src = (attn_tm + lstm_tm).transpose(1, 0, 2)             # (B, T', H) batch-first
    for l in range(num_layers):
        src = transformer_encoder_layer(src, p['enc'][l], num_heads)

    out = pallas_linear(src[:, -1, :], p['fc_w'], p['fc_b'])  # (B, 10)
    return out


# -----------------------------------------------------------------------------
# Parameter init (torch-convention shapes) + one-time packing (outside jit)
# -----------------------------------------------------------------------------

def init_params(key, input_dim, hidden_dim, num_layers, dim_ff=2048):
    keys = jax.random.split(key, 64)
    it = iter(keys)

    def nrm(shape, s=0.1):
        return jax.random.normal(next(it), shape, jnp.float32) * s

    def bn_params(c):
        return dict(gamma=nrm((c,)) + 1.0, beta=nrm((c,)), mean=nrm((c,)),
                    var=jax.random.uniform(next(it), (c,), jnp.float32, 0.5, 1.5))

    H = hidden_dim
    p = {}
    p['conv1_w'] = nrm((64, input_dim, 3)); p['conv1_b'] = nrm((64,))
    p['bn1'] = bn_params(64)
    p['conv2_w'] = nrm((128, 64, 3)); p['conv2_b'] = nrm((128,))
    p['bn2'] = bn_params(128)
    p['lstm'] = []
    for l in range(num_layers):
        din = 128 if l == 0 else H
        p['lstm'].append(dict(w_ih=nrm((4 * H, din)), w_hh=nrm((4 * H, H)),
                              b_ih=nrm((4 * H,)), b_hh=nrm((4 * H,))))
    p['attn'] = dict(in_w=nrm((3 * H, H)), in_b=nrm((3 * H,)),
                     out_w=nrm((H, H)), out_b=nrm((H,)))
    p['enc'] = []
    for l in range(num_layers):
        p['enc'].append(dict(
            attn=dict(in_w=nrm((3 * H, H)), in_b=nrm((3 * H,)),
                      out_w=nrm((H, H)), out_b=nrm((H,))),
            lin1_w=nrm((dim_ff, H)), lin1_b=nrm((dim_ff,)),
            lin2_w=nrm((H, dim_ff)), lin2_b=nrm((H,)),
            ln1_g=nrm((H,)) + 1.0, ln1_b=nrm((H,)),
            ln2_g=nrm((H,)) + 1.0, ln2_b=nrm((H,))))
    p['fc_w'] = nrm((10, H)); p['fc_b'] = nrm((10,))
    return p


def pack_params(p):
    """One-time weight packing: transposes, BN folding, fused W_hh, bf16 casts."""
    f32, bf16 = jnp.float32, jnp.bfloat16

    def bn_fold(bias, bn):
        scale = bn['gamma'] * jax.lax.rsqrt(bn['var'] + 1e-5)
        shift = bn['beta'] + (bias - bn['mean']) * scale
        return scale.astype(f32), shift.astype(f32)

    def pack_attn(ap):
        return dict(wqkv=ap['in_w'].T.astype(bf16), bqkv=ap['in_b'].astype(f32),
                    wo=ap['out_w'].T.astype(bf16), bo=ap['out_b'].astype(f32))

    out = {}
    s1, sh1 = bn_fold(p['conv1_b'], p['bn1'])
    out['conv1'] = dict(w=jnp.transpose(p['conv1_w'], (2, 1, 0)).astype(bf16),
                        scale=s1, shift=sh1)
    s2, sh2 = bn_fold(p['conv2_b'], p['bn2'])
    out['conv2'] = dict(w=jnp.transpose(p['conv2_w'], (2, 1, 0)).astype(bf16),
                        scale=s2, shift=sh2)
    out['lstm'] = []
    for lp in p['lstm']:
        out['lstm'].append(dict(
            wih=lp['w_ih'].T.astype(bf16),          # (Din, 4H), gate blocks [i|f|g|o]
            whh=lp['w_hh'].T.astype(bf16),          # (H, 4H) fused recurrent weight
            bias=(lp['b_ih'] + lp['b_hh']).astype(f32)))
    out['attn'] = pack_attn(p['attn'])
    out['enc'] = []
    for ep in p['enc']:
        out['enc'].append(dict(
            attn=pack_attn(ep['attn']),
            lin1_w=ep['lin1_w'].T.astype(bf16), lin1_b=ep['lin1_b'].astype(f32),
            lin2_w=ep['lin2_w'].T.astype(bf16), lin2_b=ep['lin2_b'].astype(f32),
            ln1_g=ep['ln1_g'].astype(f32), ln1_b=ep['ln1_b'].astype(f32),
            ln2_g=ep['ln2_g'].astype(f32), ln2_b=ep['ln2_b'].astype(f32)))
    out['fc_w'] = p['fc_w'].T.astype(bf16)
    out['fc_b'] = p['fc_b'].astype(f32)
    return out


# -----------------------------------------------------------------------------

if __name__ == "__main__":
    B, T = 2, 16
    input_dim, hidden_dim, num_layers, num_heads = 8, 32, 2, 4

    key = jax.random.PRNGKey(0)
    k_x, k_p = jax.random.split(key)
    x = jax.random.normal(k_x, (B, T, input_dim), jnp.float32)   # (batch, seq, feat)
    params = init_params(k_p, input_dim, hidden_dim, num_layers)
    packed = pack_params(params)                                 # pack once, outside jit

    fwd = jax.jit(functools.partial(forward, num_layers=num_layers,
                                    num_heads=num_heads))
    out = jax.block_until_ready(fwd(x, packed))
    assert out.shape == (B, 10) and out.dtype == jnp.float32
    print("KERNEL_OK")
</pallas_src>

<mosaic_0001>
module attributes {stable_mosaic.version = 11 : i64} {
  func.func @_conv3_bn_relu_kernel(%arg0: i32, %arg1: memref<1x18x8xbf16, #tpu.memory_space<vmem>>, %arg2: memref<3x8x64xbf16, #tpu.memory_space<vmem>>, %arg3: memref<1x64xf32, #tpu.memory_space<vmem>>, %arg4: memref<1x64xf32, #tpu.memory_space<vmem>>, %arg5: memref<1x16x64xbf16, #tpu.memory_space<vmem>>) attributes {dimension_semantics = [#tpu.dimension_semantics<parallel>], iteration_bounds = array<i64: 2>, scalar_prefetch = 0 : i64, scratch_operands = 0 : i64, tpu.core_type = #tpu.core_type<tc>, window_params = [{transform_indices = @transform_0, window_bounds = array<i64: 1, 18, 8>}, {pipeline_mode = #tpu.pipeline_mode<synchronous>, transform_indices = @transform_1, window_bounds = array<i64: 3, 8, 64>}, {pipeline_mode = #tpu.pipeline_mode<synchronous>, transform_indices = @transform_2, window_bounds = array<i64: 1, 64>}, {pipeline_mode = #tpu.pipeline_mode<synchronous>, transform_indices = @transform_3, window_bounds = array<i64: 1, 64>}, {transform_indices = @transform_4, window_bounds = array<i64: 1, 16, 64>}]} {
    %c0 = arith.constant 0 : index
    %c0_0 = arith.constant 0 : index
    %c0_1 = arith.constant 0 : index
    %0 = vector.load %arg1[%c0, %c0_0, %c0_1] : memref<1x18x8xbf16, #tpu.memory_space<vmem>>, vector<1x18x8xbf16>
    %1 = vector.shape_cast %0 : vector<1x18x8xbf16> to vector<18x8xbf16>
    %c0_2 = arith.constant 0 : index
    %c0_3 = arith.constant 0 : index
    %c0_4 = arith.constant 0 : index
    %2 = vector.load %arg2[%c0_2, %c0_3, %c0_4] : memref<3x8x64xbf16, #tpu.memory_space<vmem>>, vector<3x8x64xbf16>
    %3 = vector.extract_strided_slice %1 {offsets = [0, 0], sizes = [16, 8], strides = [1, 1]} : vector<18x8xbf16> to vector<16x8xbf16>
    %4 = vector.extract_strided_slice %2 {offsets = [0, 0, 0], sizes = [1, 8, 64], strides = [1, 1, 1]} : vector<3x8x64xbf16> to vector<1x8x64xbf16>
    %5 = vector.shape_cast %4 : vector<1x8x64xbf16> to vector<8x64xbf16>
    %cst = arith.constant dense<0.000000e+00> : vector<16x64xf32>
    %6 = tpu.matmul %3, %5, %cst {dimension_numbers = #tpu.dot_dimension_numbers<[1], [0], [0], [1], [0, 0, 1, 1], [], []>} : vector<16x8xbf16>, vector<8x64xbf16>, vector<16x64xf32> -> vector<16x64xf32>
    %7 = vector.extract_strided_slice %1 {offsets = [1, 0], sizes = [16, 8], strides = [1, 1]} : vector<18x8xbf16> to vector<16x8xbf16>
    %8 = vector.extract_strided_slice %2 {offsets = [1, 0, 0], sizes = [1, 8, 64], strides = [1, 1, 1]} : vector<3x8x64xbf16> to vector<1x8x64xbf16>
    %9 = vector.shape_cast %8 : vector<1x8x64xbf16> to vector<8x64xbf16>
    %cst_5 = arith.constant dense<0.000000e+00> : vector<16x64xf32>
    %10 = tpu.matmul %7, %9, %cst_5 {dimension_numbers = #tpu.dot_dimension_numbers<[1], [0], [0], [1], [0, 0, 1, 1], [], []>} : vector<16x8xbf16>, vector<8x64xbf16>, vector<16x64xf32> -> vector<16x64xf32>
    %11 = arith.addf %6, %10 : vector<16x64xf32>
    %12 = vector.extract_strided_slice %1 {offsets = [2, 0], sizes = [16, 8], strides = [1, 1]} : vector<18x8xbf16> to vector<16x8xbf16>
    %13 = vector.extract_strided_slice %2 {offsets = [2, 0, 0], sizes = [1, 8, 64], strides = [1, 1, 1]} : vector<3x8x64xbf16> to vector<1x8x64xbf16>
    %14 = vector.shape_cast %13 : vector<1x8x64xbf16> to vector<8x64xbf16>
    %cst_6 = arith.constant dense<0.000000e+00> : vector<16x64xf32>
    %15 = tpu.matmul %12, %14, %cst_6 {dimension_numbers = #tpu.dot_dimension_numbers<[1], [0], [0], [1], [0, 0, 1, 1], [], []>} : vector<16x8xbf16>, vector<8x64xbf16>, vector<16x64xf32> -> vector<16x64xf32>
    %16 = arith.addf %11, %15 : vector<16x64xf32>
    %c0_7 = arith.constant 0 : index
    %c0_8 = arith.constant 0 : index
    %17 = vector.load %arg3[%c0_7, %c0_8] : memref<1x64xf32, #tpu.memory_space<vmem>>, vector<1x64xf32>
    %18 = vector.broadcast %17 : vector<1x64xf32> to vector<16x64xf32>
    %19 = arith.mulf %16, %18 : vector<16x64xf32>
    %c0_9 = arith.constant 0 : index
    %c0_10 = arith.constant 0 : index
    %20 = vector.load %arg4[%c0_9, %c0_10] : memref<1x64xf32, #tpu.memory_space<vmem>>, vector<1x64xf32>
    %21 = vector.broadcast %20 : vector<1x64xf32> to vector<16x64xf32>
    %22 = arith.addf %19, %21 : vector<16x64xf32>
    %cst_11 = arith.constant 0.000000e+00 : f32
    %23 = vector.broadcast %cst_11 : f32 to vector<16x64xf32>
    %24 = arith.maximumf %22, %23 : vector<16x64xf32>
    %25 = arith.truncf %24 : vector<16x64xf32> to vector<16x64xbf16>
    %c0_12 = arith.constant 0 : index
    %c0_13 = arith.constant 0 : index
    %c0_14 = arith.constant 0 : index
    %26 = vector.load %arg5[%c0_12, %c0_13, %c0_14] : memref<1x16x64xbf16, #tpu.memory_space<vmem>>, vector<1x16x64xbf16>
    %27 = vector.shape_cast %26 : vector<1x16x64xbf16> to vector<16x64xbf16>
    %28 = vector.shape_cast %25 : vector<16x64xbf16> to vector<1x16x64xbf16>
    tpu.vector_store %arg5[%c0_12, %c0_13, %c0_14], %28 {strides = array<i32>} : memref<1x16x64xbf16, #tpu.memory_space<vmem>>, vector<1x16x64xbf16>,
    return
  }
  func.func @transform_0(%arg0: i32) -> (i32, i32, i32) {
    %c0_i32 = arith.constant 0 : i32
    %c0_i32_0 = arith.constant 0 : i32
    %c0_i32_1 = arith.constant 0 : i32
    return %arg0, %c0_i32, %c0_i32_0 : i32, i32, i32
  }
  func.func @transform_1(%arg0: i32) -> (i32, i32, i32) {
    %c0_i32 = arith.constant 0 : i32
    %c0_i32_0 = arith.constant 0 : i32
    %c0_i32_1 = arith.constant 0 : i32
    %c0_i32_2 = arith.constant 0 : i32
    return %c0_i32, %c0_i32_0, %c0_i32_1 : i32, i32, i32
  }
  func.func @transform_2(%arg0: i32) -> (i32, i32) {
    %c0_i32 = arith.constant 0 : i32
    %c0_i32_0 = arith.constant 0 : i32
    %c0_i32_1 = arith.constant 0 : i32
    return %c0_i32, %c0_i32_0 : i32, i32
  }
  func.func @transform_3(%arg0: i32) -> (i32, i32) {
    %c0_i32 = arith.constant 0 : i32
    %c0_i32_0 = arith.constant 0 : i32
    %c0_i32_1 = arith.constant 0 : i32
    return %c0_i32, %c0_i32_0 : i32, i32
  }
  func.func @transform_4(%arg0: i32) -> (i32, i32, i32) {
    %c0_i32 = arith.constant 0 : i32
    %c0_i32_0 = arith.constant 0 : i32
    %c0_i32_1 = arith.constant 0 : i32
    return %arg0, %c0_i32, %c0_i32_0 : i32, i32, i32
  }
}

module attributes {stable_mosaic.version = 11 : i64} {
  func.func @_conv3_bn_relu_kernel(%arg0: i32, %arg1: memref<1x10x64xbf16, #tpu.memory_space<vmem>>, %arg2: memref<3x64x128xbf16, #tpu.memory_space<vmem>>, %arg3: memref<1x128xf32, #tpu.memory_space<vmem>>, %arg4: memref<1x128xf32, #tpu.memory_space<vmem>>, %arg5: memref<1x8x128xbf16, #tpu.memory_space<vmem>>) attributes {dimension_semantics = [#tpu.dimension_semantics<parallel>], iteration_bounds = array<i64: 2>, scalar_prefetch = 0 : i64, scratch_operands = 0 : i64, tpu.core_type = #tpu.core_type<tc>, window_params = [{transform_indices = @transform_0, window_bounds = array<i64: 1, 10, 64>}, {pipeline_mode = #tpu.pipeline_mode<synchronous>, transform_indices = @transform_1, window_bounds = array<i64: 3, 64, 128>}, {pipeline_mode = #tpu.pipeline_mode<synchronous>, transform_indices = @transform_2, window_bounds = array<i64: 1, 128>}, {pipeline_mode = #tpu.pipeline_mode<synchronous>, transform_indices = @transform_3, window_bounds = array<i64: 1, 128>}, {transform_indices = @transform_4, window_bounds = array<i64: 1, 8, 128>}]} {
    %c0 = arith.constant 0 : index
    %c0_0 = arith.constant 0 : index
    %c0_1 = arith.constant 0 : index
    %0 = vector.load %arg1[%c0, %c0_0, %c0_1] : memref<1x10x64xbf16, #tpu.memory_space<vmem>>, vector<1x10x64xbf16>
    %1 = vector.shape_cast %0 : vector<1x10x64xbf16> to vector<10x64xbf16>
    %c0_2 = arith.constant 0 : index
    %c0_3 = arith.constant 0 : index
    %c0_4 = arith.constant 0 : index
    %2 = vector.load %arg2[%c0_2, %c0_3, %c0_4] : memref<3x64x128xbf16, #tpu.memory_space<vmem>>, vector<3x64x128xbf16>
    %3 = vector.extract_strided_slice %1 {offsets = [0, 0], sizes = [8, 64], strides = [1, 1]} : vector<10x64xbf16> to vector<8x64xbf16>
    %4 = vector.extract_strided_slice %2 {offsets = [0, 0, 0], sizes = [1, 64, 128], strides = [1, 1, 1]} : vector<3x64x128xbf16> to vector<1x64x128xbf16>
    %5 = vector.shape_cast %4 : vector<1x64x128xbf16> to vector<64x128xbf16>
    %cst = arith.constant dense<0.000000e+00> : vector<8x128xf32>
    %6 = tpu.matmul %3, %5, %cst {dimension_numbers = #tpu.dot_dimension_numbers<[1], [0], [0], [1], [0, 0, 1, 1], [], []>} : vector<8x64xbf16>, vector<64x128xbf16>, vector<8x128xf32> -> vector<8x128xf32>
    %7 = vector.extract_strided_slice %1 {offsets = [1, 0], sizes = [8, 64], strides = [1, 1]} : vector<10x64xbf16> to vector<8x64xbf16>
    %8 = vector.extract_strided_slice %2 {offsets = [1, 0, 0], sizes = [1, 64, 128], strides = [1, 1, 1]} : vector<3x64x128xbf16> to vector<1x64x128xbf16>
    %9 = vector.shape_cast %8 : vector<1x64x128xbf16> to vector<64x128xbf16>
    %cst_5 = arith.constant dense<0.000000e+00> : vector<8x128xf32>
    %10 = tpu.matmul %7, %9, %cst_5 {dimension_numbers = #tpu.dot_dimension_numbers<[1], [0], [0], [1], [0, 0, 1, 1], [], []>} : vector<8x64xbf16>, vector<64x128xbf16>, vector<8x128xf32> -> vector<8x128xf32>
    %11 = arith.addf %6, %10 : vector<8x128xf32>
    %12 = vector.extract_strided_slice %1 {offsets = [2, 0], sizes = [8, 64], strides = [1, 1]} : vector<10x64xbf16> to vector<8x64xbf16>
    %13 = vector.extract_strided_slice %2 {offsets = [2, 0, 0], sizes = [1, 64, 128], strides = [1, 1, 1]} : vector<3x64x128xbf16> to vector<1x64x128xbf16>
    %14 = vector.shape_cast %13 : vector<1x64x128xbf16> to vector<64x128xbf16>
    %cst_6 = arith.constant dense<0.000000e+00> : vector<8x128xf32>
    %15 = tpu.matmul %12, %14, %cst_6 {dimension_numbers = #tpu.dot_dimension_numbers<[1], [0], [0], [1], [0, 0, 1, 1], [], []>} : vector<8x64xbf16>, vector<64x128xbf16>, vector<8x128xf32> -> vector<8x128xf32>
    %16 = arith.addf %11, %15 : vector<8x128xf32>
    %c0_7 = arith.constant 0 : index
    %c0_8 = arith.constant 0 : index
    %17 = vector.load %arg3[%c0_7, %c0_8] : memref<1x128xf32, #tpu.memory_space<vmem>>, vector<1x128xf32>
    %18 = vector.broadcast %17 : vector<1x128xf32> to vector<8x128xf32>
    %19 = arith.mulf %16, %18 : vector<8x128xf32>
    %c0_9 = arith.constant 0 : index
    %c0_10 = arith.constant 0 : index
    %20 = vector.load %arg4[%c0_9, %c0_10] : memref<1x128xf32, #tpu.memory_space<vmem>>, vector<1x128xf32>
    %21 = vector.broadcast %20 : vector<1x128xf32> to vector<8x128xf32>
    %22 = arith.addf %19, %21 : vector<8x128xf32>
    %cst_11 = arith.constant 0.000000e+00 : f32
    %23 = vector.broadcast %cst_11 : f32 to vector<8x128xf32>
    %24 = arith.maximumf %22, %23 : vector<8x128xf32>
    %25 = arith.truncf %24 : vector<8x128xf32> to vector<8x128xbf16>
    %c0_12 = arith.constant 0 : index
    %c0_13 = arith.constant 0 : index
    %c0_14 = arith.constant 0 : index
    %26 = vector.load %arg5[%c0_12, %c0_13, %c0_14] : memref<1x8x128xbf16, #tpu.memory_space<vmem>>, vector<1x8x128xbf16>
    %27 = vector.shape_cast %26 : vector<1x8x128xbf16> to vector<8x128xbf16>
    %28 = vector.shape_cast %25 : vector<8x128xbf16> to vector<1x8x128xbf16>
    tpu.vector_store %arg5[%c0_12, %c0_13, %c0_14], %28 {strides = array<i32>} : memref<1x8x128xbf16, #tpu.memory_space<vmem>>, vector<1x8x128xbf16>,
    return
  }
  func.func @transform_0(%arg0: i32) -> (i32, i32, i32) {
    %c0_i32 = arith.constant 0 : i32
    %c0_i32_0 = arith.constant 0 : i32
    %c0_i32_1 = arith.constant 0 : i32
    return %arg0, %c0_i32, %c0_i32_0 : i32, i32, i32
  }
  func.func @transform_1(%arg0: i32) -> (i32, i32, i32) {
    %c0_i32 = arith.constant 0 : i32
    %c0_i32_0 = arith.constant 0 : i32
    %c0_i32_1 = arith.constant 0 : i32
    %c0_i32_2 = arith.constant 0 : i32
    return %c0_i32, %c0_i32_0, %c0_i32_1 : i32, i32, i32
  }
  func.func @transform_2(%arg0: i32) -> (i32, i32) {
    %c0_i32 = arith.constant 0 : i32
    %c0_i32_0 = arith.constant 0 : i32
    %c0_i32_1 = arith.constant 0 : i32
    return %c0_i32, %c0_i32_0 : i32, i32
  }
  func.func @transform_3(%arg0: i32) -> (i32, i32) {
    %c0_i32 = arith.constant 0 : i32
    %c0_i32_0 = arith.constant 0 : i32
    %c0_i32_1 = arith.constant 0 : i32
    return %c0_i32, %c0_i32_0 : i32, i32
  }
  func.func @transform_4(%arg0: i32) -> (i32, i32, i32) {
    %c0_i32 = arith.constant 0 : i32
    %c0_i32_0 = arith.constant 0 : i32
    %c0_i32_1 = arith.constant 0 : i32
    return %arg0, %c0_i32, %c0_i32_0 : i32, i32, i32
  }
}

module attributes {stable_mosaic.version = 11 : i64} {
  func.func @_mm_single_kernel(%arg0: i32, %arg1: i32, %arg2: memref<8x128xbf16, #tpu.memory_space<vmem>>, %arg3: memref<128x128xbf16, #tpu.memory_space<vmem>>, %arg4: memref<1x128xf32, #tpu.memory_space<vmem>>, %arg5: memref<8x128xf32, #tpu.memory_space<vmem>>) attributes {dimension_semantics = [#tpu.dimension_semantics<parallel>, #tpu.dimension_semantics<parallel>], iteration_bounds = array<i64: 1, 1>, scalar_prefetch = 0 : i64, scratch_operands = 0 : i64, tpu.core_type = #tpu.core_type<tc>, window_params = [{transform_indices = @transform_0, window_bounds = array<i64: 8, 128>}, {transform_indices = @transform_1, window_bounds = array<i64: 128, 128>}, {transform_indices = @transform_2, window_bounds = array<i64: 1, 128>}, {transform_indices = @transform_3, window_bounds = array<i64: 8, 128>}]} {
    %c0 = arith.constant 0 : index
    %c0_0 = arith.constant 0 : index
    %0 = vector.load %arg2[%c0, %c0_0] : memref<8x128xbf16, #tpu.memory_space<vmem>>, vector<8x128xbf16>
    %c0_1 = arith.constant 0 : index
    %c0_2 = arith.constant 0 : index
    %1 = vector.load %arg3[%c0_1, %c0_2] : memref<128x128xbf16, #tpu.memory_space<vmem>>, vector<128x128xbf16>
    %cst = arith.constant dense<0.000000e+00> : vector<8x128xf32>
    %2 = tpu.matmul %0, %1, %cst {dimension_numbers = #tpu.dot_dimension_numbers<[1], [0], [0], [1], [0, 0, 1, 1], [], []>} : vector<8x128xbf16>, vector<128x128xbf16>, vector<8x128xf32> -> vector<8x128xf32>
    %c0_3 = arith.constant 0 : index
    %c0_4 = arith.constant 0 : index
    %3 = vector.load %arg4[%c0_3, %c0_4] : memref<1x128xf32, #tpu.memory_space<vmem>>, vector<1x128xf32>
    %4 = vector.broadcast %3 : vector<1x128xf32> to vector<8x128xf32>
    %5 = arith.addf %2, %4 : vector<8x128xf32>
    %c0_5 = arith.constant 0 : index
    %c0_6 = arith.constant 0 : index
    %6 = vector.load %arg5[%c0_5, %c0_6] : memref<8x128xf32, #tpu.memory_space<vmem>>, vector<8x128xf32>
    tpu.vector_store %arg5[%c0_5, %c0_6], %5 {strides = array<i32>} : memref<8x128xf32, #tpu.memory_space<vmem>>, vector<8x128xf32>,
    return
  }
  func.func @transform_0(%arg0: i32, %arg1: i32) -> (i32, i32) {
    %c0_i32 = arith.constant 0 : i32
    %c0_i32_0 = arith.constant 0 : i32
    return %arg0, %c0_i32 : i32, i32
  }
  func.func @transform_1(%arg0: i32, %arg1: i32) -> (i32, i32) {
    %c0_i32 = arith.constant 0 : i32
    %c0_i32_0 = arith.constant 0 : i32
    return %c0_i32, %arg1 : i32, i32
  }
  func.func @transform_2(%arg0: i32, %arg1: i32) -> (i32, i32) {
    %c0_i32 = arith.constant 0 : i32
    %c0_i32_0 = arith.constant 0 : i32
    return %c0_i32, %arg1 : i32, i32
  }
  func.func @transform_3(%arg0: i32, %arg1: i32) -> (i32, i32) {
    %c0_i32 = arith.constant 0 : i32
    return %arg0, %arg1 : i32, i32
  }
}

module attributes {stable_mosaic.version = 11 : i64} {
  func.func @_lstm_rec_kernel(%arg0: i32, %arg1: memref<4x2x128xf32, #tpu.memory_space<vmem>>, %arg2: memref<32x128xbf16, #tpu.memory_space<vmem>>, %arg3: memref<4x2x32xbf16, #tpu.memory_space<vmem>>, %arg4: memref<2x32xf32, #tpu.memory_space<vmem>>, %arg5: memref<2x32xf32, #tpu.memory_space<vmem>>) attributes {dimension_semantics = [#tpu.dimension_semantics<arbitrary>], iteration_bounds = array<i64: 1>, scalar_prefetch = 0 : i64, scratch_operands = 2 : i64, tpu.core_type = #tpu.core_type<tc>, window_params = [{transform_indices = @transform_0, window_bounds = array<i64: 4, 2, 128>}, {pipeline_mode = #tpu.pipeline_mode<synchronous>, transform_indices = @transform_1, window_bounds = array<i64: 32, 128>}, {transform_indices = @transform_2, window_bounds = array<i64: 4, 2, 32>}]} {
    %c0_i32 = arith.constant 0 : i32
    %0 = arith.cmpi eq, %arg0, %c0_i32 : i32
    %1 = arith.extui %0 : i1 to i32
    %c0_i32_0 = arith.constant 0 : i32
    %2 = arith.cmpi ne, %1, %c0_i32_0 : i32
    scf.if %2 {
      %cst_66 = arith.constant 0.000000e+00 : f32
      %164 = vector.broadcast %cst_66 : f32 to vector<2x32xf32>
      %c0_67 = arith.constant 0 : index
      %c0_68 = arith.constant 0 : index
      %165 = vector.load %arg4[%c0_67, %c0_68] : memref<2x32xf32, #tpu.memory_space<vmem>>, vector<2x32xf32>
      tpu.vector_store %arg4[%c0_67, %c0_68], %164 {strides = array<i32>} : memref<2x32xf32, #tpu.memory_space<vmem>>, vector<2x32xf32>,
      %cst_69 = arith.constant 0.000000e+00 : f32
      %166 = vector.broadcast %cst_69 : f32 to vector<2x32xf32>
      %c0_70 = arith.constant 0 : index
      %c0_71 = arith.constant 0 : index
      %167 = vector.load %arg5[%c0_70, %c0_71] : memref<2x32xf32, #tpu.memory_space<vmem>>, vector<2x32xf32>
      tpu.vector_store %arg5[%c0_70, %c0_71], %166 {strides = array<i32>} : memref<2x32xf32, #tpu.memory_space<vmem>>, vector<2x32xf32>,
    } else {
    }
    %c0 = arith.constant 0 : index
    %c0_1 = arith.constant 0 : index
    %3 = vector.load %arg2[%c0, %c0_1] : memref<32x128xbf16, #tpu.memory_space<vmem>>, vector<32x128xbf16>
    %c0_i32_2 = arith.constant 0 : i32
    %4 = arith.index_cast %c0_i32_2 : i32 to index
    %c0_3 = arith.constant 0 : index
    %c0_4 = arith.constant 0 : index
    %5 = vector.load %arg1[%4, %c0_3, %c0_4] : memref<4x2x128xf32, #tpu.memory_space<vmem>>, vector<1x2x128xf32>
    %6 = vector.shape_cast %5 : vector<1x2x128xf32> to vector<2x128xf32>
    %c0_5 = arith.constant 0 : index
    %c0_6 = arith.constant 0 : index
    %7 = vector.load %arg4[%c0_5, %c0_6] : memref<2x32xf32, #tpu.memory_space<vmem>>, vector<2x32xf32>
    %8 = arith.truncf %7 : vector<2x32xf32> to vector<2x32xbf16>
    %cst = arith.constant dense<0.000000e+00> : vector<2x128xf32>
    %9 = tpu.matmul %8, %3, %cst {dimension_numbers = #tpu.dot_dimension_numbers<[1], [0], [0], [1], [0, 0, 1, 1], [], []>} : vector<2x32xbf16>, vector<32x128xbf16>, vector<2x128xf32> -> vector<2x128xf32>
    %10 = arith.addf %6, %9 : vector<2x128xf32>
    %11 = vector.extract_strided_slice %10 {offsets = [0, 0], sizes = [2, 32], strides = [1, 1]} : vector<2x128xf32> to vector<2x32xf32>
    %12 = arith.negf %11 : vector<2x32xf32>
    %13 = math.exp %12 : vector<2x32xf32>
    %cst_7 = arith.constant 1.000000e+00 : f32
    %14 = vector.broadcast %cst_7 : f32 to vector<2x32xf32>
    %15 = arith.addf %14, %13 : vector<2x32xf32>
    %16 = arith.divf %14, %15 : vector<2x32xf32>
    %17 = vector.extract_strided_slice %10 {offsets = [0, 32], sizes = [2, 32], strides = [1, 1]} : vector<2x128xf32> to vector<2x32xf32>
    %18 = arith.negf %17 : vector<2x32xf32>
    %19 = math.exp %18 : vector<2x32xf32>
    %cst_8 = arith.constant 1.000000e+00 : f32
    %20 = vector.broadcast %cst_8 : f32 to vector<2x32xf32>
    %21 = arith.addf %20, %19 : vector<2x32xf32>
    %22 = arith.divf %20, %21 : vector<2x32xf32>
    %23 = vector.extract_strided_slice %10 {offsets = [0, 64], sizes = [2, 32], strides = [1, 1]} : vector<2x128xf32> to vector<2x32xf32>
    %24 = math.tanh %23 : vector<2x32xf32>
    %25 = vector.extract_strided_slice %10 {offsets = [0, 96], sizes = [2, 32], strides = [1, 1]} : vector<2x128xf32> to vector<2x32xf32>
    %26 = arith.negf %25 : vector<2x32xf32>
    %27 = math.exp %26 : vector<2x32xf32>
    %cst_9 = arith.constant 1.000000e+00 : f32
    %28 = vector.broadcast %cst_9 : f32 to vector<2x32xf32>
    %29 = arith.addf %28, %27 : vector<2x32xf32>
    %30 = arith.divf %28, %29 : vector<2x32xf32>
    %c0_10 = arith.constant 0 : index
    %c0_11 = arith.constant 0 : index
    %31 = vector.load %arg5[%c0_10, %c0_11] : memref<2x32xf32, #tpu.memory_space<vmem>>, vector<2x32xf32>
    %32 = arith.mulf %22, %31 : vector<2x32xf32>
    %33 = arith.mulf %16, %24 : vector<2x32xf32>
    %34 = arith.addf %32, %33 : vector<2x32xf32>
    %35 = math.tanh %34 : vector<2x32xf32>
    %36 = arith.mulf %30, %35 : vector<2x32xf32>
    %c0_12 = arith.constant 0 : index
    %c0_13 = arith.constant 0 : index
    %37 = vector.load %arg5[%c0_12, %c0_13] : memref<2x32xf32, #tpu.memory_space<vmem>>, vector<2x32xf32>
    tpu.vector_store %arg5[%c0_12, %c0_13], %34 {strides = array<i32>} : memref<2x32xf32, #tpu.memory_space<vmem>>, vector<2x32xf32>,
    %c0_14 = arith.constant 0 : index
    %c0_15 = arith.constant 0 : index
    %38 = vector.load %arg4[%c0_14, %c0_15] : memref<2x32xf32, #tpu.memory_space<vmem>>, vector<2x32xf32>
    tpu.vector_store %arg4[%c0_14, %c0_15], %36 {strides = array<i32>} : memref<2x32xf32, #tpu.memory_space<vmem>>, vector<2x32xf32>,
    %39 = arith.truncf %36 : vector<2x32xf32> to vector<2x32xbf16>
    %40 = arith.index_cast %c0_i32_2 : i32 to index
    %c0_16 = arith.constant 0 : index
    %c0_17 = arith.constant 0 : index
    %41 = vector.load %arg3[%40, %c0_16, %c0_17] : memref<4x2x32xbf16, #tpu.memory_space<vmem>>, vector<1x2x32xbf16>
    %42 = vector.shape_cast %41 : vector<1x2x32xbf16> to vector<2x32xbf16>
    %43 = vector.shape_cast %39 : vector<2x32xbf16> to vector<1x2x32xbf16>
    tpu.vector_store %arg3[%40, %c0_16, %c0_17], %43 {strides = array<i32>} : memref<4x2x32xbf16, #tpu.memory_space<vmem>>, vector<1x2x32xbf16>,
    %c1_i32 = arith.constant 1 : i32
    %44 = arith.index_cast %c1_i32 : i32 to index
    %c0_18 = arith.constant 0 : index
    %c0_19 = arith.constant 0 : index
    %45 = vector.load %arg1[%44, %c0_18, %c0_19] : memref<4x2x128xf32, #tpu.memory_space<vmem>>, vector<1x2x128xf32>
    %46 = vector.shape_cast %45 : vector<1x2x128xf32> to vector<2x128xf32>
    %c0_20 = arith.constant 0 : index
    %c0_21 = arith.constant 0 : index
    %47 = vector.load %arg4[%c0_20, %c0_21] : memref<2x32xf32, #tpu.memory_space<vmem>>, vector<2x32xf32>
    %48 = arith.truncf %47 : vector<2x32xf32> to vector<2x32xbf16>
    %cst_22 = arith.constant dense<0.000000e+00> : vector<2x128xf32>
    %49 = tpu.matmul %48, %3, %cst_22 {dimension_numbers = #tpu.dot_dimension_numbers<[1], [0], [0], [1], [0, 0, 1, 1], [], []>} : vector<2x32xbf16>, vector<32x128xbf16>, vector<2x128xf32> -> vector<2x128xf32>
    %50 = arith.addf %46, %49 : vector<2x128xf32>
    %51 = vector.extract_strided_slice %50 {offsets = [0, 0], sizes = [2, 32], strides = [1, 1]} : vector<2x128xf32> to vector<2x32xf32>
    %52 = arith.negf %51 : vector<2x32xf32>
    %53 = math.exp %52 : vector<2x32xf32>
    %cst_23 = arith.constant 1.000000e+00 : f32
    %54 = vector.broadcast %cst_23 : f32 to vector<2x32xf32>
    %55 = arith.addf %54, %53 : vector<2x32xf32>
    %56 = arith.divf %54, %55 : vector<2x32xf32>
    %57 = vector.extract_strided_slice %50 {offsets = [0, 32], sizes = [2, 32], strides = [1, 1]} : vector<2x128xf32> to vector<2x32xf32>
    %58 = arith.negf %57 : vector<2x32xf32>
    %59 = math.exp %58 : vector<2x32xf32>
    %cst_24 = arith.constant 1.000000e+00 : f32
    %60 = vector.broadcast %cst_24 : f32 to vector<2x32xf32>
    %61 = arith.addf %60, %59 : vector<2x32xf32>
    %62 = arith.divf %60, %61 : vector<2x32xf32>
    %63 = vector.extract_strided_slice %50 {offsets = [0, 64], sizes = [2, 32], strides = [1, 1]} : vector<2x128xf32> to vector<2x32xf32>
    %64 = math.tanh %63 : vector<2x32xf32>
    %65 = vector.extract_strided_slice %50 {offsets = [0, 96], sizes = [2, 32], strides = [1, 1]} : vector<2x128xf32> to vector<2x32xf32>
    %66 = arith.negf %65 : vector<2x32xf32>
    %67 = math.exp %66 : vector<2x32xf32>
    %cst_25 = arith.constant 1.000000e+00 : f32
    %68 = vector.broadcast %cst_25 : f32 to vector<2x32xf32>
    %69 = arith.addf %68, %67 : vector<2x32xf32>
    %70 = arith.divf %68, %69 : vector<2x32xf32>
    %c0_26 = arith.constant 0 : index
    %c0_27 = arith.constant 0 : index
    %71 = vector.load %arg5[%c0_26, %c0_27] : memref<2x32xf32, #tpu.memory_space<vmem>>, vector<2x32xf32>
    %72 = arith.mulf %62, %71 : vector<2x32xf32>
    %73 = arith.mulf %56, %64 : vector<2x32xf32>
    %74 = arith.addf %72, %73 : vector<2x32xf32>
    %75 = math.tanh %74 : vector<2x32xf32>
    %76 = arith.mulf %70, %75 : vector<2x32xf32>
    %c0_28 = arith.constant 0 : index
    %c0_29 = arith.constant 0 : index
    %77 = vector.load %arg5[%c0_28, %c0_29] : memref<2x32xf32, #tpu.memory_space<vmem>>, vector<2x32xf32>
    tpu.vector_store %arg5[%c0_28, %c0_29], %74 {strides = array<i32>} : memref<2x32xf32, #tpu.memory_space<vmem>>, vector<2x32xf32>,
    %c0_30 = arith.constant 0 : index
    %c0_31 = arith.constant 0 : index
    %78 = vector.load %arg4[%c0_30, %c0_31] : memref<2x32xf32, #tpu.memory_space<vmem>>, vector<2x32xf32>
    tpu.vector_store %arg4[%c0_30, %c0_31], %76 {strides = array<i32>} : memref<2x32xf32, #tpu.memory_space<vmem>>, vector<2x32xf32>,
    %79 = arith.truncf %76 : vector<2x32xf32> to vector<2x32xbf16>
    %80 = arith.index_cast %c1_i32 : i32 to index
    %c0_32 = arith.constant 0 : index
    %c0_33 = arith.constant 0 : index
    %81 = vector.load %arg3[%80, %c0_32, %c0_33] : memref<4x2x32xbf16, #tpu.memory_space<vmem>>, vector<1x2x32xbf16>
    %82 = vector.shape_cast %81 : vector<1x2x32xbf16> to vector<2x32xbf16>
    %83 = vector.shape_cast %79 : vector<2x32xbf16> to vector<1x2x32xbf16>
    tpu.vector_store %arg3[%80, %c0_32, %c0_33], %83 {strides = array<i32>} : memref<4x2x32xbf16, #tpu.memory_space<vmem>>, vector<1x2x32xbf16>,
    %c2_i32 = arith.constant 2 : i32
    %84 = arith.index_cast %c2_i32 : i32 to index
    %c0_34 = arith.constant 0 : index
    %c0_35 = arith.constant 0 : index
    %85 = vector.load %arg1[%84, %c0_34, %c0_35] : memref<4x2x128xf32, #tpu.memory_space<vmem>>, vector<1x2x128xf32>
    %86 = vector.shape_cast %85 : vector<1x2x128xf32> to vector<2x128xf32>
    %c0_36 = arith.constant 0 : index
    %c0_37 = arith.constant 0 : index
    %87 = vector.load %arg4[%c0_36, %c0_37] : memref<2x32xf32, #tpu.memory_space<vmem>>, vector<2x32xf32>
    %88 = arith.truncf %87 : vector<2x32xf32> to vector<2x32xbf16>
    %cst_38 = arith.constant dense<0.000000e+00> : vector<2x128xf32>
    %89 = tpu.matmul %88, %3, %cst_38 {dimension_numbers = #tpu.dot_dimension_numbers<[1], [0], [0], [1], [0, 0, 1, 1], [], []>} : vector<2x32xbf16>, vector<32x128xbf16>, vector<2x128xf32> -> vector<2x128xf32>
    %90 = arith.addf %86, %89 : vector<2x128xf32>
    %91 = vector.extract_strided_slice %90 {offsets = [0, 0], sizes = [2, 32], strides = [1, 1]} : vector<2x128xf32> to vector<2x32xf32>
    %92 = arith.negf %91 : vector<2x32xf32>
    %93 = math.exp %92 : vector<2x32xf32>
    %cst_39 = arith.constant 1.000000e+00 : f32
    %94 = vector.broadcast %cst_39 : f32 to vector<2x32xf32>
    %95 = arith.addf %94, %93 : vector<2x32xf32>
    %96 = arith.divf %94, %95 : vector<2x32xf32>
    %97 = vector.extract_strided_slice %90 {offsets = [0, 32], sizes = [2, 32], strides = [1, 1]} : vector<2x128xf32> to vector<2x32xf32>
    %98 = arith.negf %97 : vector<2x32xf32>
    %99 = math.exp %98 : vector<2x32xf32>
    %cst_40 = arith.constant 1.000000e+00 : f32
    %100 = vector.broadcast %cst_40 : f32 to vector<2x32xf32>
    %101 = arith.addf %100, %99 : vector<2x32xf32>
    %102 = arith.divf %100, %101 : vector<2x32xf32>
    %103 = vector.extract_strided_slice %90 {offsets = [0, 64], sizes = [2, 32], strides = [1, 1]} : vector<2x128xf32> to vector<2x32xf32>
    %104 = math.tanh %103 : vector<2x32xf32>
    %105 = vector.extract_strided_slice %90 {offsets = [0, 96], sizes = [2, 32], strides = [1, 1]} : vector<2x128xf32> to vector<2x32xf32>
    %106 = arith.negf %105 : vector<2x32xf32>
    %107 = math.exp %106 : vector<2x32xf32>
    %cst_41 = arith.constant 1.000000e+00 : f32
    %108 = vector.broadcast %cst_41 : f32 to vector<2x32xf32>
    %109 = arith.addf %108, %107 : vector<2x32xf32>
    %110 = arith.divf %108, %109 : vector<2x32xf32>
    %c0_42 = arith.constant 0 : index
    %c0_43 = arith.constant 0 : index
    %111 = vector.load %arg5[%c0_42, %c0_43] : memref<2x32xf32, #tpu.memory_space<vmem>>, vector<2x32xf32>
    %112 = arith.mulf %102, %111 : vector<2x32xf32>
    %113 = arith.mulf %96, %104 : vector<2x32xf32>
    %114 = arith.addf %112, %113 : vector<2x32xf32>
    %115 = math.tanh %114 : vector<2x32xf32>
    %116 = arith.mulf %110, %115 : vector<2x32xf32>
    %c0_44 = arith.constant 0 : index
    %c0_45 = arith.constant 0 : index
    %117 = vector.load %arg5[%c0_44, %c0_45] : memref<2x32xf32, #tpu.memory_space<vmem>>, vector<2x32xf32>
    tpu.vector_store %arg5[%c0_44, %c0_45], %114 {strides = array<i32>} : memref<2x32xf32, #tpu.memory_space<vmem>>, vector<2x32xf32>,
    %c0_46 = arith.constant 0 : index
    %c0_47 = arith.constant 0 : index
    %118 = vector.load %arg4[%c0_46, %c0_47] : memref<2x32xf32, #tpu.memory_space<vmem>>, vector<2x32xf32>
    tpu.vector_store %arg4[%c0_46, %c0_47], %116 {strides = array<i32>} : memref<2x32xf32, #tpu.memory_space<vmem>>, vector<2x32xf32>,
    %119 = arith.truncf %116 : vector<2x32xf32> to vector<2x32xbf16>
    %120 = arith.index_cast %c2_i32 : i32 to index
    %c0_48 = arith.constant 0 : index
    %c0_49 = arith.constant 0 : index
    %121 = vector.load %arg3[%120, %c0_48, %c0_49] : memref<4x2x32xbf16, #tpu.memory_space<vmem>>, vector<1x2x32xbf16>
    %122 = vector.shape_cast %121 : vector<1x2x32xbf16> to vector<2x32xbf16>
    %123 = vector.shape_cast %119 : vector<2x32xbf16> to vector<1x2x32xbf16>
    tpu.vector_store %arg3[%120, %c0_48, %c0_49], %123 {strides = array<i32>} : memref<4x2x32xbf16, #tpu.memory_space<vmem>>, vector<1x2x32xbf16>,
    %c3_i32 = arith.constant 3 : i32
    %124 = arith.index_cast %c3_i32 : i32 to index
    %c0_50 = arith.constant 0 : index
    %c0_51 = arith.constant 0 : index
    %125 = vector.load %arg1[%124, %c0_50, %c0_51] : memref<4x2x128xf32, #tpu.memory_space<vmem>>, vector<1x2x128xf32>
    %126 = vector.shape_cast %125 : vector<1x2x128xf32> to vector<2x128xf32>
    %c0_52 = arith.constant 0 : index
    %c0_53 = arith.constant 0 : index
    %127 = vector.load %arg4[%c0_52, %c0_53] : memref<2x32xf32, #tpu.memory_space<vmem>>, vector<2x32xf32>
    %128 = arith.truncf %127 : vector<2x32xf32> to vector<2x32xbf16>
    %cst_54 = arith.constant dense<0.000000e+00> : vector<2x128xf32>
    %129 = tpu.matmul %128, %3, %cst_54 {dimension_numbers = #tpu.dot_dimension_numbers<[1], [0], [0], [1], [0, 0, 1, 1], [], []>} : vector<2x32xbf16>, vector<32x128xbf16>, vector<2x128xf32> -> vector<2x128xf32>
    %130 = arith.addf %126, %129 : vector<2x128xf32>
    %131 = vector.extract_strided_slice %130 {offsets = [0, 0], sizes = [2, 32], strides = [1, 1]} : vector<2x128xf32> to vector<2x32xf32>
    %132 = arith.negf %131 : vector<2x32xf32>
    %133 = math.exp %132 : vector<2x32xf32>
    %cst_55 = arith.constant 1.000000e+00 : f32
    %134 = vector.broadcast %cst_55 : f32 to vector<2x32xf32>
    %135 = arith.addf %134, %133 : vector<2x32xf32>
    %136 = arith.divf %134, %135 : vector<2x32xf32>
    %137 = vector.extract_strided_slice %130 {offsets = [0, 32], sizes = [2, 32], strides = [1, 1]} : vector<2x128xf32> to vector<2x32xf32>
    %138 = arith.negf %137 : vector<2x32xf32>
    %139 = math.exp %138 : vector<2x32xf32>
    %cst_56 = arith.constant 1.000000e+00 : f32
    %140 = vector.broadcast %cst_56 : f32 to vector<2x32xf32>
    %141 = arith.addf %140, %139 : vector<2x32xf32>
    %142 = arith.divf %140, %141 : vector<2x32xf32>
    %143 = vector.extract_strided_slice %130 {offsets = [0, 64], sizes = [2, 32], strides = [1, 1]} : vector<2x128xf32> to vector<2x32xf32>
    %144 = math.tanh %143 : vector<2x32xf32>
    %145 = vector.extract_strided_slice %130 {offsets = [0, 96], sizes = [2, 32], strides = [1, 1]} : vector<2x128xf32> to vector<2x32xf32>
    %146 = arith.negf %145 : vector<2x32xf32>
    %147 = math.exp %146 : vector<2x32xf32>
    %cst_57 = arith.constant 1.000000e+00 : f32
    %148 = vector.broadcast %cst_57 : f32 to vector<2x32xf32>
    %149 = arith.addf %148, %147 : vector<2x32xf32>
    %150 = arith.divf %148, %149 : vector<2x32xf32>
    %c0_58 = arith.constant 0 : index
    %c0_59 = arith.constant 0 : index
    %151 = vector.load %arg5[%c0_58, %c0_59] : memref<2x32xf32, #tpu.memory_space<vmem>>, vector<2x32xf32>
    %152 = arith.mulf %142, %151 : vector<2x32xf32>
    %153 = arith.mulf %136, %144 : vector<2x32xf32>
    %154 = arith.addf %152, %153 : vector<2x32xf32>
    %155 = math.tanh %154 : vector<2x32xf32>
    %156 = arith.mulf %150, %155 : vector<2x32xf32>
    %c0_60 = arith.constant 0 : index
    %c0_61 = arith.constant 0 : index
    %157 = vector.load %arg5[%c0_60, %c0_61] : memref<2x32xf32, #tpu.memory_space<vmem>>, vector<2x32xf32>
    tpu.vector_store %arg5[%c0_60, %c0_61], %154 {strides = array<i32>} : memref<2x32xf32, #tpu.memory_space<vmem>>, vector<2x32xf32>,
    %c0_62 = arith.constant 0 : index
    %c0_63 = arith.constant 0 : index
    %158 = vector.load %arg4[%c0_62, %c0_63] : memref<2x32xf32, #tpu.memory_space<vmem>>, vector<2x32xf32>
    tpu.vector_store %arg4[%c0_62, %c0_63], %156 {strides = array<i32>} : memref<2x32xf32, #tpu.memory_space<vmem>>, vector<2x32xf32>,
    %159 = arith.truncf %156 : vector<2x32xf32> to vector<2x32xbf16>
    %160 = arith.index_cast %c3_i32 : i32 to index
    %c0_64 = arith.constant 0 : index
    %c0_65 = arith.constant 0 : index
    %161 = vector.load %arg3[%160, %c0_64, %c0_65] : memref<4x2x32xbf16, #tpu.memory_space<vmem>>, vector<1x2x32xbf16>
    %162 = vector.shape_cast %161 : vector<1x2x32xbf16> to vector<2x32xbf16>
    %163 = vector.shape_cast %159 : vector<2x32xbf16> to vector<1x2x32xbf16>
    tpu.vector_store %arg3[%160, %c0_64, %c0_65], %163 {strides = array<i32>} : memref<4x2x32xbf16, #tpu.memory_space<vmem>>, vector<1x2x32xbf16>,
    %c4_i32 = arith.constant 4 : i32
    return
  }
  func.func @transform_0(%arg0: i32) -> (i32, i32, i32) {
    %c0_i32 = arith.constant 0 : i32
    %c0_i32_0 = arith.constant 0 : i32
    %c0_i32_1 = arith.constant 0 : i32
    return %arg0, %c0_i32, %c0_i32_0 : i32, i32, i32
  }
  func.func @transform_1(%arg0: i32) -> (i32, i32) {
    %c0_i32 = arith.constant 0 : i32
    %c0_i32_0 = arith.constant 0 : i32
    %c0_i32_1 = arith.constant 0 : i32
    return %c0_i32, %c0_i32_0 : i32, i32
  }
  func.func @transform_2(%arg0: i32) -> (i32, i32, i32) {
    %c0_i32 = arith.constant 0 : i32
    %c0_i32_0 = arith.constant 0 : i32
    %c0_i32_1 = arith.constant 0 : i32
    return %arg0, %c0_i32, %c0_i32_0 : i32, i32, i32
  }
}

module attributes {stable_mosaic.version = 11 : i64} {
  func.func @_mm_single_kernel(%arg0: i32, %arg1: i32, %arg2: memref<8x32xbf16, #tpu.memory_space<vmem>>, %arg3: memref<32x128xbf16, #tpu.memory_space<vmem>>, %arg4: memref<1x128xf32, #tpu.memory_space<vmem>>, %arg5: memref<8x128xf32, #tpu.memory_space<vmem>>) attributes {dimension_semantics = [#tpu.dimension_semantics<parallel>, #tpu.dimension_semantics<parallel>], iteration_bounds = array<i64: 1, 1>, scalar_prefetch = 0 : i64, scratch_operands = 0 : i64, tpu.core_type = #tpu.core_type<tc>, window_params = [{transform_indices = @transform_0, window_bounds = array<i64: 8, 32>}, {transform_indices = @transform_1, window_bounds = array<i64: 32, 128>}, {transform_indices = @transform_2, window_bounds = array<i64: 1, 128>}, {transform_indices = @transform_3, window_bounds = array<i64: 8, 128>}]} {
    %c0 = arith.constant 0 : index
    %c0_0 = arith.constant 0 : index
    %0 = vector.load %arg2[%c0, %c0_0] : memref<8x32xbf16, #tpu.memory_space<vmem>>, vector<8x32xbf16>
    %c0_1 = arith.constant 0 : index
    %c0_2 = arith.constant 0 : index
    %1 = vector.load %arg3[%c0_1, %c0_2] : memref<32x128xbf16, #tpu.memory_space<vmem>>, vector<32x128xbf16>
    %cst = arith.constant dense<0.000000e+00> : vector<8x128xf32>
    %2 = tpu.matmul %0, %1, %cst {dimension_numbers = #tpu.dot_dimension_numbers<[1], [0], [0], [1], [0, 0, 1, 1], [], []>} : vector<8x32xbf16>, vector<32x128xbf16>, vector<8x128xf32> -> vector<8x128xf32>
    %c0_3 = arith.constant 0 : index
    %c0_4 = arith.constant 0 : index
    %3 = vector.load %arg4[%c0_3, %c0_4] : memref<1x128xf32, #tpu.memory_space<vmem>>, vector<1x128xf32>
    %4 = vector.broadcast %3 : vector<1x128xf32> to vector<8x128xf32>
    %5 = arith.addf %2, %4 : vector<8x128xf32>
    %c0_5 = arith.constant 0 : index
    %c0_6 = arith.constant 0 : index
    %6 = vector.load %arg5[%c0_5, %c0_6] : memref<8x128xf32, #tpu.memory_space<vmem>>, vector<8x128xf32>
    tpu.vector_store %arg5[%c0_5, %c0_6], %5 {strides = array<i32>} : memref<8x128xf32, #tpu.memory_space<vmem>>, vector<8x128xf32>,
    return
  }
  func.func @transform_0(%arg0: i32, %arg1: i32) -> (i32, i32) {
    %c0_i32 = arith.constant 0 : i32
    %c0_i32_0 = arith.constant 0 : i32
    return %arg0, %c0_i32 : i32, i32
  }
  func.func @transform_1(%arg0: i32, %arg1: i32) -> (i32, i32) {
    %c0_i32 = arith.constant 0 : i32
    %c0_i32_0 = arith.constant 0 : i32
    return %c0_i32, %arg1 : i32, i32
  }
  func.func @transform_2(%arg0: i32, %arg1: i32) -> (i32, i32) {
    %c0_i32 = arith.constant 0 : i32
    %c0_i32_0 = arith.constant 0 : i32
    return %c0_i32, %arg1 : i32, i32
  }
  func.func @transform_3(%arg0: i32, %arg1: i32) -> (i32, i32) {
    %c0_i32 = arith.constant 0 : i32
    return %arg0, %arg1 : i32, i32
  }
}

module attributes {stable_mosaic.version = 11 : i64} {
  func.func @_lstm_rec_kernel(%arg0: i32, %arg1: memref<4x2x128xf32, #tpu.memory_space<vmem>>, %arg2: memref<32x128xbf16, #tpu.memory_space<vmem>>, %arg3: memref<4x2x32xf32, #tpu.memory_space<vmem>>, %arg4: memref<2x32xf32, #tpu.memory_space<vmem>>, %arg5: memref<2x32xf32, #tpu.memory_space<vmem>>) attributes {dimension_semantics = [#tpu.dimension_semantics<arbitrary>], iteration_bounds = array<i64: 1>, scalar_prefetch = 0 : i64, scratch_operands = 2 : i64, tpu.core_type = #tpu.core_type<tc>, window_params = [{transform_indices = @transform_0, window_bounds = array<i64: 4, 2, 128>}, {pipeline_mode = #tpu.pipeline_mode<synchronous>, transform_indices = @transform_1, window_bounds = array<i64: 32, 128>}, {transform_indices = @transform_2, window_bounds = array<i64: 4, 2, 32>}]} {
    %c0_i32 = arith.constant 0 : i32
    %0 = arith.cmpi eq, %arg0, %c0_i32 : i32
    %1 = arith.extui %0 : i1 to i32
    %c0_i32_0 = arith.constant 0 : i32
    %2 = arith.cmpi ne, %1, %c0_i32_0 : i32
    scf.if %2 {
      %cst_66 = arith.constant 0.000000e+00 : f32
      %160 = vector.broadcast %cst_66 : f32 to vector<2x32xf32>
      %c0_67 = arith.constant 0 : index
      %c0_68 = arith.constant 0 : index
      %161 = vector.load %arg4[%c0_67, %c0_68] : memref<2x32xf32, #tpu.memory_space<vmem>>, vector<2x32xf32>
      tpu.vector_store %arg4[%c0_67, %c0_68], %160 {strides = array<i32>} : memref<2x32xf32, #tpu.memory_space<vmem>>, vector<2x32xf32>,
      %cst_69 = arith.constant 0.000000e+00 : f32
      %162 = vector.broadcast %cst_69 : f32 to vector<2x32xf32>
      %c0_70 = arith.constant 0 : index
      %c0_71 = arith.constant 0 : index
      %163 = vector.load %arg5[%c0_70, %c0_71] : memref<2x32xf32, #tpu.memory_space<vmem>>, vector<2x32xf32>
      tpu.vector_store %arg5[%c0_70, %c0_71], %162 {strides = array<i32>} : memref<2x32xf32, #tpu.memory_space<vmem>>, vector<2x32xf32>,
    } else {
    }
    %c0 = arith.constant 0 : index
    %c0_1 = arith.constant 0 : index
    %3 = vector.load %arg2[%c0, %c0_1] : memref<32x128xbf16, #tpu.memory_space<vmem>>, vector<32x128xbf16>
    %c0_i32_2 = arith.constant 0 : i32
    %4 = arith.index_cast %c0_i32_2 : i32 to index
    %c0_3 = arith.constant 0 : index
    %c0_4 = arith.constant 0 : index
    %5 = vector.load %arg1[%4, %c0_3, %c0_4] : memref<4x2x128xf32, #tpu.memory_space<vmem>>, vector<1x2x128xf32>
    %6 = vector.shape_cast %5 : vector<1x2x128xf32> to vector<2x128xf32>
    %c0_5 = arith.constant 0 : index
    %c0_6 = arith.constant 0 : index
    %7 = vector.load %arg4[%c0_5, %c0_6] : memref<2x32xf32, #tpu.memory_space<vmem>>, vector<2x32xf32>
    %8 = arith.truncf %7 : vector<2x32xf32> to vector<2x32xbf16>
    %cst = arith.constant dense<0.000000e+00> : vector<2x128xf32>
    %9 = tpu.matmul %8, %3, %cst {dimension_numbers = #tpu.dot_dimension_numbers<[1], [0], [0], [1], [0, 0, 1, 1], [], []>} : vector<2x32xbf16>, vector<32x128xbf16>, vector<2x128xf32> -> vector<2x128xf32>
    %10 = arith.addf %6, %9 : vector<2x128xf32>
    %11 = vector.extract_strided_slice %10 {offsets = [0, 0], sizes = [2, 32], strides = [1, 1]} : vector<2x128xf32> to vector<2x32xf32>
    %12 = arith.negf %11 : vector<2x32xf32>
    %13 = math.exp %12 : vector<2x32xf32>
    %cst_7 = arith.constant 1.000000e+00 : f32
    %14 = vector.broadcast %cst_7 : f32 to vector<2x32xf32>
    %15 = arith.addf %14, %13 : vector<2x32xf32>
    %16 = arith.divf %14, %15 : vector<2x32xf32>
    %17 = vector.extract_strided_slice %10 {offsets = [0, 32], sizes = [2, 32], strides = [1, 1]} : vector<2x128xf32> to vector<2x32xf32>
    %18 = arith.negf %17 : vector<2x32xf32>
    %19 = math.exp %18 : vector<2x32xf32>
    %cst_8 = arith.constant 1.000000e+00 : f32
    %20 = vector.broadcast %cst_8 : f32 to vector<2x32xf32>
    %21 = arith.addf %20, %19 : vector<2x32xf32>
    %22 = arith.divf %20, %21 : vector<2x32xf32>
    %23 = vector.extract_strided_slice %10 {offsets = [0, 64], sizes = [2, 32], strides = [1, 1]} : vector<2x128xf32> to vector<2x32xf32>
    %24 = math.tanh %23 : vector<2x32xf32>
    %25 = vector.extract_strided_slice %10 {offsets = [0, 96], sizes = [2, 32], strides = [1, 1]} : vector<2x128xf32> to vector<2x32xf32>
    %26 = arith.negf %25 : vector<2x32xf32>
    %27 = math.exp %26 : vector<2x32xf32>
    %cst_9 = arith.constant 1.000000e+00 : f32
    %28 = vector.broadcast %cst_9 : f32 to vector<2x32xf32>
    %29 = arith.addf %28, %27 : vector<2x32xf32>
    %30 = arith.divf %28, %29 : vector<2x32xf32>
    %c0_10 = arith.constant 0 : index
    %c0_11 = arith.constant 0 : index
    %31 = vector.load %arg5[%c0_10, %c0_11] : memref<2x32xf32, #tpu.memory_space<vmem>>, vector<2x32xf32>
    %32 = arith.mulf %22, %31 : vector<2x32xf32>
    %33 = arith.mulf %16, %24 : vector<2x32xf32>
    %34 = arith.addf %32, %33 : vector<2x32xf32>
    %35 = math.tanh %34 : vector<2x32xf32>
    %36 = arith.mulf %30, %35 : vector<2x32xf32>
    %c0_12 = arith.constant 0 : index
    %c0_13 = arith.constant 0 : index
    %37 = vector.load %arg5[%c0_12, %c0_13] : memref<2x32xf32, #tpu.memory_space<vmem>>, vector<2x32xf32>
    tpu.vector_store %arg5[%c0_12, %c0_13], %34 {strides = array<i32>} : memref<2x32xf32, #tpu.memory_space<vmem>>, vector<2x32xf32>,
    %c0_14 = arith.constant 0 : index
    %c0_15 = arith.constant 0 : index
    %38 = vector.load %arg4[%c0_14, %c0_15] : memref<2x32xf32, #tpu.memory_space<vmem>>, vector<2x32xf32>
    tpu.vector_store %arg4[%c0_14, %c0_15], %36 {strides = array<i32>} : memref<2x32xf32, #tpu.memory_space<vmem>>, vector<2x32xf32>,
    %39 = arith.index_cast %c0_i32_2 : i32 to index
    %c0_16 = arith.constant 0 : index
    %c0_17 = arith.constant 0 : index
    %40 = vector.load %arg3[%39, %c0_16, %c0_17] : memref<4x2x32xf32, #tpu.memory_space<vmem>>, vector<1x2x32xf32>
    %41 = vector.shape_cast %40 : vector<1x2x32xf32> to vector<2x32xf32>
    %42 = vector.shape_cast %36 : vector<2x32xf32> to vector<1x2x32xf32>
    tpu.vector_store %arg3[%39, %c0_16, %c0_17], %42 {strides = array<i32>} : memref<4x2x32xf32, #tpu.memory_space<vmem>>, vector<1x2x32xf32>,
    %c1_i32 = arith.constant 1 : i32
    %43 = arith.index_cast %c1_i32 : i32 to index
    %c0_18 = arith.constant 0 : index
    %c0_19 = arith.constant 0 : index
    %44 = vector.load %arg1[%43, %c0_18, %c0_19] : memref<4x2x128xf32, #tpu.memory_space<vmem>>, vector<1x2x128xf32>
    %45 = vector.shape_cast %44 : vector<1x2x128xf32> to vector<2x128xf32>
    %c0_20 = arith.constant 0 : index
    %c0_21 = arith.constant 0 : index
    %46 = vector.load %arg4[%c0_20, %c0_21] : memref<2x32xf32, #tpu.memory_space<vmem>>, vector<2x32xf32>
    %47 = arith.truncf %46 : vector<2x32xf32> to vector<2x32xbf16>
    %cst_22 = arith.constant dense<0.000000e+00> : vector<2x128xf32>
    %48 = tpu.matmul %47, %3, %cst_22 {dimension_numbers = #tpu.dot_dimension_numbers<[1], [0], [0], [1], [0, 0, 1, 1], [], []>} : vector<2x32xbf16>, vector<32x128xbf16>, vector<2x128xf32> -> vector<2x128xf32>
    %49 = arith.addf %45, %48 : vector<2x128xf32>
    %50 = vector.extract_strided_slice %49 {offsets = [0, 0], sizes = [2, 32], strides = [1, 1]} : vector<2x128xf32> to vector<2x32xf32>
    %51 = arith.negf %50 : vector<2x32xf32>
    %52 = math.exp %51 : vector<2x32xf32>
    %cst_23 = arith.constant 1.000000e+00 : f32
    %53 = vector.broadcast %cst_23 : f32 to vector<2x32xf32>
    %54 = arith.addf %53, %52 : vector<2x32xf32>
    %55 = arith.divf %53, %54 : vector<2x32xf32>
    %56 = vector.extract_strided_slice %49 {offsets = [0, 32], sizes = [2, 32], strides = [1, 1]} : vector<2x128xf32> to vector<2x32xf32>
    %57 = arith.negf %56 : vector<2x32xf32>
    %58 = math.exp %57 : vector<2x32xf32>
    %cst_24 = arith.constant 1.000000e+00 : f32
    %59 = vector.broadcast %cst_24 : f32 to vector<2x32xf32>
    %60 = arith.addf %59, %58 : vector<2x32xf32>
    %61 = arith.divf %59, %60 : vector<2x32xf32>
    %62 = vector.extract_strided_slice %49 {offsets = [0, 64], sizes = [2, 32], strides = [1, 1]} : vector<2x128xf32> to vector<2x32xf32>
    %63 = math.tanh %62 : vector<2x32xf32>
    %64 = vector.extract_strided_slice %49 {offsets = [0, 96], sizes = [2, 32], strides = [1, 1]} : vector<2x128xf32> to vector<2x32xf32>
    %65 = arith.negf %64 : vector<2x32xf32>
    %66 = math.exp %65 : vector<2x32xf32>
    %cst_25 = arith.constant 1.000000e+00 : f32
    %67 = vector.broadcast %cst_25 : f32 to vector<2x32xf32>
    %68 = arith.addf %67, %66 : vector<2x32xf32>
    %69 = arith.divf %67, %68 : vector<2x32xf32>
    %c0_26 = arith.constant 0 : index
    %c0_27 = arith.constant 0 : index
    %70 = vector.load %arg5[%c0_26, %c0_27] : memref<2x32xf32, #tpu.memory_space<vmem>>, vector<2x32xf32>
    %71 = arith.mulf %61, %70 : vector<2x32xf32>
    %72 = arith.mulf %55, %63 : vector<2x32xf32>
    %73 = arith.addf %71, %72 : vector<2x32xf32>
    %74 = math.tanh %73 : vector<2x32xf32>
    %75 = arith.mulf %69, %74 : vector<2x32xf32>
    %c0_28 = arith.constant 0 : index
    %c0_29 = arith.constant 0 : index
    %76 = vector.load %arg5[%c0_28, %c0_29] : memref<2x32xf32, #tpu.memory_space<vmem>>, vector<2x32xf32>
    tpu.vector_store %arg5[%c0_28, %c0_29], %73 {strides = array<i32>} : memref<2x32xf32, #tpu.memory_space<vmem>>, vector<2x32xf32>,
    %c0_30 = arith.constant 0 : index
    %c0_31 = arith.constant 0 : index
    %77 = vector.load %arg4[%c0_30, %c0_31] : memref<2x32xf32, #tpu.memory_space<vmem>>, vector<2x32xf32>
    tpu.vector_store %arg4[%c0_30, %c0_31], %75 {strides = array<i32>} : memref<2x32xf32, #tpu.memory_space<vmem>>, vector<2x32xf32>,
    %78 = arith.index_cast %c1_i32 : i32 to index
    %c0_32 = arith.constant 0 : index
    %c0_33 = arith.constant 0 : index
    %79 = vector.load %arg3[%78, %c0_32, %c0_33] : memref<4x2x32xf32, #tpu.memory_space<vmem>>, vector<1x2x32xf32>
    %80 = vector.shape_cast %79 : vector<1x2x32xf32> to vector<2x32xf32>
    %81 = vector.shape_cast %75 : vector<2x32xf32> to vector<1x2x32xf32>
    tpu.vector_store %arg3[%78, %c0_32, %c0_33], %81 {strides = array<i32>} : memref<4x2x32xf32, #tpu.memory_space<vmem>>, vector<1x2x32xf32>,
    %c2_i32 = arith.constant 2 : i32
    %82 = arith.index_cast %c2_i32 : i32 to index
    %c0_34 = arith.constant 0 : index
    %c0_35 = arith.constant 0 : index
    %83 = vector.load %arg1[%82, %c0_34, %c0_35] : memref<4x2x128xf32, #tpu.memory_space<vmem>>, vector<1x2x128xf32>
    %84 = vector.shape_cast %83 : vector<1x2x128xf32> to vector<2x128xf32>
    %c0_36 = arith.constant 0 : index
    %c0_37 = arith.constant 0 : index
    %85 = vector.load %arg4[%c0_36, %c0_37] : memref<2x32xf32, #tpu.memory_space<vmem>>, vector<2x32xf32>
    %86 = arith.truncf %85 : vector<2x32xf32> to vector<2x32xbf16>
    %cst_38 = arith.constant dense<0.000000e+00> : vector<2x128xf32>
    %87 = tpu.matmul %86, %3, %cst_38 {dimension_numbers = #tpu.dot_dimension_numbers<[1], [0], [0], [1], [0, 0, 1, 1], [], []>} : vector<2x32xbf16>, vector<32x128xbf16>, vector<2x128xf32> -> vector<2x128xf32>
    %88 = arith.addf %84, %87 : vector<2x128xf32>
    %89 = vector.extract_strided_slice %88 {offsets = [0, 0], sizes = [2, 32], strides = [1, 1]} : vector<2x128xf32> to vector<2x32xf32>
    %90 = arith.negf %89 : vector<2x32xf32>
    %91 = math.exp %90 : vector<2x32xf32>
    %cst_39 = arith.constant 1.000000e+00 : f32
    %92 = vector.broadcast %cst_39 : f32 to vector<2x32xf32>
    %93 = arith.addf %92, %91 : vector<2x32xf32>
    %94 = arith.divf %92, %93 : vector<2x32xf32>
    %95 = vector.extract_strided_slice %88 {offsets = [0, 32], sizes = [2, 32], strides = [1, 1]} : vector<2x128xf32> to vector<2x32xf32>
    %96 = arith.negf %95 : vector<2x32xf32>
    %97 = math.exp %96 : vector<2x32xf32>
    %cst_40 = arith.constant 1.000000e+00 : f32
    %98 = vector.broadcast %cst_40 : f32 to vector<2x32xf32>
    %99 = arith.addf %98, %97 : vector<2x32xf32>
    %100 = arith.divf %98, %99 : vector<2x32xf32>
    %101 = vector.extract_strided_slice %88 {offsets = [0, 64], sizes = [2, 32], strides = [1, 1]} : vector<2x128xf32> to vector<2x32xf32>
    %102 = math.tanh %101 : vector<2x32xf32>
    %103 = vector.extract_strided_slice %88 {offsets = [0, 96], sizes = [2, 32], strides = [1, 1]} : vector<2x128xf32> to vector<2x32xf32>
    %104 = arith.negf %103 : vector<2x32xf32>
    %105 = math.exp %104 : vector<2x32xf32>
    %cst_41 = arith.constant 1.000000e+00 : f32
    %106 = vector.broadcast %cst_41 : f32 to vector<2x32xf32>
    %107 = arith.addf %106, %105 : vector<2x32xf32>
    %108 = arith.divf %106, %107 : vector<2x32xf32>
    %c0_42 = arith.constant 0 : index
    %c0_43 = arith.constant 0 : index
    %109 = vector.load %arg5[%c0_42, %c0_43] : memref<2x32xf32, #tpu.memory_space<vmem>>, vector<2x32xf32>
    %110 = arith.mulf %100, %109 : vector<2x32xf32>
    %111 = arith.mulf %94, %102 : vector<2x32xf32>
    %112 = arith.addf %110, %111 : vector<2x32xf32>
    %113 = math.tanh %112 : vector<2x32xf32>
    %114 = arith.mulf %108, %113 : vector<2x32xf32>
    %c0_44 = arith.constant 0 : index
    %c0_45 = arith.constant 0 : index
    %115 = vector.load %arg5[%c0_44, %c0_45] : memref<2x32xf32, #tpu.memory_space<vmem>>, vector<2x32xf32>
    tpu.vector_store %arg5[%c0_44, %c0_45], %112 {strides = array<i32>} : memref<2x32xf32, #tpu.memory_space<vmem>>, vector<2x32xf32>,
    %c0_46 = arith.constant 0 : index
    %c0_47 = arith.constant 0 : index
    %116 = vector.load %arg4[%c0_46, %c0_47] : memref<2x32xf32, #tpu.memory_space<vmem>>, vector<2x32xf32>
    tpu.vector_store %arg4[%c0_46, %c0_47], %114 {strides = array<i32>} : memref<2x32xf32, #tpu.memory_space<vmem>>, vector<2x32xf32>,
    %117 = arith.index_cast %c2_i32 : i32 to index
    %c0_48 = arith.constant 0 : index
    %c0_49 = arith.constant 0 : index
    %118 = vector.load %arg3[%117, %c0_48, %c0_49] : memref<4x2x32xf32, #tpu.memory_space<vmem>>, vector<1x2x32xf32>
    %119 = vector.shape_cast %118 : vector<1x2x32xf32> to vector<2x32xf32>
    %120 = vector.shape_cast %114 : vector<2x32xf32> to vector<1x2x32xf32>
    tpu.vector_store %arg3[%117, %c0_48, %c0_49], %120 {strides = array<i32>} : memref<4x2x32xf32, #tpu.memory_space<vmem>>, vector<1x2x32xf32>,
    %c3_i32 = arith.constant 3 : i32
    %121 = arith.index_cast %c3_i32 : i32 to index
    %c0_50 = arith.constant 0 : index
    %c0_51 = arith.constant 0 : index
    %122 = vector.load %arg1[%121, %c0_50, %c0_51] : memref<4x2x128xf32, #tpu.memory_space<vmem>>, vector<1x2x128xf32>
    %123 = vector.shape_cast %122 : vector<1x2x128xf32> to vector<2x128xf32>
    %c0_52 = arith.constant 0 : index
    %c0_53 = arith.constant 0 : index
    %124 = vector.load %arg4[%c0_52, %c0_53] : memref<2x32xf32, #tpu.memory_space<vmem>>, vector<2x32xf32>
    %125 = arith.truncf %124 : vector<2x32xf32> to vector<2x32xbf16>
    %cst_54 = arith.constant dense<0.000000e+00> : vector<2x128xf32>
    %126 = tpu.matmul %125, %3, %cst_54 {dimension_numbers = #tpu.dot_dimension_numbers<[1], [0], [0], [1], [0, 0, 1, 1], [], []>} : vector<2x32xbf16>, vector<32x128xbf16>, vector<2x128xf32> -> vector<2x128xf32>
    %127 = arith.addf %123, %126 : vector<2x128xf32>
    %128 = vector.extract_strided_slice %127 {offsets = [0, 0], sizes = [2, 32], strides = [1, 1]} : vector<2x128xf32> to vector<2x32xf32>
    %129 = arith.negf %128 : vector<2x32xf32>
    %130 = math.exp %129 : vector<2x32xf32>
    %cst_55 = arith.constant 1.000000e+00 : f32
    %131 = vector.broadcast %cst_55 : f32 to vector<2x32xf32>
    %132 = arith.addf %131, %130 : vector<2x32xf32>
    %133 = arith.divf %131, %132 : vector<2x32xf32>
    %134 = vector.extract_strided_slice %127 {offsets = [0, 32], sizes = [2, 32], strides = [1, 1]} : vector<2x128xf32> to vector<2x32xf32>
    %135 = arith.negf %134 : vector<2x32xf32>
    %136 = math.exp %135 : vector<2x32xf32>
    %cst_56 = arith.constant 1.000000e+00 : f32
    %137 = vector.broadcast %cst_56 : f32 to vector<2x32xf32>
    %138 = arith.addf %137, %136 : vector<2x32xf32>
    %139 = arith.divf %137, %138 : vector<2x32xf32>
    %140 = vector.extract_strided_slice %127 {offsets = [0, 64], sizes = [2, 32], strides = [1, 1]} : vector<2x128xf32> to vector<2x32xf32>
    %141 = math.tanh %140 : vector<2x32xf32>
    %142 = vector.extract_strided_slice %127 {offsets = [0, 96], sizes = [2, 32], strides = [1, 1]} : vector<2x128xf32> to vector<2x32xf32>
    %143 = arith.negf %142 : vector<2x32xf32>
    %144 = math.exp %143 : vector<2x32xf32>
    %cst_57 = arith.constant 1.000000e+00 : f32
    %145 = vector.broadcast %cst_57 : f32 to vector<2x32xf32>
    %146 = arith.addf %145, %144 : vector<2x32xf32>
    %147 = arith.divf %145, %146 : vector<2x32xf32>
    %c0_58 = arith.constant 0 : index
    %c0_59 = arith.constant 0 : index
    %148 = vector.load %arg5[%c0_58, %c0_59] : memref<2x32xf32, #tpu.memory_space<vmem>>, vector<2x32xf32>
    %149 = arith.mulf %139, %148 : vector<2x32xf32>
    %150 = arith.mulf %133, %141 : vector<2x32xf32>
    %151 = arith.addf %149, %150 : vector<2x32xf32>
    %152 = math.tanh %151 : vector<2x32xf32>
    %153 = arith.mulf %147, %152 : vector<2x32xf32>
    %c0_60 = arith.constant 0 : index
    %c0_61 = arith.constant 0 : index
    %154 = vector.load %arg5[%c0_60, %c0_61] : memref<2x32xf32, #tpu.memory_space<vmem>>, vector<2x32xf32>
    tpu.vector_store %arg5[%c0_60, %c0_61], %151 {strides = array<i32>} : memref<2x32xf32, #tpu.memory_space<vmem>>, vector<2x32xf32>,
    %c0_62 = arith.constant 0 : index
    %c0_63 = arith.constant 0 : index
    %155 = vector.load %arg4[%c0_62, %c0_63] : memref<2x32xf32, #tpu.memory_space<vmem>>, vector<2x32xf32>
    tpu.vector_store %arg4[%c0_62, %c0_63], %153 {strides = array<i32>} : memref<2x32xf32, #tpu.memory_space<vmem>>, vector<2x32xf32>,
    %156 = arith.index_cast %c3_i32 : i32 to index
    %c0_64 = arith.constant 0 : index
    %c0_65 = arith.constant 0 : index
    %157 = vector.load %arg3[%156, %c0_64, %c0_65] : memref<4x2x32xf32, #tpu.memory_space<vmem>>, vector<1x2x32xf32>
    %158 = vector.shape_cast %157 : vector<1x2x32xf32> to vector<2x32xf32>
    %159 = vector.shape_cast %153 : vector<2x32xf32> to vector<1x2x32xf32>
    tpu.vector_store %arg3[%156, %c0_64, %c0_65], %159 {strides = array<i32>} : memref<4x2x32xf32, #tpu.memory_space<vmem>>, vector<1x2x32xf32>,
    %c4_i32 = arith.constant 4 : i32
    return
  }
  func.func @transform_0(%arg0: i32) -> (i32, i32, i32) {
    %c0_i32 = arith.constant 0 : i32
    %c0_i32_0 = arith.constant 0 : i32
    %c0_i32_1 = arith.constant 0 : i32
    return %arg0, %c0_i32, %c0_i32_0 : i32, i32, i32
  }
  func.func @transform_1(%arg0: i32) -> (i32, i32) {
    %c0_i32 = arith.constant 0 : i32
    %c0_i32_0 = arith.constant 0 : i32
    %c0_i32_1 = arith.constant 0 : i32
    return %c0_i32, %c0_i32_0 : i32, i32
  }
  func.func @transform_2(%arg0: i32) -> (i32, i32, i32) {
    %c0_i32 = arith.constant 0 : i32
    %c0_i32_0 = arith.constant 0 : i32
    %c0_i32_1 = arith.constant 0 : i32
    return %arg0, %c0_i32, %c0_i32_0 : i32, i32, i32
  }
}

module attributes {stable_mosaic.version = 11 : i64} {
  func.func @_mm_single_kernel(%arg0: i32, %arg1: i32, %arg2: memref<8x32xbf16, #tpu.memory_space<vmem>>, %arg3: memref<32x96xbf16, #tpu.memory_space<vmem>>, %arg4: memref<1x96xf32, #tpu.memory_space<vmem>>, %arg5: memref<8x96xbf16, #tpu.memory_space<vmem>>) attributes {dimension_semantics = [#tpu.dimension_semantics<parallel>, #tpu.dimension_semantics<parallel>], iteration_bounds = array<i64: 1, 1>, scalar_prefetch = 0 : i64, scratch_operands = 0 : i64, tpu.core_type = #tpu.core_type<tc>, window_params = [{transform_indices = @transform_0, window_bounds = array<i64: 8, 32>}, {transform_indices = @transform_1, window_bounds = array<i64: 32, 96>}, {transform_indices = @transform_2, window_bounds = array<i64: 1, 96>}, {transform_indices = @transform_3, window_bounds = array<i64: 8, 96>}]} {
    %c0 = arith.constant 0 : index
    %c0_0 = arith.constant 0 : index
    %0 = vector.load %arg2[%c0, %c0_0] : memref<8x32xbf16, #tpu.memory_space<vmem>>, vector<8x32xbf16>
    %c0_1 = arith.constant 0 : index
    %c0_2 = arith.constant 0 : index
    %1 = vector.load %arg3[%c0_1, %c0_2] : memref<32x96xbf16, #tpu.memory_space<vmem>>, vector<32x96xbf16>
    %cst = arith.constant dense<0.000000e+00> : vector<8x96xf32>
    %2 = tpu.matmul %0, %1, %cst {dimension_numbers = #tpu.dot_dimension_numbers<[1], [0], [0], [1], [0, 0, 1, 1], [], []>} : vector<8x32xbf16>, vector<32x96xbf16>, vector<8x96xf32> -> vector<8x96xf32>
    %c0_3 = arith.constant 0 : index
    %c0_4 = arith.constant 0 : index
    %3 = vector.load %arg4[%c0_3, %c0_4] : memref<1x96xf32, #tpu.memory_space<vmem>>, vector<1x96xf32>
    %4 = vector.broadcast %3 : vector<1x96xf32> to vector<8x96xf32>
    %5 = arith.addf %2, %4 : vector<8x96xf32>
    %6 = arith.truncf %5 : vector<8x96xf32> to vector<8x96xbf16>
    %c0_5 = arith.constant 0 : index
    %c0_6 = arith.constant 0 : index
    %7 = vector.load %arg5[%c0_5, %c0_6] : memref<8x96xbf16, #tpu.memory_space<vmem>>, vector<8x96xbf16>
    tpu.vector_store %arg5[%c0_5, %c0_6], %6 {strides = array<i32>} : memref<8x96xbf16, #tpu.memory_space<vmem>>, vector<8x96xbf16>,
    return
  }
  func.func @transform_0(%arg0: i32, %arg1: i32) -> (i32, i32) {
    %c0_i32 = arith.constant 0 : i32
    %c0_i32_0 = arith.constant 0 : i32
    return %arg0, %c0_i32 : i32, i32
  }
  func.func @transform_1(%arg0: i32, %arg1: i32) -> (i32, i32) {
    %c0_i32 = arith.constant 0 : i32
    %c0_i32_0 = arith.constant 0 : i32
    return %c0_i32, %arg1 : i32, i32
  }
  func.func @transform_2(%arg0: i32, %arg1: i32) -> (i32, i32) {
    %c0_i32 = arith.constant 0 : i32
    %c0_i32_0 = arith.constant 0 : i32
    return %c0_i32, %arg1 : i32, i32
  }
  func.func @transform_3(%arg0: i32, %arg1: i32) -> (i32, i32) {
    %c0_i32 = arith.constant 0 : i32
    return %arg0, %arg1 : i32, i32
  }
}

module attributes {stable_mosaic.version = 11 : i64} {
  func.func @_mm_single_kernel(%arg0: i32, %arg1: i32, %arg2: memref<8x32xbf16, #tpu.memory_space<vmem>>, %arg3: memref<32x32xbf16, #tpu.memory_space<vmem>>, %arg4: memref<1x32xf32, #tpu.memory_space<vmem>>, %arg5: memref<8x32xf32, #tpu.memory_space<vmem>>) attributes {dimension_semantics = [#tpu.dimension_semantics<parallel>, #tpu.dimension_semantics<parallel>], iteration_bounds = array<i64: 1, 1>, scalar_prefetch = 0 : i64, scratch_operands = 0 : i64, tpu.core_type = #tpu.core_type<tc>, window_params = [{transform_indices = @transform_0, window_bounds = array<i64: 8, 32>}, {transform_indices = @transform_1, window_bounds = array<i64: 32, 32>}, {transform_indices = @transform_2, window_bounds = array<i64: 1, 32>}, {transform_indices = @transform_3, window_bounds = array<i64: 8, 32>}]} {
    %c0 = arith.constant 0 : index
    %c0_0 = arith.constant 0 : index
    %0 = vector.load %arg2[%c0, %c0_0] : memref<8x32xbf16, #tpu.memory_space<vmem>>, vector<8x32xbf16>
    %c0_1 = arith.constant 0 : index
    %c0_2 = arith.constant 0 : index
    %1 = vector.load %arg3[%c0_1, %c0_2] : memref<32x32xbf16, #tpu.memory_space<vmem>>, vector<32x32xbf16>
    %cst = arith.constant dense<0.000000e+00> : vector<8x32xf32>
    %2 = tpu.matmul %0, %1, %cst {dimension_numbers = #tpu.dot_dimension_numbers<[1], [0], [0], [1], [0, 0, 1, 1], [], []>} : vector<8x32xbf16>, vector<32x32xbf16>, vector<8x32xf32> -> vector<8x32xf32>
    %c0_3 = arith.constant 0 : index
    %c0_4 = arith.constant 0 : index
    %3 = vector.load %arg4[%c0_3, %c0_4] : memref<1x32xf32, #tpu.memory_space<vmem>>, vector<1x32xf32>
    %4 = vector.broadcast %3 : vector<1x32xf32> to vector<8x32xf32>
    %5 = arith.addf %2, %4 : vector<8x32xf32>
    %c0_5 = arith.constant 0 : index
    %c0_6 = arith.constant 0 : index
    %6 = vector.load %arg5[%c0_5, %c0_6] : memref<8x32xf32, #tpu.memory_space<vmem>>, vector<8x32xf32>
    tpu.vector_store %arg5[%c0_5, %c0_6], %5 {strides = array<i32>} : memref<8x32xf32, #tpu.memory_space<vmem>>, vector<8x32xf32>,
    return
  }
  func.func @transform_0(%arg0: i32, %arg1: i32) -> (i32, i32) {
    %c0_i32 = arith.constant 0 : i32
    %c0_i32_0 = arith.constant 0 : i32
    return %arg0, %c0_i32 : i32, i32
  }
  func.func @transform_1(%arg0: i32, %arg1: i32) -> (i32, i32) {
    %c0_i32 = arith.constant 0 : i32
    %c0_i32_0 = arith.constant 0 : i32
    return %c0_i32, %arg1 : i32, i32
  }
  func.func @transform_2(%arg0: i32, %arg1: i32) -> (i32, i32) {
    %c0_i32 = arith.constant 0 : i32
    %c0_i32_0 = arith.constant 0 : i32
    return %c0_i32, %arg1 : i32, i32
  }
  func.func @transform_3(%arg0: i32, %arg1: i32) -> (i32, i32) {
    %c0_i32 = arith.constant 0 : i32
    return %arg0, %arg1 : i32, i32
  }
}

module attributes {stable_mosaic.version = 11 : i64} {
  func.func @_sdpa_kernel(%arg0: i32, %arg1: memref<1x2x96xbf16, #tpu.memory_space<vmem>>, %arg2: memref<1x2x32xbf16, #tpu.memory_space<vmem>>) attributes {dimension_semantics = [#tpu.dimension_semantics<parallel>], iteration_bounds = array<i64: 4>, scalar_prefetch = 0 : i64, scratch_operands = 0 : i64, tpu.core_type = #tpu.core_type<tc>, window_params = [{transform_indices = @transform_0, window_bounds = array<i64: 1, 2, 96>}, {transform_indices = @transform_1, window_bounds = array<i64: 1, 2, 32>}]} {
    %c0 = arith.constant 0 : index
    %c0_0 = arith.constant 0 : index
    %c0_1 = arith.constant 0 : index
    %0 = vector.load %arg1[%c0, %c0_0, %c0_1] : memref<1x2x96xbf16, #tpu.memory_space<vmem>>, vector<1x2x96xbf16>
    %1 = vector.shape_cast %0 : vector<1x2x96xbf16> to vector<2x96xbf16>
    %2 = vector.extract_strided_slice %1 {offsets = [0, 0], sizes = [2, 8], strides = [1, 1]} : vector<2x96xbf16> to vector<2x8xbf16>
    %3 = vector.extract_strided_slice %1 {offsets = [0, 32], sizes = [2, 8], strides = [1, 1]} : vector<2x96xbf16> to vector<2x8xbf16>
    %4 = vector.extract_strided_slice %1 {offsets = [0, 64], sizes = [2, 8], strides = [1, 1]} : vector<2x96xbf16> to vector<2x8xbf16>
    %cst = arith.constant dense<0.000000e+00> : vector<2x2xf32>
    %5 = tpu.matmul %2, %3, %cst {dimension_numbers = #tpu.dot_dimension_numbers<[1], [1], [0], [0], [0, 0, 1, 0], [], []>} : vector<2x8xbf16>, vector<2x8xbf16>, vector<2x2xf32> -> vector<2x2xf32>
    %cst_2 = arith.constant 0.353553385 : f32
    %6 = vector.broadcast %cst_2 : f32 to vector<2x2xf32>
    %7 = arith.mulf %5, %6 : vector<2x2xf32>
    %cst_3 = arith.constant dense<0xFF800000> : vector<2xf32>
    %8 = vector.multi_reduction <maximumf>, %7, %cst_3 [1] : vector<2x2xf32> to vector<2xf32>
    %9 = vector.shape_cast %8 : vector<2xf32> to vector<2x1xf32>
    %10 = vector.broadcast %9 : vector<2x1xf32> to vector<2x2xf32>
    %11 = arith.subf %7, %10 : vector<2x2xf32>
    %12 = math.exp %11 : vector<2x2xf32>
    %cst_4 = arith.constant dense<0.000000e+00> : vector<2xf32>
    %13 = vector.multi_reduction <add>, %12, %cst_4 [1] : vector<2x2xf32> to vector<2xf32>
    %14 = vector.shape_cast %13 : vector<2xf32> to vector<2x1xf32>
    %15 = tpu.reciprocal %14 {approx = true} : vector<2x1xf32> -> vector<2x1xf32>
    %16 = vector.broadcast %15 : vector<2x1xf32> to vector<2x2xf32>
    %17 = arith.mulf %12, %16 : vector<2x2xf32>
    %18 = arith.truncf %17 : vector<2x2xf32> to vector<2x2xbf16>
    %cst_5 = arith.constant dense<0.000000e+00> : vector<2x8xf32>
    %19 = tpu.matmul %18, %4, %cst_5 {dimension_numbers = #tpu.dot_dimension_numbers<[1], [0], [0], [1], [0, 0, 1, 1], [], []>} : vector<2x2xbf16>, vector<2x8xbf16>, vector<2x8xf32> -> vector<2x8xf32>
    %20 = vector.extract_strided_slice %1 {offsets = [0, 8], sizes = [2, 8], strides = [1, 1]} : vector<2x96xbf16> to vector<2x8xbf16>
    %21 = vector.extract_strided_slice %1 {offsets = [0, 40], sizes = [2, 8], strides = [1, 1]} : vector<2x96xbf16> to vector<2x8xbf16>
    %22 = vector.extract_strided_slice %1 {offsets = [0, 72], sizes = [2, 8], strides = [1, 1]} : vector<2x96xbf16> to vector<2x8xbf16>
    %cst_6 = arith.constant dense<0.000000e+00> : vector<2x2xf32>
    %23 = tpu.matmul %20, %21, %cst_6 {dimension_numbers = #tpu.dot_dimension_numbers<[1], [1], [0], [0], [0, 0, 1, 0], [], []>} : vector<2x8xbf16>, vector<2x8xbf16>, vector<2x2xf32> -> vector<2x2xf32>
    %cst_7 = arith.constant 0.353553385 : f32
    %24 = vector.broadcast %cst_7 : f32 to vector<2x2xf32>
    %25 = arith.mulf %23, %24 : vector<2x2xf32>
    %cst_8 = arith.constant dense<0xFF800000> : vector<2xf32>
    %26 = vector.multi_reduction <maximumf>, %25, %cst_8 [1] : vector<2x2xf32> to vector<2xf32>
    %27 = vector.shape_cast %26 : vector<2xf32> to vector<2x1xf32>
    %28 = vector.broadcast %27 : vector<2x1xf32> to vector<2x2xf32>
    %29 = arith.subf %25, %28 : vector<2x2xf32>
    %30 = math.exp %29 : vector<2x2xf32>
    %cst_9 = arith.constant dense<0.000000e+00> : vector<2xf32>
    %31 = vector.multi_reduction <add>, %30, %cst_9 [1] : vector<2x2xf32> to vector<2xf32>
    %32 = vector.shape_cast %31 : vector<2xf32> to vector<2x1xf32>
    %33 = tpu.reciprocal %32 {approx = true} : vector<2x1xf32> -> vector<2x1xf32>
    %34 = vector.broadcast %33 : vector<2x1xf32> to vector<2x2xf32>
    %35 = arith.mulf %30, %34 : vector<2x2xf32>
    %36 = arith.truncf %35 : vector<2x2xf32> to vector<2x2xbf16>
    %cst_10 = arith.constant dense<0.000000e+00> : vector<2x8xf32>
    %37 = tpu.matmul %36, %22, %cst_10 {dimension_numbers = #tpu.dot_dimension_numbers<[1], [0], [0], [1], [0, 0, 1, 1], [], []>} : vector<2x2xbf16>, vector<2x8xbf16>, vector<2x8xf32> -> vector<2x8xf32>
    %38 = vector.extract_strided_slice %1 {offsets = [0, 16], sizes = [2, 8], strides = [1, 1]} : vector<2x96xbf16> to vector<2x8xbf16>
    %39 = vector.extract_strided_slice %1 {offsets = [0, 48], sizes = [2, 8], strides = [1, 1]} : vector<2x96xbf16> to vector<2x8xbf16>
    %40 = vector.extract_strided_slice %1 {offsets = [0, 80], sizes = [2, 8], strides = [1, 1]} : vector<2x96xbf16> to vector<2x8xbf16>
    %cst_11 = arith.constant dense<0.000000e+00> : vector<2x2xf32>
    %41 = tpu.matmul %38, %39, %cst_11 {dimension_numbers = #tpu.dot_dimension_numbers<[1], [1], [0], [0], [0, 0, 1, 0], [], []>} : vector<2x8xbf16>, vector<2x8xbf16>, vector<2x2xf32> -> vector<2x2xf32>
    %cst_12 = arith.constant 0.353553385 : f32
    %42 = vector.broadcast %cst_12 : f32 to vector<2x2xf32>
    %43 = arith.mulf %41, %42 : vector<2x2xf32>
    %cst_13 = arith.constant dense<0xFF800000> : vector<2xf32>
    %44 = vector.multi_reduction <maximumf>, %43, %cst_13 [1] : vector<2x2xf32> to vector<2xf32>
    %45 = vector.shape_cast %44 : vector<2xf32> to vector<2x1xf32>
    %46 = vector.broadcast %45 : vector<2x1xf32> to vector<2x2xf32>
    %47 = arith.subf %43, %46 : vector<2x2xf32>
    %48 = math.exp %47 : vector<2x2xf32>
    %cst_14 = arith.constant dense<0.000000e+00> : vector<2xf32>
    %49 = vector.multi_reduction <add>, %48, %cst_14 [1] : vector<2x2xf32> to vector<2xf32>
    %50 = vector.shape_cast %49 : vector<2xf32> to vector<2x1xf32>
    %51 = tpu.reciprocal %50 {approx = true} : vector<2x1xf32> -> vector<2x1xf32>
    %52 = vector.broadcast %51 : vector<2x1xf32> to vector<2x2xf32>
    %53 = arith.mulf %48, %52 : vector<2x2xf32>
    %54 = arith.truncf %53 : vector<2x2xf32> to vector<2x2xbf16>
    %cst_15 = arith.constant dense<0.000000e+00> : vector<2x8xf32>
    %55 = tpu.matmul %54, %40, %cst_15 {dimension_numbers = #tpu.dot_dimension_numbers<[1], [0], [0], [1], [0, 0, 1, 1], [], []>} : vector<2x2xbf16>, vector<2x8xbf16>, vector<2x8xf32> -> vector<2x8xf32>
    %56 = vector.extract_strided_slice %1 {offsets = [0, 24], sizes = [2, 8], strides = [1, 1]} : vector<2x96xbf16> to vector<2x8xbf16>
    %57 = vector.extract_strided_slice %1 {offsets = [0, 56], sizes = [2, 8], strides = [1, 1]} : vector<2x96xbf16> to vector<2x8xbf16>
    %58 = vector.extract_strided_slice %1 {offsets = [0, 88], sizes = [2, 8], strides = [1, 1]} : vector<2x96xbf16> to vector<2x8xbf16>
    %cst_16 = arith.constant dense<0.000000e+00> : vector<2x2xf32>
    %59 = tpu.matmul %56, %57, %cst_16 {dimension_numbers = #tpu.dot_dimension_numbers<[1], [1], [0], [0], [0, 0, 1, 0], [], []>} : vector<2x8xbf16>, vector<2x8xbf16>, vector<2x2xf32> -> vector<2x2xf32>
    %cst_17 = arith.constant 0.353553385 : f32
    %60 = vector.broadcast %cst_17 : f32 to vector<2x2xf32>
    %61 = arith.mulf %59, %60 : vector<2x2xf32>
    %cst_18 = arith.constant dense<0xFF800000> : vector<2xf32>
    %62 = vector.multi_reduction <maximumf>, %61, %cst_18 [1] : vector<2x2xf32> to vector<2xf32>
    %63 = vector.shape_cast %62 : vector<2xf32> to vector<2x1xf32>
    %64 = vector.broadcast %63 : vector<2x1xf32> to vector<2x2xf32>
    %65 = arith.subf %61, %64 : vector<2x2xf32>
    %66 = math.exp %65 : vector<2x2xf32>
    %cst_19 = arith.constant dense<0.000000e+00> : vector<2xf32>
    %67 = vector.multi_reduction <add>, %66, %cst_19 [1] : vector<2x2xf32> to vector<2xf32>
    %68 = vector.shape_cast %67 : vector<2xf32> to vector<2x1xf32>
    %69 = tpu.reciprocal %68 {approx = true} : vector<2x1xf32> -> vector<2x1xf32>
    %70 = vector.broadcast %69 : vector<2x1xf32> to vector<2x2xf32>
    %71 = arith.mulf %66, %70 : vector<2x2xf32>
    %72 = arith.truncf %71 : vector<2x2xf32> to vector<2x2xbf16>
    %cst_20 = arith.constant dense<0.000000e+00> : vector<2x8xf32>
    %73 = tpu.matmul %72, %58, %cst_20 {dimension_numbers = #tpu.dot_dimension_numbers<[1], [0], [0], [1], [0, 0, 1, 1], [], []>} : vector<2x2xbf16>, vector<2x8xbf16>, vector<2x8xf32> -> vector<2x8xf32>
    %74 = tpu.concatenate %19, %37, %55, %73 in 1 : vector<2x8xf32>, vector<2x8xf32>, vector<2x8xf32>, vector<2x8xf32> -> vector<2x32xf32>
    %75 = arith.truncf %74 : vector<2x32xf32> to vector<2x32xbf16>
    %c0_21 = arith.constant 0 : index
    %c0_22 = arith.constant 0 : index
    %c0_23 = arith.constant 0 : index
    %76 = vector.load %arg2[%c0_21, %c0_22, %c0_23] : memref<1x2x32xbf16, #tpu.memory_space<vmem>>, vector<1x2x32xbf16>
    %77 = vector.shape_cast %76 : vector<1x2x32xbf16> to vector<2x32xbf16>
    %78 = vector.shape_cast %75 : vector<2x32xbf16> to vector<1x2x32xbf16>
    tpu.vector_store %arg2[%c0_21, %c0_22, %c0_23], %78 {strides = array<i32>} : memref<1x2x32xbf16, #tpu.memory_space<vmem>>, vector<1x2x32xbf16>,
    return
  }
  func.func @transform_0(%arg0: i32) -> (i32, i32, i32) {
    %c0_i32 = arith.constant 0 : i32
    %c0_i32_0 = arith.constant 0 : i32
    %c0_i32_1 = arith.constant 0 : i32
    return %arg0, %c0_i32, %c0_i32_0 : i32, i32, i32
  }
  func.func @transform_1(%arg0: i32) -> (i32, i32, i32) {
    %c0_i32 = arith.constant 0 : i32
    %c0_i32_0 = arith.constant 0 : i32
    %c0_i32_1 = arith.constant 0 : i32
    return %arg0, %c0_i32, %c0_i32_0 : i32, i32, i32
  }
}

module attributes {stable_mosaic.version = 11 : i64} {
  func.func @_sdpa_kernel(%arg0: i32, %arg1: memref<1x4x96xbf16, #tpu.memory_space<vmem>>, %arg2: memref<1x4x32xbf16, #tpu.memory_space<vmem>>) attributes {dimension_semantics = [#tpu.dimension_semantics<parallel>], iteration_bounds = array<i64: 2>, scalar_prefetch = 0 : i64, scratch_operands = 0 : i64, tpu.core_type = #tpu.core_type<tc>, window_params = [{transform_indices = @transform_0, window_bounds = array<i64: 1, 4, 96>}, {transform_indices = @transform_1, window_bounds = array<i64: 1, 4, 32>}]} {
    %c0 = arith.constant 0 : index
    %c0_0 = arith.constant 0 : index
    %c0_1 = arith.constant 0 : index
    %0 = vector.load %arg1[%c0, %c0_0, %c0_1] : memref<1x4x96xbf16, #tpu.memory_space<vmem>>, vector<1x4x96xbf16>
    %1 = vector.shape_cast %0 : vector<1x4x96xbf16> to vector<4x96xbf16>
    %2 = vector.extract_strided_slice %1 {offsets = [0, 0], sizes = [4, 8], strides = [1, 1]} : vector<4x96xbf16> to vector<4x8xbf16>
    %3 = vector.extract_strided_slice %1 {offsets = [0, 32], sizes = [4, 8], strides = [1, 1]} : vector<4x96xbf16> to vector<4x8xbf16>
    %4 = vector.extract_strided_slice %1 {offsets = [0, 64], sizes = [4, 8], strides = [1, 1]} : vector<4x96xbf16> to vector<4x8xbf16>
    %cst = arith.constant dense<0.000000e+00> : vector<4x4xf32>
    %5 = tpu.matmul %2, %3, %cst {dimension_numbers = #tpu.dot_dimension_numbers<[1], [1], [0], [0], [0, 0, 1, 0], [], []>} : vector<4x8xbf16>, vector<4x8xbf16>, vector<4x4xf32> -> vector<4x4xf32>
    %cst_2 = arith.constant 0.353553385 : f32
    %6 = vector.broadcast %cst_2 : f32 to vector<4x4xf32>
    %7 = arith.mulf %5, %6 : vector<4x4xf32>
    %cst_3 = arith.constant dense<0xFF800000> : vector<4xf32>
    %8 = vector.multi_reduction <maximumf>, %7, %cst_3 [1] : vector<4x4xf32> to vector<4xf32>
    %9 = vector.shape_cast %8 : vector<4xf32> to vector<4x1xf32>
    %10 = vector.broadcast %9 : vector<4x1xf32> to vector<4x4xf32>
    %11 = arith.subf %7, %10 : vector<4x4xf32>
    %12 = math.exp %11 : vector<4x4xf32>
    %cst_4 = arith.constant dense<0.000000e+00> : vector<4xf32>
    %13 = vector.multi_reduction <add>, %12, %cst_4 [1] : vector<4x4xf32> to vector<4xf32>
    %14 = vector.shape_cast %13 : vector<4xf32> to vector<4x1xf32>
    %15 = tpu.reciprocal %14 {approx = true} : vector<4x1xf32> -> vector<4x1xf32>
    %16 = vector.broadcast %15 : vector<4x1xf32> to vector<4x4xf32>
    %17 = arith.mulf %12, %16 : vector<4x4xf32>
    %18 = arith.truncf %17 : vector<4x4xf32> to vector<4x4xbf16>
    %cst_5 = arith.constant dense<0.000000e+00> : vector<4x8xf32>
    %19 = tpu.matmul %18, %4, %cst_5 {dimension_numbers = #tpu.dot_dimension_numbers<[1], [0], [0], [1], [0, 0, 1, 1], [], []>} : vector<4x4xbf16>, vector<4x8xbf16>, vector<4x8xf32> -> vector<4x8xf32>
    %20 = vector.extract_strided_slice %1 {offsets = [0, 8], sizes = [4, 8], strides = [1, 1]} : vector<4x96xbf16> to vector<4x8xbf16>
    %21 = vector.extract_strided_slice %1 {offsets = [0, 40], sizes = [4, 8], strides = [1, 1]} : vector<4x96xbf16> to vector<4x8xbf16>
    %22 = vector.extract_strided_slice %1 {offsets = [0, 72], sizes = [4, 8], strides = [1, 1]} : vector<4x96xbf16> to vector<4x8xbf16>
    %cst_6 = arith.constant dense<0.000000e+00> : vector<4x4xf32>
    %23 = tpu.matmul %20, %21, %cst_6 {dimension_numbers = #tpu.dot_dimension_numbers<[1], [1], [0], [0], [0, 0, 1, 0], [], []>} : vector<4x8xbf16>, vector<4x8xbf16>, vector<4x4xf32> -> vector<4x4xf32>
    %cst_7 = arith.constant 0.353553385 : f32
    %24 = vector.broadcast %cst_7 : f32 to vector<4x4xf32>
    %25 = arith.mulf %23, %24 : vector<4x4xf32>
    %cst_8 = arith.constant dense<0xFF800000> : vector<4xf32>
    %26 = vector.multi_reduction <maximumf>, %25, %cst_8 [1] : vector<4x4xf32> to vector<4xf32>
    %27 = vector.shape_cast %26 : vector<4xf32> to vector<4x1xf32>
    %28 = vector.broadcast %27 : vector<4x1xf32> to vector<4x4xf32>
    %29 = arith.subf %25, %28 : vector<4x4xf32>
    %30 = math.exp %29 : vector<4x4xf32>
    %cst_9 = arith.constant dense<0.000000e+00> : vector<4xf32>
    %31 = vector.multi_reduction <add>, %30, %cst_9 [1] : vector<4x4xf32> to vector<4xf32>
    %32 = vector.shape_cast %31 : vector<4xf32> to vector<4x1xf32>
    %33 = tpu.reciprocal %32 {approx = true} : vector<4x1xf32> -> vector<4x1xf32>
    %34 = vector.broadcast %33 : vector<4x1xf32> to vector<4x4xf32>
    %35 = arith.mulf %30, %34 : vector<4x4xf32>
    %36 = arith.truncf %35 : vector<4x4xf32> to vector<4x4xbf16>
    %cst_10 = arith.constant dense<0.000000e+00> : vector<4x8xf32>
    %37 = tpu.matmul %36, %22, %cst_10 {dimension_numbers = #tpu.dot_dimension_numbers<[1], [0], [0], [1], [0, 0, 1, 1], [], []>} : vector<4x4xbf16>, vector<4x8xbf16>, vector<4x8xf32> -> vector<4x8xf32>
    %38 = vector.extract_strided_slice %1 {offsets = [0, 16], sizes = [4, 8], strides = [1, 1]} : vector<4x96xbf16> to vector<4x8xbf16>
    %39 = vector.extract_strided_slice %1 {offsets = [0, 48], sizes = [4, 8], strides = [1, 1]} : vector<4x96xbf16> to vector<4x8xbf16>
    %40 = vector.extract_strided_slice %1 {offsets = [0, 80], sizes = [4, 8], strides = [1, 1]} : vector<4x96xbf16> to vector<4x8xbf16>
    %cst_11 = arith.constant dense<0.000000e+00> : vector<4x4xf32>
    %41 = tpu.matmul %38, %39, %cst_11 {dimension_numbers = #tpu.dot_dimension_numbers<[1], [1], [0], [0], [0, 0, 1, 0], [], []>} : vector<4x8xbf16>, vector<4x8xbf16>, vector<4x4xf32> -> vector<4x4xf32>
    %cst_12 = arith.constant 0.353553385 : f32
    %42 = vector.broadcast %cst_12 : f32 to vector<4x4xf32>
    %43 = arith.mulf %41, %42 : vector<4x4xf32>
    %cst_13 = arith.constant dense<0xFF800000> : vector<4xf32>
    %44 = vector.multi_reduction <maximumf>, %43, %cst_13 [1] : vector<4x4xf32> to vector<4xf32>
    %45 = vector.shape_cast %44 : vector<4xf32> to vector<4x1xf32>
    %46 = vector.broadcast %45 : vector<4x1xf32> to vector<4x4xf32>
    %47 = arith.subf %43, %46 : vector<4x4xf32>
    %48 = math.exp %47 : vector<4x4xf32>
    %cst_14 = arith.constant dense<0.000000e+00> : vector<4xf32>
    %49 = vector.multi_reduction <add>, %48, %cst_14 [1] : vector<4x4xf32> to vector<4xf32>
    %50 = vector.shape_cast %49 : vector<4xf32> to vector<4x1xf32>
    %51 = tpu.reciprocal %50 {approx = true} : vector<4x1xf32> -> vector<4x1xf32>
    %52 = vector.broadcast %51 : vector<4x1xf32> to vector<4x4xf32>
    %53 = arith.mulf %48, %52 : vector<4x4xf32>
    %54 = arith.truncf %53 : vector<4x4xf32> to vector<4x4xbf16>
    %cst_15 = arith.constant dense<0.000000e+00> : vector<4x8xf32>
    %55 = tpu.matmul %54, %40, %cst_15 {dimension_numbers = #tpu.dot_dimension_numbers<[1], [0], [0], [1], [0, 0, 1, 1], [], []>} : vector<4x4xbf16>, vector<4x8xbf16>, vector<4x8xf32> -> vector<4x8xf32>
    %56 = vector.extract_strided_slice %1 {offsets = [0, 24], sizes = [4, 8], strides = [1, 1]} : vector<4x96xbf16> to vector<4x8xbf16>
    %57 = vector.extract_strided_slice %1 {offsets = [0, 56], sizes = [4, 8], strides = [1, 1]} : vector<4x96xbf16> to vector<4x8xbf16>
    %58 = vector.extract_strided_slice %1 {offsets = [0, 88], sizes = [4, 8], strides = [1, 1]} : vector<4x96xbf16> to vector<4x8xbf16>
    %cst_16 = arith.constant dense<0.000000e+00> : vector<4x4xf32>
    %59 = tpu.matmul %56, %57, %cst_16 {dimension_numbers = #tpu.dot_dimension_numbers<[1], [1], [0], [0], [0, 0, 1, 0], [], []>} : vector<4x8xbf16>, vector<4x8xbf16>, vector<4x4xf32> -> vector<4x4xf32>
    %cst_17 = arith.constant 0.353553385 : f32
    %60 = vector.broadcast %cst_17 : f32 to vector<4x4xf32>
    %61 = arith.mulf %59, %60 : vector<4x4xf32>
    %cst_18 = arith.constant dense<0xFF800000> : vector<4xf32>
    %62 = vector.multi_reduction <maximumf>, %61, %cst_18 [1] : vector<4x4xf32> to vector<4xf32>
    %63 = vector.shape_cast %62 : vector<4xf32> to vector<4x1xf32>
    %64 = vector.broadcast %63 : vector<4x1xf32> to vector<4x4xf32>
    %65 = arith.subf %61, %64 : vector<4x4xf32>
    %66 = math.exp %65 : vector<4x4xf32>
    %cst_19 = arith.constant dense<0.000000e+00> : vector<4xf32>
    %67 = vector.multi_reduction <add>, %66, %cst_19 [1] : vector<4x4xf32> to vector<4xf32>
    %68 = vector.shape_cast %67 : vector<4xf32> to vector<4x1xf32>
    %69 = tpu.reciprocal %68 {approx = true} : vector<4x1xf32> -> vector<4x1xf32>
    %70 = vector.broadcast %69 : vector<4x1xf32> to vector<4x4xf32>
    %71 = arith.mulf %66, %70 : vector<4x4xf32>
    %72 = arith.truncf %71 : vector<4x4xf32> to vector<4x4xbf16>
    %cst_20 = arith.constant dense<0.000000e+00> : vector<4x8xf32>
    %73 = tpu.matmul %72, %58, %cst_20 {dimension_numbers = #tpu.dot_dimension_numbers<[1], [0], [0], [1], [0, 0, 1, 1], [], []>} : vector<4x4xbf16>, vector<4x8xbf16>, vector<4x8xf32> -> vector<4x8xf32>
    %74 = tpu.concatenate %19, %37, %55, %73 in 1 : vector<4x8xf32>, vector<4x8xf32>, vector<4x8xf32>, vector<4x8xf32> -> vector<4x32xf32>
    %75 = arith.truncf %74 : vector<4x32xf32> to vector<4x32xbf16>
    %c0_21 = arith.constant 0 : index
    %c0_22 = arith.constant 0 : index
    %c0_23 = arith.constant 0 : index
    %76 = vector.load %arg2[%c0_21, %c0_22, %c0_23] : memref<1x4x32xbf16, #tpu.memory_space<vmem>>, vector<1x4x32xbf16>
    %77 = vector.shape_cast %76 : vector<1x4x32xbf16> to vector<4x32xbf16>
    %78 = vector.shape_cast %75 : vector<4x32xbf16> to vector<1x4x32xbf16>
    tpu.vector_store %arg2[%c0_21, %c0_22, %c0_23], %78 {strides = array<i32>} : memref<1x4x32xbf16, #tpu.memory_space<vmem>>, vector<1x4x32xbf16>,
    return
  }
  func.func @transform_0(%arg0: i32) -> (i32, i32, i32) {
    %c0_i32 = arith.constant 0 : i32
    %c0_i32_0 = arith.constant 0 : i32
    %c0_i32_1 = arith.constant 0 : i32
    return %arg0, %c0_i32, %c0_i32_0 : i32, i32, i32
  }
  func.func @transform_1(%arg0: i32) -> (i32, i32, i32) {
    %c0_i32 = arith.constant 0 : i32
    %c0_i32_0 = arith.constant 0 : i32
    %c0_i32_1 = arith.constant 0 : i32
    return %arg0, %c0_i32, %c0_i32_0 : i32, i32, i32
  }
}

module attributes {stable_mosaic.version = 11 : i64} {
  func.func @_mm_add_ln_kernel(%arg0: i32, %arg1: memref<8x32xbf16, #tpu.memory_space<vmem>>, %arg2: memref<32x32xbf16, #tpu.memory_space<vmem>>, %arg3: memref<1x32xf32, #tpu.memory_space<vmem>>, %arg4: memref<8x32xf32, #tpu.memory_space<vmem>>, %arg5: memref<1x32xf32, #tpu.memory_space<vmem>>, %arg6: memref<1x32xf32, #tpu.memory_space<vmem>>, %arg7: memref<8x32xf32, #tpu.memory_space<vmem>>) attributes {dimension_semantics = [#tpu.dimension_semantics<parallel>], iteration_bounds = array<i64: 1>, scalar_prefetch = 0 : i64, scratch_operands = 0 : i64, tpu.core_type = #tpu.core_type<tc>, window_params = [{transform_indices = @transform_0, window_bounds = array<i64: 8, 32>}, {pipeline_mode = #tpu.pipeline_mode<synchronous>, transform_indices = @transform_1, window_bounds = array<i64: 32, 32>}, {pipeline_mode = #tpu.pipeline_mode<synchronous>, transform_indices = @transform_2, window_bounds = array<i64: 1, 32>}, {transform_indices = @transform_3, window_bounds = array<i64: 8, 32>}, {pipeline_mode = #tpu.pipeline_mode<synchronous>, transform_indices = @transform_4, window_bounds = array<i64: 1, 32>}, {pipeline_mode = #tpu.pipeline_mode<synchronous>, transform_indices = @transform_5, window_bounds = array<i64: 1, 32>}, {transform_indices = @transform_6, window_bounds = array<i64: 8, 32>}]} {
    %c0 = arith.constant 0 : index
    %c0_0 = arith.constant 0 : index
    %0 = vector.load %arg1[%c0, %c0_0] : memref<8x32xbf16, #tpu.memory_space<vmem>>, vector<8x32xbf16>
    %c0_1 = arith.constant 0 : index
    %c0_2 = arith.constant 0 : index
    %1 = vector.load %arg2[%c0_1, %c0_2] : memref<32x32xbf16, #tpu.memory_space<vmem>>, vector<32x32xbf16>
    %cst = arith.constant dense<0.000000e+00> : vector<8x32xf32>
    %2 = tpu.matmul %0, %1, %cst {dimension_numbers = #tpu.dot_dimension_numbers<[1], [0], [0], [1], [0, 0, 1, 1], [], []>} : vector<8x32xbf16>, vector<32x32xbf16>, vector<8x32xf32> -> vector<8x32xf32>
    %c0_3 = arith.constant 0 : index
    %c0_4 = arith.constant 0 : index
    %3 = vector.load %arg3[%c0_3, %c0_4] : memref<1x32xf32, #tpu.memory_space<vmem>>, vector<1x32xf32>
    %4 = vector.broadcast %3 : vector<1x32xf32> to vector<8x32xf32>
    %5 = arith.addf %2, %4 : vector<8x32xf32>
    %c0_5 = arith.constant 0 : index
    %c0_6 = arith.constant 0 : index
    %6 = vector.load %arg4[%c0_5, %c0_6] : memref<8x32xf32, #tpu.memory_space<vmem>>, vector<8x32xf32>
    %7 = arith.addf %5, %6 : vector<8x32xf32>
    %cst_7 = arith.constant dense<0.000000e+00> : vector<8xf32>
    %8 = vector.multi_reduction <add>, %7, %cst_7 [1] : vector<8x32xf32> to vector<8xf32>
    %9 = vector.shape_cast %8 : vector<8xf32> to vector<8x1xf32>
    %cst_8 = arith.constant 3.200000e+01 : f32
    %10 = vector.broadcast %cst_8 : f32 to vector<8x1xf32>
    %11 = arith.divf %9, %10 : vector<8x1xf32>
    %12 = vector.broadcast %11 : vector<8x1xf32> to vector<8x32xf32>
    %13 = arith.subf %7, %12 : vector<8x32xf32>
    %14 = arith.mulf %13, %13 : vector<8x32xf32>
    %cst_9 = arith.constant dense<0.000000e+00> : vector<8xf32>
    %15 = vector.multi_reduction <add>, %14, %cst_9 [1] : vector<8x32xf32> to vector<8xf32>
    %16 = vector.shape_cast %15 : vector<8xf32> to vector<8x1xf32>
    %cst_10 = arith.constant 3.200000e+01 : f32
    %17 = vector.broadcast %cst_10 : f32 to vector<8x1xf32>
    %18 = arith.divf %16, %17 : vector<8x1xf32>
    %cst_11 = arith.constant 9.99999974E-6 : f32
    %19 = vector.broadcast %cst_11 : f32 to vector<8x1xf32>
    %20 = arith.addf %18, %19 : vector<8x1xf32>
    %21 = math.rsqrt %20 : vector<8x1xf32>
    %22 = vector.broadcast %21 : vector<8x1xf32> to vector<8x32xf32>
    %23 = arith.mulf %13, %22 : vector<8x32xf32>
    %c0_12 = arith.constant 0 : index
    %c0_13 = arith.constant 0 : index
    %24 = vector.load %arg5[%c0_12, %c0_13] : memref<1x32xf32, #tpu.memory_space<vmem>>, vector<1x32xf32>
    %25 = vector.broadcast %24 : vector<1x32xf32> to vector<8x32xf32>
    %26 = arith.mulf %23, %25 : vector<8x32xf32>
    %c0_14 = arith.constant 0 : index
    %c0_15 = arith.constant 0 : index
    %27 = vector.load %arg6[%c0_14, %c0_15] : memref<1x32xf32, #tpu.memory_space<vmem>>, vector<1x32xf32>
    %28 = vector.broadcast %27 : vector<1x32xf32> to vector<8x32xf32>
    %29 = arith.addf %26, %28 : vector<8x32xf32>
    %c0_16 = arith.constant 0 : index
    %c0_17 = arith.constant 0 : index
    %30 = vector.load %arg7[%c0_16, %c0_17] : memref<8x32xf32, #tpu.memory_space<vmem>>, vector<8x32xf32>
    tpu.vector_store %arg7[%c0_16, %c0_17], %29 {strides = array<i32>} : memref<8x32xf32, #tpu.memory_space<vmem>>, vector<8x32xf32>,
    return
  }
  func.func @transform_0(%arg0: i32) -> (i32, i32) {
    %c0_i32 = arith.constant 0 : i32
    %c0_i32_0 = arith.constant 0 : i32
    return %arg0, %c0_i32 : i32, i32
  }
  func.func @transform_1(%arg0: i32) -> (i32, i32) {
    %c0_i32 = arith.constant 0 : i32
    %c0_i32_0 = arith.constant 0 : i32
    %c0_i32_1 = arith.constant 0 : i32
    return %c0_i32, %c0_i32_0 : i32, i32
  }
  func.func @transform_2(%arg0: i32) -> (i32, i32) {
    %c0_i32 = arith.constant 0 : i32
    %c0_i32_0 = arith.constant 0 : i32
    %c0_i32_1 = arith.constant 0 : i32
    return %c0_i32, %c0_i32_0 : i32, i32
  }
  func.func @transform_3(%arg0: i32) -> (i32, i32) {
    %c0_i32 = arith.constant 0 : i32
    %c0_i32_0 = arith.constant 0 : i32
    return %arg0, %c0_i32 : i32, i32
  }
  func.func @transform_4(%arg0: i32) -> (i32, i32) {
    %c0_i32 = arith.constant 0 : i32
    %c0_i32_0 = arith.constant 0 : i32
    %c0_i32_1 = arith.constant 0 : i32
    return %c0_i32, %c0_i32_0 : i32, i32
  }
  func.func @transform_5(%arg0: i32) -> (i32, i32) {
    %c0_i32 = arith.constant 0 : i32
    %c0_i32_0 = arith.constant 0 : i32
    %c0_i32_1 = arith.constant 0 : i32
    return %c0_i32, %c0_i32_0 : i32, i32
  }
  func.func @transform_6(%arg0: i32) -> (i32, i32) {
    %c0_i32 = arith.constant 0 : i32
    %c0_i32_0 = arith.constant 0 : i32
    return %arg0, %c0_i32 : i32, i32
  }
}

module attributes {stable_mosaic.version = 11 : i64} {
  func.func @_mm_single_kernel(%arg0: i32, %arg1: i32, %arg2: memref<8x32xbf16, #tpu.memory_space<vmem>>, %arg3: memref<32x512xbf16, #tpu.memory_space<vmem>>, %arg4: memref<1x512xf32, #tpu.memory_space<vmem>>, %arg5: memref<8x512xbf16, #tpu.memory_space<vmem>>) attributes {dimension_semantics = [#tpu.dimension_semantics<parallel>, #tpu.dimension_semantics<parallel>], iteration_bounds = array<i64: 1, 4>, scalar_prefetch = 0 : i64, scratch_operands = 0 : i64, tpu.core_type = #tpu.core_type<tc>, window_params = [{transform_indices = @transform_0, window_bounds = array<i64: 8, 32>}, {transform_indices = @transform_1, window_bounds = array<i64: 32, 512>}, {transform_indices = @transform_2, window_bounds = array<i64: 1, 512>}, {transform_indices = @transform_3, window_bounds = array<i64: 8, 512>}]} {
    %c0 = arith.constant 0 : index
    %c0_0 = arith.constant 0 : index
    %0 = vector.load %arg2[%c0, %c0_0] : memref<8x32xbf16, #tpu.memory_space<vmem>>, vector<8x32xbf16>
    %c0_1 = arith.constant 0 : index
    %c0_2 = arith.constant 0 : index
    %1 = vector.load %arg3[%c0_1, %c0_2] : memref<32x512xbf16, #tpu.memory_space<vmem>>, vector<32x512xbf16>
    %cst = arith.constant dense<0.000000e+00> : vector<8x512xf32>
    %2 = tpu.matmul %0, %1, %cst {dimension_numbers = #tpu.dot_dimension_numbers<[1], [0], [0], [1], [0, 0, 1, 1], [], []>} : vector<8x32xbf16>, vector<32x512xbf16>, vector<8x512xf32> -> vector<8x512xf32>
    %c0_3 = arith.constant 0 : index
    %c0_4 = arith.constant 0 : index
    %3 = vector.load %arg4[%c0_3, %c0_4] : memref<1x512xf32, #tpu.memory_space<vmem>>, vector<1x512xf32>
    %4 = vector.broadcast %3 : vector<1x512xf32> to vector<8x512xf32>
    %5 = arith.addf %2, %4 : vector<8x512xf32>
    %cst_5 = arith.constant 0.000000e+00 : f32
    %6 = vector.broadcast %cst_5 : f32 to vector<8x512xf32>
    %7 = arith.maximumf %5, %6 : vector<8x512xf32>
    %8 = arith.truncf %7 : vector<8x512xf32> to vector<8x512xbf16>
    %c0_6 = arith.constant 0 : index
    %c0_7 = arith.constant 0 : index
    %9 = vector.load %arg5[%c0_6, %c0_7] : memref<8x512xbf16, #tpu.memory_space<vmem>>, vector<8x512xbf16>
    tpu.vector_store %arg5[%c0_6, %c0_7], %8 {strides = array<i32>} : memref<8x512xbf16, #tpu.memory_space<vmem>>, vector<8x512xbf16>,
    return
  }
  func.func @transform_0(%arg0: i32, %arg1: i32) -> (i32, i32) {
    %c0_i32 = arith.constant 0 : i32
    %c0_i32_0 = arith.constant 0 : i32
    return %arg0, %c0_i32 : i32, i32
  }
  func.func @transform_1(%arg0: i32, %arg1: i32) -> (i32, i32) {
    %c0_i32 = arith.constant 0 : i32
    %c0_i32_0 = arith.constant 0 : i32
    return %c0_i32, %arg1 : i32, i32
  }
  func.func @transform_2(%arg0: i32, %arg1: i32) -> (i32, i32) {
    %c0_i32 = arith.constant 0 : i32
    %c0_i32_0 = arith.constant 0 : i32
    return %c0_i32, %arg1 : i32, i32
  }
  func.func @transform_3(%arg0: i32, %arg1: i32) -> (i32, i32) {
    %c0_i32 = arith.constant 0 : i32
    return %arg0, %arg1 : i32, i32
  }
}

module attributes {stable_mosaic.version = 11 : i64} {
  func.func @_mm_add_ln_kernel(%arg0: i32, %arg1: memref<8x2048xbf16, #tpu.memory_space<vmem>>, %arg2: memref<2048x32xbf16, #tpu.memory_space<vmem>>, %arg3: memref<1x32xf32, #tpu.memory_space<vmem>>, %arg4: memref<8x32xf32, #tpu.memory_space<vmem>>, %arg5: memref<1x32xf32, #tpu.memory_space<vmem>>, %arg6: memref<1x32xf32, #tpu.memory_space<vmem>>, %arg7: memref<8x32xf32, #tpu.memory_space<vmem>>) attributes {dimension_semantics = [#tpu.dimension_semantics<parallel>], iteration_bounds = array<i64: 1>, scalar_prefetch = 0 : i64, scratch_operands = 0 : i64, tpu.core_type = #tpu.core_type<tc>, window_params = [{transform_indices = @transform_0, window_bounds = array<i64: 8, 2048>}, {pipeline_mode = #tpu.pipeline_mode<synchronous>, transform_indices = @transform_1, window_bounds = array<i64: 2048, 32>}, {pipeline_mode = #tpu.pipeline_mode<synchronous>, transform_indices = @transform_2, window_bounds = array<i64: 1, 32>}, {transform_indices = @transform_3, window_bounds = array<i64: 8, 32>}, {pipeline_mode = #tpu.pipeline_mode<synchronous>, transform_indices = @transform_4, window_bounds = array<i64: 1, 32>}, {pipeline_mode = #tpu.pipeline_mode<synchronous>, transform_indices = @transform_5, window_bounds = array<i64: 1, 32>}, {transform_indices = @transform_6, window_bounds = array<i64: 8, 32>}]} {
    %c0 = arith.constant 0 : index
    %c0_0 = arith.constant 0 : index
    %0 = vector.load %arg1[%c0, %c0_0] : memref<8x2048xbf16, #tpu.memory_space<vmem>>, vector<8x2048xbf16>
    %c0_1 = arith.constant 0 : index
    %c0_2 = arith.constant 0 : index
    %1 = vector.load %arg2[%c0_1, %c0_2] : memref<2048x32xbf16, #tpu.memory_space<vmem>>, vector<2048x32xbf16>
    %cst = arith.constant dense<0.000000e+00> : vector<8x32xf32>
    %2 = tpu.matmul %0, %1, %cst {dimension_numbers = #tpu.dot_dimension_numbers<[1], [0], [0], [1], [0, 0, 1, 1], [], []>} : vector<8x2048xbf16>, vector<2048x32xbf16>, vector<8x32xf32> -> vector<8x32xf32>
    %c0_3 = arith.constant 0 : index
    %c0_4 = arith.constant 0 : index
    %3 = vector.load %arg3[%c0_3, %c0_4] : memref<1x32xf32, #tpu.memory_space<vmem>>, vector<1x32xf32>
    %4 = vector.broadcast %3 : vector<1x32xf32> to vector<8x32xf32>
    %5 = arith.addf %2, %4 : vector<8x32xf32>
    %c0_5 = arith.constant 0 : index
    %c0_6 = arith.constant 0 : index
    %6 = vector.load %arg4[%c0_5, %c0_6] : memref<8x32xf32, #tpu.memory_space<vmem>>, vector<8x32xf32>
    %7 = arith.addf %5, %6 : vector<8x32xf32>
    %cst_7 = arith.constant dense<0.000000e+00> : vector<8xf32>
    %8 = vector.multi_reduction <add>, %7, %cst_7 [1] : vector<8x32xf32> to vector<8xf32>
    %9 = vector.shape_cast %8 : vector<8xf32> to vector<8x1xf32>
    %cst_8 = arith.constant 3.200000e+01 : f32
    %10 = vector.broadcast %cst_8 : f32 to vector<8x1xf32>
    %11 = arith.divf %9, %10 : vector<8x1xf32>
    %12 = vector.broadcast %11 : vector<8x1xf32> to vector<8x32xf32>
    %13 = arith.subf %7, %12 : vector<8x32xf32>
    %14 = arith.mulf %13, %13 : vector<8x32xf32>
    %cst_9 = arith.constant dense<0.000000e+00> : vector<8xf32>
    %15 = vector.multi_reduction <add>, %14, %cst_9 [1] : vector<8x32xf32> to vector<8xf32>
    %16 = vector.shape_cast %15 : vector<8xf32> to vector<8x1xf32>
    %cst_10 = arith.constant 3.200000e+01 : f32
    %17 = vector.broadcast %cst_10 : f32 to vector<8x1xf32>
    %18 = arith.divf %16, %17 : vector<8x1xf32>
    %cst_11 = arith.constant 9.99999974E-6 : f32
    %19 = vector.broadcast %cst_11 : f32 to vector<8x1xf32>
    %20 = arith.addf %18, %19 : vector<8x1xf32>
    %21 = math.rsqrt %20 : vector<8x1xf32>
    %22 = vector.broadcast %21 : vector<8x1xf32> to vector<8x32xf32>
    %23 = arith.mulf %13, %22 : vector<8x32xf32>
    %c0_12 = arith.constant 0 : index
    %c0_13 = arith.constant 0 : index
    %24 = vector.load %arg5[%c0_12, %c0_13] : memref<1x32xf32, #tpu.memory_space<vmem>>, vector<1x32xf32>
    %25 = vector.broadcast %24 : vector<1x32xf32> to vector<8x32xf32>
    %26 = arith.mulf %23, %25 : vector<8x32xf32>
    %c0_14 = arith.constant 0 : index
    %c0_15 = arith.constant 0 : index
    %27 = vector.load %arg6[%c0_14, %c0_15] : memref<1x32xf32, #tpu.memory_space<vmem>>, vector<1x32xf32>
    %28 = vector.broadcast %27 : vector<1x32xf32> to vector<8x32xf32>
    %29 = arith.addf %26, %28 : vector<8x32xf32>
    %c0_16 = arith.constant 0 : index
    %c0_17 = arith.constant 0 : index
    %30 = vector.load %arg7[%c0_16, %c0_17] : memref<8x32xf32, #tpu.memory_space<vmem>>, vector<8x32xf32>
    tpu.vector_store %arg7[%c0_16, %c0_17], %29 {strides = array<i32>} : memref<8x32xf32, #tpu.memory_space<vmem>>, vector<8x32xf32>,
    return
  }
  func.func @transform_0(%arg0: i32) -> (i32, i32) {
    %c0_i32 = arith.constant 0 : i32
    %c0_i32_0 = arith.constant 0 : i32
    return %arg0, %c0_i32 : i32, i32
  }
  func.func @transform_1(%arg0: i32) -> (i32, i32) {
    %c0_i32 = arith.constant 0 : i32
    %c0_i32_0 = arith.constant 0 : i32
    %c0_i32_1 = arith.constant 0 : i32
    return %c0_i32, %c0_i32_0 : i32, i32
  }
  func.func @transform_2(%arg0: i32) -> (i32, i32) {
    %c0_i32 = arith.constant 0 : i32
    %c0_i32_0 = arith.constant 0 : i32
    %c0_i32_1 = arith.constant 0 : i32
    return %c0_i32, %c0_i32_0 : i32, i32
  }
  func.func @transform_3(%arg0: i32) -> (i32, i32) {
    %c0_i32 = arith.constant 0 : i32
    %c0_i32_0 = arith.constant 0 : i32
    return %arg0, %c0_i32 : i32, i32
  }
  func.func @transform_4(%arg0: i32) -> (i32, i32) {
    %c0_i32 = arith.constant 0 : i32
    %c0_i32_0 = arith.constant 0 : i32
    %c0_i32_1 = arith.constant 0 : i32
    return %c0_i32, %c0_i32_0 : i32, i32
  }
  func.func @transform_5(%arg0: i32) -> (i32, i32) {
    %c0_i32 = arith.constant 0 : i32
    %c0_i32_0 = arith.constant 0 : i32
    %c0_i32_1 = arith.constant 0 : i32
    return %c0_i32, %c0_i32_0 : i32, i32
  }
  func.func @transform_6(%arg0: i32) -> (i32, i32) {
    %c0_i32 = arith.constant 0 : i32
    %c0_i32_0 = arith.constant 0 : i32
    return %arg0, %c0_i32 : i32, i32
  }
}

module attributes {stable_mosaic.version = 11 : i64} {
  func.func @_mm_single_kernel(%arg0: i32, %arg1: i32, %arg2: memref<2x32xbf16, #tpu.memory_space<vmem>>, %arg3: memref<32x10xbf16, #tpu.memory_space<vmem>>, %arg4: memref<1x10xf32, #tpu.memory_space<vmem>>, %arg5: memref<2x10xf32, #tpu.memory_space<vmem>>) attributes {dimension_semantics = [#tpu.dimension_semantics<parallel>, #tpu.dimension_semantics<parallel>], iteration_bounds = array<i64: 1, 1>, scalar_prefetch = 0 : i64, scratch_operands = 0 : i64, tpu.core_type = #tpu.core_type<tc>, window_params = [{transform_indices = @transform_0, window_bounds = array<i64: 2, 32>}, {transform_indices = @transform_1, window_bounds = array<i64: 32, 10>}, {transform_indices = @transform_2, window_bounds = array<i64: 1, 10>}, {transform_indices = @transform_3, window_bounds = array<i64: 2, 10>}]} {
    %c0 = arith.constant 0 : index
    %c0_0 = arith.constant 0 : index
    %0 = vector.load %arg2[%c0, %c0_0] : memref<2x32xbf16, #tpu.memory_space<vmem>>, vector<2x32xbf16>
    %c0_1 = arith.constant 0 : index
    %c0_2 = arith.constant 0 : index
    %1 = vector.load %arg3[%c0_1, %c0_2] : memref<32x10xbf16, #tpu.memory_space<vmem>>, vector<32x10xbf16>
    %cst = arith.constant dense<0.000000e+00> : vector<2x10xf32>
    %2 = tpu.matmul %0, %1, %cst {dimension_numbers = #tpu.dot_dimension_numbers<[1], [0], [0], [1], [0, 0, 1, 1], [], []>} : vector<2x32xbf16>, vector<32x10xbf16>, vector<2x10xf32> -> vector<2x10xf32>
    %c0_3 = arith.constant 0 : index
    %c0_4 = arith.constant 0 : index
    %3 = vector.load %arg4[%c0_3, %c0_4] : memref<1x10xf32, #tpu.memory_space<vmem>>, vector<1x10xf32>
    %4 = vector.broadcast %3 : vector<1x10xf32> to vector<2x10xf32>
    %5 = arith.addf %2, %4 : vector<2x10xf32>
    %c0_5 = arith.constant 0 : index
    %c0_6 = arith.constant 0 : index
    %6 = vector.load %arg5[%c0_5, %c0_6] : memref<2x10xf32, #tpu.memory_space<vmem>>, vector<2x10xf32>
    tpu.vector_store %arg5[%c0_5, %c0_6], %5 {strides = array<i32>} : memref<2x10xf32, #tpu.memory_space<vmem>>, vector<2x10xf32>,
    return
  }
  func.func @transform_0(%arg0: i32, %arg1: i32) -> (i32, i32) {
    %c0_i32 = arith.constant 0 : i32
    %c0_i32_0 = arith.constant 0 : i32
    return %arg0, %c0_i32 : i32, i32
  }
  func.func @transform_1(%arg0: i32, %arg1: i32) -> (i32, i32) {
    %c0_i32 = arith.constant 0 : i32
    %c0_i32_0 = arith.constant 0 : i32
    return %c0_i32, %arg1 : i32, i32
  }
  func.func @transform_2(%arg0: i32, %arg1: i32) -> (i32, i32) {
    %c0_i32 = arith.constant 0 : i32
    %c0_i32_0 = arith.constant 0 : i32
    return %c0_i32, %arg1 : i32, i32
  }
  func.func @transform_3(%arg0: i32, %arg1: i32) -> (i32, i32) {
    %c0_i32 = arith.constant 0 : i32
    return %arg0, %arg1 : i32, i32
  }
}

</mosaic_0001>

<llo_original>
// kernel: forward.21
$region0: #{forward.21}
  #allocation0 [shape = 'u32[]', space=smem, size = 0x4, offset = 0x4, fixed_abs, tag = 'smem constant byte address 0x4 - core index']
  #allocation1 [shape = 'u32[144,128]{1,0:T(1,128)}', space=vmem, size = 0x12000, scoped, tag = 'internal scratch']
  %s0 = inlined_call_operand.vmem [shape: bf16[2,10,64], index: 0, kind: input, shape index: {}]
  %s1 = inlined_call_operand.vmem [shape: bf16[3,64,128], index: 1, kind: input, shape index: {}]
  %s2 = inlined_call_operand.vmem [shape: f32[1,128], index: 2, kind: input, shape index: {}]
  %s3 = inlined_call_operand.vmem [shape: f32[1,128], index: 3, kind: input, shape index: {}]
  %s4 = inlined_call_operand.vmem [shape: bf16[2,8,128], index: 4, kind: output, shape index: {}]
  %s5 = sld [smem:[#allocation0]]
  $region49: #{forward.21} parent=0
    _
  %s7 = ssub.s32 1, %s5
  %s8 = scalar_select 0, %s7, %s5
  loop: start=0, step=1, limit=4
  $region2: #{forward.21} parent=0 // loop_pre_header
    _
  $region3: #{forward.21} parent=0 // loop_header
    %s10 = sphi 0, %s14
    %p11 = scmp.ge.s32.totalorder %s10, 4
    %s20 = sphi 0, %s22
    %s23 = sphi 0, %s20
    %s24 = sphi 0, %s23
    %s40 = sphi 0, %s24
    %s44 = sphi 0, %s44
    %s46 = sphi 0, %s44
    %s47 = sphi 0, %s46
    %s61 = sphi 0, %s47
    %s65 = sphi 0, %s65
    %s67 = sphi 0, %s65
    %s68 = sphi 0, %s67
    %s82 = sphi 0, %s68
    %s86 = sphi 0, %s86
    %s88 = sphi 0, %s86
    %s89 = sphi 0, %s88
    %s103 = sphi 0, %s89
    %s109 = sphi 0, %s111
    %s112 = sphi 0, %s109
    %s113 = sphi 0, %s112
    %s129 = sphi 0, %s113
  $region4: #{forward.21} parent=0 // loop_header_branch
    %13 = sbr.rel (%p11) target = $region8
  $region5: #{forward.21} parent=0 // loop_body
    %s15 = ssub.s32 %s10, 1
    %s16 = ssub.s32 %s10, 2
    %s17 = sadd.s32 %s10, 1
    %s18 = ssub.s32 %s10, %s17
    %p19 = scmp.eq.s32.totalorder %s18, 0
    %s21 = sadd.s32 %s20, 1
    %s22 = scalar_select %p19, %s20, %s21
    %p25 = pneg %p19
    %p26 = scmp.eq.s32.totalorder %s10, 1
    %p27 = por %p25, %p26
    %p28 = scmp.ne.s32.totalorder %s20, %s23
    %p29 = scmp.eq.s32.totalorder %s10, 0
    %p30 = por %p28, %p29
    %p31 = scmp.ne.s32.totalorder %s20, %s23
    %p32 = scmp.eq.s32.totalorder %s15, 1
    %p33 = por %p31, %p32
    %p34 = scmp.ne.s32.totalorder %s23, %s24
    %p35 = scmp.eq.s32.totalorder %s15, 0
    %p36 = por %p34, %p35
    %p37 = scmp.ne.s32.totalorder %s23, %s24
    %p38 = scmp.eq.s32.totalorder %s16, 1
    %p39 = por %p37, %p38
    %p41 = scmp.ne.s32.totalorder %s24, %s40
    %p42 = scmp.eq.s32.totalorder %s16, 0
    %p43 = por %p41, %p42
    %s45 = sadd.s32 %s44, 1
    %p48 = scmp.eq.s32.totalorder %s10, 1
    %p49 = scmp.ne.s32.totalorder %s44, %s46
    %p50 = scmp.eq.s32.totalorder %s10, 0
    %p51 = por %p49, %p50
    %p52 = scmp.ne.s32.totalorder %s44, %s46
    %p53 = scmp.eq.s32.totalorder %s15, 1
    %p54 = por %p52, %p53
    %p55 = scmp.ne.s32.totalorder %s46, %s47
    %p56 = scmp.eq.s32.totalorder %s15, 0
    %p57 = por %p55, %p56
    %p58 = scmp.ne.s32.totalorder %s46, %s47
    %p59 = scmp.eq.s32.totalorder %s16, 1
    %p60 = por %p58, %p59
    %p62 = scmp.ne.s32.totalorder %s47, %s61
    %p63 = scmp.eq.s32.totalorder %s16, 0
    %p64 = por %p62, %p63
    %s66 = sadd.s32 %s65, 1
    %p69 = scmp.eq.s32.totalorder %s10, 1
    %p70 = scmp.ne.s32.totalorder %s65, %s67
    %p71 = scmp.eq.s32.totalorder %s10, 0
    %p72 = por %p70, %p71
    %p73 = scmp.ne.s32.totalorder %s65, %s67
    %p74 = scmp.eq.s32.totalorder %s15, 1
    %p75 = por %p73, %p74
    %p76 = scmp.ne.s32.totalorder %s67, %s68
    %p77 = scmp.eq.s32.totalorder %s15, 0
    %p78 = por %p76, %p77
    %p79 = scmp.ne.s32.totalorder %s67, %s68
    %p80 = scmp.eq.s32.totalorder %s16, 1
    %p81 = por %p79, %p80
    %p83 = scmp.ne.s32.totalorder %s68, %s82
    %p84 = scmp.eq.s32.totalorder %s16, 0
    %p85 = por %p83, %p84
    %s87 = sadd.s32 %s86, 1
    %p90 = scmp.eq.s32.totalorder %s10, 1
    %p91 = scmp.ne.s32.totalorder %s86, %s88
    %p92 = scmp.eq.s32.totalorder %s10, 0
    %p93 = por %p91, %p92
    %p94 = scmp.ne.s32.totalorder %s86, %s88
    %p95 = scmp.eq.s32.totalorder %s15, 1
    %p96 = por %p94, %p95
    %p97 = scmp.ne.s32.totalorder %s88, %s89
    %p98 = scmp.eq.s32.totalorder %s15, 0
    %p99 = por %p97, %p98
    %p100 = scmp.ne.s32.totalorder %s88, %s89
    %p101 = scmp.eq.s32.totalorder %s16, 1
    %p102 = por %p100, %p101
    %p104 = scmp.ne.s32.totalorder %s89, %s103
    %p105 = scmp.eq.s32.totalorder %s16, 0
    %p106 = por %p104, %p105
    %s107 = ssub.s32 %s10, %s17
    %p108 = scmp.eq.s32.totalorder %s107, 0
    %s110 = sadd.s32 %s109, 1
    %s111 = scalar_select %p108, %s109, %s110
    %p114 = pneg %p108
    %p115 = scmp.eq.s32.totalorder %s10, 1
    %p116 = por %p114, %p115
    %p117 = scmp.ne.s32.totalorder %s109, %s112
    %p118 = scmp.eq.s32.totalorder %s10, 0
    %p119 = por %p117, %p118
    %p120 = scmp.ne.s32.totalorder %s109, %s112
    %p121 = scmp.eq.s32.totalorder %s15, 1
    %p122 = por %p120, %p121
    %p123 = scmp.ne.s32.totalorder %s112, %s113
    %p124 = scmp.eq.s32.totalorder %s15, 0
    %p125 = por %p123, %p124
    %p126 = scmp.ne.s32.totalorder %s112, %s113
    %p127 = scmp.eq.s32.totalorder %s16, 1
    %p128 = por %p126, %p127
    %p130 = scmp.ne.s32.totalorder %s113, %s129
    %p131 = scmp.eq.s32.totalorder %s16, 0
    %p132 = por %p130, %p131
    %p133 = scmp.le.s32.totalorder 1, %s10
    %p134 = scmp.lt.s32.totalorder %s10, 3
    %p135 = pnand %p133, %p134
    %p136 = pneg %p135
    // Predicated region
    $region9: #{forward.21} parent=5 // pred_check
      _
    $region10: #{forward.21} parent=5 // pred_check_branch
      %138 = sbr.rel (%p135) target = $region12
    $region11: #{forward.21} parent=5 // pred_region
      %s139 = ssub.s32 %s10, 1
      // Predicated region
      $region13: #{forward.21} parent=11 // pred_check
        %p140 = pneg %p57
      $region14: #{forward.21} parent=11 // pred_check_branch
        %142 = sbr.rel (%p140) target = $region16
      $region15: #{forward.21} parent=11 // pred_region
        _
      $region16: #{forward.21} parent=11 // pred_fallthru
        _
      // Predicated region
      $region17: #{forward.21} parent=11 // pred_check
        %p143 = pneg %p78
      $region18: #{forward.21} parent=11 // pred_check_branch
        %145 = sbr.rel (%p143) target = $region20
      $region19: #{forward.21} parent=11 // pred_region
        _
      $region20: #{forward.21} parent=11 // pred_fallthru
        _
      // Predicated region
      $region21: #{forward.21} parent=11 // pred_check
        %p146 = pneg %p99
      $region22: #{forward.21} parent=11 // pred_check_branch
        %148 = sbr.rel (%p146) target = $region24
      $region23: #{forward.21} parent=11 // pred_region
        _
      $region24: #{forward.21} parent=11 // pred_fallthru
        _
    $region12: #{forward.21} parent=5 // pred_fallthru
      _
    %p149 = scmp.lt.s32.totalorder %s10, 2
    // Predicated region
    $region25: #{forward.21} parent=5 // pred_check
      %p150 = pneg %p149
    $region26: #{forward.21} parent=5 // pred_check_branch
      %152 = sbr.rel (%p150) target = $region28
    $region27: #{forward.21} parent=5 // pred_region
      // Predicated region
      $region29: #{forward.21} parent=27 // pred_check
        %p153 = pneg %p30
      $region30: #{forward.21} parent=27 // pred_check_branch
        %155 = sbr.rel (%p153) target = $region32
      $region31: #{forward.21} parent=27 // pred_region
        %p156 = scmp.lt.s32.totalorder %s10, 1
        %s157 = scalar_select %p156, %s10, 1
        %s158 = smul.addr %s157, 2
        %s159 = smul.addr %s158, 4
        %s160 = scalar_lea.vmem %s0, %s159
      $region32: #{forward.21} parent=27 // pred_fallthru
        _
    $region28: #{forward.21} parent=5 // pred_fallthru
      _
    %p161 = scmp.le.s32.totalorder 1, %s10
    %p162 = scmp.lt.s32.totalorder %s10, 3
    %p163 = pnand %p161, %p162
    %p164 = pneg %p163
    // Predicated region
    $region33: #{forward.21} parent=5 // pred_check
      _
    $region34: #{forward.21} parent=5 // pred_check_branch
      %166 = sbr.rel (%p163) target = $region36
    $region35: #{forward.21} parent=5 // pred_region
      %s167 = ssub.s32 %s10, 1
      %p168 = scmp.lt.s32.totalorder %s15, 1
      %s169 = scalar_select %p168, %s15, 1
      %s170 = smul.addr %s169, 2
      %s171 = smul.addr %s170, 4
      %s172 = scalar_lea.vmem %s0, %s171
      %p173 = pneg %p36
      %p174 = pneg %p33
      %p175 = pneg %p57
      %p176 = pneg %p54
      %p177 = pneg %p78
      %p178 = pneg %p75
      %p179 = pneg %p99
      %p180 = pneg %p96
      %p181 = pneg %p125
      %p182 = pneg %p122
      %p183 = scmp.lt.s32.totalorder %s15, 1
      %s184 = scalar_select %p183, %s15, 1
      %s185 = smul.addr %s184, 4
      %s186 = scalar_lea.vmem %s4, %s185
      %p187 = scmp.lt.s32.totalorder %s15, 1
      %s188 = scalar_select %p187, %s15, 1
      %s189 = smul.addr %s188, 2
      %s190 = smul.addr %s189, 4
      %s191 = scalar_lea.vmem %s0, %s190
      %p192 = scmp.lt.s32.totalorder %s15, 1
      %s193 = scalar_select %p192, %s15, 1
      %s194 = smul.addr %s193, 4
      %s195 = scalar_lea.vmem %s4, %s194
      %v197 = vld [vmem:[%s191] sm:$0xf]
      %v198 = vld [vmem:[%s191 + $0x4] sm:$0x1]
      %v199 = vld [vmem:[%s1] sm:$0xf]
      %v200 = vld [vmem:[%s1 + $0x4] sm:$0xf]
      %v201 = vld [vmem:[%s1 + $0x8] sm:$0xf]
      %v202 = vld [vmem:[%s1 + $0xc] sm:$0xf]
      %v203 = vld [vmem:[%s1 + $0x10] sm:$0xf]
      %v204 = vld [vmem:[%s1 + $0x14] sm:$0xf]
      %v205 = vld [vmem:[%s1 + $0x18] sm:$0xf]
      %v206 = vld [vmem:[%s1 + $0x1c] sm:$0xf]
      %v207 = vld [vmem:[%s1 + $0x20] sm:$0xf]
      %v208 = vld [vmem:[%s1 + $0x24] sm:$0xf]
      %v209 = vld [vmem:[%s1 + $0x28] sm:$0xf]
      %v210 = vld [vmem:[%s1 + $0x2c] sm:$0xf]
      %v211 = vld [vmem:[%s1 + $0x30] sm:$0xf]
      %v212 = vld [vmem:[%s1 + $0x34] sm:$0xf]
      %v213 = vld [vmem:[%s1 + $0x38] sm:$0xf]
      %v214 = vld [vmem:[%s1 + $0x3c] sm:$0xf]
      %v215 = vld [vmem:[%s1 + $0x40] sm:$0xf]
      %v216 = vld [vmem:[%s1 + $0x44] sm:$0xf]
      %v217 = vld [vmem:[%s1 + $0x48] sm:$0xf]
      %v218 = vld [vmem:[%s1 + $0x4c] sm:$0xf]
      %v219 = vld [vmem:[%s1 + $0x50] sm:$0xf]
      %v220 = vld [vmem:[%s1 + $0x54] sm:$0xf]
      %v221 = vld [vmem:[%s1 + $0x58] sm:$0xf]
      %v222 = vld [vmem:[%s1 + $0x5c] sm:$0xf]
      %v225 = vunpack.c.l.b16 %v197
      %v226 = vunpack.c.l.b16 %v198
      %v227 = vpack.c.b16 %v226, %v225
      %v229 = vshrl.u32 %v227, 16
      %v231 = vshll.u32 %v227, 16
      %v233 = vrot.slane %v231, 1
      %v234 = vor.u32 %v229, %v233
      %v243 = vunpack.c.l.b16 %v207
      %v244 = vunpack.c.l.b16 %v208
      %v245 = vunpack.c.l.b16 %v209
      %v246 = vunpack.c.l.b16 %v210
      %v247 = vunpack.c.l.b16 %v211
      %v248 = vunpack.c.l.b16 %v212
      %v249 = vunpack.c.l.b16 %v213
      %v250 = vunpack.c.l.b16 %v214
      %v251 = vpack.c.b16 %v244, %v243
      %v252 = vpack.c.b16 %v246, %v245
      %v253 = vpack.c.b16 %v248, %v247
      %v254 = vpack.c.b16 %v250, %v249
      %vm259 = vcmask 523264
      %v261 = vsel %vm259, %v234, 0
      %263 = vmatprep.subr.bf16.mxu0 0
      %264 = vmatpush1.bf16.msra.mxu0 %v251
      %265 = vmatprep.subr.bf16.mxu0 0
      %266 = vmatpush1.bf16.msra.mxu0 %v252
      %267 = vmatprep.subr.bf16.mxu0 0
      %268 = vmatpush1.bf16.msra.mxu0 %v253
      %269 = vmatprep.subr.bf16.mxu0 0
      %270 = vmatpush1.bf16.msra.mxu0 %v254
      %271 = vmatprep.subr.bf16.mxu0 0
      %272 = vmatpush1.bf16.msra.mxu0 0
      %273 = vmatprep.subr.bf16.mxu0 0
      %274 = vmatpush1.bf16.msra.mxu0 0
      %275 = vmatprep.subr.bf16.mxu0 0
      %276 = vmatpush1.bf16.msra.mxu0 0
      %277 = vmatprep.subr.bf16.mxu0 0
      %278 = vmatpush1.bf16.msra.mxu0 0
      %279 = vmatprep.subr.bf16.mxu0 0
      %280 = vmatpush1.bf16.msra.mxu0 0
      %281 = vmatprep.subr.bf16.mxu0 0
      %282 = vmatpush1.bf16.msra.mxu0 0
      %283 = vmatprep.subr.bf16.mxu0 0
      %284 = vmatpush1.bf16.msra.mxu0 0
      %285 = vmatprep.subr.bf16.mxu0 0
      %286 = vmatpush1.bf16.msra.mxu0 0
      %287 = vmatprep.subr.bf16.mxu0 0
      %288 = vmatpush1.bf16.msra.mxu0 0
      %289 = vmatprep.subr.bf16.mxu0 0
      %290 = vmatpush1.bf16.msra.mxu0 0
      %291 = vmatprep.subr.bf16.mxu0 0
      %292 = vmatpush1.bf16.msra.mxu0 0
      %293 = vmatprep.subr.bf16.mxu0 0
      %294 = vmatpush1.bf16.msra.mxu0 0
      %295 = vmatprep.mubr.bf16.mxu0 0
      %296 = vmatmul.mubr.bf16.gmra.mrb[0].mxu0 %v261
      %v297 = vpop.f32.mrb[0].mxu0
      %v298 = vadd.f32 0.0, %v297
      %v299 = vpop.f32.mrb[0].mxu0
      %v300 = vpop.f32.mrb[0].mxu0
      %v301 = vpop.f32.mrb[0].mxu0
      %302 = vdwg.mxu0
      %v311 = vunpack.c.l.b16 %v199
      %v312 = vunpack.c.l.b16 %v200
      %v313 = vunpack.c.l.b16 %v201
      %v314 = vunpack.c.l.b16 %v202
      %v315 = vunpack.c.l.b16 %v203
      %v316 = vunpack.c.l.b16 %v204
      %v317 = vunpack.c.l.b16 %v205
      %v318 = vunpack.c.l.b16 %v206
      %v319 = vpack.c.b16 %v312, %v311
      %v320 = vpack.c.b16 %v314, %v313
      %v321 = vpack.c.b16 %v316, %v315
      %v322 = vpack.c.b16 %v318, %v317
      %v328 = vsel %vm259, %v197, 0
      %330 = vmatprep.subr.bf16.mxu0 0
      %331 = vmatpush1.bf16.msra.mxu0 %v319
      %332 = vmatprep.subr.bf16.mxu0 0
      %333 = vmatpush1.bf16.msra.mxu0 %v320
      %334 = vmatprep.subr.bf16.mxu0 0
      %335 = vmatpush1.bf16.msra.mxu0 %v321
      %336 = vmatprep.subr.bf16.mxu0 0
      %337 = vmatpush1.bf16.msra.mxu0 %v322
      %338 = vmatprep.subr.bf16.mxu0 0
      %339 = vmatpush1.bf16.msra.mxu0 0
      %340 = vmatprep.subr.bf16.mxu0 0
      %341 = vmatpush1.bf16.msra.mxu0 0
      %342 = vmatprep.subr.bf16.mxu0 0
      %343 = vmatpush1.bf16.msra.mxu0 0
      %344 = vmatprep.subr.bf16.mxu0 0
      %345 = vmatpush1.bf16.msra.mxu0 0
      %346 = vmatprep.subr.bf16.mxu0 0
      %347 = vmatpush1.bf16.msra.mxu0 0
      %348 = vmatprep.subr.bf16.mxu0 0
      %349 = vmatpush1.bf16.msra.mxu0 0
      %350 = vmatprep.subr.bf16.mxu0 0
      %351 = vmatpush1.bf16.msra.mxu0 0
      %352 = vmatprep.subr.bf16.mxu0 0
      %353 = vmatpush1.bf16.msra.mxu0 0
      %354 = vmatprep.subr.bf16.mxu0 0
      %355 = vmatpush1.bf16.msra.mxu0 0
      %356 = vmatprep.subr.bf16.mxu0 0
      %357 = vmatpush1.bf16.msra.mxu0 0
      %358 = vmatprep.subr.bf16.mxu0 0
      %359 = vmatpush1.bf16.msra.mxu0 0
      %360 = vmatprep.subr.bf16.mxu0 0
      %361 = vmatpush1.bf16.msra.mxu0 0
      %362 = vmatprep.mubr.bf16.mxu0 0
      %363 = vmatmul.mubr.bf16.gmra.mrb[0].mxu0 %v328
      %v364 = vpop.f32.mrb[0].mxu0
      %v365 = vadd.f32 %v298, %v364
      %v366 = vpop.f32.mrb[0].mxu0
      %v367 = vpop.f32.mrb[0].mxu0
      %v368 = vpop.f32.mrb[0].mxu0
      %369 = vdwg.mxu0
      %v370 = vrot.slane %v227, 1
      %v379 = vunpack.c.l.b16 %v215
      %v380 = vunpack.c.l.b16 %v216
      %v381 = vunpack.c.l.b16 %v217
      %v382 = vunpack.c.l.b16 %v218
      %v383 = vunpack.c.l.b16 %v219
      %v384 = vunpack.c.l.b16 %v220
      %v385 = vunpack.c.l.b16 %v221
      %v386 = vunpack.c.l.b16 %v222
      %v387 = vpack.c.b16 %v380, %v379
      %v388 = vpack.c.b16 %v382, %v381
      %v389 = vpack.c.b16 %v384, %v383
      %v390 = vpack.c.b16 %v386, %v385
      %v396 = vsel %vm259, %v370, 0
      %398 = vmatprep.subr.bf16.mxu0 0
      %399 = vmatpush1.bf16.msra.mxu0 %v387
      %400 = vmatprep.subr.bf16.mxu0 0
      %401 = vmatpush1.bf16.msra.mxu0 %v388
      %402 = vmatprep.subr.bf16.mxu0 0
      %403 = vmatpush1.bf16.msra.mxu0 %v389
      %404 = vmatprep.subr.bf16.mxu0 0
      %405 = vmatpush1.bf16.msra.mxu0 %v390
      %406 = vmatprep.subr.bf16.mxu0 0
      %407 = vmatpush1.bf16.msra.mxu0 0
      %408 = vmatprep.subr.bf16.mxu0 0
      %409 = vmatpush1.bf16.msra.mxu0 0
      %410 = vmatprep.subr.bf16.mxu0 0
      %411 = vmatpush1.bf16.msra.mxu0 0
      %412 = vmatprep.subr.bf16.mxu0 0
      %413 = vmatpush1.bf16.msra.mxu0 0
      %414 = vmatprep.subr.bf16.mxu0 0
      %415 = vmatpush1.bf16.msra.mxu0 0
      %416 = vmatprep.subr.bf16.mxu0 0
      %417 = vmatpush1.bf16.msra.mxu0 0
      %418 = vmatprep.subr.bf16.mxu0 0
      %419 = vmatpush1.bf16.msra.mxu0 0
      %420 = vmatprep.subr.bf16.mxu0 0
      %421 = vmatpush1.bf16.msra.mxu0 0
      %422 = vmatprep.subr.bf16.mxu0 0
      %423 = vmatpush1.bf16.msra.mxu0 0
      %424 = vmatprep.subr.bf16.mxu0 0
      %425 = vmatpush1.bf16.msra.mxu0 0
      %426 = vmatprep.subr.bf16.mxu0 0
      %427 = vmatpush1.bf16.msra.mxu0 0
      %428 = vmatprep.subr.bf16.mxu0 0
      %429 = vmatpush1.bf16.msra.mxu0 0
      %430 = vmatprep.mubr.bf16.mxu0 0
      %431 = vmatmul.mubr.bf16.gmra.mrb[0].mxu0 %v396
      %v432 = vpop.f32.mrb[0].mxu0
      %v433 = vadd.f32 0.0, %v432
      %v434 = vpop.f32.mrb[0].mxu0
      %v435 = vpop.f32.mrb[0].mxu0
      %v436 = vpop.f32.mrb[0].mxu0
      %437 = vdwg.mxu0
      %v438 = vadd.f32 %v365, %v433
      %v439 = vld [vmem:[%s2] sm:$0x1]
      %v441 = vlaneseq
      %v442 = vshrl.u32 %v441, 7
      %v443 = vsub.s32 0, %v442
      %v444 = vrot.slane %v439, %v443
      %v446 = vmul.f32 %v438, %v444
      %v447 = vld [vmem:[%s3] sm:$0x1]
      %v449 = vlaneseq
      %v450 = vshrl.u32 %v449, 7
      %v451 = vsub.s32 0, %v450
      %v452 = vrot.slane %v447, %v451
      %v454 = vadd.f32 %v446, %v452
      %v455 = vmax.f32 %v454, 0.0
      %v456 = vpack.c.bf16 %v455, %v455
      %457 = vst [vmem:[%s195] sm:$0xf] %v456
      %p458 = scmp.lt.s32.totalorder %s15, 1
      %s459 = scalar_select %p458, %s15, 1
      %s460 = smul.addr %s459, 4
      %s461 = scalar_lea.vmem %s4, %s460
      // Predicated region
      $region37: #{forward.21} parent=35 // pred_check
        %p462 = pneg %p122
      $region38: #{forward.21} parent=35 // pred_check_branch
        %464 = sbr.rel (%p462) target = $region40
      $region39: #{forward.21} parent=35 // pred_region
        _
      $region40: #{forward.21} parent=35 // pred_fallthru
        _
    $region36: #{forward.21} parent=5 // pred_fallthru
      _
    %p465 = scmp.le.s32.totalorder 2, %s10
    // Predicated region
    $region41: #{forward.21} parent=5 // pred_check
      %p466 = pneg %p465
    $region42: #{forward.21} parent=5 // pred_check_branch
      %468 = sbr.rel (%p466) target = $region44
    $region43: #{forward.21} parent=5 // pred_region
      %s469 = ssub.s32 %s10, 2
      // Predicated region
      $region45: #{forward.21} parent=43 // pred_check
        %p470 = pneg %p128
      $region46: #{forward.21} parent=43 // pred_check_branch
        %472 = sbr.rel (%p470) target = $region48
      $region47: #{forward.21} parent=43 // pred_region
        %p473 = scmp.lt.s32.totalorder %s16, 1
        %s474 = scalar_select %p473, %s16, 1
        %s475 = smul.addr %s474, 4
        %s476 = scalar_lea.vmem %s4, %s475
      $region48: #{forward.21} parent=43 // pred_fallthru
        _
    $region44: #{forward.21} parent=5 // pred_fallthru
      _
  $region6: #{forward.21} parent=0 // loop_footer
    %s14 = sadd.s32 1, %s10
  $region7: #{forward.21} parent=0 // loop_footer_branch
    %9 = sbr.rel target = $region3
  $region8: #{forward.21} parent=0 // loop_exit
    _

// kernel: forward.20
$region0: #{forward.20}
  #allocation0 [shape = 'u32[]', space=smem, size = 0x4, offset = 0x4, fixed_abs, tag = 'smem constant byte address 0x4 - core index']
  #allocation1 [shape = 'u32[144,128]{1,0:T(1,128)}', space=vmem, size = 0x12000, scoped, tag = 'internal scratch']
  %s0 = inlined_call_operand.vmem [shape: bf16[2,18,8], index: 0, kind: input, shape index: {}]
  %s1 = inlined_call_operand.vmem [shape: bf16[3,8,64], index: 1, kind: input, shape index: {}]
  %s2 = inlined_call_operand.vmem [shape: f32[1,64], index: 2, kind: input, shape index: {}]
  %s3 = inlined_call_operand.vmem [shape: f32[1,64], index: 3, kind: input, shape index: {}]
  %s4 = inlined_call_operand.vmem [shape: bf16[2,16,64], index: 4, kind: output, shape index: {}]
  %s5 = sld [smem:[#allocation0]]
  $region49: #{forward.20} parent=0
    _
  %s7 = ssub.s32 1, %s5
  %s8 = scalar_select 0, %s7, %s5
  loop: start=0, step=1, limit=4
  $region2: #{forward.20} parent=0 // loop_pre_header
    _
  $region3: #{forward.20} parent=0 // loop_header
    %s10 = sphi 0, %s14
    %p11 = scmp.ge.s32.totalorder %s10, 4
    %s20 = sphi 0, %s22
    %s23 = sphi 0, %s20
    %s24 = sphi 0, %s23
    %s40 = sphi 0, %s24
    %s44 = sphi 0, %s44
    %s46 = sphi 0, %s44
    %s47 = sphi 0, %s46
    %s61 = sphi 0, %s47
    %s65 = sphi 0, %s65
    %s67 = sphi 0, %s65
    %s68 = sphi 0, %s67
    %s82 = sphi 0, %s68
    %s86 = sphi 0, %s86
    %s88 = sphi 0, %s86
    %s89 = sphi 0, %s88
    %s103 = sphi 0, %s89
    %s109 = sphi 0, %s111
    %s112 = sphi 0, %s109
    %s113 = sphi 0, %s112
    %s129 = sphi 0, %s113
  $region4: #{forward.20} parent=0 // loop_header_branch
    %13 = sbr.rel (%p11) target = $region8
  $region5: #{forward.20} parent=0 // loop_body
    %s15 = ssub.s32 %s10, 1
    %s16 = ssub.s32 %s10, 2
    %s17 = sadd.s32 %s10, 1
    %s18 = ssub.s32 %s10, %s17
    %p19 = scmp.eq.s32.totalorder %s18, 0
    %s21 = sadd.s32 %s20, 1
    %s22 = scalar_select %p19, %s20, %s21
    %p25 = pneg %p19
    %p26 = scmp.eq.s32.totalorder %s10, 1
    %p27 = por %p25, %p26
    %p28 = scmp.ne.s32.totalorder %s20, %s23
    %p29 = scmp.eq.s32.totalorder %s10, 0
    %p30 = por %p28, %p29
    %p31 = scmp.ne.s32.totalorder %s20, %s23
    %p32 = scmp.eq.s32.totalorder %s15, 1
    %p33 = por %p31, %p32
    %p34 = scmp.ne.s32.totalorder %s23, %s24
    %p35 = scmp.eq.s32.totalorder %s15, 0
    %p36 = por %p34, %p35
    %p37 = scmp.ne.s32.totalorder %s23, %s24
    %p38 = scmp.eq.s32.totalorder %s16, 1
    %p39 = por %p37, %p38
    %p41 = scmp.ne.s32.totalorder %s24, %s40
    %p42 = scmp.eq.s32.totalorder %s16, 0
    %p43 = por %p41, %p42
    %s45 = sadd.s32 %s44, 1
    %p48 = scmp.eq.s32.totalorder %s10, 1
    %p49 = scmp.ne.s32.totalorder %s44, %s46
    %p50 = scmp.eq.s32.totalorder %s10, 0
    %p51 = por %p49, %p50
    %p52 = scmp.ne.s32.totalorder %s44, %s46
    %p53 = scmp.eq.s32.totalorder %s15, 1
    %p54 = por %p52, %p53
    %p55 = scmp.ne.s32.totalorder %s46, %s47
    %p56 = scmp.eq.s32.totalorder %s15, 0
    %p57 = por %p55, %p56
    %p58 = scmp.ne.s32.totalorder %s46, %s47
    %p59 = scmp.eq.s32.totalorder %s16, 1
    %p60 = por %p58, %p59
    %p62 = scmp.ne.s32.totalorder %s47, %s61
    %p63 = scmp.eq.s32.totalorder %s16, 0
    %p64 = por %p62, %p63
    %s66 = sadd.s32 %s65, 1
    %p69 = scmp.eq.s32.totalorder %s10, 1
    %p70 = scmp.ne.s32.totalorder %s65, %s67
    %p71 = scmp.eq.s32.totalorder %s10, 0
    %p72 = por %p70, %p71
    %p73 = scmp.ne.s32.totalorder %s65, %s67
    %p74 = scmp.eq.s32.totalorder %s15, 1
    %p75 = por %p73, %p74
    %p76 = scmp.ne.s32.totalorder %s67, %s68
    %p77 = scmp.eq.s32.totalorder %s15, 0
    %p78 = por %p76, %p77
    %p79 = scmp.ne.s32.totalorder %s67, %s68
    %p80 = scmp.eq.s32.totalorder %s16, 1
    %p81 = por %p79, %p80
    %p83 = scmp.ne.s32.totalorder %s68, %s82
    %p84 = scmp.eq.s32.totalorder %s16, 0
    %p85 = por %p83, %p84
    %s87 = sadd.s32 %s86, 1
    %p90 = scmp.eq.s32.totalorder %s10, 1
    %p91 = scmp.ne.s32.totalorder %s86, %s88
    %p92 = scmp.eq.s32.totalorder %s10, 0
    %p93 = por %p91, %p92
    %p94 = scmp.ne.s32.totalorder %s86, %s88
    %p95 = scmp.eq.s32.totalorder %s15, 1
    %p96 = por %p94, %p95
    %p97 = scmp.ne.s32.totalorder %s88, %s89
    %p98 = scmp.eq.s32.totalorder %s15, 0
    %p99 = por %p97, %p98
    %p100 = scmp.ne.s32.totalorder %s88, %s89
    %p101 = scmp.eq.s32.totalorder %s16, 1
    %p102 = por %p100, %p101
    %p104 = scmp.ne.s32.totalorder %s89, %s103
    %p105 = scmp.eq.s32.totalorder %s16, 0
    %p106 = por %p104, %p105
    %s107 = ssub.s32 %s10, %s17
    %p108 = scmp.eq.s32.totalorder %s107, 0
    %s110 = sadd.s32 %s109, 1
    %s111 = scalar_select %p108, %s109, %s110
    %p114 = pneg %p108
    %p115 = scmp.eq.s32.totalorder %s10, 1
    %p116 = por %p114, %p115
    %p117 = scmp.ne.s32.totalorder %s109, %s112
    %p118 = scmp.eq.s32.totalorder %s10, 0
    %p119 = por %p117, %p118
    %p120 = scmp.ne.s32.totalorder %s109, %s112
    %p121 = scmp.eq.s32.totalorder %s15, 1
    %p122 = por %p120, %p121
    %p123 = scmp.ne.s32.totalorder %s112, %s113
    %p124 = scmp.eq.s32.totalorder %s15, 0
    %p125 = por %p123, %p124
    %p126 = scmp.ne.s32.totalorder %s112, %s113
    %p127 = scmp.eq.s32.totalorder %s16, 1
    %p128 = por %p126, %p127
    %p130 = scmp.ne.s32.totalorder %s113, %s129
    %p131 = scmp.eq.s32.totalorder %s16, 0
    %p132 = por %p130, %p131
    %p133 = scmp.le.s32.totalorder 1, %s10
    %p134 = scmp.lt.s32.totalorder %s10, 3
    %p135 = pnand %p133, %p134
    %p136 = pneg %p135
    // Predicated region
    $region9: #{forward.20} parent=5 // pred_check
      _
    $region10: #{forward.20} parent=5 // pred_check_branch
      %138 = sbr.rel (%p135) target = $region12
    $region11: #{forward.20} parent=5 // pred_region
      %s139 = ssub.s32 %s10, 1
      // Predicated region
      $region13: #{forward.20} parent=11 // pred_check
        %p140 = pneg %p57
      $region14: #{forward.20} parent=11 // pred_check_branch
        %142 = sbr.rel (%p140) target = $region16
      $region15: #{forward.20} parent=11 // pred_region
        _
      $region16: #{forward.20} parent=11 // pred_fallthru
        _
      // Predicated region
      $region17: #{forward.20} parent=11 // pred_check
        %p143 = pneg %p78
      $region18: #{forward.20} parent=11 // pred_check_branch
        %145 = sbr.rel (%p143) target = $region20
      $region19: #{forward.20} parent=11 // pred_region
        _
      $region20: #{forward.20} parent=11 // pred_fallthru
        _
      // Predicated region
      $region21: #{forward.20} parent=11 // pred_check
        %p146 = pneg %p99
      $region22: #{forward.20} parent=11 // pred_check_branch
        %148 = sbr.rel (%p146) target = $region24
      $region23: #{forward.20} parent=11 // pred_region
        _
      $region24: #{forward.20} parent=11 // pred_fallthru
        _
    $region12: #{forward.20} parent=5 // pred_fallthru
      _
    %p149 = scmp.lt.s32.totalorder %s10, 2
    // Predicated region
    $region25: #{forward.20} parent=5 // pred_check
      %p150 = pneg %p149
    $region26: #{forward.20} parent=5 // pred_check_branch
      %152 = sbr.rel (%p150) target = $region28
    $region27: #{forward.20} parent=5 // pred_region
      // Predicated region
      $region29: #{forward.20} parent=27 // pred_check
        %p153 = pneg %p30
      $region30: #{forward.20} parent=27 // pred_check_branch
        %155 = sbr.rel (%p153) target = $region32
      $region31: #{forward.20} parent=27 // pred_region
        %p156 = scmp.lt.s32.totalorder %s10, 1
        %s157 = scalar_select %p156, %s10, 1
        %s158 = smul.addr %s157, 3
        %s159 = smul.addr %s158, 4
        %s160 = scalar_lea.vmem %s0, %s159
      $region32: #{forward.20} parent=27 // pred_fallthru
        _
    $region28: #{forward.20} parent=5 // pred_fallthru
      _
    %p161 = scmp.le.s32.totalorder 1, %s10
    %p162 = scmp.lt.s32.totalorder %s10, 3
    %p163 = pnand %p161, %p162
    %p164 = pneg %p163
    // Predicated region
    $region33: #{forward.20} parent=5 // pred_check
      _
    $region34: #{forward.20} parent=5 // pred_check_branch
      %166 = sbr.rel (%p163) target = $region36
    $region35: #{forward.20} parent=5 // pred_region
      %s167 = ssub.s32 %s10, 1
      %p168 = scmp.lt.s32.totalorder %s15, 1
      %s169 = scalar_select %p168, %s15, 1
      %s170 = smul.addr %s169, 3
      %s171 = smul.addr %s170, 4
      %s172 = scalar_lea.vmem %s0, %s171
      %p173 = pneg %p36
      %p174 = pneg %p33
      %p175 = pneg %p57
      %p176 = pneg %p54
      %p177 = pneg %p78
      %p178 = pneg %p75
      %p179 = pneg %p99
      %p180 = pneg %p96
      %p181 = pneg %p125
      %p182 = pneg %p122
      %p183 = scmp.lt.s32.totalorder %s15, 1
      %s184 = scalar_select %p183, %s15, 1
      %s185 = smul.addr %s184, 2
      %s186 = smul.addr %s185, 4
      %s187 = scalar_lea.vmem %s4, %s186
      %p188 = scmp.lt.s32.totalorder %s15, 1
      %s189 = scalar_select %p188, %s15, 1
      %s190 = smul.addr %s189, 3
      %s191 = smul.addr %s190, 4
      %s192 = scalar_lea.vmem %s0, %s191
      %p193 = scmp.lt.s32.totalorder %s15, 1
      %s194 = scalar_select %p193, %s15, 1
      %s195 = smul.addr %s194, 2
      %s196 = smul.addr %s195, 4
      %s197 = scalar_lea.vmem %s4, %s196
      %v199 = vld [vmem:[%s192] sm:$0xf]
      %v200 = vld [vmem:[%s192 + $0x4] sm:$0xf]
      %v201 = vld [vmem:[%s192 + $0x8] sm:$0x1]
      %v202 = vld [vmem:[%s1] sm:$0xf]
      %v203 = vld [vmem:[%s1 + $0x4] sm:$0xf]
      %v204 = vld [vmem:[%s1 + $0x8] sm:$0xf]
      %v208 = vunpack.c.l.b16 %v199
      %v209 = vunpack.c.l.b16 %v200
      %v210 = vunpack.c.l.b16 %v201
      %v211 = vpack.c.b16 %v209, %v208
      %v212 = vpack.c.b16 %v210, %v210
      %vm213 = vsmask.f32 7424
      %v215 = vshrl.u32 %v211, 16
      %v217 = vshll.u32 %v211, 16
      %v219 = vrot.slane %v217, 1
      %v220 = vor.u32 %v215, %v219
      %v222 = vshll.u32 %v212, 16
      %v224 = vrot.slane %v222, 1
      %v225 = vsel %vm213, %v220, %v224
      %vm226 = vcmask 64512
      %v228 = vsel %vm226, %v225, 0
      %vm230 = vcmask 1043456
      %v232 = vsel %vm230, %v203, 0
      %234 = vmatprep.subr.bf16.mxu0 0
      %235 = vmatpush1.bf16.msra.mxu0 %v232
      %236 = vmatprep.subr.bf16.mxu0 0
      %237 = vmatpush1.bf16.msra.mxu0 0
      %238 = vmatprep.subr.bf16.mxu0 0
      %239 = vmatpush1.bf16.msra.mxu0 0
      %240 = vmatprep.subr.bf16.mxu0 0
      %241 = vmatpush1.bf16.msra.mxu0 0
      %242 = vmatprep.subr.bf16.mxu0 0
      %243 = vmatpush1.bf16.msra.mxu0 0
      %244 = vmatprep.subr.bf16.mxu0 0
      %245 = vmatpush1.bf16.msra.mxu0 0
      %246 = vmatprep.subr.bf16.mxu0 0
      %247 = vmatpush1.bf16.msra.mxu0 0
      %248 = vmatprep.subr.bf16.mxu0 0
      %249 = vmatpush1.bf16.msra.mxu0 0
      %250 = vmatprep.subr.bf16.mxu0 0
      %251 = vmatpush1.bf16.msra.mxu0 0
      %252 = vmatprep.subr.bf16.mxu0 0
      %253 = vmatpush1.bf16.msra.mxu0 0
      %254 = vmatprep.subr.bf16.mxu0 0
      %255 = vmatpush1.bf16.msra.mxu0 0
      %256 = vmatprep.subr.bf16.mxu0 0
      %257 = vmatpush1.bf16.msra.mxu0 0
      %258 = vmatprep.subr.bf16.mxu0 0
      %259 = vmatpush1.bf16.msra.mxu0 0
      %260 = vmatprep.subr.bf16.mxu0 0
      %261 = vmatpush1.bf16.msra.mxu0 0
      %262 = vmatprep.subr.bf16.mxu0 0
      %263 = vmatpush1.bf16.msra.mxu0 0
      %264 = vmatprep.subr.bf16.mxu0 0
      %265 = vmatpush1.bf16.msra.mxu0 0
      %266 = vmatprep.mubr.bf16.mxu0 0
      %267 = vmatmul.mubr.bf16.gmra.mrb[0].mxu0 %v228
      %v268 = vpop.f32.mrb[0].mxu0
      %v269 = vadd.f32 0.0, %v268
      %v270 = vpop.f32.mrb[0].mxu0
      %v271 = vpop.f32.mrb[0].mxu0
      %v272 = vadd.f32 0.0, %v271
      %v273 = vpop.f32.mrb[0].mxu0
      %274 = vdwg.mxu0
      %v275 = vsel %vm226, %v211, 0
      %v278 = vsel %vm230, %v202, 0
      %280 = vmatprep.subr.bf16.mxu0 0
      %281 = vmatpush1.bf16.msra.mxu0 %v278
      %282 = vmatprep.subr.bf16.mxu0 0
      %283 = vmatpush1.bf16.msra.mxu0 0
      %284 = vmatprep.subr.bf16.mxu0 0
      %285 = vmatpush1.bf16.msra.mxu0 0
      %286 = vmatprep.subr.bf16.mxu0 0
      %287 = vmatpush1.bf16.msra.mxu0 0
      %288 = vmatprep.subr.bf16.mxu0 0
      %289 = vmatpush1.bf16.msra.mxu0 0
      %290 = vmatprep.subr.bf16.mxu0 0
      %291 = vmatpush1.bf16.msra.mxu0 0
      %292 = vmatprep.subr.bf16.mxu0 0
      %293 = vmatpush1.bf16.msra.mxu0 0
      %294 = vmatprep.subr.bf16.mxu0 0
      %295 = vmatpush1.bf16.msra.mxu0 0
      %296 = vmatprep.subr.bf16.mxu0 0
      %297 = vmatpush1.bf16.msra.mxu0 0
      %298 = vmatprep.subr.bf16.mxu0 0
      %299 = vmatpush1.bf16.msra.mxu0 0
      %300 = vmatprep.subr.bf16.mxu0 0
      %301 = vmatpush1.bf16.msra.mxu0 0
      %302 = vmatprep.subr.bf16.mxu0 0
      %303 = vmatpush1.bf16.msra.mxu0 0
      %304 = vmatprep.subr.bf16.mxu0 0
      %305 = vmatpush1.bf16.msra.mxu0 0
      %306 = vmatprep.subr.bf16.mxu0 0
      %307 = vmatpush1.bf16.msra.mxu0 0
      %308 = vmatprep.subr.bf16.mxu0 0
      %309 = vmatpush1.bf16.msra.mxu0 0
      %310 = vmatprep.subr.bf16.mxu0 0
      %311 = vmatpush1.bf16.msra.mxu0 0
      %312 = vmatprep.mubr.bf16.mxu0 0
      %313 = vmatmul.mubr.bf16.gmra.mrb[0].mxu0 %v275
      %v314 = vpop.f32.mrb[0].mxu0
      %v315 = vadd.f32 %v269, %v314
      %v316 = vpop.f32.mrb[0].mxu0
      %v317 = vpop.f32.mrb[0].mxu0
      %v318 = vadd.f32 %v272, %v317
      %v319 = vpop.f32.mrb[0].mxu0
      %320 = vdwg.mxu0
      %vm321 = vcmask 1046528
      %v322 = vrot.slane %v211, 1
      %v323 = vrot.slane %v212, 1
      %v324 = vsel %vm321, %v322, %v323
      %v326 = vsel %vm226, %v324, 0
      %v329 = vsel %vm230, %v204, 0
      %331 = vmatprep.subr.bf16.mxu0 0
      %332 = vmatpush1.bf16.msra.mxu0 %v329
      %333 = vmatprep.subr.bf16.mxu0 0
      %334 = vmatpush1.bf16.msra.mxu0 0
      %335 = vmatprep.subr.bf16.mxu0 0
      %336 = vmatpush1.bf16.msra.mxu0 0
      %337 = vmatprep.subr.bf16.mxu0 0
      %338 = vmatpush1.bf16.msra.mxu0 0
      %339 = vmatprep.subr.bf16.mxu0 0
      %340 = vmatpush1.bf16.msra.mxu0 0
      %341 = vmatprep.subr.bf16.mxu0 0
      %342 = vmatpush1.bf16.msra.mxu0 0
      %343 = vmatprep.subr.bf16.mxu0 0
      %344 = vmatpush1.bf16.msra.mxu0 0
      %345 = vmatprep.subr.bf16.mxu0 0
      %346 = vmatpush1.bf16.msra.mxu0 0
      %347 = vmatprep.subr.bf16.mxu0 0
      %348 = vmatpush1.bf16.msra.mxu0 0
      %349 = vmatprep.subr.bf16.mxu0 0
      %350 = vmatpush1.bf16.msra.mxu0 0
      %351 = vmatprep.subr.bf16.mxu0 0
      %352 = vmatpush1.bf16.msra.mxu0 0
      %353 = vmatprep.subr.bf16.mxu0 0
      %354 = vmatpush1.bf16.msra.mxu0 0
      %355 = vmatprep.subr.bf16.mxu0 0
      %356 = vmatpush1.bf16.msra.mxu0 0
      %357 = vmatprep.subr.bf16.mxu0 0
      %358 = vmatpush1.bf16.msra.mxu0 0
      %359 = vmatprep.subr.bf16.mxu0 0
      %360 = vmatpush1.bf16.msra.mxu0 0
      %361 = vmatprep.subr.bf16.mxu0 0
      %362 = vmatpush1.bf16.msra.mxu0 0
      %363 = vmatprep.mubr.bf16.mxu0 0
      %364 = vmatmul.mubr.bf16.gmra.mrb[0].mxu0 %v326
      %v365 = vpop.f32.mrb[0].mxu0
      %v366 = vadd.f32 0.0, %v365
      %v367 = vpop.f32.mrb[0].mxu0
      %v368 = vpop.f32.mrb[0].mxu0
      %v369 = vadd.f32 0.0, %v368
      %v370 = vpop.f32.mrb[0].mxu0
      %371 = vdwg.mxu0
      %v372 = vadd.f32 %v315, %v366
      %v373 = vadd.f32 %v318, %v369
      %v374 = vld [vmem:[%s2] sm:$0x1]
      %v376 = vlaneseq
      %v377 = vshrl.u32 %v376, 7
      %v378 = vsub.s32 0, %v377
      %v379 = vrot.slane %v374, %v378
      %v381 = vmul.f32 %v372, %v379
      %v382 = vmul.f32 %v373, %v379
      %v383 = vld [vmem:[%s3] sm:$0x1]
      %v385 = vlaneseq
      %v386 = vshrl.u32 %v385, 7
      %v387 = vsub.s32 0, %v386
      %v388 = vrot.slane %v383, %v387
      %v390 = vadd.f32 %v381, %v388
      %v391 = vadd.f32 %v382, %v388
      %v392 = vmax.f32 %v390, 0.0
      %v393 = vmax.f32 %v391, 0.0
      %v394 = vpack.c.bf16 %v393, %v392
      %v396 = vunpack.c.l.b16 %v394
      %v397 = vunpack.c.h.b16 %v394
      %v398 = vpack.c.b16 %v396, %v396
      %v399 = vpack.c.b16 %v397, %v397
      %vm402 = vcmask 519168
      %403 = vst.msk [vmem:[%s197] sm:$0xf] %vm402, %v398
      %404 = vst.msk [vmem:[%s197 + $0x4] sm:$0xf] %vm402, %v399
      %p405 = scmp.lt.s32.totalorder %s15, 1
      %s406 = scalar_select %p405, %s15, 1
      %s407 = smul.addr %s406, 2
      %s408 = smul.addr %s407, 4
      %s409 = scalar_lea.vmem %s4, %s408
      // Predicated region
      $region37: #{forward.20} parent=35 // pred_check
        %p410 = pneg %p122
      $region38: #{forward.20} parent=35 // pred_check_branch
        %412 = sbr.rel (%p410) target = $region40
      $region39: #{forward.20} parent=35 // pred_region
        _
      $region40: #{forward.20} parent=35 // pred_fallthru
        _
    $region36: #{forward.20} parent=5 // pred_fallthru
      _
    %p413 = scmp.le.s32.totalorder 2, %s10
    // Predicated region
    $region41: #{forward.20} parent=5 // pred_check
      %p414 = pneg %p413
    $region42: #{forward.20} parent=5 // pred_check_branch
      %416 = sbr.rel (%p414) target = $region44
    $region43: #{forward.20} parent=5 // pred_region
      %s417 = ssub.s32 %s10, 2
      // Predicated region
      $region45: #{forward.20} parent=43 // pred_check
        %p418 = pneg %p128
      $region46: #{forward.20} parent=43 // pred_check_branch
        %420 = sbr.rel (%p418) target = $region48
      $region47: #{forward.20} parent=43 // pred_region
        %p421 = scmp.lt.s32.totalorder %s16, 1
        %s422 = scalar_select %p421, %s16, 1
        %s423 = smul.addr %s422, 2
        %s424 = smul.addr %s423, 4
        %s425 = scalar_lea.vmem %s4, %s424
      $region48: #{forward.20} parent=43 // pred_fallthru
        _
    $region44: #{forward.20} parent=5 // pred_fallthru
      _
  $region6: #{forward.20} parent=0 // loop_footer
    %s14 = sadd.s32 1, %s10
  $region7: #{forward.20} parent=0 // loop_footer_branch
    %9 = sbr.rel target = $region3
  $region8: #{forward.20} parent=0 // loop_exit
    _

// kernel: forward.22
$region0: #{forward.22}
  #allocation0 [shape = 'u32[]', space=smem, size = 0x4, offset = 0x4, fixed_abs, tag = 'smem constant byte address 0x4 - core index']
  #allocation1 [shape = 'u32[144,128]{1,0:T(1,128)}', space=vmem, size = 0x12000, scoped, tag = 'internal scratch']
  %s0 = inlined_call_operand.vmem [shape: bf16[8,128], index: 0, kind: input, shape index: {}]
  %s1 = inlined_call_operand.vmem [shape: bf16[128,128], index: 1, kind: input, shape index: {}]
  %s2 = inlined_call_operand.vmem [shape: f32[1,128], index: 2, kind: input, shape index: {}]
  %s3 = inlined_call_operand.vmem [shape: f32[8,128], index: 3, kind: output, shape index: {}]
  %s4 = sld [smem:[#allocation0]]
  $region22: #{forward.22} parent=0
    _
  %s6 = ssub.s32 1, %s4
  %s7 = scalar_select 0, %s6, %s4
  // Predicated region
  $region2: #{forward.22} parent=0 // pred_check
    _
  $region3: #{forward.22} parent=0 // pred_check_branch
    %9 = sbr.rel (0) target = $region5
  $region4: #{forward.22} parent=0 // pred_region
    _
  $region5: #{forward.22} parent=0 // pred_fallthru
    _
  // Predicated region
  $region6: #{forward.22} parent=0 // pred_check
    _
  $region7: #{forward.22} parent=0 // pred_check_branch
    %11 = sbr.rel (0) target = $region9
  $region8: #{forward.22} parent=0 // pred_region
    _
  $region9: #{forward.22} parent=0 // pred_fallthru
    _
  // Predicated region
  $region10: #{forward.22} parent=0 // pred_check
    _
  $region11: #{forward.22} parent=0 // pred_check_branch
    %13 = sbr.rel (0) target = $region13
  $region12: #{forward.22} parent=0 // pred_region
    _
  $region13: #{forward.22} parent=0 // pred_fallthru
    _
  %v15 = vld [vmem:[%s0] sm:$0xf]
  %v16 = vld [vmem:[%s1] sm:$0xf]
  %v17 = vld [vmem:[%s1 + $0x4] sm:$0xf]
  %v18 = vld [vmem:[%s1 + $0x8] sm:$0xf]
  %v19 = vld [vmem:[%s1 + $0xc] sm:$0xf]
  %v20 = vld [vmem:[%s1 + $0x10] sm:$0xf]
  %v21 = vld [vmem:[%s1 + $0x14] sm:$0xf]
  %v22 = vld [vmem:[%s1 + $0x18] sm:$0xf]
  %v23 = vld [vmem:[%s1 + $0x1c] sm:$0xf]
  %v24 = vld [vmem:[%s1 + $0x20] sm:$0xf]
  %v25 = vld [vmem:[%s1 + $0x24] sm:$0xf]
  %v26 = vld [vmem:[%s1 + $0x28] sm:$0xf]
  %v27 = vld [vmem:[%s1 + $0x2c] sm:$0xf]
  %v28 = vld [vmem:[%s1 + $0x30] sm:$0xf]
  %v29 = vld [vmem:[%s1 + $0x34] sm:$0xf]
  %v30 = vld [vmem:[%s1 + $0x38] sm:$0xf]
  %v31 = vld [vmem:[%s1 + $0x3c] sm:$0xf]
  %v32 = vld [vmem:[%s2] sm:$0x1]
  %v34 = vlaneseq
  %v35 = vshrl.u32 %v34, 7
  %v36 = vsub.s32 0, %v35
  %v37 = vrot.slane %v32, %v36
  %v55 = vunpack.c.l.b16 %v16
  %v56 = vunpack.c.l.b16 %v17
  %v57 = vunpack.c.l.b16 %v18
  %v58 = vunpack.c.l.b16 %v19
  %v59 = vunpack.c.l.b16 %v20
  %v60 = vunpack.c.l.b16 %v21
  %v61 = vunpack.c.l.b16 %v22
  %v62 = vunpack.c.l.b16 %v23
  %v63 = vunpack.c.l.b16 %v24
  %v64 = vunpack.c.l.b16 %v25
  %v65 = vunpack.c.l.b16 %v26
  %v66 = vunpack.c.l.b16 %v27
  %v67 = vunpack.c.l.b16 %v28
  %v68 = vunpack.c.l.b16 %v29
  %v69 = vunpack.c.l.b16 %v30
  %v70 = vunpack.c.l.b16 %v31
  %v71 = vpack.c.b16 %v56, %v55
  %v72 = vpack.c.b16 %v58, %v57
  %v73 = vpack.c.b16 %v60, %v59
  %v74 = vpack.c.b16 %v62, %v61
  %v75 = vpack.c.b16 %v64, %v63
  %v76 = vpack.c.b16 %v66, %v65
  %v77 = vpack.c.b16 %v68, %v67
  %v78 = vpack.c.b16 %v70, %v69
  %87 = vmatprep.subr.bf16.mxu0 0
  %88 = vmatpush1.bf16.msra.mxu0 %v71
  %89 = vmatprep.subr.bf16.mxu0 0
  %90 = vmatpush1.bf16.msra.mxu0 %v72
  %91 = vmatprep.subr.bf16.mxu0 0
  %92 = vmatpush1.bf16.msra.mxu0 %v73
  %93 = vmatprep.subr.bf16.mxu0 0
  %94 = vmatpush1.bf16.msra.mxu0 %v74
  %95 = vmatprep.subr.bf16.mxu0 0
  %96 = vmatpush1.bf16.msra.mxu0 %v75
  %97 = vmatprep.subr.bf16.mxu0 0
  %98 = vmatpush1.bf16.msra.mxu0 %v76
  %99 = vmatprep.subr.bf16.mxu0 0
  %100 = vmatpush1.bf16.msra.mxu0 %v77
  %101 = vmatprep.subr.bf16.mxu0 0
  %102 = vmatpush1.bf16.msra.mxu0 %v78
  %103 = vmatprep.subr.bf16.mxu0 0
  %104 = vmatpush1.bf16.msra.mxu0 0
  %105 = vmatprep.subr.bf16.mxu0 0
  %106 = vmatpush1.bf16.msra.mxu0 0
  %107 = vmatprep.subr.bf16.mxu0 0
  %108 = vmatpush1.bf16.msra.mxu0 0
  %109 = vmatprep.subr.bf16.mxu0 0
  %110 = vmatpush1.bf16.msra.mxu0 0
  %111 = vmatprep.subr.bf16.mxu0 0
  %112 = vmatpush1.bf16.msra.mxu0 0
  %113 = vmatprep.subr.bf16.mxu0 0
  %114 = vmatpush1.bf16.msra.mxu0 0
  %115 = vmatprep.subr.bf16.mxu0 0
  %116 = vmatpush1.bf16.msra.mxu0 0
  %117 = vmatprep.subr.bf16.mxu0 0
  %118 = vmatpush1.bf16.msra.mxu0 0
  %119 = vmatprep.mubr.bf16.mxu0 0
  %120 = vmatmul.mubr.bf16.gmra.mrb[0].mxu0 %v15
  %v121 = vpop.f32.mrb[0].mxu0
  %v122 = vadd.f32 %v37, %v121
  %v123 = vpop.f32.mrb[0].mxu0
  %v124 = vpop.f32.mrb[0].mxu0
  %v125 = vpop.f32.mrb[0].mxu0
  %126 = vdwg.mxu0
  %127 = vst [vmem:[%s3] sm:$0xff] %v122
  // Predicated region
  $region14: #{forward.22} parent=0 // pred_check
    _
  $region15: #{forward.22} parent=0 // pred_check_branch
    %129 = sbr.rel (0) target = $region17
  $region16: #{forward.22} parent=0 // pred_region
    _
  $region17: #{forward.22} parent=0 // pred_fallthru
    _
  // Predicated region
  $region18: #{forward.22} parent=0 // pred_check
    _
  $region19: #{forward.22} parent=0 // pred_check_branch
    %131 = sbr.rel (0) target = $region21
  $region20: #{forward.22} parent=0 // pred_region
    _
  $region21: #{forward.22} parent=0 // pred_fallthru
    _

// kernel: forward.23
$region0: #{forward.23}
  #allocation0 [shape = 'u32[]', space=smem, size = 0x4, offset = 0x4, fixed_abs, tag = 'smem constant byte address 0x4 - core index']
  #allocation1 [shape = 'u32[144,128]{1,0:T(1,128)}', space=vmem, size = 0x12000, scoped, tag = 'internal scratch']
  #allocation2 [shape = 'f32[2,32]{1,0:T(2,128)}', space=vmem, size = 0x400, scoped, tag = 'scratch operand']
  #allocation3 [shape = 'f32[2,32]{1,0:T(2,128)}', space=vmem, size = 0x400, scoped, tag = 'scratch operand']
  %s0 = inlined_call_operand.vmem [shape: f32[4,2,128], index: 0, kind: input, shape index: {}]
  %s1 = inlined_call_operand.vmem [shape: bf16[32,128], index: 1, kind: input, shape index: {}]
  %s2 = inlined_call_operand.vmem [shape: bf16[4,2,32], index: 2, kind: output, shape index: {}]
  %s3 = sld [smem:[#allocation0]]
  $region22: #{forward.23} parent=0
    _
  %s5 = ssub.s32 1, %s3
  %s6 = scalar_select 0, %s5, %s3
  // Predicated region
  $region2: #{forward.23} parent=0 // pred_check
    _
  $region3: #{forward.23} parent=0 // pred_check_branch
    %8 = sbr.rel (0) target = $region5
  $region4: #{forward.23} parent=0 // pred_region
    _
  $region5: #{forward.23} parent=0 // pred_fallthru
    _
  // Predicated region
  $region6: #{forward.23} parent=0 // pred_check
    _
  $region7: #{forward.23} parent=0 // pred_check_branch
    %10 = sbr.rel (0) target = $region9
  $region8: #{forward.23} parent=0 // pred_region
    _
  $region9: #{forward.23} parent=0 // pred_fallthru
    _
  %p12 = scmp.eq.s32.totalorder 0, 0
  // Predicated region
  $region10: #{forward.23} parent=0 // pred_check
    %p13 = pneg %p12
  $region11: #{forward.23} parent=0 // pred_check_branch
    %15 = sbr.rel (%p13) target = $region13
  $region12: #{forward.23} parent=0 // pred_region
    %vm16 = vcmask 254976
    %17 = vst.msk [vmem:[#allocation2] sm:$0x3] %vm16, 0.0
    %18 = vst.msk [vmem:[#allocation3] sm:$0x3] %vm16, 0.0
  $region13: #{forward.23} parent=0 // pred_fallthru
    _
  %v19 = vld [vmem:[%s1] sm:$0xf]
  %v20 = vld [vmem:[%s1 + $0x4] sm:$0xf]
  %v21 = vld [vmem:[%s1 + $0x8] sm:$0xf]
  %v22 = vld [vmem:[%s1 + $0xc] sm:$0xf]
  %v23 = vld [vmem:[%s0] sm:$0x3]
  %v24 = vld [vmem:[#allocation2] sm:$0x3]
  %v25 = vpack.c.bf16 %v24, %v24
  %v30 = vunpack.c.l.b16 %v19
  %v31 = vunpack.c.l.b16 %v20
  %v32 = vunpack.c.l.b16 %v21
  %v33 = vunpack.c.l.b16 %v22
  %v34 = vpack.c.b16 %v31, %v30
  %v35 = vpack.c.b16 %v33, %v32
  %vm38 = vcmask 261120
  %v40 = vsel %vm38, %v25, 0
  %42 = vmatprep.subr.bf16.mxu0 0
  %43 = vmatpush1.bf16.msra.mxu0 %v34
  %44 = vmatprep.subr.bf16.mxu0 0
  %45 = vmatpush1.bf16.msra.mxu0 %v35
  %46 = vmatprep.subr.bf16.mxu0 0
  %47 = vmatpush1.bf16.msra.mxu0 0
  %48 = vmatprep.subr.bf16.mxu0 0
  %49 = vmatpush1.bf16.msra.mxu0 0
  %50 = vmatprep.subr.bf16.mxu0 0
  %51 = vmatpush1.bf16.msra.mxu0 0
  %52 = vmatprep.subr.bf16.mxu0 0
  %53 = vmatpush1.bf16.msra.mxu0 0
  %54 = vmatprep.subr.bf16.mxu0 0
  %55 = vmatpush1.bf16.msra.mxu0 0
  %56 = vmatprep.subr.bf16.mxu0 0
  %57 = vmatpush1.bf16.msra.mxu0 0
  %58 = vmatprep.subr.bf16.mxu0 0
  %59 = vmatpush1.bf16.msra.mxu0 0
  %60 = vmatprep.subr.bf16.mxu0 0
  %61 = vmatpush1.bf16.msra.mxu0 0
  %62 = vmatprep.subr.bf16.mxu0 0
  %63 = vmatpush1.bf16.msra.mxu0 0
  %64 = vmatprep.subr.bf16.mxu0 0
  %65 = vmatpush1.bf16.msra.mxu0 0
  %66 = vmatprep.subr.bf16.mxu0 0
  %67 = vmatpush1.bf16.msra.mxu0 0
  %68 = vmatprep.subr.bf16.mxu0 0
  %69 = vmatpush1.bf16.msra.mxu0 0
  %70 = vmatprep.subr.bf16.mxu0 0
  %71 = vmatpush1.bf16.msra.mxu0 0
  %72 = vmatprep.subr.bf16.mxu0 0
  %73 = vmatpush1.bf16.msra.mxu0 0
  %74 = vmatprep.mubr.bf16.mxu0 0
  %75 = vmatmul.mubr.bf16.gmra.mrb[0].mxu0 %v40
  %v76 = vpop.f32.mrb[0].mxu0
  %v77 = vadd.f32 0.0, %v76
  %v78 = vpop.f32.mrb[0].mxu0
  %v79 = vpop.f32.mrb[0].mxu0
  %v80 = vpop.f32.mrb[0].mxu0
  %81 = vdwg.mxu0
  %v82 = vadd.f32 %v23, %v77
  %v83 = vxor.u32 %v82, 2147483648
  %v84 = vmul.f32 %v83, 1.442695
  %v85 = vpow.pop %v84
  %v86 = vadd.f32 %v85, 1.0
  %v87 = vrcp.pop %v86
  %v88 = vmul.f32 1.0, %v87
  %v89 = vtanh.pop %v82
  %v90 = vld [vmem:[#allocation3] sm:$0x3]
  %92 = vrot.lane.b32.xlu0 %v90, 32
  %v93 = vpop.permute.xlu0 %92
  %v95 = vmul.f32 %v88, %v93
  %97 = vrot.lane.b32.xlu0 %v89, 64
  %v98 = vpop.permute.xlu0 %97
  %v100 = vmul.f32 %v88, %v98
  %102 = vrot.lane.b32.xlu0 %v100, 32
  %v103 = vpop.permute.xlu0 %102
  %v105 = vadd.f32 %v95, %v103
  %v106 = vtanh.pop %v105
  %108 = vrot.lane.b32.xlu0 %v106, 64
  %v109 = vpop.permute.xlu0 %108
  %v111 = vmul.f32 %v88, %v109
  %113 = vrot.lane.b32.xlu0 %v105, 96
  %v114 = vpop.permute.xlu0 %113
  %vm116 = vcmask 254976
  %117 = vst.msk [vmem:[#allocation3] sm:$0x3] %vm116, %v114
  %119 = vrot.lane.b32.xlu0 %v111, 32
  %v120 = vpop.permute.xlu0 %119
  %122 = vst.msk [vmem:[#allocation2] sm:$0x3] %vm116, %v120
  %v123 = vpack.c.bf16 %v111, %v111
  %v126 = vunpack.c.l.s4 1966171168
  %v127 = vunpack.c.0.s8 %v126
  %v128 = vlaneseq
  %v129 = vshrl.u32 %v128, 7
  %v130 = vsub.s32 %v127, %v129
  %v131 = vrot.slane %v123, %v130
  %v133 = vunpack.c.l.s4 1966171168
  %v134 = vunpack.c.0.s8 %v133
  %v135 = vlaneseq
  %v136 = vshrl.u32 %v135, 7
  %v137 = vsub.s32 %v134, %v136
  %v138 = vrot.slane %v131, %v137
  %139 = vrot.lane.b32.xlu0 %v138, 32
  %v140 = vpop.permute.xlu0 %139
  %vm142 = vcmask 253952
  %143 = vst.msk [vmem:[%s2] sm:$0x1] %vm142, %v140
  %s144 = scalar_lea.vmem %s0, 2
  %v145 = vld [vmem:[%s144] sm:$0x3]
  %v146 = vld [vmem:[#allocation2] sm:$0x3]
  %v147 = vpack.c.bf16 %v146, %v146
  %v149 = vsel %vm38, %v147, 0
  %151 = vmatprep.subr.bf16.mxu0 0
  %152 = vmatpush1.bf16.msra.mxu0 %v34
  %153 = vmatprep.subr.bf16.mxu0 0
  %154 = vmatpush1.bf16.msra.mxu0 %v35
  %155 = vmatprep.subr.bf16.mxu0 0
  %156 = vmatpush1.bf16.msra.mxu0 0
  %157 = vmatprep.subr.bf16.mxu0 0
  %158 = vmatpush1.bf16.msra.mxu0 0
  %159 = vmatprep.subr.bf16.mxu0 0
  %160 = vmatpush1.bf16.msra.mxu0 0
  %161 = vmatprep.subr.bf16.mxu0 0
  %162 = vmatpush1.bf16.msra.mxu0 0
  %163 = vmatprep.subr.bf16.mxu0 0
  %164 = vmatpush1.bf16.msra.mxu0 0
  %165 = vmatprep.subr.bf16.mxu0 0
  %166 = vmatpush1.bf16.msra.mxu0 0
  %167 = vmatprep.subr.bf16.mxu0 0
  %168 = vmatpush1.bf16.msra.mxu0 0
  %169 = vmatprep.subr.bf16.mxu0 0
  %170 = vmatpush1.bf16.msra.mxu0 0
  %171 = vmatprep.subr.bf16.mxu0 0
  %172 = vmatpush1.bf16.msra.mxu0 0
  %173 = vmatprep.subr.bf16.mxu0 0
  %174 = vmatpush1.bf16.msra.mxu0 0
  %175 = vmatprep.subr.bf16.mxu0 0
  %176 = vmatpush1.bf16.msra.mxu0 0
  %177 = vmatprep.subr.bf16.mxu0 0
  %178 = vmatpush1.bf16.msra.mxu0 0
  %179 = vmatprep.subr.bf16.mxu0 0
  %180 = vmatpush1.bf16.msra.mxu0 0
  %181 = vmatprep.subr.bf16.mxu0 0
  %182 = vmatpush1.bf16.msra.mxu0 0
  %183 = vmatprep.mubr.bf16.mxu0 0
  %184 = vmatmul.mubr.bf16.gmra.mrb[0].mxu0 %v149
  %v185 = vpop.f32.mrb[0].mxu0
  %v186 = vadd.f32 0.0, %v185
  %v187 = vpop.f32.mrb[0].mxu0
  %v188 = vpop.f32.mrb[0].mxu0
  %v189 = vpop.f32.mrb[0].mxu0
  %190 = vdwg.mxu0
  %v191 = vadd.f32 %v145, %v186
  %v192 = vxor.u32 %v191, 2147483648
  %v193 = vmul.f32 %v192, 1.442695
  %v194 = vpow.pop %v193
  %v195 = vadd.f32 %v194, 1.0
  %v196 = vrcp.pop %v195
  %v197 = vmul.f32 1.0, %v196
  %v198 = vtanh.pop %v191
  %v199 = vld [vmem:[#allocation3] sm:$0x3]
  %201 = vrot.lane.b32.xlu0 %v199, 32
  %v202 = vpop.permute.xlu0 %201
  %v204 = vmul.f32 %v197, %v202
  %206 = vrot.lane.b32.xlu0 %v198, 64
  %v207 = vpop.permute.xlu0 %206
  %v209 = vmul.f32 %v197, %v207
  %211 = vrot.lane.b32.xlu0 %v209, 32
  %v212 = vpop.permute.xlu0 %211
  %v214 = vadd.f32 %v204, %v212
  %v215 = vtanh.pop %v214
  %217 = vrot.lane.b32.xlu0 %v215, 64
  %v218 = vpop.permute.xlu0 %217
  %v220 = vmul.f32 %v197, %v218
  %222 = vrot.lane.b32.xlu0 %v214, 96
  %v223 = vpop.permute.xlu0 %222
  %225 = vst.msk [vmem:[#allocation3] sm:$0x3] %vm116, %v223
  %227 = vrot.lane.b32.xlu0 %v220, 32
  %v228 = vpop.permute.xlu0 %227
  %230 = vst.msk [vmem:[#allocation2] sm:$0x3] %vm116, %v228
  %v231 = vpack.c.bf16 %v220, %v220
  %v234 = vunpack.c.l.s4 1966171168
  %v235 = vunpack.c.0.s8 %v234
  %v236 = vlaneseq
  %v237 = vshrl.u32 %v236, 7
  %v238 = vsub.s32 %v235, %v237
  %v239 = vrot.slane %v231, %v238
  %v241 = vunpack.c.l.s4 1966171168
  %v242 = vunpack.c.0.s8 %v241
  %v243 = vlaneseq
  %v244 = vshrl.u32 %v243, 7
  %v245 = vsub.s32 %v242, %v244
  %v246 = vrot.slane %v239, %v245
  %247 = vrot.lane.b32.xlu0 %v246, 32
  %v248 = vpop.permute.xlu0 %247
  %s250 = scalar_lea.vmem %s2, 1
  %251 = vst.msk [vmem:[%s250] sm:$0x1] %vm142, %v248
  %s252 = scalar_lea.vmem %s0, 4
  %v253 = vld [vmem:[%s252] sm:$0x3]
  %v254 = vld [vmem:[#allocation2] sm:$0x3]
  %v255 = vpack.c.bf16 %v254, %v254
  %v257 = vsel %vm38, %v255, 0
  %259 = vmatprep.subr.bf16.mxu0 0
  %260 = vmatpush1.bf16.msra.mxu0 %v34
  %261 = vmatprep.subr.bf16.mxu0 0
  %262 = vmatpush1.bf16.msra.mxu0 %v35
  %263 = vmatprep.subr.bf16.mxu0 0
  %264 = vmatpush1.bf16.msra.mxu0 0
  %265 = vmatprep.subr.bf16.mxu0 0
  %266 = vmatpush1.bf16.msra.mxu0 0
  %267 = vmatprep.subr.bf16.mxu0 0
  %268 = vmatpush1.bf16.msra.mxu0 0
  %269 = vmatprep.subr.bf16.mxu0 0
  %270 = vmatpush1.bf16.msra.mxu0 0
  %271 = vmatprep.subr.bf16.mxu0 0
  %272 = vmatpush1.bf16.msra.mxu0 0
  %273 = vmatprep.subr.bf16.mxu0 0
  %274 = vmatpush1.bf16.msra.mxu0 0
  %275 = vmatprep.subr.bf16.mxu0 0
  %276 = vmatpush1.bf16.msra.mxu0 0
  %277 = vmatprep.subr.bf16.mxu0 0
  %278 = vmatpush1.bf16.msra.mxu0 0
  %279 = vmatprep.subr.bf16.mxu0 0
  %280 = vmatpush1.bf16.msra.mxu0 0
  %281 = vmatprep.subr.bf16.mxu0 0
  %282 = vmatpush1.bf16.msra.mxu0 0
  %283 = vmatprep.subr.bf16.mxu0 0
  %284 = vmatpush1.bf16.msra.mxu0 0
  %285 = vmatprep.subr.bf16.mxu0 0
  %286 = vmatpush1.bf16.msra.mxu0 0
  %287 = vmatprep.subr.bf16.mxu0 0
  %288 = vmatpush1.bf16.msra.mxu0 0
  %289 = vmatprep.subr.bf16.mxu0 0
  %290 = vmatpush1.bf16.msra.mxu0 0
  %291 = vmatprep.mubr.bf16.mxu0 0
  %292 = vmatmul.mubr.bf16.gmra.mrb[0].mxu0 %v257
  %v293 = vpop.f32.mrb[0].mxu0
  %v294 = vadd.f32 0.0, %v293
  %v295 = vpop.f32.mrb[0].mxu0
  %v296 = vpop.f32.mrb[0].mxu0
  %v297 = vpop.f32.mrb[0].mxu0
  %298 = vdwg.mxu0
  %v299 = vadd.f32 %v253, %v294
  %v300 = vxor.u32 %v299, 2147483648
  %v301 = vmul.f32 %v300, 1.442695
  %v302 = vpow.pop %v301
  %v303 = vadd.f32 %v302, 1.0
  %v304 = vrcp.pop %v303
  %v305 = vmul.f32 1.0, %v304
  %v306 = vtanh.pop %v299
  %v307 = vld [vmem:[#allocation3] sm:$0x3]
  %309 = vrot.lane.b32.xlu0 %v307, 32
  %v310 = vpop.permute.xlu0 %309
  %v312 = vmul.f32 %v305, %v310
  %314 = vrot.lane.b32.xlu0 %v306, 64
  %v315 = vpop.permute.xlu0 %314
  %v317 = vmul.f32 %v305, %v315
  %319 = vrot.lane.b32.xlu0 %v317, 32
  %v320 = vpop.permute.xlu0 %319
  %v322 = vadd.f32 %v312, %v320
  %v323 = vtanh.pop %v322
  %325 = vrot.lane.b32.xlu0 %v323, 64
  %v326 = vpop.permute.xlu0 %325
  %v328 = vmul.f32 %v305, %v326
  %330 = vrot.lane.b32.xlu0 %v322, 96
  %v331 = vpop.permute.xlu0 %330
  %333 = vst.msk [vmem:[#allocation3] sm:$0x3] %vm116, %v331
  %335 = vrot.lane.b32.xlu0 %v328, 32
  %v336 = vpop.permute.xlu0 %335
  %338 = vst.msk [vmem:[#allocation2] sm:$0x3] %vm116, %v336
  %v339 = vpack.c.bf16 %v328, %v328
  %v342 = vunpack.c.l.s4 1966171168
  %v343 = vunpack.c.0.s8 %v342
  %v344 = vlaneseq
  %v345 = vshrl.u32 %v344, 7
  %v346 = vsub.s32 %v343, %v345
  %v347 = vrot.slane %v339, %v346
  %v349 = vunpack.c.l.s4 1966171168
  %v350 = vunpack.c.0.s8 %v349
  %v351 = vlaneseq
  %v352 = vshrl.u32 %v351, 7
  %v353 = vsub.s32 %v350, %v352
  %v354 = vrot.slane %v347, %v353
  %355 = vrot.lane.b32.xlu0 %v354, 32
  %v356 = vpop.permute.xlu0 %355
  %s358 = scalar_lea.vmem %s2, 2
  %359 = vst.msk [vmem:[%s358] sm:$0x1] %vm142, %v356
  %s360 = scalar_lea.vmem %s0, 6
  %v361 = vld [vmem:[%s360] sm:$0x3]
  %v362 = vld [vmem:[#allocation2] sm:$0x3]
  %v363 = vpack.c.bf16 %v362, %v362
  %v365 = vsel %vm38, %v363, 0
  %367 = vmatprep.subr.bf16.mxu0 0
  %368 = vmatpush1.bf16.msra.mxu0 %v34
  %369 = vmatprep.subr.bf16.mxu0 0
  %370 = vmatpush1.bf16.msra.mxu0 %v35
  %371 = vmatprep.subr.bf16.mxu0 0
  %372 = vmatpush1.bf16.msra.mxu0 0
  %373 = vmatprep.subr.bf16.mxu0 0
  %374 = vmatpush1.bf16.msra.mxu0 0
  %375 = vmatprep.subr.bf16.mxu0 0
  %376 = vmatpush1.bf16.msra.mxu0 0
  %377 = vmatprep.subr.bf16.mxu0 0
  %378 = vmatpush1.bf16.msra.mxu0 0
  %379 = vmatprep.subr.bf16.mxu0 0
  %380 = vmatpush1.bf16.msra.mxu0 0
  %381 = vmatprep.subr.bf16.mxu0 0
  %382 = vmatpush1.bf16.msra.mxu0 0
  %383 = vmatprep.subr.bf16.mxu0 0
  %384 = vmatpush1.bf16.msra.mxu0 0
  %385 = vmatprep.subr.bf16.mxu0 0
  %386 = vmatpush1.bf16.msra.mxu0 0
  %387 = vmatprep.subr.bf16.mxu0 0
  %388 = vmatpush1.bf16.msra.mxu0 0
  %389 = vmatprep.subr.bf16.mxu0 0
  %390 = vmatpush1.bf16.msra.mxu0 0
  %391 = vmatprep.subr.bf16.mxu0 0
  %392 = vmatpush1.bf16.msra.mxu0 0
  %393 = vmatprep.subr.bf16.mxu0 0
  %394 = vmatpush1.bf16.msra.mxu0 0
  %395 = vmatprep.subr.bf16.mxu0 0
  %396 = vmatpush1.bf16.msra.mxu0 0
  %397 = vmatprep.subr.bf16.mxu0 0
  %398 = vmatpush1.bf16.msra.mxu0 0
  %399 = vmatprep.mubr.bf16.mxu0 0
  %400 = vmatmul.mubr.bf16.gmra.mrb[0].mxu0 %v365
  %v401 = vpop.f32.mrb[0].mxu0
  %v402 = vadd.f32 0.0, %v401
  %v403 = vpop.f32.mrb[0].mxu0
  %v404 = vpop.f32.mrb[0].mxu0
  %v405 = vpop.f32.mrb[0].mxu0
  %406 = vdwg.mxu0
  %v407 = vadd.f32 %v361, %v402
  %v408 = vxor.u32 %v407, 2147483648
  %v409 = vmul.f32 %v408, 1.442695
  %v410 = vpow.pop %v409
  %v411 = vadd.f32 %v410, 1.0
  %v412 = vrcp.pop %v411
  %v413 = vmul.f32 1.0, %v412
  %v414 = vtanh.pop %v407
  %v415 = vld [vmem:[#allocation3] sm:$0x3]
  %417 = vrot.lane.b32.xlu0 %v415, 32
  %v418 = vpop.permute.xlu0 %417
  %v420 = vmul.f32 %v413, %v418
  %422 = vrot.lane.b32.xlu0 %v414, 64
  %v423 = vpop.permute.xlu0 %422
  %v425 = vmul.f32 %v413, %v423
  %427 = vrot.lane.b32.xlu0 %v425, 32
  %v428 = vpop.permute.xlu0 %427
  %v430 = vadd.f32 %v420, %v428
  %v431 = vtanh.pop %v430
  %433 = vrot.lane.b32.xlu0 %v431, 64
  %v434 = vpop.permute.xlu0 %433
  %v436 = vmul.f32 %v413, %v434
  %438 = vrot.lane.b32.xlu0 %v430, 96
  %v439 = vpop.permute.xlu0 %438
  %441 = vst.msk [vmem:[#allocation3] sm:$0x3] %vm116, %v439
  %443 = vrot.lane.b32.xlu0 %v436, 32
  %v444 = vpop.permute.xlu0 %443
  %446 = vst.msk [vmem:[#allocation2] sm:$0x3] %vm116, %v444
  %v447 = vpack.c.bf16 %v436, %v436
  %v450 = vunpack.c.l.s4 1966171168
  %v451 = vunpack.c.0.s8 %v450
  %v452 = vlaneseq
  %v453 = vshrl.u32 %v452, 7
  %v454 = vsub.s32 %v451, %v453
  %v455 = vrot.slane %v447, %v454
  %v457 = vunpack.c.l.s4 1966171168
  %v458 = vunpack.c.0.s8 %v457
  %v459 = vlaneseq
  %v460 = vshrl.u32 %v459, 7
  %v461 = vsub.s32 %v458, %v460
  %v462 = vrot.slane %v455, %v461
  %463 = vrot.lane.b32.xlu0 %v462, 32
  %v464 = vpop.permute.xlu0 %463
  %s466 = scalar_lea.vmem %s2, 3
  %467 = vst.msk [vmem:[%s466] sm:$0x1] %vm142, %v464
  // Predicated region
  $region14: #{forward.23} parent=0 // pred_check
    _
  $region15: #{forward.23} parent=0 // pred_check_branch
    %469 = sbr.rel (0) target = $region17
  $region16: #{forward.23} parent=0 // pred_region
    _
  $region17: #{forward.23} parent=0 // pred_fallthru
    _
  // Predicated region
  $region18: #{forward.23} parent=0 // pred_check
    _
  $region19: #{forward.23} parent=0 // pred_check_branch
    %471 = sbr.rel (0) target = $region21
  $region20: #{forward.23} parent=0 // pred_region
    _
  $region21: #{forward.23} parent=0 // pred_fallthru
    _

// kernel: forward.24
$region0: #{forward.24}
  #allocation0 [shape = 'u32[]', space=smem, size = 0x4, offset = 0x4, fixed_abs, tag = 'smem constant byte address 0x4 - core index']
  #allocation1 [shape = 'u32[144,128]{1,0:T(1,128)}', space=vmem, size = 0x12000, scoped, tag = 'internal scratch']
  %s0 = inlined_call_operand.vmem [shape: bf16[8,32], index: 0, kind: input, shape index: {}]
  %s1 = inlined_call_operand.vmem [shape: bf16[32,128], index: 1, kind: input, shape index: {}]
  %s2 = inlined_call_operand.vmem [shape: f32[1,128], index: 2, kind: input, shape index: {}]
  %s3 = inlined_call_operand.vmem [shape: f32[8,128], index: 3, kind: output, shape index: {}]
  %s4 = sld [smem:[#allocation0]]
  $region22: #{forward.24} parent=0
    _
  %s6 = ssub.s32 1, %s4
  %s7 = scalar_select 0, %s6, %s4
  // Predicated region
  $region2: #{forward.24} parent=0 // pred_check
    _
  $region3: #{forward.24} parent=0 // pred_check_branch
    %9 = sbr.rel (0) target = $region5
  $region4: #{forward.24} parent=0 // pred_region
    _
  $region5: #{forward.24} parent=0 // pred_fallthru
    _
  // Predicated region
  $region6: #{forward.24} parent=0 // pred_check
    _
  $region7: #{forward.24} parent=0 // pred_check_branch
    %11 = sbr.rel (0) target = $region9
  $region8: #{forward.24} parent=0 // pred_region
    _
  $region9: #{forward.24} parent=0 // pred_fallthru
    _
  // Predicated region
  $region10: #{forward.24} parent=0 // pred_check
    _
  $region11: #{forward.24} parent=0 // pred_check_branch
    %13 = sbr.rel (0) target = $region13
  $region12: #{forward.24} parent=0 // pred_region
    _
  $region13: #{forward.24} parent=0 // pred_fallthru
    _
  %v15 = vld [vmem:[%s0] sm:$0xf]
  %v16 = vld [vmem:[%s1] sm:$0xf]
  %v17 = vld [vmem:[%s1 + $0x4] sm:$0xf]
  %v18 = vld [vmem:[%s1 + $0x8] sm:$0xf]
  %v19 = vld [vmem:[%s1 + $0xc] sm:$0xf]
  %v20 = vld [vmem:[%s2] sm:$0x1]
  %v22 = vlaneseq
  %v23 = vshrl.u32 %v22, 7
  %v24 = vsub.s32 0, %v23
  %v25 = vrot.slane %v20, %v24
  %v31 = vunpack.c.l.b16 %v16
  %v32 = vunpack.c.l.b16 %v17
  %v33 = vunpack.c.l.b16 %v18
  %v34 = vunpack.c.l.b16 %v19
  %v35 = vpack.c.b16 %v32, %v31
  %v36 = vpack.c.b16 %v34, %v33
  %vm39 = vcmask 261120
  %v41 = vsel %vm39, %v15, 0
  %43 = vmatprep.subr.bf16.mxu0 0
  %44 = vmatpush1.bf16.msra.mxu0 %v35
  %45 = vmatprep.subr.bf16.mxu0 0
  %46 = vmatpush1.bf16.msra.mxu0 %v36
  %47 = vmatprep.subr.bf16.mxu0 0
  %48 = vmatpush1.bf16.msra.mxu0 0
  %49 = vmatprep.subr.bf16.mxu0 0
  %50 = vmatpush1.bf16.msra.mxu0 0
  %51 = vmatprep.subr.bf16.mxu0 0
  %52 = vmatpush1.bf16.msra.mxu0 0
  %53 = vmatprep.subr.bf16.mxu0 0
  %54 = vmatpush1.bf16.msra.mxu0 0
  %55 = vmatprep.subr.bf16.mxu0 0
  %56 = vmatpush1.bf16.msra.mxu0 0
  %57 = vmatprep.subr.bf16.mxu0 0
  %58 = vmatpush1.bf16.msra.mxu0 0
  %59 = vmatprep.subr.bf16.mxu0 0
  %60 = vmatpush1.bf16.msra.mxu0 0
  %61 = vmatprep.subr.bf16.mxu0 0
  %62 = vmatpush1.bf16.msra.mxu0 0
  %63 = vmatprep.subr.bf16.mxu0 0
  %64 = vmatpush1.bf16.msra.mxu0 0
  %65 = vmatprep.subr.bf16.mxu0 0
  %66 = vmatpush1.bf16.msra.mxu0 0
  %67 = vmatprep.subr.bf16.mxu0 0
  %68 = vmatpush1.bf16.msra.mxu0 0
  %69 = vmatprep.subr.bf16.mxu0 0
  %70 = vmatpush1.bf16.msra.mxu0 0
  %71 = vmatprep.subr.bf16.mxu0 0
  %72 = vmatpush1.bf16.msra.mxu0 0
  %73 = vmatprep.subr.bf16.mxu0 0
  %74 = vmatpush1.bf16.msra.mxu0 0
  %75 = vmatprep.mubr.bf16.mxu0 0
  %76 = vmatmul.mubr.bf16.gmra.mrb[0].mxu0 %v41
  %v77 = vpop.f32.mrb[0].mxu0
  %v78 = vadd.f32 %v25, %v77
  %v79 = vpop.f32.mrb[0].mxu0
  %v80 = vpop.f32.mrb[0].mxu0
  %v81 = vpop.f32.mrb[0].mxu0
  %82 = vdwg.mxu0
  %83 = vst [vmem:[%s3] sm:$0xff] %v78
  // Predicated region
  $region14: #{forward.24} parent=0 // pred_check
    _
  $region15: #{forward.24} parent=0 // pred_check_branch
    %85 = sbr.rel (0) target = $region17
  $region16: #{forward.24} parent=0 // pred_region
    _
  $region17: #{forward.24} parent=0 // pred_fallthru
    _
  // Predicated region
  $region18: #{forward.24} parent=0 // pred_check
    _
  $region19: #{forward.24} parent=0 // pred_check_branch
    %87 = sbr.rel (0) target = $region21
  $region20: #{forward.24} parent=0 // pred_region
    _
  $region21: #{forward.24} parent=0 // pred_fallthru
    _

// kernel: forward.26
$region0: #{forward.26}
  #allocation0 [shape = 'u32[]', space=smem, size = 0x4, offset = 0x4, fixed_abs, tag = 'smem constant byte address 0x4 - core index']
  #allocation1 [shape = 'u32[144,128]{1,0:T(1,128)}', space=vmem, size = 0x12000, scoped, tag = 'internal scratch']
  %s0 = inlined_call_operand.vmem [shape: bf16[8,32], index: 0, kind: input, shape index: {}]
  %s1 = inlined_call_operand.vmem [shape: bf16[32,96], index: 1, kind: input, shape index: {}]
  %s2 = inlined_call_operand.vmem [shape: f32[1,96], index: 2, kind: input, shape index: {}]
  %s3 = inlined_call_operand.vmem [shape: bf16[8,96], index: 3, kind: output, shape index: {}]
  %s4 = sld [smem:[#allocation0]]
  $region22: #{forward.26} parent=0
    _
  %s6 = ssub.s32 1, %s4
  %s7 = scalar_select 0, %s6, %s4
  // Predicated region
  $region2: #{forward.26} parent=0 // pred_check
    _
  $region3: #{forward.26} parent=0 // pred_check_branch
    %9 = sbr.rel (0) target = $region5
  $region4: #{forward.26} parent=0 // pred_region
    _
  $region5: #{forward.26} parent=0 // pred_fallthru
    _
  // Predicated region
  $region6: #{forward.26} parent=0 // pred_check
    _
  $region7: #{forward.26} parent=0 // pred_check_branch
    %11 = sbr.rel (0) target = $region9
  $region8: #{forward.26} parent=0 // pred_region
    _
  $region9: #{forward.26} parent=0 // pred_fallthru
    _
  // Predicated region
  $region10: #{forward.26} parent=0 // pred_check
    _
  $region11: #{forward.26} parent=0 // pred_check_branch
    %13 = sbr.rel (0) target = $region13
  $region12: #{forward.26} parent=0 // pred_region
    _
  $region13: #{forward.26} parent=0 // pred_fallthru
    _
  %v15 = vld [vmem:[%s0] sm:$0xf]
  %v16 = vld [vmem:[%s1] sm:$0xf]
  %v17 = vld [vmem:[%s1 + $0x4] sm:$0xf]
  %v18 = vld [vmem:[%s1 + $0x8] sm:$0xf]
  %v19 = vld [vmem:[%s1 + $0xc] sm:$0xf]
  %v20 = vld [vmem:[%s2] sm:$0x1]
  %v22 = vlaneseq
  %v23 = vshrl.u32 %v22, 7
  %v24 = vsub.s32 0, %v23
  %v25 = vrot.slane %v20, %v24
  %v31 = vunpack.c.l.b16 %v16
  %v32 = vunpack.c.l.b16 %v17
  %v33 = vunpack.c.l.b16 %v18
  %v34 = vunpack.c.l.b16 %v19
  %v35 = vpack.c.b16 %v32, %v31
  %v36 = vpack.c.b16 %v34, %v33
  %vm39 = vcmask 261120
  %v41 = vsel %vm39, %v15, 0
  %43 = vmatprep.subr.bf16.mxu0 0
  %44 = vmatpush1.bf16.msra.mxu0 %v35
  %45 = vmatprep.subr.bf16.mxu0 0
  %46 = vmatpush1.bf16.msra.mxu0 %v36
  %47 = vmatprep.subr.bf16.mxu0 0
  %48 = vmatpush1.bf16.msra.mxu0 0
  %49 = vmatprep.subr.bf16.mxu0 0
  %50 = vmatpush1.bf16.msra.mxu0 0
  %51 = vmatprep.subr.bf16.mxu0 0
  %52 = vmatpush1.bf16.msra.mxu0 0
  %53 = vmatprep.subr.bf16.mxu0 0
  %54 = vmatpush1.bf16.msra.mxu0 0
  %55 = vmatprep.subr.bf16.mxu0 0
  %56 = vmatpush1.bf16.msra.mxu0 0
  %57 = vmatprep.subr.bf16.mxu0 0
  %58 = vmatpush1.bf16.msra.mxu0 0
  %59 = vmatprep.subr.bf16.mxu0 0
  %60 = vmatpush1.bf16.msra.mxu0 0
  %61 = vmatprep.subr.bf16.mxu0 0
  %62 = vmatpush1.bf16.msra.mxu0 0
  %63 = vmatprep.subr.bf16.mxu0 0
  %64 = vmatpush1.bf16.msra.mxu0 0
  %65 = vmatprep.subr.bf16.mxu0 0
  %66 = vmatpush1.bf16.msra.mxu0 0
  %67 = vmatprep.subr.bf16.mxu0 0
  %68 = vmatpush1.bf16.msra.mxu0 0
  %69 = vmatprep.subr.bf16.mxu0 0
  %70 = vmatpush1.bf16.msra.mxu0 0
  %71 = vmatprep.subr.bf16.mxu0 0
  %72 = vmatpush1.bf16.msra.mxu0 0
  %73 = vmatprep.subr.bf16.mxu0 0
  %74 = vmatpush1.bf16.msra.mxu0 0
  %75 = vmatprep.mubr.bf16.mxu0 0
  %76 = vmatmul.mubr.bf16.gmra.mrb[0].mxu0 %v41
  %v77 = vpop.f32.mrb[0].mxu0
  %v78 = vadd.f32 %v25, %v77
  %v79 = vpop.f32.mrb[0].mxu0
  %v80 = vpop.f32.mrb[0].mxu0
  %v81 = vpop.f32.mrb[0].mxu0
  %82 = vdwg.mxu0
  %v83 = vpack.c.bf16 %v78, %v78
  %vm84 = vcmask 781312
  %85 = vst.msk [vmem:[%s3] sm:$0xf] %vm84, %v83
  // Predicated region
  $region14: #{forward.26} parent=0 // pred_check
    _
  $region15: #{forward.26} parent=0 // pred_check_branch
    %87 = sbr.rel (0) target = $region17
  $region16: #{forward.26} parent=0 // pred_region
    _
  $region17: #{forward.26} parent=0 // pred_fallthru
    _
  // Predicated region
  $region18: #{forward.26} parent=0 // pred_check
    _
  $region19: #{forward.26} parent=0 // pred_check_branch
    %89 = sbr.rel (0) target = $region21
  $region20: #{forward.26} parent=0 // pred_region
    _
  $region21: #{forward.26} parent=0 // pred_fallthru
    _

// kernel: forward.25
$region0: #{forward.25}
  #allocation0 [shape = 'u32[]', space=smem, size = 0x4, offset = 0x4, fixed_abs, tag = 'smem constant byte address 0x4 - core index']
  #allocation1 [shape = 'u32[144,128]{1,0:T(1,128)}', space=vmem, size = 0x12000, scoped, tag = 'internal scratch']
  #allocation2 [shape = 'f32[2,32]{1,0:T(2,128)}', space=vmem, size = 0x400, scoped, tag = 'scratch operand']
  #allocation3 [shape = 'f32[2,32]{1,0:T(2,128)}', space=vmem, size = 0x400, scoped, tag = 'scratch operand']
  %s0 = inlined_call_operand.vmem [shape: f32[4,2,128], index: 0, kind: input, shape index: {}]
  %s1 = inlined_call_operand.vmem [shape: bf16[32,128], index: 1, kind: input, shape index: {}]
  %s2 = inlined_call_operand.vmem [shape: f32[4,2,32], index: 2, kind: output, shape index: {}]
  %s3 = sld [smem:[#allocation0]]
  $region22: #{forward.25} parent=0
    _
  %s5 = ssub.s32 1, %s3
  %s6 = scalar_select 0, %s5, %s3
  // Predicated region
  $region2: #{forward.25} parent=0 // pred_check
    _
  $region3: #{forward.25} parent=0 // pred_check_branch
    %8 = sbr.rel (0) target = $region5
  $region4: #{forward.25} parent=0 // pred_region
    _
  $region5: #{forward.25} parent=0 // pred_fallthru
    _
  // Predicated region
  $region6: #{forward.25} parent=0 // pred_check
    _
  $region7: #{forward.25} parent=0 // pred_check_branch
    %10 = sbr.rel (0) target = $region9
  $region8: #{forward.25} parent=0 // pred_region
    _
  $region9: #{forward.25} parent=0 // pred_fallthru
    _
  %p12 = scmp.eq.s32.totalorder 0, 0
  // Predicated region
  $region10: #{forward.25} parent=0 // pred_check
    %p13 = pneg %p12
  $region11: #{forward.25} parent=0 // pred_check_branch
    %15 = sbr.rel (%p13) target = $region13
  $region12: #{forward.25} parent=0 // pred_region
    %vm16 = vcmask 254976
    %17 = vst.msk [vmem:[#allocation2] sm:$0x3] %vm16, 0.0
    %18 = vst.msk [vmem:[#allocation3] sm:$0x3] %vm16, 0.0
  $region13: #{forward.25} parent=0 // pred_fallthru
    _
  %v19 = vld [vmem:[%s1] sm:$0xf]
  %v20 = vld [vmem:[%s1 + $0x4] sm:$0xf]
  %v21 = vld [vmem:[%s1 + $0x8] sm:$0xf]
  %v22 = vld [vmem:[%s1 + $0xc] sm:$0xf]
  %v23 = vld [vmem:[%s0] sm:$0x3]
  %v24 = vld [vmem:[#allocation2] sm:$0x3]
  %v25 = vpack.c.bf16 %v24, %v24
  %v30 = vunpack.c.l.b16 %v19
  %v31 = vunpack.c.l.b16 %v20
  %v32 = vunpack.c.l.b16 %v21
  %v33 = vunpack.c.l.b16 %v22
  %v34 = vpack.c.b16 %v31, %v30
  %v35 = vpack.c.b16 %v33, %v32
  %vm38 = vcmask 261120
  %v40 = vsel %vm38, %v25, 0
  %42 = vmatprep.subr.bf16.mxu0 0
  %43 = vmatpush1.bf16.msra.mxu0 %v34
  %44 = vmatprep.subr.bf16.mxu0 0
  %45 = vmatpush1.bf16.msra.mxu0 %v35
  %46 = vmatprep.subr.bf16.mxu0 0
  %47 = vmatpush1.bf16.msra.mxu0 0
  %48 = vmatprep.subr.bf16.mxu0 0
  %49 = vmatpush1.bf16.msra.mxu0 0
  %50 = vmatprep.subr.bf16.mxu0 0
  %51 = vmatpush1.bf16.msra.mxu0 0
  %52 = vmatprep.subr.bf16.mxu0 0
  %53 = vmatpush1.bf16.msra.mxu0 0
  %54 = vmatprep.subr.bf16.mxu0 0
  %55 = vmatpush1.bf16.msra.mxu0 0
  %56 = vmatprep.subr.bf16.mxu0 0
  %57 = vmatpush1.bf16.msra.mxu0 0
  %58 = vmatprep.subr.bf16.mxu0 0
  %59 = vmatpush1.bf16.msra.mxu0 0
  %60 = vmatprep.subr.bf16.mxu0 0
  %61 = vmatpush1.bf16.msra.mxu0 0
  %62 = vmatprep.subr.bf16.mxu0 0
  %63 = vmatpush1.bf16.msra.mxu0 0
  %64 = vmatprep.subr.bf16.mxu0 0
  %65 = vmatpush1.bf16.msra.mxu0 0
  %66 = vmatprep.subr.bf16.mxu0 0
  %67 = vmatpush1.bf16.msra.mxu0 0
  %68 = vmatprep.subr.bf16.mxu0 0
  %69 = vmatpush1.bf16.msra.mxu0 0
  %70 = vmatprep.subr.bf16.mxu0 0
  %71 = vmatpush1.bf16.msra.mxu0 0
  %72 = vmatprep.subr.bf16.mxu0 0
  %73 = vmatpush1.bf16.msra.mxu0 0
  %74 = vmatprep.mubr.bf16.mxu0 0
  %75 = vmatmul.mubr.bf16.gmra.mrb[0].mxu0 %v40
  %v76 = vpop.f32.mrb[0].mxu0
  %v77 = vadd.f32 0.0, %v76
  %v78 = vpop.f32.mrb[0].mxu0
  %v79 = vpop.f32.mrb[0].mxu0
  %v80 = vpop.f32.mrb[0].mxu0
  %81 = vdwg.mxu0
  %v82 = vadd.f32 %v23, %v77
  %v83 = vxor.u32 %v82, 2147483648
  %v84 = vmul.f32 %v83, 1.442695
  %v85 = vpow.pop %v84
  %v86 = vadd.f32 %v85, 1.0
  %v87 = vrcp.pop %v86
  %v88 = vmul.f32 1.0, %v87
  %v89 = vtanh.pop %v82
  %v90 = vld [vmem:[#allocation3] sm:$0x3]
  %92 = vrot.lane.b32.xlu0 %v90, 32
  %v93 = vpop.permute.xlu0 %92
  %v95 = vmul.f32 %v88, %v93
  %97 = vrot.lane.b32.xlu0 %v89, 64
  %v98 = vpop.permute.xlu0 %97
  %v100 = vmul.f32 %v88, %v98
  %102 = vrot.lane.b32.xlu0 %v100, 32
  %v103 = vpop.permute.xlu0 %102
  %v105 = vadd.f32 %v95, %v103
  %v106 = vtanh.pop %v105
  %108 = vrot.lane.b32.xlu0 %v106, 64
  %v109 = vpop.permute.xlu0 %108
  %v111 = vmul.f32 %v88, %v109
  %113 = vrot.lane.b32.xlu0 %v105, 96
  %v114 = vpop.permute.xlu0 %113
  %vm116 = vcmask 254976
  %117 = vst.msk [vmem:[#allocation3] sm:$0x3] %vm116, %v114
  %119 = vrot.lane.b32.xlu0 %v111, 32
  %v120 = vpop.permute.xlu0 %119
  %122 = vst.msk [vmem:[#allocation2] sm:$0x3] %vm116, %v120
  %123 = vst.msk [vmem:[%s2] sm:$0x3] %vm116, %v120
  %s124 = scalar_lea.vmem %s0, 2
  %v125 = vld [vmem:[%s124] sm:$0x3]
  %v126 = vld [vmem:[#allocation2] sm:$0x3]
  %v127 = vpack.c.bf16 %v126, %v126
  %v129 = vsel %vm38, %v127, 0
  %131 = vmatprep.subr.bf16.mxu0 0
  %132 = vmatpush1.bf16.msra.mxu0 %v34
  %133 = vmatprep.subr.bf16.mxu0 0
  %134 = vmatpush1.bf16.msra.mxu0 %v35
  %135 = vmatprep.subr.bf16.mxu0 0
  %136 = vmatpush1.bf16.msra.mxu0 0
  %137 = vmatprep.subr.bf16.mxu0 0
  %138 = vmatpush1.bf16.msra.mxu0 0
  %139 = vmatprep.subr.bf16.mxu0 0
  %140 = vmatpush1.bf16.msra.mxu0 0
  %141 = vmatprep.subr.bf16.mxu0 0
  %142 = vmatpush1.bf16.msra.mxu0 0
  %143 = vmatprep.subr.bf16.mxu0 0
  %144 = vmatpush1.bf16.msra.mxu0 0
  %145 = vmatprep.subr.bf16.mxu0 0
  %146 = vmatpush1.bf16.msra.mxu0 0
  %147 = vmatprep.subr.bf16.mxu0 0
  %148 = vmatpush1.bf16.msra.mxu0 0
  %149 = vmatprep.subr.bf16.mxu0 0
  %150 = vmatpush1.bf16.msra.mxu0 0
  %151 = vmatprep.subr.bf16.mxu0 0
  %152 = vmatpush1.bf16.msra.mxu0 0
  %153 = vmatprep.subr.bf16.mxu0 0
  %154 = vmatpush1.bf16.msra.mxu0 0
  %155 = vmatprep.subr.bf16.mxu0 0
  %156 = vmatpush1.bf16.msra.mxu0 0
  %157 = vmatprep.subr.bf16.mxu0 0
  %158 = vmatpush1.bf16.msra.mxu0 0
  %159 = vmatprep.subr.bf16.mxu0 0
  %160 = vmatpush1.bf16.msra.mxu0 0
  %161 = vmatprep.subr.bf16.mxu0 0
  %162 = vmatpush1.bf16.msra.mxu0 0
  %163 = vmatprep.mubr.bf16.mxu0 0
  %164 = vmatmul.mubr.bf16.gmra.mrb[0].mxu0 %v129
  %v165 = vpop.f32.mrb[0].mxu0
  %v166 = vadd.f32 0.0, %v165
  %v167 = vpop.f32.mrb[0].mxu0
  %v168 = vpop.f32.mrb[0].mxu0
  %v169 = vpop.f32.mrb[0].mxu0
  %170 = vdwg.mxu0
  %v171 = vadd.f32 %v125, %v166
  %v172 = vxor.u32 %v171, 2147483648
  %v173 = vmul.f32 %v172, 1.442695
  %v174 = vpow.pop %v173
  %v175 = vadd.f32 %v174, 1.0
  %v176 = vrcp.pop %v175
  %v177 = vmul.f32 1.0, %v176
  %v178 = vtanh.pop %v171
  %v179 = vld [vmem:[#allocation3] sm:$0x3]
  %181 = vrot.lane.b32.xlu0 %v179, 32
  %v182 = vpop.permute.xlu0 %181
  %v184 = vmul.f32 %v177, %v182
  %186 = vrot.lane.b32.xlu0 %v178, 64
  %v187 = vpop.permute.xlu0 %186
  %v189 = vmul.f32 %v177, %v187
  %191 = vrot.lane.b32.xlu0 %v189, 32
  %v192 = vpop.permute.xlu0 %191
  %v194 = vadd.f32 %v184, %v192
  %v195 = vtanh.pop %v194
  %197 = vrot.lane.b32.xlu0 %v195, 64
  %v198 = vpop.permute.xlu0 %197
  %v200 = vmul.f32 %v177, %v198
  %202 = vrot.lane.b32.xlu0 %v194, 96
  %v203 = vpop.permute.xlu0 %202
  %205 = vst.msk [vmem:[#allocation3] sm:$0x3] %vm116, %v203
  %207 = vrot.lane.b32.xlu0 %v200, 32
  %v208 = vpop.permute.xlu0 %207
  %210 = vst.msk [vmem:[#allocation2] sm:$0x3] %vm116, %v208
  %s211 = scalar_lea.vmem %s2, 2
  %212 = vst.msk [vmem:[%s211] sm:$0x3] %vm116, %v208
  %s213 = scalar_lea.vmem %s0, 4
  %v214 = vld [vmem:[%s213] sm:$0x3]
  %v215 = vld [vmem:[#allocation2] sm:$0x3]
  %v216 = vpack.c.bf16 %v215, %v215
  %v218 = vsel %vm38, %v216, 0
  %220 = vmatprep.subr.bf16.mxu0 0
  %221 = vmatpush1.bf16.msra.mxu0 %v34
  %222 = vmatprep.subr.bf16.mxu0 0
  %223 = vmatpush1.bf16.msra.mxu0 %v35
  %224 = vmatprep.subr.bf16.mxu0 0
  %225 = vmatpush1.bf16.msra.mxu0 0
  %226 = vmatprep.subr.bf16.mxu0 0
  %227 = vmatpush1.bf16.msra.mxu0 0
  %228 = vmatprep.subr.bf16.mxu0 0
  %229 = vmatpush1.bf16.msra.mxu0 0
  %230 = vmatprep.subr.bf16.mxu0 0
  %231 = vmatpush1.bf16.msra.mxu0 0
  %232 = vmatprep.subr.bf16.mxu0 0
  %233 = vmatpush1.bf16.msra.mxu0 0
  %234 = vmatprep.subr.bf16.mxu0 0
  %235 = vmatpush1.bf16.msra.mxu0 0
  %236 = vmatprep.subr.bf16.mxu0 0
  %237 = vmatpush1.bf16.msra.mxu0 0
  %238 = vmatprep.subr.bf16.mxu0 0
  %239 = vmatpush1.bf16.msra.mxu0 0
  %240 = vmatprep.subr.bf16.mxu0 0
  %241 = vmatpush1.bf16.msra.mxu0 0
  %242 = vmatprep.subr.bf16.mxu0 0
  %243 = vmatpush1.bf16.msra.mxu0 0
  %244 = vmatprep.subr.bf16.mxu0 0
  %245 = vmatpush1.bf16.msra.mxu0 0
  %246 = vmatprep.subr.bf16.mxu0 0
  %247 = vmatpush1.bf16.msra.mxu0 0
  %248 = vmatprep.subr.bf16.mxu0 0
  %249 = vmatpush1.bf16.msra.mxu0 0
  %250 = vmatprep.subr.bf16.mxu0 0
  %251 = vmatpush1.bf16.msra.mxu0 0
  %252 = vmatprep.mubr.bf16.mxu0 0
  %253 = vmatmul.mubr.bf16.gmra.mrb[0].mxu0 %v218
  %v254 = vpop.f32.mrb[0].mxu0
  %v255 = vadd.f32 0.0, %v254
  %v256 = vpop.f32.mrb[0].mxu0
  %v257 = vpop.f32.mrb[0].mxu0
  %v258 = vpop.f32.mrb[0].mxu0
  %259 = vdwg.mxu0
  %v260 = vadd.f32 %v214, %v255
  %v261 = vxor.u32 %v260, 2147483648
  %v262 = vmul.f32 %v261, 1.442695
  %v263 = vpow.pop %v262
  %v264 = vadd.f32 %v263, 1.0
  %v265 = vrcp.pop %v264
  %v266 = vmul.f32 1.0, %v265
  %v267 = vtanh.pop %v260
  %v268 = vld [vmem:[#allocation3] sm:$0x3]
  %270 = vrot.lane.b32.xlu0 %v268, 32
  %v271 = vpop.permute.xlu0 %270
  %v273 = vmul.f32 %v266, %v271
  %275 = vrot.lane.b32.xlu0 %v267, 64
  %v276 = vpop.permute.xlu0 %275
  %v278 = vmul.f32 %v266, %v276
  %280 = vrot.lane.b32.xlu0 %v278, 32
  %v281 = vpop.permute.xlu0 %280
  %v283 = vadd.f32 %v273, %v281
  %v284 = vtanh.pop %v283
  %286 = vrot.lane.b32.xlu0 %v284, 64
  %v287 = vpop.permute.xlu0 %286
  %v289 = vmul.f32 %v266, %v287
  %291 = vrot.lane.b32.xlu0 %v283, 96
  %v292 = vpop.permute.xlu0 %291
  %294 = vst.msk [vmem:[#allocation3] sm:$0x3] %vm116, %v292
  %296 = vrot.lane.b32.xlu0 %v289, 32
  %v297 = vpop.permute.xlu0 %296
  %299 = vst.msk [vmem:[#allocation2] sm:$0x3] %vm116, %v297
  %s300 = scalar_lea.vmem %s2, 4
  %301 = vst.msk [vmem:[%s300] sm:$0x3] %vm116, %v297
  %s302 = scalar_lea.vmem %s0, 6
  %v303 = vld [vmem:[%s302] sm:$0x3]
  %v304 = vld [vmem:[#allocation2] sm:$0x3]
  %v305 = vpack.c.bf16 %v304, %v304
  %v307 = vsel %vm38, %v305, 0
  %309 = vmatprep.subr.bf16.mxu0 0
  %310 = vmatpush1.bf16.msra.mxu0 %v34
  %311 = vmatprep.subr.bf16.mxu0 0
  %312 = vmatpush1.bf16.msra.mxu0 %v35
  %313 = vmatprep.subr.bf16.mxu0 0
  %314 = vmatpush1.bf16.msra.mxu0 0
  %315 = vmatprep.subr.bf16.mxu0 0
  %316 = vmatpush1.bf16.msra.mxu0 0
  %317 = vmatprep.subr.bf16.mxu0 0
  %318 = vmatpush1.bf16.msra.mxu0 0
  %319 = vmatprep.subr.bf16.mxu0 0
  %320 = vmatpush1.bf16.msra.mxu0 0
  %321 = vmatprep.subr.bf16.mxu0 0
  %322 = vmatpush1.bf16.msra.mxu0 0
  %323 = vmatprep.subr.bf16.mxu0 0
  %324 = vmatpush1.bf16.msra.mxu0 0
  %325 = vmatprep.subr.bf16.mxu0 0
  %326 = vmatpush1.bf16.msra.mxu0 0
  %327 = vmatprep.subr.bf16.mxu0 0
  %328 = vmatpush1.bf16.msra.mxu0 0
  %329 = vmatprep.subr.bf16.mxu0 0
  %330 = vmatpush1.bf16.msra.mxu0 0
  %331 = vmatprep.subr.bf16.mxu0 0
  %332 = vmatpush1.bf16.msra.mxu0 0
  %333 = vmatprep.subr.bf16.mxu0 0
  %334 = vmatpush1.bf16.msra.mxu0 0
  %335 = vmatprep.subr.bf16.mxu0 0
  %336 = vmatpush1.bf16.msra.mxu0 0
  %337 = vmatprep.subr.bf16.mxu0 0
  %338 = vmatpush1.bf16.msra.mxu0 0
  %339 = vmatprep.subr.bf16.mxu0 0
  %340 = vmatpush1.bf16.msra.mxu0 0
  %341 = vmatprep.mubr.bf16.mxu0 0
  %342 = vmatmul.mubr.bf16.gmra.mrb[0].mxu0 %v307
  %v343 = vpop.f32.mrb[0].mxu0
  %v344 = vadd.f32 0.0, %v343
  %v345 = vpop.f32.mrb[0].mxu0
  %v346 = vpop.f32.mrb[0].mxu0
  %v347 = vpop.f32.mrb[0].mxu0
  %348 = vdwg.mxu0
  %v349 = vadd.f32 %v303, %v344
  %v350 = vxor.u32 %v349, 2147483648
  %v351 = vmul.f32 %v350, 1.442695
  %v352 = vpow.pop %v351
  %v353 = vadd.f32 %v352, 1.0
  %v354 = vrcp.pop %v353
  %v355 = vmul.f32 1.0, %v354
  %v356 = vtanh.pop %v349
  %v357 = vld [vmem:[#allocation3] sm:$0x3]
  %359 = vrot.lane.b32.xlu0 %v357, 32
  %v360 = vpop.permute.xlu0 %359
  %v362 = vmul.f32 %v355, %v360
  %364 = vrot.lane.b32.xlu0 %v356, 64
  %v365 = vpop.permute.xlu0 %364
  %v367 = vmul.f32 %v355, %v365
  %369 = vrot.lane.b32.xlu0 %v367, 32
  %v370 = vpop.permute.xlu0 %369
  %v372 = vadd.f32 %v362, %v370
  %v373 = vtanh.pop %v372
  %375 = vrot.lane.b32.xlu0 %v373, 64
  %v376 = vpop.permute.xlu0 %375
  %v378 = vmul.f32 %v355, %v376
  %380 = vrot.lane.b32.xlu0 %v372, 96
  %v381 = vpop.permute.xlu0 %380
  %383 = vst.msk [vmem:[#allocation3] sm:$0x3] %vm116, %v381
  %385 = vrot.lane.b32.xlu0 %v378, 32
  %v386 = vpop.permute.xlu0 %385
  %388 = vst.msk [vmem:[#allocation2] sm:$0x3] %vm116, %v386
  %s389 = scalar_lea.vmem %s2, 6
  %390 = vst.msk [vmem:[%s389] sm:$0x3] %vm116, %v386
  // Predicated region
  $region14: #{forward.25} parent=0 // pred_check
    _
  $region15: #{forward.25} parent=0 // pred_check_branch
    %392 = sbr.rel (0) target = $region17
  $region16: #{forward.25} parent=0 // pred_region
    _
  $region17: #{forward.25} parent=0 // pred_fallthru
    _
  // Predicated region
  $region18: #{forward.25} parent=0 // pred_check
    _
  $region19: #{forward.25} parent=0 // pred_check_branch
    %394 = sbr.rel (0) target = $region21
  $region20: #{forward.25} parent=0 // pred_region
    _
  $region21: #{forward.25} parent=0 // pred_fallthru
    _

// kernel: forward.28
$region0: #{forward.28}
  #allocation0 [shape = 'u32[]', space=smem, size = 0x4, offset = 0x4, fixed_abs, tag = 'smem constant byte address 0x4 - core index']
  #allocation1 [shape = 'u32[144,128]{1,0:T(1,128)}', space=vmem, size = 0x12000, scoped, tag = 'internal scratch']
  %s0 = inlined_call_operand.vmem [shape: bf16[8,32], index: 0, kind: input, shape index: {}]
  %s1 = inlined_call_operand.vmem [shape: bf16[32,32], index: 1, kind: input, shape index: {}]
  %s2 = inlined_call_operand.vmem [shape: f32[1,32], index: 2, kind: input, shape index: {}]
  %s3 = inlined_call_operand.vmem [shape: f32[8,32], index: 3, kind: output, shape index: {}]
  %s4 = sld [smem:[#allocation0]]
  $region22: #{forward.28} parent=0
    _
  %s6 = ssub.s32 1, %s4
  %s7 = scalar_select 0, %s6, %s4
  // Predicated region
  $region2: #{forward.28} parent=0 // pred_check
    _
  $region3: #{forward.28} parent=0 // pred_check_branch
    %9 = sbr.rel (0) target = $region5
  $region4: #{forward.28} parent=0 // pred_region
    _
  $region5: #{forward.28} parent=0 // pred_fallthru
    _
  // Predicated region
  $region6: #{forward.28} parent=0 // pred_check
    _
  $region7: #{forward.28} parent=0 // pred_check_branch
    %11 = sbr.rel (0) target = $region9
  $region8: #{forward.28} parent=0 // pred_region
    _
  $region9: #{forward.28} parent=0 // pred_fallthru
    _
  // Predicated region
  $region10: #{forward.28} parent=0 // pred_check
    _
  $region11: #{forward.28} parent=0 // pred_check_branch
    %13 = sbr.rel (0) target = $region13
  $region12: #{forward.28} parent=0 // pred_region
    _
  $region13: #{forward.28} parent=0 // pred_fallthru
    _
  %v15 = vld [vmem:[%s0] sm:$0xf]
  %v16 = vld [vmem:[%s1] sm:$0xf]
  %v17 = vld [vmem:[%s1 + $0x4] sm:$0xf]
  %v18 = vld [vmem:[%s1 + $0x8] sm:$0xf]
  %v19 = vld [vmem:[%s1 + $0xc] sm:$0xf]
  %v20 = vld [vmem:[%s2] sm:$0x1]
  %v22 = vlaneseq
  %v23 = vshrl.u32 %v22, 7
  %v24 = vsub.s32 0, %v23
  %v25 = vrot.slane %v20, %v24
  %v31 = vunpack.c.l.b16 %v16
  %v32 = vunpack.c.l.b16 %v17
  %v33 = vunpack.c.l.b16 %v18
  %v34 = vunpack.c.l.b16 %v19
  %v35 = vpack.c.b16 %v32, %v31
  %v36 = vpack.c.b16 %v34, %v33
  %vm39 = vcmask 261120
  %v41 = vsel %vm39, %v15, 0
  %43 = vmatprep.subr.bf16.mxu0 0
  %44 = vmatpush1.bf16.msra.mxu0 %v35
  %45 = vmatprep.subr.bf16.mxu0 0
  %46 = vmatpush1.bf16.msra.mxu0 %v36
  %47 = vmatprep.subr.bf16.mxu0 0
  %48 = vmatpush1.bf16.msra.mxu0 0
  %49 = vmatprep.subr.bf16.mxu0 0
  %50 = vmatpush1.bf16.msra.mxu0 0
  %51 = vmatprep.subr.bf16.mxu0 0
  %52 = vmatpush1.bf16.msra.mxu0 0
  %53 = vmatprep.subr.bf16.mxu0 0
  %54 = vmatpush1.bf16.msra.mxu0 0
  %55 = vmatprep.subr.bf16.mxu0 0
  %56 = vmatpush1.bf16.msra.mxu0 0
  %57 = vmatprep.subr.bf16.mxu0 0
  %58 = vmatpush1.bf16.msra.mxu0 0
  %59 = vmatprep.subr.bf16.mxu0 0
  %60 = vmatpush1.bf16.msra.mxu0 0
  %61 = vmatprep.subr.bf16.mxu0 0
  %62 = vmatpush1.bf16.msra.mxu0 0
  %63 = vmatprep.subr.bf16.mxu0 0
  %64 = vmatpush1.bf16.msra.mxu0 0
  %65 = vmatprep.subr.bf16.mxu0 0
  %66 = vmatpush1.bf16.msra.mxu0 0
  %67 = vmatprep.subr.bf16.mxu0 0
  %68 = vmatpush1.bf16.msra.mxu0 0
  %69 = vmatprep.subr.bf16.mxu0 0
  %70 = vmatpush1.bf16.msra.mxu0 0
  %71 = vmatprep.subr.bf16.mxu0 0
  %72 = vmatpush1.bf16.msra.mxu0 0
  %73 = vmatprep.subr.bf16.mxu0 0
  %74 = vmatpush1.bf16.msra.mxu0 0
  %75 = vmatprep.mubr.bf16.mxu0 0
  %76 = vmatmul.mubr.bf16.gmra.mrb[0].mxu0 %v41
  %v77 = vpop.f32.mrb[0].mxu0
  %v78 = vadd.f32 %v25, %v77
  %v79 = vpop.f32.mrb[0].mxu0
  %v80 = vpop.f32.mrb[0].mxu0
  %v81 = vpop.f32.mrb[0].mxu0
  %82 = vdwg.mxu0
  %83 = vst.msk [vmem:[%s3] sm:$0xff] %vm39, %v78
  // Predicated region
  $region14: #{forward.28} parent=0 // pred_check
    _
  $region15: #{forward.28} parent=0 // pred_check_branch
    %85 = sbr.rel (0) target = $region17
  $region16: #{forward.28} parent=0 // pred_region
    _
  $region17: #{forward.28} parent=0 // pred_fallthru
    _
  // Predicated region
  $region18: #{forward.28} parent=0 // pred_check
    _
  $region19: #{forward.28} parent=0 // pred_check_branch
    %87 = sbr.rel (0) target = $region21
  $region20: #{forward.28} parent=0 // pred_region
    _
  $region21: #{forward.28} parent=0 // pred_fallthru
    _

// kernel: forward.27
$region0: #{forward.27}
  #allocation0 [shape = 'u32[]', space=smem, size = 0x4, offset = 0x4, fixed_abs, tag = 'smem constant byte address 0x4 - core index']
  #allocation1 [shape = 'u32[144,128]{1,0:T(1,128)}', space=vmem, size = 0x12000, scoped, tag = 'internal scratch']
  %s0 = inlined_call_operand.vmem [shape: bf16[4,2,96], index: 0, kind: input, shape index: {}]
  %s1 = inlined_call_operand.vmem [shape: bf16[4,2,32], index: 1, kind: output, shape index: {}]
  %s2 = sld [smem:[#allocation0]]
  $region37: #{forward.27} parent=0
    _
  %s4 = ssub.s32 1, %s2
  %s5 = scalar_select 0, %s4, %s2
  loop: start=0, step=1, limit=6
  $region2: #{forward.27} parent=0 // loop_pre_header
    _
  $region3: #{forward.27} parent=0 // loop_header
    %s7 = sphi 0, %s11
    %p8 = scmp.ge.s32.totalorder %s7, 6
    %s17 = sphi 0, %s19
    %s20 = sphi 0, %s17
    %s21 = sphi 0, %s20
    %s37 = sphi 0, %s21
    %s43 = sphi 0, %s45
    %s46 = sphi 0, %s43
    %s47 = sphi 0, %s46
    %s63 = sphi 0, %s47
  $region4: #{forward.27} parent=0 // loop_header_branch
    %10 = sbr.rel (%p8) target = $region8
  $region5: #{forward.27} parent=0 // loop_body
    %s12 = ssub.s32 %s7, 1
    %s13 = ssub.s32 %s7, 2
    %s14 = sadd.s32 %s7, 1
    %s15 = ssub.s32 %s7, %s14
    %p16 = scmp.eq.s32.totalorder %s15, 0
    %s18 = sadd.s32 %s17, 1
    %s19 = scalar_select %p16, %s17, %s18
    %p22 = pneg %p16
    %p23 = scmp.eq.s32.totalorder %s7, 3
    %p24 = por %p22, %p23
    %p25 = scmp.ne.s32.totalorder %s17, %s20
    %p26 = scmp.eq.s32.totalorder %s7, 0
    %p27 = por %p25, %p26
    %p28 = scmp.ne.s32.totalorder %s17, %s20
    %p29 = scmp.eq.s32.totalorder %s12, 3
    %p30 = por %p28, %p29
    %p31 = scmp.ne.s32.totalorder %s20, %s21
    %p32 = scmp.eq.s32.totalorder %s12, 0
    %p33 = por %p31, %p32
    %p34 = scmp.ne.s32.totalorder %s20, %s21
    %p35 = scmp.eq.s32.totalorder %s13, 3
    %p36 = por %p34, %p35
    %p38 = scmp.ne.s32.totalorder %s21, %s37
    %p39 = scmp.eq.s32.totalorder %s13, 0
    %p40 = por %p38, %p39
    %s41 = ssub.s32 %s7, %s14
    %p42 = scmp.eq.s32.totalorder %s41, 0
    %s44 = sadd.s32 %s43, 1
    %s45 = scalar_select %p42, %s43, %s44
    %p48 = pneg %p42
    %p49 = scmp.eq.s32.totalorder %s7, 3
    %p50 = por %p48, %p49
    %p51 = scmp.ne.s32.totalorder %s43, %s46
    %p52 = scmp.eq.s32.totalorder %s7, 0
    %p53 = por %p51, %p52
    %p54 = scmp.ne.s32.totalorder %s43, %s46
    %p55 = scmp.eq.s32.totalorder %s12, 3
    %p56 = por %p54, %p55
    %p57 = scmp.ne.s32.totalorder %s46, %s47
    %p58 = scmp.eq.s32.totalorder %s12, 0
    %p59 = por %p57, %p58
    %p60 = scmp.ne.s32.totalorder %s46, %s47
    %p61 = scmp.eq.s32.totalorder %s13, 3
    %p62 = por %p60, %p61
    %p64 = scmp.ne.s32.totalorder %s47, %s63
    %p65 = scmp.eq.s32.totalorder %s13, 0
    %p66 = por %p64, %p65
    %p67 = scmp.le.s32.totalorder 1, %s7
    %p68 = scmp.lt.s32.totalorder %s7, 5
    %p69 = pnand %p67, %p68
    %p70 = pneg %p69
    // Predicated region
    $region9: #{forward.27} parent=5 // pred_check
      _
    $region10: #{forward.27} parent=5 // pred_check_branch
      %72 = sbr.rel (%p69) target = $region12
    $region11: #{forward.27} parent=5 // pred_region
      %s73 = ssub.s32 %s7, 1
    $region12: #{forward.27} parent=5 // pred_fallthru
      _
    %p74 = scmp.lt.s32.totalorder %s7, 4
    // Predicated region
    $region13: #{forward.27} parent=5 // pred_check
      %p75 = pneg %p74
    $region14: #{forward.27} parent=5 // pred_check_branch
      %77 = sbr.rel (%p75) target = $region16
    $region15: #{forward.27} parent=5 // pred_region
      // Predicated region
      $region17: #{forward.27} parent=15 // pred_check
        %p78 = pneg %p27
      $region18: #{forward.27} parent=15 // pred_check_branch
        %80 = sbr.rel (%p78) target = $region20
      $region19: #{forward.27} parent=15 // pred_region
        %p81 = scmp.lt.s32.totalorder %s7, 3
        %s82 = scalar_select %p81, %s7, 3
        %s83 = scalar_lea.vmem %s0, %s82
      $region20: #{forward.27} parent=15 // pred_fallthru
        _
    $region16: #{forward.27} parent=5 // pred_fallthru
      _
    %p84 = scmp.le.s32.totalorder 1, %s7
    %p85 = scmp.lt.s32.totalorder %s7, 5
    %p86 = pnand %p84, %p85
    %p87 = pneg %p86
    // Predicated region
    $region21: #{forward.27} parent=5 // pred_check
      _
    $region22: #{forward.27} parent=5 // pred_check_branch
      %89 = sbr.rel (%p86) target = $region24
    $region23: #{forward.27} parent=5 // pred_region
      %s90 = ssub.s32 %s7, 1
      %p91 = scmp.lt.s32.totalorder %s12, 3
      %s92 = scalar_select %p91, %s12, 3
      %s93 = scalar_lea.vmem %s0, %s92
      %p94 = pneg %p33
      %p95 = pneg %p30
      %p96 = pneg %p59
      %p97 = pneg %p56
      %p98 = scmp.lt.s32.totalorder %s12, 3
      %s99 = scalar_select %p98, %s12, 3
      %s100 = scalar_lea.vmem %s1, %s99
      %p101 = scmp.lt.s32.totalorder %s12, 3
      %s102 = scalar_select %p101, %s12, 3
      %s103 = scalar_lea.vmem %s0, %s102
      %p104 = scmp.lt.s32.totalorder %s12, 3
      %s105 = scalar_select %p104, %s12, 3
      %s106 = scalar_lea.vmem %s1, %s105
      %v108 = vld [vmem:[%s103] sm:$0x1]
      %v111 = vunpack.c.l.s4 1966171168
      %v112 = vunpack.c.0.s8 %v111
      %v113 = vlaneseq
      %v114 = vshrl.u32 %v113, 7
      %v115 = vsub.s32 %v112, %v114
      %v116 = vrot.slane %v108, %v115
      %v118 = vunpack.c.l.s4 1966171168
      %v119 = vunpack.c.0.s8 %v118
      %v120 = vlaneseq
      %v121 = vshrl.u32 %v120, 7
      %v122 = vsub.s32 %v119, %v121
      %v123 = vrot.slane %v116, %v122
      %124 = vrot.lane.b32.xlu0 %v123, 96
      %v125 = vpop.permute.xlu0 %124
      %vm126 = vcmask 64512
      %v128 = vsel %vm126, %v108, 0
      %v131 = vsel %vm126, %v125, 0
      %133 = vmatprep.subr.bf16.mxu0 0
      %134 = vmatpush1.bf16.xpose.msra.mxu0 %v131
      %135 = vmatprep.subr.bf16.mxu0 0
      %136 = vmatpush1.bf16.xpose.msra.mxu0 0
      %137 = vmatprep.subr.bf16.mxu0 0
      %138 = vmatpush1.bf16.xpose.msra.mxu0 0
      %139 = vmatprep.subr.bf16.mxu0 0
      %140 = vmatpush1.bf16.xpose.msra.mxu0 0
      %141 = vmatprep.subr.bf16.mxu0 0
      %142 = vmatpush1.bf16.xpose.msra.mxu0 0
      %143 = vmatprep.subr.bf16.mxu0 0
      %144 = vmatpush1.bf16.xpose.msra.mxu0 0
      %145 = vmatprep.subr.bf16.mxu0 0
      %146 = vmatpush1.bf16.xpose.msra.mxu0 0
      %147 = vmatprep.subr.bf16.mxu0 0
      %148 = vmatpush1.bf16.xpose.msra.mxu0 0
      %149 = vmatprep.subr.bf16.mxu0 0
      %150 = vmatpush1.bf16.xpose.msra.mxu0 0
      %151 = vmatprep.subr.bf16.mxu0 0
      %152 = vmatpush1.bf16.xpose.msra.mxu0 0
      %153 = vmatprep.subr.bf16.mxu0 0
      %154 = vmatpush1.bf16.xpose.msra.mxu0 0
      %155 = vmatprep.subr.bf16.mxu0 0
      %156 = vmatpush1.bf16.xpose.msra.mxu0 0
      %157 = vmatprep.subr.bf16.mxu0 0
      %158 = vmatpush1.bf16.xpose.msra.mxu0 0
      %159 = vmatprep.subr.bf16.mxu0 0
      %160 = vmatpush1.bf16.xpose.msra.mxu0 0
      %161 = vmatprep.subr.bf16.mxu0 0
      %162 = vmatpush1.bf16.xpose.msra.mxu0 0
      %163 = vmatprep.subr.bf16.mxu0 0
      %164 = vmatpush1.bf16.xpose.msra.mxu0 0
      %165 = vmatprep.mubr.bf16.mxu0 0
      %166 = vmatmul.mubr.bf16.gmra.mrb[0].mxu0 %v128
      %v167 = vpop.f32.mrb[0].mxu0
      %v168 = vadd.f32 0.0, %v167
      %v169 = vpop.f32.mrb[0].mxu0
      %v170 = vpop.f32.mrb[0].mxu0
      %v171 = vpop.f32.mrb[0].mxu0
      %172 = vdwg.mxu0
      %v173 = vmul.f32 %v168, 0.35355338
      %vm174 = vcmask 9216
      %v175 = vsel %vm174, %v173, -inf
      %176 = vmax.xlane.f32.xlu0 %v175
      %v177 = vpop.xlane.xlu0 %176
      %v178 = vsub.f32 %v173, %v177
      %v179 = vmul.f32 %v178, 1.442695
      %v180 = vpow.pop %v179
      %v181 = vsel %vm174, %v180, 0.0
      %182 = vadd.xlane.f32.xlu0 %v181
      %v183 = vpop.xlane.xlu0 %182
      %v184 = vrcp.pop %v183
      %v185 = vmul.f32 %v180, %v184
      %v186 = vpack.c.bf16 %v185, %v185
      %187 = vrot.lane.b32.xlu0 %v123, 64
      %v188 = vpop.permute.xlu0 %187
      %vm189 = vcmask 15360
      %v191 = vsel %vm189, %v186, 0
      %vm193 = vcmask 1040384
      %v195 = vsel %vm193, %v188, 0
      %197 = vmatprep.subr.bf16.mxu0 0
      %198 = vmatpush1.bf16.msra.mxu0 %v195
      %199 = vmatprep.subr.bf16.mxu0 0
      %200 = vmatpush1.bf16.msra.mxu0 0
      %201 = vmatprep.subr.bf16.mxu0 0
      %202 = vmatpush1.bf16.msra.mxu0 0
      %203 = vmatprep.subr.bf16.mxu0 0
      %204 = vmatpush1.bf16.msra.mxu0 0
      %205 = vmatprep.subr.bf16.mxu0 0
      %206 = vmatpush1.bf16.msra.mxu0 0
      %207 = vmatprep.subr.bf16.mxu0 0
      %208 = vmatpush1.bf16.msra.mxu0 0
      %209 = vmatprep.subr.bf16.mxu0 0
      %210 = vmatpush1.bf16.msra.mxu0 0
      %211 = vmatprep.subr.bf16.mxu0 0
      %212 = vmatpush1.bf16.msra.mxu0 0
      %213 = vmatprep.subr.bf16.mxu0 0
      %214 = vmatpush1.bf16.msra.mxu0 0
      %215 = vmatprep.subr.bf16.mxu0 0
      %216 = vmatpush1.bf16.msra.mxu0 0
      %217 = vmatprep.subr.bf16.mxu0 0
      %218 = vmatpush1.bf16.msra.mxu0 0
      %219 = vmatprep.subr.bf16.mxu0 0
      %220 = vmatpush1.bf16.msra.mxu0 0
      %221 = vmatprep.subr.bf16.mxu0 0
      %222 = vmatpush1.bf16.msra.mxu0 0
      %223 = vmatprep.subr.bf16.mxu0 0
      %224 = vmatpush1.bf16.msra.mxu0 0
      %225 = vmatprep.subr.bf16.mxu0 0
      %226 = vmatpush1.bf16.msra.mxu0 0
      %227 = vmatprep.subr.bf16.mxu0 0
      %228 = vmatpush1.bf16.msra.mxu0 0
      %229 = vmatprep.mubr.bf16.mxu0 0
      %230 = vmatmul.mubr.bf16.gmra.mrb[0].mxu0 %v191
      %v231 = vpop.f32.mrb[0].mxu0
      %v232 = vadd.f32 0.0, %v231
      %v233 = vpop.f32.mrb[0].mxu0
      %v234 = vpop.f32.mrb[0].mxu0
      %v235 = vpop.f32.mrb[0].mxu0
      %236 = vdwg.mxu0
      %237 = vrot.lane.b32.xlu0 %v123, 120
      %v238 = vpop.permute.xlu0 %237
      %239 = vrot.lane.b32.xlu0 %v123, 88
      %v240 = vpop.permute.xlu0 %239
      %v242 = vsel %vm126, %v238, 0
      %v245 = vsel %vm126, %v240, 0
      %247 = vmatprep.subr.bf16.mxu0 0
      %248 = vmatpush1.bf16.xpose.msra.mxu0 %v245
      %249 = vmatprep.subr.bf16.mxu0 0
      %250 = vmatpush1.bf16.xpose.msra.mxu0 0
      %251 = vmatprep.subr.bf16.mxu0 0
      %252 = vmatpush1.bf16.xpose.msra.mxu0 0
      %253 = vmatprep.subr.bf16.mxu0 0
      %254 = vmatpush1.bf16.xpose.msra.mxu0 0
      %255 = vmatprep.subr.bf16.mxu0 0
      %256 = vmatpush1.bf16.xpose.msra.mxu0 0
      %257 = vmatprep.subr.bf16.mxu0 0
      %258 = vmatpush1.bf16.xpose.msra.mxu0 0
      %259 = vmatprep.subr.bf16.mxu0 0
      %260 = vmatpush1.bf16.xpose.msra.mxu0 0
      %261 = vmatprep.subr.bf16.mxu0 0
      %262 = vmatpush1.bf16.xpose.msra.mxu0 0
      %263 = vmatprep.subr.bf16.mxu0 0
      %264 = vmatpush1.bf16.xpose.msra.mxu0 0
      %265 = vmatprep.subr.bf16.mxu0 0
      %266 = vmatpush1.bf16.xpose.msra.mxu0 0
      %267 = vmatprep.subr.bf16.mxu0 0
      %268 = vmatpush1.bf16.xpose.msra.mxu0 0
      %269 = vmatprep.subr.bf16.mxu0 0
      %270 = vmatpush1.bf16.xpose.msra.mxu0 0
      %271 = vmatprep.subr.bf16.mxu0 0
      %272 = vmatpush1.bf16.xpose.msra.mxu0 0
      %273 = vmatprep.subr.bf16.mxu0 0
      %274 = vmatpush1.bf16.xpose.msra.mxu0 0
      %275 = vmatprep.subr.bf16.mxu0 0
      %276 = vmatpush1.bf16.xpose.msra.mxu0 0
      %277 = vmatprep.subr.bf16.mxu0 0
      %278 = vmatpush1.bf16.xpose.msra.mxu0 0
      %279 = vmatprep.mubr.bf16.mxu0 0
      %280 = vmatmul.mubr.bf16.gmra.mrb[0].mxu0 %v242
      %v281 = vpop.f32.mrb[0].mxu0
      %v282 = vadd.f32 0.0, %v281
      %v283 = vpop.f32.mrb[0].mxu0
      %v284 = vpop.f32.mrb[0].mxu0
      %v285 = vpop.f32.mrb[0].mxu0
      %286 = vdwg.mxu0
      %v287 = vmul.f32 %v282, 0.35355338
      %v288 = vsel %vm174, %v287, -inf
      %289 = vmax.xlane.f32.xlu0 %v288
      %v290 = vpop.xlane.xlu0 %289
      %v291 = vsub.f32 %v287, %v290
      %v292 = vmul.f32 %v291, 1.442695
      %v293 = vpow.pop %v292
      %v294 = vsel %vm174, %v293, 0.0
      %295 = vadd.xlane.f32.xlu0 %v294
      %v296 = vpop.xlane.xlu0 %295
      %v297 = vrcp.pop %v296
      %v298 = vmul.f32 %v293, %v297
      %v299 = vpack.c.bf16 %v298, %v298
      %300 = vrot.lane.b32.xlu0 %v123, 56
      %v301 = vpop.permute.xlu0 %300
      %v303 = vsel %vm189, %v299, 0
      %v306 = vsel %vm193, %v301, 0
      %308 = vmatprep.subr.bf16.mxu0 0
      %309 = vmatpush1.bf16.msra.mxu0 %v306
      %310 = vmatprep.subr.bf16.mxu0 0
      %311 = vmatpush1.bf16.msra.mxu0 0
      %312 = vmatprep.subr.bf16.mxu0 0
      %313 = vmatpush1.bf16.msra.mxu0 0
      %314 = vmatprep.subr.bf16.mxu0 0
      %315 = vmatpush1.bf16.msra.mxu0 0
      %316 = vmatprep.subr.bf16.mxu0 0
      %317 = vmatpush1.bf16.msra.mxu0 0
      %318 = vmatprep.subr.bf16.mxu0 0
      %319 = vmatpush1.bf16.msra.mxu0 0
      %320 = vmatprep.subr.bf16.mxu0 0
      %321 = vmatpush1.bf16.msra.mxu0 0
      %322 = vmatprep.subr.bf16.mxu0 0
      %323 = vmatpush1.bf16.msra.mxu0 0
      %324 = vmatprep.subr.bf16.mxu0 0
      %325 = vmatpush1.bf16.msra.mxu0 0
      %326 = vmatprep.subr.bf16.mxu0 0
      %327 = vmatpush1.bf16.msra.mxu0 0
      %328 = vmatprep.subr.bf16.mxu0 0
      %329 = vmatpush1.bf16.msra.mxu0 0
      %330 = vmatprep.subr.bf16.mxu0 0
      %331 = vmatpush1.bf16.msra.mxu0 0
      %332 = vmatprep.subr.bf16.mxu0 0
      %333 = vmatpush1.bf16.msra.mxu0 0
      %334 = vmatprep.subr.bf16.mxu0 0
      %335 = vmatpush1.bf16.msra.mxu0 0
      %336 = vmatprep.subr.bf16.mxu0 0
      %337 = vmatpush1.bf16.msra.mxu0 0
      %338 = vmatprep.subr.bf16.mxu0 0
      %339 = vmatpush1.bf16.msra.mxu0 0
      %340 = vmatprep.mubr.bf16.mxu0 0
      %341 = vmatmul.mubr.bf16.gmra.mrb[0].mxu0 %v303
      %v342 = vpop.f32.mrb[0].mxu0
      %v343 = vadd.f32 0.0, %v342
      %v344 = vpop.f32.mrb[0].mxu0
      %v345 = vpop.f32.mrb[0].mxu0
      %v346 = vpop.f32.mrb[0].mxu0
      %347 = vdwg.mxu0
      %348 = vrot.lane.b32.xlu0 %v123, 112
      %v349 = vpop.permute.xlu0 %348
      %350 = vrot.lane.b32.xlu0 %v123, 80
      %v351 = vpop.permute.xlu0 %350
      %v353 = vsel %vm126, %v349, 0
      %v356 = vsel %vm126, %v351, 0
      %358 = vmatprep.subr.bf16.mxu0 0
      %359 = vmatpush1.bf16.xpose.msra.mxu0 %v356
      %360 = vmatprep.subr.bf16.mxu0 0
      %361 = vmatpush1.bf16.xpose.msra.mxu0 0
      %362 = vmatprep.subr.bf16.mxu0 0
      %363 = vmatpush1.bf16.xpose.msra.mxu0 0
      %364 = vmatprep.subr.bf16.mxu0 0
      %365 = vmatpush1.bf16.xpose.msra.mxu0 0
      %366 = vmatprep.subr.bf16.mxu0 0
      %367 = vmatpush1.bf16.xpose.msra.mxu0 0
      %368 = vmatprep.subr.bf16.mxu0 0
      %369 = vmatpush1.bf16.xpose.msra.mxu0 0
      %370 = vmatprep.subr.bf16.mxu0 0
      %371 = vmatpush1.bf16.xpose.msra.mxu0 0
      %372 = vmatprep.subr.bf16.mxu0 0
      %373 = vmatpush1.bf16.xpose.msra.mxu0 0
      %374 = vmatprep.subr.bf16.mxu0 0
      %375 = vmatpush1.bf16.xpose.msra.mxu0 0
      %376 = vmatprep.subr.bf16.mxu0 0
      %377 = vmatpush1.bf16.xpose.msra.mxu0 0
      %378 = vmatprep.subr.bf16.mxu0 0
      %379 = vmatpush1.bf16.xpose.msra.mxu0 0
      %380 = vmatprep.subr.bf16.mxu0 0
      %381 = vmatpush1.bf16.xpose.msra.mxu0 0
      %382 = vmatprep.subr.bf16.mxu0 0
      %383 = vmatpush1.bf16.xpose.msra.mxu0 0
      %384 = vmatprep.subr.bf16.mxu0 0
      %385 = vmatpush1.bf16.xpose.msra.mxu0 0
      %386 = vmatprep.subr.bf16.mxu0 0
      %387 = vmatpush1.bf16.xpose.msra.mxu0 0
      %388 = vmatprep.subr.bf16.mxu0 0
      %389 = vmatpush1.bf16.xpose.msra.mxu0 0
      %390 = vmatprep.mubr.bf16.mxu0 0
      %391 = vmatmul.mubr.bf16.gmra.mrb[0].mxu0 %v353
      %v392 = vpop.f32.mrb[0].mxu0
      %v393 = vadd.f32 0.0, %v392
      %v394 = vpop.f32.mrb[0].mxu0
      %v395 = vpop.f32.mrb[0].mxu0
      %v396 = vpop.f32.mrb[0].mxu0
      %397 = vdwg.mxu0
      %v398 = vmul.f32 %v393, 0.35355338
      %v399 = vsel %vm174, %v398, -inf
      %400 = vmax.xlane.f32.xlu0 %v399
      %v401 = vpop.xlane.xlu0 %400
      %v402 = vsub.f32 %v398, %v401
      %v403 = vmul.f32 %v402, 1.442695
      %v404 = vpow.pop %v403
      %v405 = vsel %vm174, %v404, 0.0
      %406 = vadd.xlane.f32.xlu0 %v405
      %v407 = vpop.xlane.xlu0 %406
      %v408 = vrcp.pop %v407
      %v409 = vmul.f32 %v404, %v408
      %v410 = vpack.c.bf16 %v409, %v409
      %411 = vrot.lane.b32.xlu0 %v123, 48
      %v412 = vpop.permute.xlu0 %411
      %v414 = vsel %vm189, %v410, 0
      %v417 = vsel %vm193, %v412, 0
      %419 = vmatprep.subr.bf16.mxu0 0
      %420 = vmatpush1.bf16.msra.mxu0 %v417
      %421 = vmatprep.subr.bf16.mxu0 0
      %422 = vmatpush1.bf16.msra.mxu0 0
      %423 = vmatprep.subr.bf16.mxu0 0
      %424 = vmatpush1.bf16.msra.mxu0 0
      %425 = vmatprep.subr.bf16.mxu0 0
      %426 = vmatpush1.bf16.msra.mxu0 0
      %427 = vmatprep.subr.bf16.mxu0 0
      %428 = vmatpush1.bf16.msra.mxu0 0
      %429 = vmatprep.subr.bf16.mxu0 0
      %430 = vmatpush1.bf16.msra.mxu0 0
      %431 = vmatprep.subr.bf16.mxu0 0
      %432 = vmatpush1.bf16.msra.mxu0 0
      %433 = vmatprep.subr.bf16.mxu0 0
      %434 = vmatpush1.bf16.msra.mxu0 0
      %435 = vmatprep.subr.bf16.mxu0 0
      %436 = vmatpush1.bf16.msra.mxu0 0
      %437 = vmatprep.subr.bf16.mxu0 0
      %438 = vmatpush1.bf16.msra.mxu0 0
      %439 = vmatprep.subr.bf16.mxu0 0
      %440 = vmatpush1.bf16.msra.mxu0 0
      %441 = vmatprep.subr.bf16.mxu0 0
      %442 = vmatpush1.bf16.msra.mxu0 0
      %443 = vmatprep.subr.bf16.mxu0 0
      %444 = vmatpush1.bf16.msra.mxu0 0
      %445 = vmatprep.subr.bf16.mxu0 0
      %446 = vmatpush1.bf16.msra.mxu0 0
      %447 = vmatprep.subr.bf16.mxu0 0
      %448 = vmatpush1.bf16.msra.mxu0 0
      %449 = vmatprep.subr.bf16.mxu0 0
      %450 = vmatpush1.bf16.msra.mxu0 0
      %451 = vmatprep.mubr.bf16.mxu0 0
      %452 = vmatmul.mubr.bf16.gmra.mrb[0].mxu0 %v414
      %v453 = vpop.f32.mrb[0].mxu0
      %v454 = vadd.f32 0.0, %v453
      %v455 = vpop.f32.mrb[0].mxu0
      %v456 = vpop.f32.mrb[0].mxu0
      %v457 = vpop.f32.mrb[0].mxu0
      %458 = vdwg.mxu0
      %459 = vrot.lane.b32.xlu0 %v123, 104
      %v460 = vpop.permute.xlu0 %459
      %461 = vrot.lane.b32.xlu0 %v123, 72
      %v462 = vpop.permute.xlu0 %461
      %v464 = vsel %vm126, %v460, 0
      %v467 = vsel %vm126, %v462, 0
      %469 = vmatprep.subr.bf16.mxu0 0
      %470 = vmatpush1.bf16.xpose.msra.mxu0 %v467
      %471 = vmatprep.subr.bf16.mxu0 0
      %472 = vmatpush1.bf16.xpose.msra.mxu0 0
      %473 = vmatprep.subr.bf16.mxu0 0
      %474 = vmatpush1.bf16.xpose.msra.mxu0 0
      %475 = vmatprep.subr.bf16.mxu0 0
      %476 = vmatpush1.bf16.xpose.msra.mxu0 0
      %477 = vmatprep.subr.bf16.mxu0 0
      %478 = vmatpush1.bf16.xpose.msra.mxu0 0
      %479 = vmatprep.subr.bf16.mxu0 0
      %480 = vmatpush1.bf16.xpose.msra.mxu0 0
      %481 = vmatprep.subr.bf16.mxu0 0
      %482 = vmatpush1.bf16.xpose.msra.mxu0 0
      %483 = vmatprep.subr.bf16.mxu0 0
      %484 = vmatpush1.bf16.xpose.msra.mxu0 0
      %485 = vmatprep.subr.bf16.mxu0 0
      %486 = vmatpush1.bf16.xpose.msra.mxu0 0
      %487 = vmatprep.subr.bf16.mxu0 0
      %488 = vmatpush1.bf16.xpose.msra.mxu0 0
      %489 = vmatprep.subr.bf16.mxu0 0
      %490 = vmatpush1.bf16.xpose.msra.mxu0 0
      %491 = vmatprep.subr.bf16.mxu0 0
      %492 = vmatpush1.bf16.xpose.msra.mxu0 0
      %493 = vmatprep.subr.bf16.mxu0 0
      %494 = vmatpush1.bf16.xpose.msra.mxu0 0
      %495 = vmatprep.subr.bf16.mxu0 0
      %496 = vmatpush1.bf16.xpose.msra.mxu0 0
      %497 = vmatprep.subr.bf16.mxu0 0
      %498 = vmatpush1.bf16.xpose.msra.mxu0 0
      %499 = vmatprep.subr.bf16.mxu0 0
      %500 = vmatpush1.bf16.xpose.msra.mxu0 0
      %501 = vmatprep.mubr.bf16.mxu0 0
      %502 = vmatmul.mubr.bf16.gmra.mrb[0].mxu0 %v464
      %v503 = vpop.f32.mrb[0].mxu0
      %v504 = vadd.f32 0.0, %v503
      %v505 = vpop.f32.mrb[0].mxu0
      %v506 = vpop.f32.mrb[0].mxu0
      %v507 = vpop.f32.mrb[0].mxu0
      %508 = vdwg.mxu0
      %v509 = vmul.f32 %v504, 0.35355338
      %v510 = vsel %vm174, %v509, -inf
      %511 = vmax.xlane.f32.xlu0 %v510
      %v512 = vpop.xlane.xlu0 %511
      %v513 = vsub.f32 %v509, %v512
      %v514 = vmul.f32 %v513, 1.442695
      %v515 = vpow.pop %v514
      %v516 = vsel %vm174, %v515, 0.0
      %517 = vadd.xlane.f32.xlu0 %v516
      %v518 = vpop.xlane.xlu0 %517
      %v519 = vrcp.pop %v518
      %v520 = vmul.f32 %v515, %v519
      %v521 = vpack.c.bf16 %v520, %v520
      %522 = vrot.lane.b32.xlu0 %v123, 40
      %v523 = vpop.permute.xlu0 %522
      %v525 = vsel %vm189, %v521, 0
      %v528 = vsel %vm193, %v523, 0
      %530 = vmatprep.subr.bf16.mxu0 0
      %531 = vmatpush1.bf16.msra.mxu0 %v528
      %532 = vmatprep.subr.bf16.mxu0 0
      %533 = vmatpush1.bf16.msra.mxu0 0
      %534 = vmatprep.subr.bf16.mxu0 0
      %535 = vmatpush1.bf16.msra.mxu0 0
      %536 = vmatprep.subr.bf16.mxu0 0
      %537 = vmatpush1.bf16.msra.mxu0 0
      %538 = vmatprep.subr.bf16.mxu0 0
      %539 = vmatpush1.bf16.msra.mxu0 0
      %540 = vmatprep.subr.bf16.mxu0 0
      %541 = vmatpush1.bf16.msra.mxu0 0
      %542 = vmatprep.subr.bf16.mxu0 0
      %543 = vmatpush1.bf16.msra.mxu0 0
      %544 = vmatprep.subr.bf16.mxu0 0
      %545 = vmatpush1.bf16.msra.mxu0 0
      %546 = vmatprep.subr.bf16.mxu0 0
      %547 = vmatpush1.bf16.msra.mxu0 0
      %548 = vmatprep.subr.bf16.mxu0 0
      %549 = vmatpush1.bf16.msra.mxu0 0
      %550 = vmatprep.subr.bf16.mxu0 0
      %551 = vmatpush1.bf16.msra.mxu0 0
      %552 = vmatprep.subr.bf16.mxu0 0
      %553 = vmatpush1.bf16.msra.mxu0 0
      %554 = vmatprep.subr.bf16.mxu0 0
      %555 = vmatpush1.bf16.msra.mxu0 0
      %556 = vmatprep.subr.bf16.mxu0 0
      %557 = vmatpush1.bf16.msra.mxu0 0
      %558 = vmatprep.subr.bf16.mxu0 0
      %559 = vmatpush1.bf16.msra.mxu0 0
      %560 = vmatprep.subr.bf16.mxu0 0
      %561 = vmatpush1.bf16.msra.mxu0 0
      %562 = vmatprep.mubr.bf16.mxu0 0
      %563 = vmatmul.mubr.bf16.gmra.mrb[0].mxu0 %v525
      %v564 = vpop.f32.mrb[0].mxu0
      %v565 = vadd.f32 0.0, %v564
      %v566 = vpop.f32.mrb[0].mxu0
      %v567 = vpop.f32.mrb[0].mxu0
      %v568 = vpop.f32.mrb[0].mxu0
      %569 = vdwg.mxu0
      %571 = vrot.lane.b32.xlu0 %v343, 8
      %v572 = vpop.permute.xlu0 %571
      %575 = vrot.lane.b32.xlu0 %v454, 16
      %v576 = vpop.permute.xlu0 %575
      %579 = vrot.lane.b32.xlu0 %v565, 24
      %v580 = vpop.permute.xlu0 %579
      %v582 = vsel %vm126, %v232, %v572
      %vm583 = vcmask 130048
      %v584 = vsel %vm583, %v582, %v576
      %vm585 = vcmask 195584
      %v586 = vsel %vm585, %v584, %v580
      %v587 = vpack.c.bf16 %v586, %v586
      %vm588 = vcmask 253952
      %589 = vst.msk [vmem:[%s106] sm:$0x1] %vm588, %v587
      %p590 = scmp.lt.s32.totalorder %s12, 3
      %s591 = scalar_select %p590, %s12, 3
      %s592 = scalar_lea.vmem %s1, %s591
      // Predicated region
      $region25: #{forward.27} parent=23 // pred_check
        %p593 = pneg %p56
      $region26: #{forward.27} parent=23 // pred_check_branch
        %595 = sbr.rel (%p593) target = $region28
      $region27: #{forward.27} parent=23 // pred_region
        _
      $region28: #{forward.27} parent=23 // pred_fallthru
        _
    $region24: #{forward.27} parent=5 // pred_fallthru
      _
    %p596 = scmp.le.s32.totalorder 2, %s7
    // Predicated region
    $region29: #{forward.27} parent=5 // pred_check
      %p597 = pneg %p596
    $region30: #{forward.27} parent=5 // pred_check_branch
      %599 = sbr.rel (%p597) target = $region32
    $region31: #{forward.27} parent=5 // pred_region
      %s600 = ssub.s32 %s7, 2
      // Predicated region
      $region33: #{forward.27} parent=31 // pred_check
        %p601 = pneg %p62
      $region34: #{forward.27} parent=31 // pred_check_branch
        %603 = sbr.rel (%p601) target = $region36
      $region35: #{forward.27} parent=31 // pred_region
        %p604 = scmp.lt.s32.totalorder %s13, 3
        %s605 = scalar_select %p604, %s13, 3
        %s606 = scalar_lea.vmem %s1, %s605
      $region36: #{forward.27} parent=31 // pred_fallthru
        _
    $region32: #{forward.27} parent=5 // pred_fallthru
      _
  $region6: #{forward.27} parent=0 // loop_footer
    %s11 = sadd.s32 1, %s7
  $region7: #{forward.27} parent=0 // loop_footer_branch
    %6 = sbr.rel target = $region3
  $region8: #{forward.27} parent=0 // loop_exit
    _

// kernel: forward.31
$region0: #{forward.31}
  #allocation0 [shape = 'u32[]', space=smem, size = 0x4, offset = 0x4, fixed_abs, tag = 'smem constant byte address 0x4 - core index']
  #allocation1 [shape = 'u32[144,128]{1,0:T(1,128)}', space=vmem, size = 0x12000, scoped, tag = 'internal scratch']
  %s0 = inlined_call_operand.vmem [shape: bf16[8,32], index: 0, kind: input, shape index: {}]
  %s1 = inlined_call_operand.vmem [shape: bf16[32,32], index: 1, kind: input, shape index: {}]
  %s2 = inlined_call_operand.vmem [shape: f32[1,32], index: 2, kind: input, shape index: {}]
  %s3 = inlined_call_operand.vmem [shape: f32[8,32], index: 3, kind: input, shape index: {}]
  %s4 = inlined_call_operand.vmem [shape: f32[1,32], index: 4, kind: input, shape index: {}]
  %s5 = inlined_call_operand.vmem [shape: f32[1,32], index: 5, kind: input, shape index: {}]
  %s6 = inlined_call_operand.vmem [shape: f32[8,32], index: 6, kind: output, shape index: {}]
  %s7 = sld [smem:[#allocation0]]
  $region34: #{forward.31} parent=0
    _
  %s9 = ssub.s32 1, %s7
  %s10 = scalar_select 0, %s9, %s7
  // Predicated region
  $region2: #{forward.31} parent=0 // pred_check
    _
  $region3: #{forward.31} parent=0 // pred_check_branch
    %12 = sbr.rel (0) target = $region5
  $region4: #{forward.31} parent=0 // pred_region
    _
  $region5: #{forward.31} parent=0 // pred_fallthru
    _
  // Predicated region
  $region6: #{forward.31} parent=0 // pred_check
    _
  $region7: #{forward.31} parent=0 // pred_check_branch
    %14 = sbr.rel (0) target = $region9
  $region8: #{forward.31} parent=0 // pred_region
    _
  $region9: #{forward.31} parent=0 // pred_fallthru
    _
  // Predicated region
  $region10: #{forward.31} parent=0 // pred_check
    _
  $region11: #{forward.31} parent=0 // pred_check_branch
    %16 = sbr.rel (0) target = $region13
  $region12: #{forward.31} parent=0 // pred_region
    _
  $region13: #{forward.31} parent=0 // pred_fallthru
    _
  // Predicated region
  $region14: #{forward.31} parent=0 // pred_check
    _
  $region15: #{forward.31} parent=0 // pred_check_branch
    %18 = sbr.rel (0) target = $region17
  $region16: #{forward.31} parent=0 // pred_region
    _
  $region17: #{forward.31} parent=0 // pred_fallthru
    _
  // Predicated region
  $region18: #{forward.31} parent=0 // pred_check
    _
  $region19: #{forward.31} parent=0 // pred_check_branch
    %20 = sbr.rel (0) target = $region21
  $region20: #{forward.31} parent=0 // pred_region
    _
  $region21: #{forward.31} parent=0 // pred_fallthru
    _
  // Predicated region
  $region22: #{forward.31} parent=0 // pred_check
    _
  $region23: #{forward.31} parent=0 // pred_check_branch
    %22 = sbr.rel (0) target = $region25
  $region24: #{forward.31} parent=0 // pred_region
    _
  $region25: #{forward.31} parent=0 // pred_fallthru
    _
  %v24 = vld [vmem:[%s0] sm:$0xf]
  %v25 = vld [vmem:[%s1] sm:$0xf]
  %v26 = vld [vmem:[%s1 + $0x4] sm:$0xf]
  %v27 = vld [vmem:[%s1 + $0x8] sm:$0xf]
  %v28 = vld [vmem:[%s1 + $0xc] sm:$0xf]
  %v29 = vld [vmem:[%s2] sm:$0x1]
  %v31 = vlaneseq
  %v32 = vshrl.u32 %v31, 7
  %v33 = vsub.s32 0, %v32
  %v34 = vrot.slane %v29, %v33
  %v40 = vunpack.c.l.b16 %v25
  %v41 = vunpack.c.l.b16 %v26
  %v42 = vunpack.c.l.b16 %v27
  %v43 = vunpack.c.l.b16 %v28
  %v44 = vpack.c.b16 %v41, %v40
  %v45 = vpack.c.b16 %v43, %v42
  %vm48 = vcmask 261120
  %v50 = vsel %vm48, %v24, 0
  %52 = vmatprep.subr.bf16.mxu0 0
  %53 = vmatpush1.bf16.msra.mxu0 %v44
  %54 = vmatprep.subr.bf16.mxu0 0
  %55 = vmatpush1.bf16.msra.mxu0 %v45
  %56 = vmatprep.subr.bf16.mxu0 0
  %57 = vmatpush1.bf16.msra.mxu0 0
  %58 = vmatprep.subr.bf16.mxu0 0
  %59 = vmatpush1.bf16.msra.mxu0 0
  %60 = vmatprep.subr.bf16.mxu0 0
  %61 = vmatpush1.bf16.msra.mxu0 0
  %62 = vmatprep.subr.bf16.mxu0 0
  %63 = vmatpush1.bf16.msra.mxu0 0
  %64 = vmatprep.subr.bf16.mxu0 0
  %65 = vmatpush1.bf16.msra.mxu0 0
  %66 = vmatprep.subr.bf16.mxu0 0
  %67 = vmatpush1.bf16.msra.mxu0 0
  %68 = vmatprep.subr.bf16.mxu0 0
  %69 = vmatpush1.bf16.msra.mxu0 0
  %70 = vmatprep.subr.bf16.mxu0 0
  %71 = vmatpush1.bf16.msra.mxu0 0
  %72 = vmatprep.subr.bf16.mxu0 0
  %73 = vmatpush1.bf16.msra.mxu0 0
  %74 = vmatprep.subr.bf16.mxu0 0
  %75 = vmatpush1.bf16.msra.mxu0 0
  %76 = vmatprep.subr.bf16.mxu0 0
  %77 = vmatpush1.bf16.msra.mxu0 0
  %78 = vmatprep.subr.bf16.mxu0 0
  %79 = vmatpush1.bf16.msra.mxu0 0
  %80 = vmatprep.subr.bf16.mxu0 0
  %81 = vmatpush1.bf16.msra.mxu0 0
  %82 = vmatprep.subr.bf16.mxu0 0
  %83 = vmatpush1.bf16.msra.mxu0 0
  %84 = vmatprep.mubr.bf16.mxu0 0
  %85 = vmatmul.mubr.bf16.gmra.mrb[0].mxu0 %v50
  %v86 = vpop.f32.mrb[0].mxu0
  %v87 = vadd.f32 %v34, %v86
  %v88 = vpop.f32.mrb[0].mxu0
  %v89 = vpop.f32.mrb[0].mxu0
  %v90 = vpop.f32.mrb[0].mxu0
  %91 = vdwg.mxu0
  %v92 = vld [vmem:[%s3] sm:$0xff]
  %v93 = vadd.f32 %v87, %v92
  %v94 = vsel %vm48, %v93, 0.0
  %95 = vadd.xlane.f32.xlu0 %v94
  %v96 = vpop.xlane.xlu0 %95
  %v97 = vrcp.pop 32.0
  %v98 = vmul.f32 %v96, %v97
  %v99 = vsub.f32 %v93, %v98
  %v100 = vmul.f32 %v99, %v99
  %v101 = vsel %vm48, %v100, 0.0
  %102 = vadd.xlane.f32.xlu0 %v101
  %v103 = vpop.xlane.xlu0 %102
  %v104 = vmul.f32 %v103, %v97
  %v105 = vadd.f32 %v104, 1e-05
  %v106 = vrsqrt.pop %v105
  %v107 = vmul.f32 %v99, %v106
  %v108 = vld [vmem:[%s4] sm:$0x1]
  %v110 = vlaneseq
  %v111 = vshrl.u32 %v110, 7
  %v112 = vsub.s32 0, %v111
  %v113 = vrot.slane %v108, %v112
  %v115 = vmul.f32 %v107, %v113
  %v116 = vld [vmem:[%s5] sm:$0x1]
  %v118 = vlaneseq
  %v119 = vshrl.u32 %v118, 7
  %v120 = vsub.s32 0, %v119
  %v121 = vrot.slane %v116, %v120
  %v123 = vadd.f32 %v115, %v121
  %124 = vst.msk [vmem:[%s6] sm:$0xff] %vm48, %v123
  // Predicated region
  $region26: #{forward.31} parent=0 // pred_check
    _
  $region27: #{forward.31} parent=0 // pred_check_branch
    %126 = sbr.rel (0) target = $region29
  $region28: #{forward.31} parent=0 // pred_region
    _
  $region29: #{forward.31} parent=0 // pred_fallthru
    _
  // Predicated region
  $region30: #{forward.31} parent=0 // pred_check
    _
  $region31: #{forward.31} parent=0 // pred_check_branch
    %128 = sbr.rel (0) target = $region33
  $region32: #{forward.31} parent=0 // pred_region
    _
  $region33: #{forward.31} parent=0 // pred_fallthru
    _

// kernel: forward.32
$region0: #{forward.32}
  #allocation0 [shape = 'u32[]', space=smem, size = 0x4, offset = 0x4, fixed_abs, tag = 'smem constant byte address 0x4 - core index']
  #allocation1 [shape = 'u32[144,128]{1,0:T(1,128)}', space=vmem, size = 0x12000, scoped, tag = 'internal scratch']
  %s0 = inlined_call_operand.vmem [shape: bf16[8,32], index: 0, kind: input, shape index: {}]
  %s1 = inlined_call_operand.vmem [shape: bf16[32,2048], index: 1, kind: input, shape index: {}]
  %s2 = inlined_call_operand.vmem [shape: f32[1,2048], index: 2, kind: input, shape index: {}]
  %s3 = inlined_call_operand.vmem [shape: bf16[8,2048], index: 3, kind: output, shape index: {}]
  %s4 = sld [smem:[#allocation0]]
  $region68: #{forward.32} parent=0
    _
  %s6 = ssub.s32 1, %s4
  %s7 = scalar_select 0, %s6, %s4
  $region1: #{forward.32} parent=0
    #allocation2 [shape = 'u8[65536]{0}', space=vmem, size = 0x10000, scoped, tag = 'input window, operand 1']
    loop: start=0, step=1, limit=6
    $region2: #{forward.32} parent=1 // loop_pre_header
      _
    $region3: #{forward.32} parent=1 // loop_header
      %s9 = sphi 0, %s13
      %p10 = scmp.ge.s32.totalorder %s9, 6
      %s16 = sphi 0, %s28
      %s17 = sphi 0, %s24
      %s18 = sphi 0, %s16
      %s19 = sphi 0, %s17
      %s20 = sphi 0, %s18
      %s21 = sphi 0, %s19
      %s31 = sphi 0, %s33
      %s34 = sphi 0, %s31
      %s35 = sphi 0, %s34
      %s51 = sphi 0, %s35
      %s57 = sphi 0, %s59
      %s60 = sphi 0, %s57
      %s61 = sphi 0, %s60
      %s77 = sphi 0, %s61
      %s83 = sphi 0, %s85
      %s86 = sphi 0, %s83
      %s87 = sphi 0, %s86
      %s103 = sphi 0, %s87
      %s111 = sphi 0, %s113
      %s114 = sphi 0, %s111
      %s115 = sphi 0, %s114
      %s131 = sphi 0, %s115
    $region4: #{forward.32} parent=1 // loop_header_branch
      %12 = sbr.rel (%p10) target = $region8
    $region5: #{forward.32} parent=1 // loop_body
      %s14 = ssub.s32 %s9, 1
      %s15 = ssub.s32 %s9, 2
      %s22 = sadd.s32 1, %s17
      %p23 = scmp.ge.s32.totalorder %s22, 4
      %s24 = scalar_select %p23, 0, %s22
      %s25 = sadd.s32 1, %s16
      %s26 = scalar_select %p23, %s25, %s16
      %p27 = scmp.ge.s32.totalorder %s26, 1
      %s28 = scalar_select %p27, 0, %s26
      %s29 = ssub.s32 %s16, %s28
      %p30 = scmp.eq.s32.totalorder %s29, 0
      %s32 = sadd.s32 %s31, 1
      %s33 = scalar_select %p30, %s31, %s32
      %p36 = pneg %p30
      %p37 = scmp.eq.s32.totalorder %s9, 3
      %p38 = por %p36, %p37
      %p39 = scmp.ne.s32.totalorder %s31, %s34
      %p40 = scmp.eq.s32.totalorder %s9, 0
      %p41 = por %p39, %p40
      %p42 = scmp.ne.s32.totalorder %s31, %s34
      %p43 = scmp.eq.s32.totalorder %s14, 3
      %p44 = por %p42, %p43
      %p45 = scmp.ne.s32.totalorder %s34, %s35
      %p46 = scmp.eq.s32.totalorder %s14, 0
      %p47 = por %p45, %p46
      %p48 = scmp.ne.s32.totalorder %s34, %s35
      %p49 = scmp.eq.s32.totalorder %s15, 3
      %p50 = por %p48, %p49
      %p52 = scmp.ne.s32.totalorder %s35, %s51
      %p53 = scmp.eq.s32.totalorder %s15, 0
      %p54 = por %p52, %p53
      %s55 = ssub.s32 %s17, %s24
      %p56 = scmp.eq.s32.totalorder %s55, 0
      %s58 = sadd.s32 %s57, 1
      %s59 = scalar_select %p56, %s57, %s58
      %p62 = pneg %p56
      %p63 = scmp.eq.s32.totalorder %s9, 3
      %p64 = por %p62, %p63
      %p65 = scmp.ne.s32.totalorder %s57, %s60
      %p66 = scmp.eq.s32.totalorder %s9, 0
      %p67 = por %p65, %p66
      %p68 = scmp.ne.s32.totalorder %s57, %s60
      %p69 = scmp.eq.s32.totalorder %s14, 3
      %p70 = por %p68, %p69
      %p71 = scmp.ne.s32.totalorder %s60, %s61
      %p72 = scmp.eq.s32.totalorder %s14, 0
      %p73 = por %p71, %p72
      %p74 = scmp.ne.s32.totalorder %s60, %s61
      %p75 = scmp.eq.s32.totalorder %s15, 3
      %p76 = por %p74, %p75
      %p78 = scmp.ne.s32.totalorder %s61, %s77
      %p79 = scmp.eq.s32.totalorder %s15, 0
      %p80 = por %p78, %p79
      %s81 = ssub.s32 %s17, %s24
      %p82 = scmp.eq.s32.totalorder %s81, 0
      %s84 = sadd.s32 %s83, 1
      %s85 = scalar_select %p82, %s83, %s84
      %p88 = pneg %p82
      %p89 = scmp.eq.s32.totalorder %s9, 3
      %p90 = por %p88, %p89
      %p91 = scmp.ne.s32.totalorder %s83, %s86
      %p92 = scmp.eq.s32.totalorder %s9, 0
      %p93 = por %p91, %p92
      %p94 = scmp.ne.s32.totalorder %s83, %s86
      %p95 = scmp.eq.s32.totalorder %s14, 3
      %p96 = por %p94, %p95
      %p97 = scmp.ne.s32.totalorder %s86, %s87
      %p98 = scmp.eq.s32.totalorder %s14, 0
      %p99 = por %p97, %p98
      %p100 = scmp.ne.s32.totalorder %s86, %s87
      %p101 = scmp.eq.s32.totalorder %s15, 3
      %p102 = por %p100, %p101
      %p104 = scmp.ne.s32.totalorder %s87, %s103
      %p105 = scmp.eq.s32.totalorder %s15, 0
      %p106 = por %p104, %p105
      %s107 = ssub.s32 %s16, %s28
      %s108 = ssub.s32 %s17, %s24
      %s109 = sor.u32 %s107, %s108
      %p110 = scmp.eq.s32.totalorder %s109, 0
      %s112 = sadd.s32 %s111, 1
      %s113 = scalar_select %p110, %s111, %s112
      %p116 = pneg %p110
      %p117 = scmp.eq.s32.totalorder %s9, 3
      %p118 = por %p116, %p117
      %p119 = scmp.ne.s32.totalorder %s111, %s114
      %p120 = scmp.eq.s32.totalorder %s9, 0
      %p121 = por %p119, %p120
      %p122 = scmp.ne.s32.totalorder %s111, %s114
      %p123 = scmp.eq.s32.totalorder %s14, 3
      %p124 = por %p122, %p123
      %p125 = scmp.ne.s32.totalorder %s114, %s115
      %p126 = scmp.eq.s32.totalorder %s14, 0
      %p127 = por %p125, %p126
      %p128 = scmp.ne.s32.totalorder %s114, %s115
      %p129 = scmp.eq.s32.totalorder %s15, 3
      %p130 = por %p128, %p129
      %p132 = scmp.ne.s32.totalorder %s115, %s131
      %p133 = scmp.eq.s32.totalorder %s15, 0
      %p134 = por %p132, %p133
      %p135 = scmp.le.s32.totalorder 1, %s9
      %p136 = scmp.lt.s32.totalorder %s9, 5
      %p137 = pnand %p135, %p136
      %p138 = pneg %p137
      // Predicated region
      $region9: #{forward.32} parent=5 // pred_check
        _
      $region10: #{forward.32} parent=5 // pred_check_branch
        %140 = sbr.rel (%p137) target = $region12
      $region11: #{forward.32} parent=5 // pred_region
        %s141 = ssub.s32 %s9, 1
        // Predicated region
        $region13: #{forward.32} parent=11 // pred_check
          %p142 = pneg %p47
        $region14: #{forward.32} parent=11 // pred_check_branch
          %144 = sbr.rel (%p142) target = $region16
        $region15: #{forward.32} parent=11 // pred_region
          %p145 = scmp.lt.s32.totalorder %s18, 0
          %s146 = scalar_select %p145, %s18, 0
          %s147 = smul.addr %s146, 4
          %s148 = scalar_lea.vmem %s0, %s147
        $region16: #{forward.32} parent=11 // pred_fallthru
          _
      $region12: #{forward.32} parent=5 // pred_fallthru
        _
      %p149 = scmp.lt.s32.totalorder %s9, 4
      // Predicated region
      $region17: #{forward.32} parent=5 // pred_check
        %p150 = pneg %p149
      $region18: #{forward.32} parent=5 // pred_check_branch
        %152 = sbr.rel (%p150) target = $region20
      $region19: #{forward.32} parent=5 // pred_region
        // Predicated region
        $region21: #{forward.32} parent=19 // pred_check
          %p153 = pneg %p67
        $region22: #{forward.32} parent=19 // pred_check_branch
          %155 = sbr.rel (%p153) target = $region24
        $region23: #{forward.32} parent=19 // pred_region
          %s156 = sand.u32 %s57, 1
          %s157 = sand.u32 %s57, 1
          %s158 = smul.addr %s157, 64
          %s159 = scalar_lea.vmem [#allocation2], %s158
          %s160 = smul.u32 4, %s17
          %s161 = smul.addr %s160, 4
          %s162 = scalar_lea.vmem %s1, %s161
          // Predicated region
          $region25: #{forward.32} parent=23 // pred_check
            _
          $region26: #{forward.32} parent=23 // pred_check_branch
            %164 = sbr.rel (0) target = $region28
          $region27: #{forward.32} parent=23 // pred_region
            // Predicated region
            $region29: #{forward.32} parent=27 // pred_check
              _
            $region30: #{forward.32} parent=27 // pred_check_branch
              %166 = sbr.rel (0) target = $region32
            $region31: #{forward.32} parent=27 // pred_region
              loop: start=0, step=1, limit=1
              $region33: #{forward.32} parent=31 // loop_pre_header
                _
              $region34: #{forward.32} parent=31 // loop_header
                %s168 = sphi 0, %s172
                %p169 = scmp.ge.s32.totalorder %s168, 1
                %s173 = sphi %s162, %s162
                %s174 = sphi %s159, %s159
              $region35: #{forward.32} parent=31 // loop_header_branch
                %171 = sbr.rel (%p169) target = $region39
              $region36: #{forward.32} parent=31 // loop_body
                %v175 = vld [vmem:[%s173] sm:$0xff]
                %176 = vst [vmem:[%s174] sm:$0xff] %v175
                %v177 = vld [vmem:[%s173 + $0x8] sm:$0xff]
                %178 = vst [vmem:[%s174 + $0x8] sm:$0xff] %v177
                %v179 = vld [vmem:[%s173 + $0x40] sm:$0xff]
                %180 = vst [vmem:[%s174 + $0x10] sm:$0xff] %v179
                %v181 = vld [vmem:[%s173 + $0x48] sm:$0xff]
                %182 = vst [vmem:[%s174 + $0x18] sm:$0xff] %v181
                %v183 = vld [vmem:[%s173 + $0x80] sm:$0xff]
                %184 = vst [vmem:[%s174 + $0x20] sm:$0xff] %v183
                %v185 = vld [vmem:[%s173 + $0x88] sm:$0xff]
                %186 = vst [vmem:[%s174 + $0x28] sm:$0xff] %v185
                %v187 = vld [vmem:[%s173 + $0xc0] sm:$0xff]
                %188 = vst [vmem:[%s174 + $0x30] sm:$0xff] %v187
                %v189 = vld [vmem:[%s173 + $0xc8] sm:$0xff]
                %190 = vst [vmem:[%s174 + $0x38] sm:$0xff] %v189
              $region37: #{forward.32} parent=31 // loop_footer
                %s172 = sadd.s32 1, %s168
              $region38: #{forward.32} parent=31 // loop_footer_branch
                %167 = sbr.rel target = $region34
              $region39: #{forward.32} parent=31 // loop_exit
                _
            $region32: #{forward.32} parent=27 // pred_fallthru
              _
            // Predicated region
            $region40: #{forward.32} parent=27 // pred_check
              _
            $region41: #{forward.32} parent=27 // pred_check_branch
              %192 = sbr.rel target = $region43
            $region42: #{forward.32} parent=27 // pred_region
              _
            $region43: #{forward.32} parent=27 // pred_fallthru
              _
          $region28: #{forward.32} parent=23 // pred_fallthru
            _
          %193 = vnop
        $region24: #{forward.32} parent=19 // pred_fallthru
          _
        // Predicated region
        $region44: #{forward.32} parent=19 // pred_check
          %p194 = pneg %p93
        $region45: #{forward.32} parent=19 // pred_check_branch
          %196 = sbr.rel (%p194) target = $region47
        $region46: #{forward.32} parent=19 // pred_region
          %s197 = smul.u32 4, %s17
          %p198 = scmp.lt.s32.totalorder %s197, 15
          %s199 = scalar_select %p198, %s197, 15
          %s200 = scalar_lea.vmem %s2, %s199
          %s201 = smul.u32 4, %s17
        $region47: #{forward.32} parent=19 // pred_fallthru
          _
      $region20: #{forward.32} parent=5 // pred_fallthru
        _
      %p202 = scmp.le.s32.totalorder 1, %s9
      %p203 = scmp.lt.s32.totalorder %s9, 5
      %p204 = pnand %p202, %p203
      %p205 = pneg %p204
      // Predicated region
      $region48: #{forward.32} parent=5 // pred_check
        _
      $region49: #{forward.32} parent=5 // pred_check_branch
        %207 = sbr.rel (%p204) target = $region51
      $region50: #{forward.32} parent=5 // pred_region
        %s208 = ssub.s32 %s9, 1
        %s209 = sand.u32 %s60, 1
        %s210 = sand.u32 %s60, 1
        %s211 = smul.addr %s210, 64
        %s212 = scalar_lea.vmem [#allocation2], %s211
        // Predicated region
        $region52: #{forward.32} parent=50 // pred_check
          %p213 = pneg %p73
        $region53: #{forward.32} parent=50 // pred_check_branch
          %215 = sbr.rel (%p213) target = $region55
        $region54: #{forward.32} parent=50 // pred_region
          _
        $region55: #{forward.32} parent=50 // pred_fallthru
          _
        %p216 = scmp.lt.s32.totalorder %s18, 0
        %s217 = scalar_select %p216, %s18, 0
        %s218 = smul.addr %s217, 4
        %s219 = scalar_lea.vmem %s0, %s218
        %p220 = pneg %p47
        %p221 = pneg %p44
        %s222 = sand.u32 %s60, 1
        %s223 = sand.u32 %s60, 1
        %s224 = smul.addr %s223, 64
        %s225 = scalar_lea.vmem [#allocation2], %s224
        %p226 = pneg %p73
        %p227 = pneg %p70
        %s228 = smul.u32 4, %s19
        %p229 = scmp.lt.s32.totalorder %s228, 15
        %s230 = scalar_select %p229, %s228, 15
        %s231 = scalar_lea.vmem %s2, %s230
        %p232 = pneg %p99
        %p233 = pneg %p96
        %p234 = pneg %p127
        %p235 = pneg %p124
        %s236 = smul.u32 4, %s19
        %p237 = scmp.lt.s32.totalorder %s18, 0
        %s238 = scalar_select %p237, %s18, 0
        %p239 = scmp.lt.s32.totalorder %s236, 15
        %s240 = scalar_select %p239, %s236, 15
        %s241 = smul.addr %s238, 16
        %s242 = sadd.s32 %s240, %s241
        %s243 = smul.addr %s242, 4
        %s244 = scalar_lea.vmem %s3, %s243
        %p245 = scmp.lt.s32.totalorder %s18, 0
        %s246 = scalar_select %p245, %s18, 0
        %s247 = smul.addr %s246, 4
        %s248 = scalar_lea.vmem %s0, %s247
        %s249 = smul.u32 4, %s19
        %s250 = smul.u32 4, %s19
        %p251 = scmp.lt.s32.totalorder %s250, 15
        %s252 = scalar_select %p251, %s250, 15
        %s253 = scalar_lea.vmem %s2, %s252
        %s254 = smul.u32 4, %s19
        %s255 = smul.u32 4, %s19
        %p256 = scmp.lt.s32.totalorder %s18, 0
        %s257 = scalar_select %p256, %s18, 0
        %p258 = scmp.lt.s32.totalorder %s255, 15
        %s259 = scalar_select %p258, %s255, 15
        %s260 = smul.addr %s257, 16
        %s261 = sadd.s32 %s259, %s260
        %s262 = smul.addr %s261, 4
        %s263 = scalar_lea.vmem %s3, %s262
        %s264 = smul.u32 4, %s19
        %v266 = vld [vmem:[%s248] sm:$0xf]
        %v267 = vld [vmem:[%s212] sm:$0xff]
        %v268 = vld [vmem:[%s212 + $0x8] sm:$0xff]
        %v269 = vld [vmem:[%s212 + $0x10] sm:$0xff]
        %v270 = vld [vmem:[%s212 + $0x18] sm:$0xff]
        %v271 = vld [vmem:[%s212 + $0x20] sm:$0xff]
        %v272 = vld [vmem:[%s212 + $0x28] sm:$0xff]
        %v273 = vld [vmem:[%s212 + $0x30] sm:$0xff]
        %v274 = vld [vmem:[%s212 + $0x38] sm:$0xff]
        %v275 = vld [vmem:[%s253] sm:$0xf]
        %v277 = vlaneseq
        %v278 = vshrl.u32 %v277, 7
        %v279 = vsub.s32 0, %v278
        %v280 = vrot.slane %v275, %v279
        %v281 = vlaneseq
        %v282 = vshrl.u32 %v281, 7
        %v283 = vsub.s32 1, %v282
        %v284 = vrot.slane %v275, %v283
        %v285 = vlaneseq
        %v286 = vshrl.u32 %v285, 7
        %v287 = vsub.s32 2, %v286
        %v288 = vrot.slane %v275, %v287
        %v289 = vlaneseq
        %v290 = vshrl.u32 %v289, 7
        %v291 = vsub.s32 3, %v290
        %v292 = vrot.slane %v275, %v291
        %v305 = vunpack.c.l.b16 %v267
        %v306 = vunpack.c.h.b16 %v267
        %v307 = vunpack.c.l.b16 %v268
        %v308 = vunpack.c.h.b16 %v268
        %v309 = vunpack.c.l.b16 %v269
        %v310 = vunpack.c.h.b16 %v269
        %v311 = vunpack.c.l.b16 %v270
        %v312 = vunpack.c.h.b16 %v270
        %v313 = vunpack.c.l.b16 %v271
        %v314 = vunpack.c.h.b16 %v271
        %v315 = vunpack.c.l.b16 %v272
        %v316 = vunpack.c.h.b16 %v272
        %v317 = vunpack.c.l.b16 %v273
        %v318 = vunpack.c.h.b16 %v273
        %v319 = vunpack.c.l.b16 %v274
        %v320 = vunpack.c.h.b16 %v274
        %v321 = vpack.c.b16 %v309, %v305
        %v322 = vpack.c.b16 %v310, %v306
        %v323 = vpack.c.b16 %v311, %v307
        %v324 = vpack.c.b16 %v312, %v308
        %v325 = vpack.c.b16 %v317, %v313
        %v326 = vpack.c.b16 %v318, %v314
        %v327 = vpack.c.b16 %v319, %v315
        %v328 = vpack.c.b16 %v320, %v316
        %vm337 = vcmask 261120
        %v339 = vsel %vm337, %v266, 0
        %341 = vmatprep.subr.bf16.mxu0 %v322
        %342 = vmatpush1.bf16.msra.mxu0 %v321
        %343 = vmatprep.subr.bf16.mxu0 %v326
        %344 = vmatpush1.bf16.msra.mxu0 %v325
        %345 = vmatprep.subr.bf16.mxu0 0
        %346 = vmatpush1.bf16.msra.mxu0 0
        %347 = vmatprep.subr.bf16.mxu0 0
        %348 = vmatpush1.bf16.msra.mxu0 0
        %349 = vmatprep.subr.bf16.mxu0 0
        %350 = vmatpush1.bf16.msra.mxu0 0
        %351 = vmatprep.subr.bf16.mxu0 0
        %352 = vmatpush1.bf16.msra.mxu0 0
        %353 = vmatprep.subr.bf16.mxu0 0
        %354 = vmatpush1.bf16.msra.mxu0 0
        %355 = vmatprep.subr.bf16.mxu0 0
        %356 = vmatpush1.bf16.msra.mxu0 0
        %357 = vmatprep.subr.bf16.mxu0 0
        %358 = vmatpush1.bf16.msra.mxu0 0
        %359 = vmatprep.subr.bf16.mxu0 0
        %360 = vmatpush1.bf16.msra.mxu0 0
        %361 = vmatprep.subr.bf16.mxu0 0
        %362 = vmatpush1.bf16.msra.mxu0 0
        %363 = vmatprep.subr.bf16.mxu0 0
        %364 = vmatpush1.bf16.msra.mxu0 0
        %365 = vmatprep.subr.bf16.mxu0 0
        %366 = vmatpush1.bf16.msra.mxu0 0
        %367 = vmatprep.subr.bf16.mxu0 0
        %368 = vmatpush1.bf16.msra.mxu0 0
        %369 = vmatprep.subr.bf16.mxu0 0
        %370 = vmatpush1.bf16.msra.mxu0 0
        %371 = vmatprep.subr.bf16.mxu0 0
        %372 = vmatpush1.bf16.msra.mxu0 0
        %373 = vmatprep.mubr.bf16.mxu0 0
        %374 = vmatmul.mubr.bf16.gmra.mrb[0].mxu0 %v339
        %v375 = vpop.f32.mrb[0].mxu0
        %v376 = vadd.f32 %v280, %v375
        %v377 = vpop.f32.mrb[0].mxu0
        %v378 = vadd.f32 %v284, %v377
        %v379 = vpop.f32.mrb[0].mxu0
        %v380 = vpop.f32.mrb[0].mxu0
        %381 = vdwg.mxu0
        %382 = vmatprep.subr.bf16.mxu0 %v324
        %383 = vmatpush1.bf16.msra.mxu0 %v323
        %384 = vmatprep.subr.bf16.mxu0 %v328
        %385 = vmatpush1.bf16.msra.mxu0 %v327
        %386 = vmatprep.subr.bf16.mxu0 0
        %387 = vmatpush1.bf16.msra.mxu0 0
        %388 = vmatprep.subr.bf16.mxu0 0
        %389 = vmatpush1.bf16.msra.mxu0 0
        %390 = vmatprep.subr.bf16.mxu0 0
        %391 = vmatpush1.bf16.msra.mxu0 0
        %392 = vmatprep.subr.bf16.mxu0 0
        %393 = vmatpush1.bf16.msra.mxu0 0
        %394 = vmatprep.subr.bf16.mxu0 0
        %395 = vmatpush1.bf16.msra.mxu0 0
        %396 = vmatprep.subr.bf16.mxu0 0
        %397 = vmatpush1.bf16.msra.mxu0 0
        %398 = vmatprep.subr.bf16.mxu0 0
        %399 = vmatpush1.bf16.msra.mxu0 0
        %400 = vmatprep.subr.bf16.mxu0 0
        %401 = vmatpush1.bf16.msra.mxu0 0
        %402 = vmatprep.subr.bf16.mxu0 0
        %403 = vmatpush1.bf16.msra.mxu0 0
        %404 = vmatprep.subr.bf16.mxu0 0
        %405 = vmatpush1.bf16.msra.mxu0 0
        %406 = vmatprep.subr.bf16.mxu0 0
        %407 = vmatpush1.bf16.msra.mxu0 0
        %408 = vmatprep.subr.bf16.mxu0 0
        %409 = vmatpush1.bf16.msra.mxu0 0
        %410 = vmatprep.subr.bf16.mxu0 0
        %411 = vmatpush1.bf16.msra.mxu0 0
        %412 = vmatprep.subr.bf16.mxu0 0
        %413 = vmatpush1.bf16.msra.mxu0 0
        %414 = vmatprep.mubr.bf16.mxu0 0
        %415 = vmatmul.mubr.bf16.gmra.mrb[0].mxu0 %v339
        %v416 = vpop.f32.mrb[0].mxu0
        %v417 = vadd.f32 %v288, %v416
        %v418 = vpop.f32.mrb[0].mxu0
        %v419 = vadd.f32 %v292, %v418
        %v420 = vpop.f32.mrb[0].mxu0
        %v421 = vpop.f32.mrb[0].mxu0
        %422 = vdwg.mxu0
        %v423 = vmax.f32 %v376, 0.0
        %v424 = vmax.f32 %v378, 0.0
        %v425 = vmax.f32 %v417, 0.0
        %v426 = vmax.f32 %v419, 0.0
        %v427 = vpack.c.bf16 %v423, %v423
        %v428 = vpack.c.bf16 %v424, %v424
        %v429 = vpack.c.bf16 %v425, %v425
        %v430 = vpack.c.bf16 %v426, %v426
        %v435 = vunpack.c.l.b16 %v427
        %v436 = vunpack.c.l.b16 %v428
        %v437 = vunpack.c.l.b16 %v429
        %v438 = vunpack.c.l.b16 %v430
        %v439 = vpack.c.b16 %v436, %v435
        %v440 = vpack.c.b16 %v438, %v437
        %443 = vst [vmem:[%s263] sm:$0xff] %v439
        %444 = vst [vmem:[%s263 + $0x8] sm:$0xff] %v440
        %s445 = smul.u32 4, %s19
        %p446 = scmp.lt.s32.totalorder %s18, 0
        %s447 = scalar_select %p446, %s18, 0
        %p448 = scmp.lt.s32.totalorder %s445, 15
        %s449 = scalar_select %p448, %s445, 15
        %s450 = smul.addr %s447, 16
        %s451 = sadd.s32 %s449, %s450
        %s452 = smul.addr %s451, 4
        %s453 = scalar_lea.vmem %s3, %s452
        // Predicated region
        $region56: #{forward.32} parent=50 // pred_check
          %p454 = pneg %p124
        $region57: #{forward.32} parent=50 // pred_check_branch
          %456 = sbr.rel (%p454) target = $region59
        $region58: #{forward.32} parent=50 // pred_region
          %s457 = smul.u32 4, %s19
        $region59: #{forward.32} parent=50 // pred_fallthru
          _
      $region51: #{forward.32} parent=5 // pred_fallthru
        _
      %p458 = scmp.le.s32.totalorder 2, %s9
      // Predicated region
      $region60: #{forward.32} parent=5 // pred_check
        %p459 = pneg %p458
      $region61: #{forward.32} parent=5 // pred_check_branch
        %461 = sbr.rel (%p459) target = $region63
      $region62: #{forward.32} parent=5 // pred_region
        %s462 = ssub.s32 %s9, 2
        // Predicated region
        $region64: #{forward.32} parent=62 // pred_check
          %p463 = pneg %p130
        $region65: #{forward.32} parent=62 // pred_check_branch
          %465 = sbr.rel (%p463) target = $region67
        $region66: #{forward.32} parent=62 // pred_region
          %s466 = smul.u32 4, %s21
          %p467 = scmp.lt.s32.totalorder %s20, 0
          %s468 = scalar_select %p467, %s20, 0
          %p469 = scmp.lt.s32.totalorder %s466, 15
          %s470 = scalar_select %p469, %s466, 15
          %s471 = smul.addr %s468, 16
          %s472 = sadd.s32 %s470, %s471
          %s473 = smul.addr %s472, 4
          %s474 = scalar_lea.vmem %s3, %s473
        $region67: #{forward.32} parent=62 // pred_fallthru
          _
      $region63: #{forward.32} parent=5 // pred_fallthru
        _
    $region6: #{forward.32} parent=1 // loop_footer
      %s13 = sadd.s32 1, %s9
    $region7: #{forward.32} parent=1 // loop_footer_branch
      %8 = sbr.rel target = $region3
    $region8: #{forward.32} parent=1 // loop_exit
      _

// kernel: forward.30
$region0: #{forward.30}
  #allocation0 [shape = 'u32[]', space=smem, size = 0x4, offset = 0x4, fixed_abs, tag = 'smem constant byte address 0x4 - core index']
  #allocation1 [shape = 'u32[144,128]{1,0:T(1,128)}', space=vmem, size = 0x12000, scoped, tag = 'internal scratch']
  %s0 = inlined_call_operand.vmem [shape: bf16[2,4,96], index: 0, kind: input, shape index: {}]
  %s1 = inlined_call_operand.vmem [shape: bf16[2,4,32], index: 1, kind: output, shape index: {}]
  %s2 = sld [smem:[#allocation0]]
  $region37: #{forward.30} parent=0
    _
  %s4 = ssub.s32 1, %s2
  %s5 = scalar_select 0, %s4, %s2
  loop: start=0, step=1, limit=4
  $region2: #{forward.30} parent=0 // loop_pre_header
    _
  $region3: #{forward.30} parent=0 // loop_header
    %s7 = sphi 0, %s11
    %p8 = scmp.ge.s32.totalorder %s7, 4
    %s17 = sphi 0, %s19
    %s20 = sphi 0, %s17
    %s21 = sphi 0, %s20
    %s37 = sphi 0, %s21
    %s43 = sphi 0, %s45
    %s46 = sphi 0, %s43
    %s47 = sphi 0, %s46
    %s63 = sphi 0, %s47
  $region4: #{forward.30} parent=0 // loop_header_branch
    %10 = sbr.rel (%p8) target = $region8
  $region5: #{forward.30} parent=0 // loop_body
    %s12 = ssub.s32 %s7, 1
    %s13 = ssub.s32 %s7, 2
    %s14 = sadd.s32 %s7, 1
    %s15 = ssub.s32 %s7, %s14
    %p16 = scmp.eq.s32.totalorder %s15, 0
    %s18 = sadd.s32 %s17, 1
    %s19 = scalar_select %p16, %s17, %s18
    %p22 = pneg %p16
    %p23 = scmp.eq.s32.totalorder %s7, 1
    %p24 = por %p22, %p23
    %p25 = scmp.ne.s32.totalorder %s17, %s20
    %p26 = scmp.eq.s32.totalorder %s7, 0
    %p27 = por %p25, %p26
    %p28 = scmp.ne.s32.totalorder %s17, %s20
    %p29 = scmp.eq.s32.totalorder %s12, 1
    %p30 = por %p28, %p29
    %p31 = scmp.ne.s32.totalorder %s20, %s21
    %p32 = scmp.eq.s32.totalorder %s12, 0
    %p33 = por %p31, %p32
    %p34 = scmp.ne.s32.totalorder %s20, %s21
    %p35 = scmp.eq.s32.totalorder %s13, 1
    %p36 = por %p34, %p35
    %p38 = scmp.ne.s32.totalorder %s21, %s37
    %p39 = scmp.eq.s32.totalorder %s13, 0
    %p40 = por %p38, %p39
    %s41 = ssub.s32 %s7, %s14
    %p42 = scmp.eq.s32.totalorder %s41, 0
    %s44 = sadd.s32 %s43, 1
    %s45 = scalar_select %p42, %s43, %s44
    %p48 = pneg %p42
    %p49 = scmp.eq.s32.totalorder %s7, 1
    %p50 = por %p48, %p49
    %p51 = scmp.ne.s32.totalorder %s43, %s46
    %p52 = scmp.eq.s32.totalorder %s7, 0
    %p53 = por %p51, %p52
    %p54 = scmp.ne.s32.totalorder %s43, %s46
    %p55 = scmp.eq.s32.totalorder %s12, 1
    %p56 = por %p54, %p55
    %p57 = scmp.ne.s32.totalorder %s46, %s47
    %p58 = scmp.eq.s32.totalorder %s12, 0
    %p59 = por %p57, %p58
    %p60 = scmp.ne.s32.totalorder %s46, %s47
    %p61 = scmp.eq.s32.totalorder %s13, 1
    %p62 = por %p60, %p61
    %p64 = scmp.ne.s32.totalorder %s47, %s63
    %p65 = scmp.eq.s32.totalorder %s13, 0
    %p66 = por %p64, %p65
    %p67 = scmp.le.s32.totalorder 1, %s7
    %p68 = scmp.lt.s32.totalorder %s7, 3
    %p69 = pnand %p67, %p68
    %p70 = pneg %p69
    // Predicated region
    $region9: #{forward.30} parent=5 // pred_check
      _
    $region10: #{forward.30} parent=5 // pred_check_branch
      %72 = sbr.rel (%p69) target = $region12
    $region11: #{forward.30} parent=5 // pred_region
      %s73 = ssub.s32 %s7, 1
    $region12: #{forward.30} parent=5 // pred_fallthru
      _
    %p74 = scmp.lt.s32.totalorder %s7, 2
    // Predicated region
    $region13: #{forward.30} parent=5 // pred_check
      %p75 = pneg %p74
    $region14: #{forward.30} parent=5 // pred_check_branch
      %77 = sbr.rel (%p75) target = $region16
    $region15: #{forward.30} parent=5 // pred_region
      // Predicated region
      $region17: #{forward.30} parent=15 // pred_check
        %p78 = pneg %p27
      $region18: #{forward.30} parent=15 // pred_check_branch
        %80 = sbr.rel (%p78) target = $region20
      $region19: #{forward.30} parent=15 // pred_region
        %p81 = scmp.lt.s32.totalorder %s7, 1
        %s82 = scalar_select %p81, %s7, 1
        %s83 = smul.addr %s82, 2
        %s84 = scalar_lea.vmem %s0, %s83
      $region20: #{forward.30} parent=15 // pred_fallthru
        _
    $region16: #{forward.30} parent=5 // pred_fallthru
      _
    %p85 = scmp.le.s32.totalorder 1, %s7
    %p86 = scmp.lt.s32.totalorder %s7, 3
    %p87 = pnand %p85, %p86
    %p88 = pneg %p87
    // Predicated region
    $region21: #{forward.30} parent=5 // pred_check
      _
    $region22: #{forward.30} parent=5 // pred_check_branch
      %90 = sbr.rel (%p87) target = $region24
    $region23: #{forward.30} parent=5 // pred_region
      %s91 = ssub.s32 %s7, 1
      %p92 = scmp.lt.s32.totalorder %s12, 1
      %s93 = scalar_select %p92, %s12, 1
      %s94 = smul.addr %s93, 2
      %s95 = scalar_lea.vmem %s0, %s94
      %p96 = pneg %p33
      %p97 = pneg %p30
      %p98 = pneg %p59
      %p99 = pneg %p56
      %p100 = scmp.lt.s32.totalorder %s12, 1
      %s101 = scalar_select %p100, %s12, 1
      %s102 = smul.addr %s101, 2
      %s103 = scalar_lea.vmem %s1, %s102
      %p104 = scmp.lt.s32.totalorder %s12, 1
      %s105 = scalar_select %p104, %s12, 1
      %s106 = smul.addr %s105, 2
      %s107 = scalar_lea.vmem %s0, %s106
      %p108 = scmp.lt.s32.totalorder %s12, 1
      %s109 = scalar_select %p108, %s12, 1
      %s110 = smul.addr %s109, 2
      %s111 = scalar_lea.vmem %s1, %s110
      %v113 = vld [vmem:[%s107] sm:$0x3]
      %v116 = vunpack.c.l.s4 1983009808
      %v117 = vunpack.c.0.s8 %v116
      %v118 = vlaneseq
      %v119 = vshrl.u32 %v118, 7
      %v120 = vsub.s32 %v117, %v119
      %v121 = vrot.slane %v113, %v120
      %122 = vrot.lane.b32.xlu0 %v121, 96
      %v123 = vpop.permute.xlu0 %122
      %vm124 = vcmask 64512
      %v126 = vsel %vm124, %v113, 0
      %v129 = vsel %vm124, %v123, 0
      %131 = vmatprep.subr.bf16.mxu0 0
      %132 = vmatpush1.bf16.xpose.msra.mxu0 %v129
      %133 = vmatprep.subr.bf16.mxu0 0
      %134 = vmatpush1.bf16.xpose.msra.mxu0 0
      %135 = vmatprep.subr.bf16.mxu0 0
      %136 = vmatpush1.bf16.xpose.msra.mxu0 0
      %137 = vmatprep.subr.bf16.mxu0 0
      %138 = vmatpush1.bf16.xpose.msra.mxu0 0
      %139 = vmatprep.subr.bf16.mxu0 0
      %140 = vmatpush1.bf16.xpose.msra.mxu0 0
      %141 = vmatprep.subr.bf16.mxu0 0
      %142 = vmatpush1.bf16.xpose.msra.mxu0 0
      %143 = vmatprep.subr.bf16.mxu0 0
      %144 = vmatpush1.bf16.xpose.msra.mxu0 0
      %145 = vmatprep.subr.bf16.mxu0 0
      %146 = vmatpush1.bf16.xpose.msra.mxu0 0
      %147 = vmatprep.subr.bf16.mxu0 0
      %148 = vmatpush1.bf16.xpose.msra.mxu0 0
      %149 = vmatprep.subr.bf16.mxu0 0
      %150 = vmatpush1.bf16.xpose.msra.mxu0 0
      %151 = vmatprep.subr.bf16.mxu0 0
      %152 = vmatpush1.bf16.xpose.msra.mxu0 0
      %153 = vmatprep.subr.bf16.mxu0 0
      %154 = vmatpush1.bf16.xpose.msra.mxu0 0
      %155 = vmatprep.subr.bf16.mxu0 0
      %156 = vmatpush1.bf16.xpose.msra.mxu0 0
      %157 = vmatprep.subr.bf16.mxu0 0
      %158 = vmatpush1.bf16.xpose.msra.mxu0 0
      %159 = vmatprep.subr.bf16.mxu0 0
      %160 = vmatpush1.bf16.xpose.msra.mxu0 0
      %161 = vmatprep.subr.bf16.mxu0 0
      %162 = vmatpush1.bf16.xpose.msra.mxu0 0
      %163 = vmatprep.mubr.bf16.mxu0 0
      %164 = vmatmul.mubr.bf16.gmra.mrb[0].mxu0 %v126
      %v165 = vpop.f32.mrb[0].mxu0
      %v166 = vadd.f32 0.0, %v165
      %v167 = vpop.f32.mrb[0].mxu0
      %v168 = vpop.f32.mrb[0].mxu0
      %v169 = vpop.f32.mrb[0].mxu0
      %170 = vdwg.mxu0
      %v171 = vmul.f32 %v166, 0.35355338
      %vm172 = vcmask 27648
      %v173 = vsel %vm172, %v171, -inf
      %174 = vmax.xlane.f32.xlu0 %v173
      %v175 = vpop.xlane.xlu0 %174
      %v176 = vsub.f32 %v171, %v175
      %v177 = vmul.f32 %v176, 1.442695
      %v178 = vpow.pop %v177
      %v179 = vsel %vm172, %v178, 0.0
      %180 = vadd.xlane.f32.xlu0 %v179
      %v181 = vpop.xlane.xlu0 %180
      %v182 = vrcp.pop %v181
      %v183 = vmul.f32 %v178, %v182
      %v184 = vpack.c.bf16 %v183, %v183
      %185 = vrot.lane.b32.xlu0 %v121, 64
      %v186 = vpop.permute.xlu0 %185
      %vm187 = vcmask 31744
      %v189 = vsel %vm187, %v184, 0
      %vm191 = vcmask 1041408
      %v193 = vsel %vm191, %v186, 0
      %195 = vmatprep.subr.bf16.mxu0 0
      %196 = vmatpush1.bf16.msra.mxu0 %v193
      %197 = vmatprep.subr.bf16.mxu0 0
      %198 = vmatpush1.bf16.msra.mxu0 0
      %199 = vmatprep.subr.bf16.mxu0 0
      %200 = vmatpush1.bf16.msra.mxu0 0
      %201 = vmatprep.subr.bf16.mxu0 0
      %202 = vmatpush1.bf16.msra.mxu0 0
      %203 = vmatprep.subr.bf16.mxu0 0
      %204 = vmatpush1.bf16.msra.mxu0 0
      %205 = vmatprep.subr.bf16.mxu0 0
      %206 = vmatpush1.bf16.msra.mxu0 0
      %207 = vmatprep.subr.bf16.mxu0 0
      %208 = vmatpush1.bf16.msra.mxu0 0
      %209 = vmatprep.subr.bf16.mxu0 0
      %210 = vmatpush1.bf16.msra.mxu0 0
      %211 = vmatprep.subr.bf16.mxu0 0
      %212 = vmatpush1.bf16.msra.mxu0 0
      %213 = vmatprep.subr.bf16.mxu0 0
      %214 = vmatpush1.bf16.msra.mxu0 0
      %215 = vmatprep.subr.bf16.mxu0 0
      %216 = vmatpush1.bf16.msra.mxu0 0
      %217 = vmatprep.subr.bf16.mxu0 0
      %218 = vmatpush1.bf16.msra.mxu0 0
      %219 = vmatprep.subr.bf16.mxu0 0
      %220 = vmatpush1.bf16.msra.mxu0 0
      %221 = vmatprep.subr.bf16.mxu0 0
      %222 = vmatpush1.bf16.msra.mxu0 0
      %223 = vmatprep.subr.bf16.mxu0 0
      %224 = vmatpush1.bf16.msra.mxu0 0
      %225 = vmatprep.subr.bf16.mxu0 0
      %226 = vmatpush1.bf16.msra.mxu0 0
      %227 = vmatprep.mubr.bf16.mxu0 0
      %228 = vmatmul.mubr.bf16.gmra.mrb[0].mxu0 %v189
      %v229 = vpop.f32.mrb[0].mxu0
      %v230 = vadd.f32 0.0, %v229
      %v231 = vpop.f32.mrb[0].mxu0
      %v232 = vpop.f32.mrb[0].mxu0
      %v233 = vpop.f32.mrb[0].mxu0
      %234 = vdwg.mxu0
      %235 = vrot.lane.b32.xlu0 %v121, 120
      %v236 = vpop.permute.xlu0 %235
      %237 = vrot.lane.b32.xlu0 %v121, 88
      %v238 = vpop.permute.xlu0 %237
      %v240 = vsel %vm124, %v236, 0
      %v243 = vsel %vm124, %v238, 0
      %245 = vmatprep.subr.bf16.mxu0 0
      %246 = vmatpush1.bf16.xpose.msra.mxu0 %v243
      %247 = vmatprep.subr.bf16.mxu0 0
      %248 = vmatpush1.bf16.xpose.msra.mxu0 0
      %249 = vmatprep.subr.bf16.mxu0 0
      %250 = vmatpush1.bf16.xpose.msra.mxu0 0
      %251 = vmatprep.subr.bf16.mxu0 0
      %252 = vmatpush1.bf16.xpose.msra.mxu0 0
      %253 = vmatprep.subr.bf16.mxu0 0
      %254 = vmatpush1.bf16.xpose.msra.mxu0 0
      %255 = vmatprep.subr.bf16.mxu0 0
      %256 = vmatpush1.bf16.xpose.msra.mxu0 0
      %257 = vmatprep.subr.bf16.mxu0 0
      %258 = vmatpush1.bf16.xpose.msra.mxu0 0
      %259 = vmatprep.subr.bf16.mxu0 0
      %260 = vmatpush1.bf16.xpose.msra.mxu0 0
      %261 = vmatprep.subr.bf16.mxu0 0
      %262 = vmatpush1.bf16.xpose.msra.mxu0 0
      %263 = vmatprep.subr.bf16.mxu0 0
      %264 = vmatpush1.bf16.xpose.msra.mxu0 0
      %265 = vmatprep.subr.bf16.mxu0 0
      %266 = vmatpush1.bf16.xpose.msra.mxu0 0
      %267 = vmatprep.subr.bf16.mxu0 0
      %268 = vmatpush1.bf16.xpose.msra.mxu0 0
      %269 = vmatprep.subr.bf16.mxu0 0
      %270 = vmatpush1.bf16.xpose.msra.mxu0 0
      %271 = vmatprep.subr.bf16.mxu0 0
      %272 = vmatpush1.bf16.xpose.msra.mxu0 0
      %273 = vmatprep.subr.bf16.mxu0 0
      %274 = vmatpush1.bf16.xpose.msra.mxu0 0
      %275 = vmatprep.subr.bf16.mxu0 0
      %276 = vmatpush1.bf16.xpose.msra.mxu0 0
      %277 = vmatprep.mubr.bf16.mxu0 0
      %278 = vmatmul.mubr.bf16.gmra.mrb[0].mxu0 %v240
      %v279 = vpop.f32.mrb[0].mxu0
      %v280 = vadd.f32 0.0, %v279
      %v281 = vpop.f32.mrb[0].mxu0
      %v282 = vpop.f32.mrb[0].mxu0
      %v283 = vpop.f32.mrb[0].mxu0
      %284 = vdwg.mxu0
      %v285 = vmul.f32 %v280, 0.35355338
      %v286 = vsel %vm172, %v285, -inf
      %287 = vmax.xlane.f32.xlu0 %v286
      %v288 = vpop.xlane.xlu0 %287
      %v289 = vsub.f32 %v285, %v288
      %v290 = vmul.f32 %v289, 1.442695
      %v291 = vpow.pop %v290
      %v292 = vsel %vm172, %v291, 0.0
      %293 = vadd.xlane.f32.xlu0 %v292
      %v294 = vpop.xlane.xlu0 %293
      %v295 = vrcp.pop %v294
      %v296 = vmul.f32 %v291, %v295
      %v297 = vpack.c.bf16 %v296, %v296
      %298 = vrot.lane.b32.xlu0 %v121, 56
      %v299 = vpop.permute.xlu0 %298
      %v301 = vsel %vm187, %v297, 0
      %v304 = vsel %vm191, %v299, 0
      %306 = vmatprep.subr.bf16.mxu0 0
      %307 = vmatpush1.bf16.msra.mxu0 %v304
      %308 = vmatprep.subr.bf16.mxu0 0
      %309 = vmatpush1.bf16.msra.mxu0 0
      %310 = vmatprep.subr.bf16.mxu0 0
      %311 = vmatpush1.bf16.msra.mxu0 0
      %312 = vmatprep.subr.bf16.mxu0 0
      %313 = vmatpush1.bf16.msra.mxu0 0
      %314 = vmatprep.subr.bf16.mxu0 0
      %315 = vmatpush1.bf16.msra.mxu0 0
      %316 = vmatprep.subr.bf16.mxu0 0
      %317 = vmatpush1.bf16.msra.mxu0 0
      %318 = vmatprep.subr.bf16.mxu0 0
      %319 = vmatpush1.bf16.msra.mxu0 0
      %320 = vmatprep.subr.bf16.mxu0 0
      %321 = vmatpush1.bf16.msra.mxu0 0
      %322 = vmatprep.subr.bf16.mxu0 0
      %323 = vmatpush1.bf16.msra.mxu0 0
      %324 = vmatprep.subr.bf16.mxu0 0
      %325 = vmatpush1.bf16.msra.mxu0 0
      %326 = vmatprep.subr.bf16.mxu0 0
      %327 = vmatpush1.bf16.msra.mxu0 0
      %328 = vmatprep.subr.bf16.mxu0 0
      %329 = vmatpush1.bf16.msra.mxu0 0
      %330 = vmatprep.subr.bf16.mxu0 0
      %331 = vmatpush1.bf16.msra.mxu0 0
      %332 = vmatprep.subr.bf16.mxu0 0
      %333 = vmatpush1.bf16.msra.mxu0 0
      %334 = vmatprep.subr.bf16.mxu0 0
      %335 = vmatpush1.bf16.msra.mxu0 0
      %336 = vmatprep.subr.bf16.mxu0 0
      %337 = vmatpush1.bf16.msra.mxu0 0
      %338 = vmatprep.mubr.bf16.mxu0 0
      %339 = vmatmul.mubr.bf16.gmra.mrb[0].mxu0 %v301
      %v340 = vpop.f32.mrb[0].mxu0
      %v341 = vadd.f32 0.0, %v340
      %v342 = vpop.f32.mrb[0].mxu0
      %v343 = vpop.f32.mrb[0].mxu0
      %v344 = vpop.f32.mrb[0].mxu0
      %345 = vdwg.mxu0
      %346 = vrot.lane.b32.xlu0 %v121, 112
      %v347 = vpop.permute.xlu0 %346
      %348 = vrot.lane.b32.xlu0 %v121, 80
      %v349 = vpop.permute.xlu0 %348
      %v351 = vsel %vm124, %v347, 0
      %v354 = vsel %vm124, %v349, 0
      %356 = vmatprep.subr.bf16.mxu0 0
      %357 = vmatpush1.bf16.xpose.msra.mxu0 %v354
      %358 = vmatprep.subr.bf16.mxu0 0
      %359 = vmatpush1.bf16.xpose.msra.mxu0 0
      %360 = vmatprep.subr.bf16.mxu0 0
      %361 = vmatpush1.bf16.xpose.msra.mxu0 0
      %362 = vmatprep.subr.bf16.mxu0 0
      %363 = vmatpush1.bf16.xpose.msra.mxu0 0
      %364 = vmatprep.subr.bf16.mxu0 0
      %365 = vmatpush1.bf16.xpose.msra.mxu0 0
      %366 = vmatprep.subr.bf16.mxu0 0
      %367 = vmatpush1.bf16.xpose.msra.mxu0 0
      %368 = vmatprep.subr.bf16.mxu0 0
      %369 = vmatpush1.bf16.xpose.msra.mxu0 0
      %370 = vmatprep.subr.bf16.mxu0 0
      %371 = vmatpush1.bf16.xpose.msra.mxu0 0
      %372 = vmatprep.subr.bf16.mxu0 0
      %373 = vmatpush1.bf16.xpose.msra.mxu0 0
      %374 = vmatprep.subr.bf16.mxu0 0
      %375 = vmatpush1.bf16.xpose.msra.mxu0 0
      %376 = vmatprep.subr.bf16.mxu0 0
      %377 = vmatpush1.bf16.xpose.msra.mxu0 0
      %378 = vmatprep.subr.bf16.mxu0 0
      %379 = vmatpush1.bf16.xpose.msra.mxu0 0
      %380 = vmatprep.subr.bf16.mxu0 0
      %381 = vmatpush1.bf16.xpose.msra.mxu0 0
      %382 = vmatprep.subr.bf16.mxu0 0
      %383 = vmatpush1.bf16.xpose.msra.mxu0 0
      %384 = vmatprep.subr.bf16.mxu0 0
      %385 = vmatpush1.bf16.xpose.msra.mxu0 0
      %386 = vmatprep.subr.bf16.mxu0 0
      %387 = vmatpush1.bf16.xpose.msra.mxu0 0
      %388 = vmatprep.mubr.bf16.mxu0 0
      %389 = vmatmul.mubr.bf16.gmra.mrb[0].mxu0 %v351
      %v390 = vpop.f32.mrb[0].mxu0
      %v391 = vadd.f32 0.0, %v390
      %v392 = vpop.f32.mrb[0].mxu0
      %v393 = vpop.f32.mrb[0].mxu0
      %v394 = vpop.f32.mrb[0].mxu0
      %395 = vdwg.mxu0
      %v396 = vmul.f32 %v391, 0.35355338
      %v397 = vsel %vm172, %v396, -inf
      %398 = vmax.xlane.f32.xlu0 %v397
      %v399 = vpop.xlane.xlu0 %398
      %v400 = vsub.f32 %v396, %v399
      %v401 = vmul.f32 %v400, 1.442695
      %v402 = vpow.pop %v401
      %v403 = vsel %vm172, %v402, 0.0
      %404 = vadd.xlane.f32.xlu0 %v403
      %v405 = vpop.xlane.xlu0 %404
      %v406 = vrcp.pop %v405
      %v407 = vmul.f32 %v402, %v406
      %v408 = vpack.c.bf16 %v407, %v407
      %409 = vrot.lane.b32.xlu0 %v121, 48
      %v410 = vpop.permute.xlu0 %409
      %v412 = vsel %vm187, %v408, 0
      %v415 = vsel %vm191, %v410, 0
      %417 = vmatprep.subr.bf16.mxu0 0
      %418 = vmatpush1.bf16.msra.mxu0 %v415
      %419 = vmatprep.subr.bf16.mxu0 0
      %420 = vmatpush1.bf16.msra.mxu0 0
      %421 = vmatprep.subr.bf16.mxu0 0
      %422 = vmatpush1.bf16.msra.mxu0 0
      %423 = vmatprep.subr.bf16.mxu0 0
      %424 = vmatpush1.bf16.msra.mxu0 0
      %425 = vmatprep.subr.bf16.mxu0 0
      %426 = vmatpush1.bf16.msra.mxu0 0
      %427 = vmatprep.subr.bf16.mxu0 0
      %428 = vmatpush1.bf16.msra.mxu0 0
      %429 = vmatprep.subr.bf16.mxu0 0
      %430 = vmatpush1.bf16.msra.mxu0 0
      %431 = vmatprep.subr.bf16.mxu0 0
      %432 = vmatpush1.bf16.msra.mxu0 0
      %433 = vmatprep.subr.bf16.mxu0 0
      %434 = vmatpush1.bf16.msra.mxu0 0
      %435 = vmatprep.subr.bf16.mxu0 0
      %436 = vmatpush1.bf16.msra.mxu0 0
      %437 = vmatprep.subr.bf16.mxu0 0
      %438 = vmatpush1.bf16.msra.mxu0 0
      %439 = vmatprep.subr.bf16.mxu0 0
      %440 = vmatpush1.bf16.msra.mxu0 0
      %441 = vmatprep.subr.bf16.mxu0 0
      %442 = vmatpush1.bf16.msra.mxu0 0
      %443 = vmatprep.subr.bf16.mxu0 0
      %444 = vmatpush1.bf16.msra.mxu0 0
      %445 = vmatprep.subr.bf16.mxu0 0
      %446 = vmatpush1.bf16.msra.mxu0 0
      %447 = vmatprep.subr.bf16.mxu0 0
      %448 = vmatpush1.bf16.msra.mxu0 0
      %449 = vmatprep.mubr.bf16.mxu0 0
      %450 = vmatmul.mubr.bf16.gmra.mrb[0].mxu0 %v412
      %v451 = vpop.f32.mrb[0].mxu0
      %v452 = vadd.f32 0.0, %v451
      %v453 = vpop.f32.mrb[0].mxu0
      %v454 = vpop.f32.mrb[0].mxu0
      %v455 = vpop.f32.mrb[0].mxu0
      %456 = vdwg.mxu0
      %457 = vrot.lane.b32.xlu0 %v121, 104
      %v458 = vpop.permute.xlu0 %457
      %459 = vrot.lane.b32.xlu0 %v121, 72
      %v460 = vpop.permute.xlu0 %459
      %v462 = vsel %vm124, %v458, 0
      %v465 = vsel %vm124, %v460, 0
      %467 = vmatprep.subr.bf16.mxu0 0
      %468 = vmatpush1.bf16.xpose.msra.mxu0 %v465
      %469 = vmatprep.subr.bf16.mxu0 0
      %470 = vmatpush1.bf16.xpose.msra.mxu0 0
      %471 = vmatprep.subr.bf16.mxu0 0
      %472 = vmatpush1.bf16.xpose.msra.mxu0 0
      %473 = vmatprep.subr.bf16.mxu0 0
      %474 = vmatpush1.bf16.xpose.msra.mxu0 0
      %475 = vmatprep.subr.bf16.mxu0 0
      %476 = vmatpush1.bf16.xpose.msra.mxu0 0
      %477 = vmatprep.subr.bf16.mxu0 0
      %478 = vmatpush1.bf16.xpose.msra.mxu0 0
      %479 = vmatprep.subr.bf16.mxu0 0
      %480 = vmatpush1.bf16.xpose.msra.mxu0 0
      %481 = vmatprep.subr.bf16.mxu0 0
      %482 = vmatpush1.bf16.xpose.msra.mxu0 0
      %483 = vmatprep.subr.bf16.mxu0 0
      %484 = vmatpush1.bf16.xpose.msra.mxu0 0
      %485 = vmatprep.subr.bf16.mxu0 0
      %486 = vmatpush1.bf16.xpose.msra.mxu0 0
      %487 = vmatprep.subr.bf16.mxu0 0
      %488 = vmatpush1.bf16.xpose.msra.mxu0 0
      %489 = vmatprep.subr.bf16.mxu0 0
      %490 = vmatpush1.bf16.xpose.msra.mxu0 0
      %491 = vmatprep.subr.bf16.mxu0 0
      %492 = vmatpush1.bf16.xpose.msra.mxu0 0
      %493 = vmatprep.subr.bf16.mxu0 0
      %494 = vmatpush1.bf16.xpose.msra.mxu0 0
      %495 = vmatprep.subr.bf16.mxu0 0
      %496 = vmatpush1.bf16.xpose.msra.mxu0 0
      %497 = vmatprep.subr.bf16.mxu0 0
      %498 = vmatpush1.bf16.xpose.msra.mxu0 0
      %499 = vmatprep.mubr.bf16.mxu0 0
      %500 = vmatmul.mubr.bf16.gmra.mrb[0].mxu0 %v462
      %v501 = vpop.f32.mrb[0].mxu0
      %v502 = vadd.f32 0.0, %v501
      %v503 = vpop.f32.mrb[0].mxu0
      %v504 = vpop.f32.mrb[0].mxu0
      %v505 = vpop.f32.mrb[0].mxu0
      %506 = vdwg.mxu0
      %v507 = vmul.f32 %v502, 0.35355338
      %v508 = vsel %vm172, %v507, -inf
      %509 = vmax.xlane.f32.xlu0 %v508
      %v510 = vpop.xlane.xlu0 %509
      %v511 = vsub.f32 %v507, %v510
      %v512 = vmul.f32 %v511, 1.442695
      %v513 = vpow.pop %v512
      %v514 = vsel %vm172, %v513, 0.0
      %515 = vadd.xlane.f32.xlu0 %v514
      %v516 = vpop.xlane.xlu0 %515
      %v517 = vrcp.pop %v516
      %v518 = vmul.f32 %v513, %v517
      %v519 = vpack.c.bf16 %v518, %v518
      %520 = vrot.lane.b32.xlu0 %v121, 40
      %v521 = vpop.permute.xlu0 %520
      %v523 = vsel %vm187, %v519, 0
      %v526 = vsel %vm191, %v521, 0
      %528 = vmatprep.subr.bf16.mxu0 0
      %529 = vmatpush1.bf16.msra.mxu0 %v526
      %530 = vmatprep.subr.bf16.mxu0 0
      %531 = vmatpush1.bf16.msra.mxu0 0
      %532 = vmatprep.subr.bf16.mxu0 0
      %533 = vmatpush1.bf16.msra.mxu0 0
      %534 = vmatprep.subr.bf16.mxu0 0
      %535 = vmatpush1.bf16.msra.mxu0 0
      %536 = vmatprep.subr.bf16.mxu0 0
      %537 = vmatpush1.bf16.msra.mxu0 0
      %538 = vmatprep.subr.bf16.mxu0 0
      %539 = vmatpush1.bf16.msra.mxu0 0
      %540 = vmatprep.subr.bf16.mxu0 0
      %541 = vmatpush1.bf16.msra.mxu0 0
      %542 = vmatprep.subr.bf16.mxu0 0
      %543 = vmatpush1.bf16.msra.mxu0 0
      %544 = vmatprep.subr.bf16.mxu0 0
      %545 = vmatpush1.bf16.msra.mxu0 0
      %546 = vmatprep.subr.bf16.mxu0 0
      %547 = vmatpush1.bf16.msra.mxu0 0
      %548 = vmatprep.subr.bf16.mxu0 0
      %549 = vmatpush1.bf16.msra.mxu0 0
      %550 = vmatprep.subr.bf16.mxu0 0
      %551 = vmatpush1.bf16.msra.mxu0 0
      %552 = vmatprep.subr.bf16.mxu0 0
      %553 = vmatpush1.bf16.msra.mxu0 0
      %554 = vmatprep.subr.bf16.mxu0 0
      %555 = vmatpush1.bf16.msra.mxu0 0
      %556 = vmatprep.subr.bf16.mxu0 0
      %557 = vmatpush1.bf16.msra.mxu0 0
      %558 = vmatprep.subr.bf16.mxu0 0
      %559 = vmatpush1.bf16.msra.mxu0 0
      %560 = vmatprep.mubr.bf16.mxu0 0
      %561 = vmatmul.mubr.bf16.gmra.mrb[0].mxu0 %v523
      %v562 = vpop.f32.mrb[0].mxu0
      %v563 = vadd.f32 0.0, %v562
      %v564 = vpop.f32.mrb[0].mxu0
      %v565 = vpop.f32.mrb[0].mxu0
      %v566 = vpop.f32.mrb[0].mxu0
      %567 = vdwg.mxu0
      %569 = vrot.lane.b32.xlu0 %v341, 8
      %v570 = vpop.permute.xlu0 %569
      %573 = vrot.lane.b32.xlu0 %v452, 16
      %v574 = vpop.permute.xlu0 %573
      %577 = vrot.lane.b32.xlu0 %v563, 24
      %v578 = vpop.permute.xlu0 %577
      %v580 = vsel %vm124, %v230, %v570
      %vm581 = vcmask 130048
      %v582 = vsel %vm581, %v580, %v574
      %vm583 = vcmask 195584
      %v584 = vsel %vm583, %v582, %v578
      %v585 = vpack.c.bf16 %v584, %v584
      %vm586 = vcmask 254976
      %587 = vst.msk [vmem:[%s111] sm:$0x3] %vm586, %v585
      %p588 = scmp.lt.s32.totalorder %s12, 1
      %s589 = scalar_select %p588, %s12, 1
      %s590 = smul.addr %s589, 2
      %s591 = scalar_lea.vmem %s1, %s590
      // Predicated region
      $region25: #{forward.30} parent=23 // pred_check
        %p592 = pneg %p56
      $region26: #{forward.30} parent=23 // pred_check_branch
        %594 = sbr.rel (%p592) target = $region28
      $region27: #{forward.30} parent=23 // pred_region
        _
      $region28: #{forward.30} parent=23 // pred_fallthru
        _
    $region24: #{forward.30} parent=5 // pred_fallthru
      _
    %p595 = scmp.le.s32.totalorder 2, %s7
    // Predicated region
    $region29: #{forward.30} parent=5 // pred_check
      %p596 = pneg %p595
    $region30: #{forward.30} parent=5 // pred_check_branch
      %598 = sbr.rel (%p596) target = $region32
    $region31: #{forward.30} parent=5 // pred_region
      %s599 = ssub.s32 %s7, 2
      // Predicated region
      $region33: #{forward.30} parent=31 // pred_check
        %p600 = pneg %p62
      $region34: #{forward.30} parent=31 // pred_check_branch
        %602 = sbr.rel (%p600) target = $region36
      $region35: #{forward.30} parent=31 // pred_region
        %p603 = scmp.lt.s32.totalorder %s13, 1
        %s604 = scalar_select %p603, %s13, 1
        %s605 = smul.addr %s604, 2
        %s606 = scalar_lea.vmem %s1, %s605
      $region36: #{forward.30} parent=31 // pred_fallthru
        _
    $region32: #{forward.30} parent=5 // pred_fallthru
      _
  $region6: #{forward.30} parent=0 // loop_footer
    %s11 = sadd.s32 1, %s7
  $region7: #{forward.30} parent=0 // loop_footer_branch
    %6 = sbr.rel target = $region3
  $region8: #{forward.30} parent=0 // loop_exit
    _

// kernel: forward.39
$region0: #{forward.39}
  #allocation0 [shape = 'u32[]', space=smem, size = 0x4, offset = 0x4, fixed_abs, tag = 'smem constant byte address 0x4 - core index']
  #allocation1 [shape = 'u32[144,128]{1,0:T(1,128)}', space=vmem, size = 0x12000, scoped, tag = 'internal scratch']
  %s0 = inlined_call_operand.vmem [shape: bf16[2,32], index: 0, kind: input, shape index: {}]
  %s1 = inlined_call_operand.vmem [shape: bf16[32,10], index: 1, kind: input, shape index: {}]
  %s2 = inlined_call_operand.vmem [shape: f32[1,10], index: 2, kind: input, shape index: {}]
  %s3 = inlined_call_operand.hbm [shape: f32[2,10], index: 3, kind: output, shape index: {}]
  %s4 = sld [smem:[#allocation0]]
  $region22: #{forward.39} parent=0
    _
  %s6 = ssub.s32 1, %s4
  %s7 = scalar_select 0, %s6, %s4
  $region1: #{forward.39} parent=0
    #allocation2 [shape = 'u8[1024]{0}', space=vmem, size = 0x400, scoped, tag = 'output window, operand 0, single buffered']
    #allocation3 [shape = 's32[1]{0}', space=sflag, size = 0x4, scoped, tag = 'scoped memory for forward.39']
    %8 = vsyncpa [#allocation3], 0
    // Predicated region
    $region2: #{forward.39} parent=1 // pred_check
      _
    $region3: #{forward.39} parent=1 // pred_check_branch
      %10 = sbr.rel (0) target = $region5
    $region4: #{forward.39} parent=1 // pred_region
      _
    $region5: #{forward.39} parent=1 // pred_fallthru
      _
    // Predicated region
    $region6: #{forward.39} parent=1 // pred_check
      _
    $region7: #{forward.39} parent=1 // pred_check_branch
      %12 = sbr.rel (0) target = $region9
    $region8: #{forward.39} parent=1 // pred_region
      _
    $region9: #{forward.39} parent=1 // pred_fallthru
      _
    // Predicated region
    $region10: #{forward.39} parent=1 // pred_check
      _
    $region11: #{forward.39} parent=1 // pred_check_branch
      %14 = sbr.rel (0) target = $region13
    $region12: #{forward.39} parent=1 // pred_region
      _
    $region13: #{forward.39} parent=1 // pred_fallthru
      _
    %v16 = vld [vmem:[%s0] sm:$0x1]
    %v17 = vld [vmem:[%s1] sm:$0xf]
    %v18 = vld [vmem:[%s1 + $0x4] sm:$0xf]
    %v19 = vld [vmem:[%s1 + $0x8] sm:$0xf]
    %v20 = vld [vmem:[%s1 + $0xc] sm:$0xf]
    %v21 = vld [vmem:[%s2] sm:$0x1]
    %v23 = vlaneseq
    %v24 = vshrl.u32 %v23, 7
    %v25 = vsub.s32 0, %v24
    %v26 = vrot.slane %v21, %v25
    %v32 = vunpack.c.l.b16 %v17
    %v33 = vunpack.c.l.b16 %v18
    %v34 = vunpack.c.l.b16 %v19
    %v35 = vunpack.c.l.b16 %v20
    %v36 = vpack.c.b16 %v33, %v32
    %v37 = vpack.c.b16 %v35, %v34
    %vm40 = vcmask 261120
    %v42 = vsel %vm40, %v16, 0
    %44 = vmatprep.subr.bf16.mxu0 0
    %45 = vmatpush1.bf16.msra.mxu0 %v36
    %46 = vmatprep.subr.bf16.mxu0 0
    %47 = vmatpush1.bf16.msra.mxu0 %v37
    %48 = vmatprep.subr.bf16.mxu0 0
    %49 = vmatpush1.bf16.msra.mxu0 0
    %50 = vmatprep.subr.bf16.mxu0 0
    %51 = vmatpush1.bf16.msra.mxu0 0
    %52 = vmatprep.subr.bf16.mxu0 0
    %53 = vmatpush1.bf16.msra.mxu0 0
    %54 = vmatprep.subr.bf16.mxu0 0
    %55 = vmatpush1.bf16.msra.mxu0 0
    %56 = vmatprep.subr.bf16.mxu0 0
    %57 = vmatpush1.bf16.msra.mxu0 0
    %58 = vmatprep.subr.bf16.mxu0 0
    %59 = vmatpush1.bf16.msra.mxu0 0
    %60 = vmatprep.subr.bf16.mxu0 0
    %61 = vmatpush1.bf16.msra.mxu0 0
    %62 = vmatprep.subr.bf16.mxu0 0
    %63 = vmatpush1.bf16.msra.mxu0 0
    %64 = vmatprep.subr.bf16.mxu0 0
    %65 = vmatpush1.bf16.msra.mxu0 0
    %66 = vmatprep.subr.bf16.mxu0 0
    %67 = vmatpush1.bf16.msra.mxu0 0
    %68 = vmatprep.subr.bf16.mxu0 0
    %69 = vmatpush1.bf16.msra.mxu0 0
    %70 = vmatprep.subr.bf16.mxu0 0
    %71 = vmatpush1.bf16.msra.mxu0 0
    %72 = vmatprep.subr.bf16.mxu0 0
    %73 = vmatpush1.bf16.msra.mxu0 0
    %74 = vmatprep.subr.bf16.mxu0 0
    %75 = vmatpush1.bf16.msra.mxu0 0
    %76 = vmatprep.mubr.bf16.mxu0 0
    %77 = vmatmul.mubr.bf16.gmra.mrb[0].mxu0 %v42
    %v78 = vpop.f32.mrb[0].mxu0
    %v79 = vadd.f32 %v26, %v78
    %v80 = vpop.f32.mrb[0].mxu0
    %v81 = vpop.f32.mrb[0].mxu0
    %v82 = vpop.f32.mrb[0].mxu0
    %83 = vdwg.mxu0
    %vm84 = vcmask 74752
    %85 = vst.msk [vmem:[#allocation2] sm:$0x3] %vm84, %v79
    // Predicated region
    $region14: #{forward.39} parent=1 // pred_check
      _
    $region15: #{forward.39} parent=1 // pred_check_branch
      %87 = sbr.rel (0) target = $region17
    $region16: #{forward.39} parent=1 // pred_region
      %s89 = ssub.s32 32, 32
      %90 = vsyncadd [#allocation3], %s89
      %s92 = sshll.u32 [#allocation2], 4
      %s93 = int_to_ptr.vmem [resolvable:$true] %s92
      %95 = dma.vmem_to_hbm [thread:$0]  %s93, 32, %s3, [#allocation3]
    $region17: #{forward.39} parent=1 // pred_fallthru
      _
    // Predicated region
    $region18: #{forward.39} parent=1 // pred_check
      _
    $region19: #{forward.39} parent=1 // pred_check_branch
      %97 = sbr.rel (0) target = $region21
    $region20: #{forward.39} parent=1 // pred_region
      %98 = dma.done [#allocation3], 32
    $region21: #{forward.39} parent=1 // pred_fallthru
      _
    %99 = vsyncpa [#allocation3], 1

// kernel: forward.33
$region0: #{forward.33}
  #allocation0 [shape = 'u32[]', space=smem, size = 0x4, offset = 0x4, fixed_abs, tag = 'smem constant byte address 0x4 - core index']
  #allocation1 [shape = 'u32[144,128]{1,0:T(1,128)}', space=vmem, size = 0x12000, scoped, tag = 'internal scratch']
  %s0 = inlined_call_operand.vmem [shape: bf16[8,2048], index: 0, kind: input, shape index: {}]
  %s1 = inlined_call_operand.vmem [shape: bf16[2048,32], index: 1, kind: input, shape index: {}]
  %s2 = inlined_call_operand.vmem [shape: f32[1,32], index: 2, kind: input, shape index: {}]
  %s3 = inlined_call_operand.vmem [shape: f32[8,32], index: 3, kind: input, shape index: {}]
  %s4 = inlined_call_operand.vmem [shape: f32[1,32], index: 4, kind: input, shape index: {}]
  %s5 = inlined_call_operand.vmem [shape: f32[1,32], index: 5, kind: input, shape index: {}]
  %s6 = inlined_call_operand.vmem [shape: f32[8,32], index: 6, kind: output, shape index: {}]
  %s7 = sld [smem:[#allocation0]]
  $region34: #{forward.33} parent=0
    _
  %s9 = ssub.s32 1, %s7
  %s10 = scalar_select 0, %s9, %s7
  // Predicated region
  $region2: #{forward.33} parent=0 // pred_check
    _
  $region3: #{forward.33} parent=0 // pred_check_branch
    %12 = sbr.rel (0) target = $region5
  $region4: #{forward.33} parent=0 // pred_region
    _
  $region5: #{forward.33} parent=0 // pred_fallthru
    _
  // Predicated region
  $region6: #{forward.33} parent=0 // pred_check
    _
  $region7: #{forward.33} parent=0 // pred_check_branch
    %14 = sbr.rel (0) target = $region9
  $region8: #{forward.33} parent=0 // pred_region
    _
  $region9: #{forward.33} parent=0 // pred_fallthru
    _
  // Predicated region
  $region10: #{forward.33} parent=0 // pred_check
    _
  $region11: #{forward.33} parent=0 // pred_check_branch
    %16 = sbr.rel (0) target = $region13
  $region12: #{forward.33} parent=0 // pred_region
    _
  $region13: #{forward.33} parent=0 // pred_fallthru
    _
  // Predicated region
  $region14: #{forward.33} parent=0 // pred_check
    _
  $region15: #{forward.33} parent=0 // pred_check_branch
    %18 = sbr.rel (0) target = $region17
  $region16: #{forward.33} parent=0 // pred_region
    _
  $region17: #{forward.33} parent=0 // pred_fallthru
    _
  // Predicated region
  $region18: #{forward.33} parent=0 // pred_check
    _
  $region19: #{forward.33} parent=0 // pred_check_branch
    %20 = sbr.rel (0) target = $region21
  $region20: #{forward.33} parent=0 // pred_region
    _
  $region21: #{forward.33} parent=0 // pred_fallthru
    _
  // Predicated region
  $region22: #{forward.33} parent=0 // pred_check
    _
  $region23: #{forward.33} parent=0 // pred_check_branch
    %22 = sbr.rel (0) target = $region25
  $region24: #{forward.33} parent=0 // pred_region
    _
  $region25: #{forward.33} parent=0 // pred_fallthru
    _
  %v24 = vld [vmem:[%s0] sm:$0xff]
  %v25 = vld [vmem:[%s0 + $0x8] sm:$0xff]
  %v26 = vld [vmem:[%s0 + $0x10] sm:$0xff]
  %v27 = vld [vmem:[%s0 + $0x18] sm:$0xff]
  %v28 = vld [vmem:[%s0 + $0x20] sm:$0xff]
  %v29 = vld [vmem:[%s0 + $0x28] sm:$0xff]
  %v30 = vld [vmem:[%s0 + $0x30] sm:$0xff]
  %v31 = vld [vmem:[%s0 + $0x38] sm:$0xff]
  %v32 = vld [vmem:[%s1] sm:$0xf]
  %v33 = vld [vmem:[%s1 + $0x4] sm:$0xf]
  %v34 = vld [vmem:[%s1 + $0x8] sm:$0xf]
  %v35 = vld [vmem:[%s1 + $0xc] sm:$0xf]
  %v36 = vld [vmem:[%s1 + $0x10] sm:$0xf]
  %v37 = vld [vmem:[%s1 + $0x14] sm:$0xf]
  %v38 = vld [vmem:[%s1 + $0x18] sm:$0xf]
  %v39 = vld [vmem:[%s1 + $0x1c] sm:$0xf]
  %v40 = vld [vmem:[%s1 + $0x20] sm:$0xf]
  %v41 = vld [vmem:[%s1 + $0x24] sm:$0xf]
  %v42 = vld [vmem:[%s1 + $0x28] sm:$0xf]
  %v43 = vld [vmem:[%s1 + $0x2c] sm:$0xf]
  %v44 = vld [vmem:[%s1 + $0x30] sm:$0xf]
  %v45 = vld [vmem:[%s1 + $0x34] sm:$0xf]
  %v46 = vld [vmem:[%s1 + $0x38] sm:$0xf]
  %v47 = vld [vmem:[%s1 + $0x3c] sm:$0xf]
  %v48 = vld [vmem:[%s1 + $0x40] sm:$0xf]
  %v49 = vld [vmem:[%s1 + $0x44] sm:$0xf]
  %v50 = vld [vmem:[%s1 + $0x48] sm:$0xf]
  %v51 = vld [vmem:[%s1 + $0x4c] sm:$0xf]
  %v52 = vld [vmem:[%s1 + $0x50] sm:$0xf]
  %v53 = vld [vmem:[%s1 + $0x54] sm:$0xf]
  %v54 = vld [vmem:[%s1 + $0x58] sm:$0xf]
  %v55 = vld [vmem:[%s1 + $0x5c] sm:$0xf]
  %v56 = vld [vmem:[%s1 + $0x60] sm:$0xf]
  %v57 = vld [vmem:[%s1 + $0x64] sm:$0xf]
  %v58 = vld [vmem:[%s1 + $0x68] sm:$0xf]
  %v59 = vld [vmem:[%s1 + $0x6c] sm:$0xf]
  %v60 = vld [vmem:[%s1 + $0x70] sm:$0xf]
  %v61 = vld [vmem:[%s1 + $0x74] sm:$0xf]
  %v62 = vld [vmem:[%s1 + $0x78] sm:$0xf]
  %v63 = vld [vmem:[%s1 + $0x7c] sm:$0xf]
  %v64 = vld [vmem:[%s1 + $0x80] sm:$0xf]
  %v65 = vld [vmem:[%s1 + $0x84] sm:$0xf]
  %v66 = vld [vmem:[%s1 + $0x88] sm:$0xf]
  %v67 = vld [vmem:[%s1 + $0x8c] sm:$0xf]
  %v68 = vld [vmem:[%s1 + $0x90] sm:$0xf]
  %v69 = vld [vmem:[%s1 + $0x94] sm:$0xf]
  %v70 = vld [vmem:[%s1 + $0x98] sm:$0xf]
  %v71 = vld [vmem:[%s1 + $0x9c] sm:$0xf]
  %v72 = vld [vmem:[%s1 + $0xa0] sm:$0xf]
  %v73 = vld [vmem:[%s1 + $0xa4] sm:$0xf]
  %v74 = vld [vmem:[%s1 + $0xa8] sm:$0xf]
  %v75 = vld [vmem:[%s1 + $0xac] sm:$0xf]
  %v76 = vld [vmem:[%s1 + $0xb0] sm:$0xf]
  %v77 = vld [vmem:[%s1 + $0xb4] sm:$0xf]
  %v78 = vld [vmem:[%s1 + $0xb8] sm:$0xf]
  %v79 = vld [vmem:[%s1 + $0xbc] sm:$0xf]
  %v80 = vld [vmem:[%s1 + $0xc0] sm:$0xf]
  %v81 = vld [vmem:[%s1 + $0xc4] sm:$0xf]
  %v82 = vld [vmem:[%s1 + $0xc8] sm:$0xf]
  %v83 = vld [vmem:[%s1 + $0xcc] sm:$0xf]
  %v84 = vld [vmem:[%s1 + $0xd0] sm:$0xf]
  %v85 = vld [vmem:[%s1 + $0xd4] sm:$0xf]
  %v86 = vld [vmem:[%s1 + $0xd8] sm:$0xf]
  %v87 = vld [vmem:[%s1 + $0xdc] sm:$0xf]
  %v88 = vld [vmem:[%s1 + $0xe0] sm:$0xf]
  %v89 = vld [vmem:[%s1 + $0xe4] sm:$0xf]
  %v90 = vld [vmem:[%s1 + $0xe8] sm:$0xf]
  %v91 = vld [vmem:[%s1 + $0xec] sm:$0xf]
  %v92 = vld [vmem:[%s1 + $0xf0] sm:$0xf]
  %v93 = vld [vmem:[%s1 + $0xf4] sm:$0xf]
  %v94 = vld [vmem:[%s1 + $0xf8] sm:$0xf]
  %v95 = vld [vmem:[%s1 + $0xfc] sm:$0xf]
  %v96 = vld [vmem:[%s1 + $0x100] sm:$0xf]
  %v97 = vld [vmem:[%s1 + $0x104] sm:$0xf]
  %v98 = vld [vmem:[%s1 + $0x108] sm:$0xf]
  %v99 = vld [vmem:[%s1 + $0x10c] sm:$0xf]
  %v100 = vld [vmem:[%s1 + $0x110] sm:$0xf]
  %v101 = vld [vmem:[%s1 + $0x114] sm:$0xf]
  %v102 = vld [vmem:[%s1 + $0x118] sm:$0xf]
  %v103 = vld [vmem:[%s1 + $0x11c] sm:$0xf]
  %v104 = vld [vmem:[%s1 + $0x120] sm:$0xf]
  %v105 = vld [vmem:[%s1 + $0x124] sm:$0xf]
  %v106 = vld [vmem:[%s1 + $0x128] sm:$0xf]
  %v107 = vld [vmem:[%s1 + $0x12c] sm:$0xf]
  %v108 = vld [vmem:[%s1 + $0x130] sm:$0xf]
  %v109 = vld [vmem:[%s1 + $0x134] sm:$0xf]
  %v110 = vld [vmem:[%s1 + $0x138] sm:$0xf]
  %v111 = vld [vmem:[%s1 + $0x13c] sm:$0xf]
  %v112 = vld [vmem:[%s1 + $0x140] sm:$0xf]
  %v113 = vld [vmem:[%s1 + $0x144] sm:$0xf]
  %v114 = vld [vmem:[%s1 + $0x148] sm:$0xf]
  %v115 = vld [vmem:[%s1 + $0x14c] sm:$0xf]
  %v116 = vld [vmem:[%s1 + $0x150] sm:$0xf]
  %v117 = vld [vmem:[%s1 + $0x154] sm:$0xf]
  %v118 = vld [vmem:[%s1 + $0x158] sm:$0xf]
  %v119 = vld [vmem:[%s1 + $0x15c] sm:$0xf]
  %v120 = vld [vmem:[%s1 + $0x160] sm:$0xf]
  %v121 = vld [vmem:[%s1 + $0x164] sm:$0xf]
  %v122 = vld [vmem:[%s1 + $0x168] sm:$0xf]
  %v123 = vld [vmem:[%s1 + $0x16c] sm:$0xf]
  %v124 = vld [vmem:[%s1 + $0x170] sm:$0xf]
  %v125 = vld [vmem:[%s1 + $0x174] sm:$0xf]
  %v126 = vld [vmem:[%s1 + $0x178] sm:$0xf]
  %v127 = vld [vmem:[%s1 + $0x17c] sm:$0xf]
  %v128 = vld [vmem:[%s1 + $0x180] sm:$0xf]
  %v129 = vld [vmem:[%s1 + $0x184] sm:$0xf]
  %v130 = vld [vmem:[%s1 + $0x188] sm:$0xf]
  %v131 = vld [vmem:[%s1 + $0x18c] sm:$0xf]
  %v132 = vld [vmem:[%s1 + $0x190] sm:$0xf]
  %v133 = vld [vmem:[%s1 + $0x194] sm:$0xf]
  %v134 = vld [vmem:[%s1 + $0x198] sm:$0xf]
  %v135 = vld [vmem:[%s1 + $0x19c] sm:$0xf]
  %v136 = vld [vmem:[%s1 + $0x1a0] sm:$0xf]
  %v137 = vld [vmem:[%s1 + $0x1a4] sm:$0xf]
  %v138 = vld [vmem:[%s1 + $0x1a8] sm:$0xf]
  %v139 = vld [vmem:[%s1 + $0x1ac] sm:$0xf]
  %v140 = vld [vmem:[%s1 + $0x1b0] sm:$0xf]
  %v141 = vld [vmem:[%s1 + $0x1b4] sm:$0xf]
  %v142 = vld [vmem:[%s1 + $0x1b8] sm:$0xf]
  %v143 = vld [vmem:[%s1 + $0x1bc] sm:$0xf]
  %v144 = vld [vmem:[%s1 + $0x1c0] sm:$0xf]
  %v145 = vld [vmem:[%s1 + $0x1c4] sm:$0xf]
  %v146 = vld [vmem:[%s1 + $0x1c8] sm:$0xf]
  %v147 = vld [vmem:[%s1 + $0x1cc] sm:$0xf]
  %v148 = vld [vmem:[%s1 + $0x1d0] sm:$0xf]
  %v149 = vld [vmem:[%s1 + $0x1d4] sm:$0xf]
  %v150 = vld [vmem:[%s1 + $0x1d8] sm:$0xf]
  %v151 = vld [vmem:[%s1 + $0x1dc] sm:$0xf]
  %v152 = vld [vmem:[%s1 + $0x1e0] sm:$0xf]
  %v153 = vld [vmem:[%s1 + $0x1e4] sm:$0xf]
  %v154 = vld [vmem:[%s1 + $0x1e8] sm:$0xf]
  %v155 = vld [vmem:[%s1 + $0x1ec] sm:$0xf]
  %v156 = vld [vmem:[%s1 + $0x1f0] sm:$0xf]
  %v157 = vld [vmem:[%s1 + $0x1f4] sm:$0xf]
  %v158 = vld [vmem:[%s1 + $0x1f8] sm:$0xf]
  %v159 = vld [vmem:[%s1 + $0x1fc] sm:$0xf]
  %v160 = vld [vmem:[%s1 + $0x200] sm:$0xf]
  %v161 = vld [vmem:[%s1 + $0x204] sm:$0xf]
  %v162 = vld [vmem:[%s1 + $0x208] sm:$0xf]
  %v163 = vld [vmem:[%s1 + $0x20c] sm:$0xf]
  %v164 = vld [vmem:[%s1 + $0x210] sm:$0xf]
  %v165 = vld [vmem:[%s1 + $0x214] sm:$0xf]
  %v166 = vld [vmem:[%s1 + $0x218] sm:$0xf]
  %v167 = vld [vmem:[%s1 + $0x21c] sm:$0xf]
  %v168 = vld [vmem:[%s1 + $0x220] sm:$0xf]
  %v169 = vld [vmem:[%s1 + $0x224] sm:$0xf]
  %v170 = vld [vmem:[%s1 + $0x228] sm:$0xf]
  %v171 = vld [vmem:[%s1 + $0x22c] sm:$0xf]
  %v172 = vld [vmem:[%s1 + $0x230] sm:$0xf]
  %v173 = vld [vmem:[%s1 + $0x234] sm:$0xf]
  %v174 = vld [vmem:[%s1 + $0x238] sm:$0xf]
  %v175 = vld [vmem:[%s1 + $0x23c] sm:$0xf]
  %v176 = vld [vmem:[%s1 + $0x240] sm:$0xf]
  %v177 = vld [vmem:[%s1 + $0x244] sm:$0xf]
  %v178 = vld [vmem:[%s1 + $0x248] sm:$0xf]
  %v179 = vld [vmem:[%s1 + $0x24c] sm:$0xf]
  %v180 = vld [vmem:[%s1 + $0x250] sm:$0xf]
  %v181 = vld [vmem:[%s1 + $0x254] sm:$0xf]
  %v182 = vld [vmem:[%s1 + $0x258] sm:$0xf]
  %v183 = vld [vmem:[%s1 + $0x25c] sm:$0xf]
  %v184 = vld [vmem:[%s1 + $0x260] sm:$0xf]
  %v185 = vld [vmem:[%s1 + $0x264] sm:$0xf]
  %v186 = vld [vmem:[%s1 + $0x268] sm:$0xf]
  %v187 = vld [vmem:[%s1 + $0x26c] sm:$0xf]
  %v188 = vld [vmem:[%s1 + $0x270] sm:$0xf]
  %v189 = vld [vmem:[%s1 + $0x274] sm:$0xf]
  %v190 = vld [vmem:[%s1 + $0x278] sm:$0xf]
  %v191 = vld [vmem:[%s1 + $0x27c] sm:$0xf]
  %v192 = vld [vmem:[%s1 + $0x280] sm:$0xf]
  %v193 = vld [vmem:[%s1 + $0x284] sm:$0xf]
  %v194 = vld [vmem:[%s1 + $0x288] sm:$0xf]
  %v195 = vld [vmem:[%s1 + $0x28c] sm:$0xf]
  %v196 = vld [vmem:[%s1 + $0x290] sm:$0xf]
  %v197 = vld [vmem:[%s1 + $0x294] sm:$0xf]
  %v198 = vld [vmem:[%s1 + $0x298] sm:$0xf]
  %v199 = vld [vmem:[%s1 + $0x29c] sm:$0xf]
  %v200 = vld [vmem:[%s1 + $0x2a0] sm:$0xf]
  %v201 = vld [vmem:[%s1 + $0x2a4] sm:$0xf]
  %v202 = vld [vmem:[%s1 + $0x2a8] sm:$0xf]
  %v203 = vld [vmem:[%s1 + $0x2ac] sm:$0xf]
  %v204 = vld [vmem:[%s1 + $0x2b0] sm:$0xf]
  %v205 = vld [vmem:[%s1 + $0x2b4] sm:$0xf]
  %v206 = vld [vmem:[%s1 + $0x2b8] sm:$0xf]
  %v207 = vld [vmem:[%s1 + $0x2bc] sm:$0xf]
  %v208 = vld [vmem:[%s1 + $0x2c0] sm:$0xf]
  %v209 = vld [vmem:[%s1 + $0x2c4] sm:$0xf]
  %v210 = vld [vmem:[%s1 + $0x2c8] sm:$0xf]
  %v211 = vld [vmem:[%s1 + $0x2cc] sm:$0xf]
  %v212 = vld [vmem:[%s1 + $0x2d0] sm:$0xf]
  %v213 = vld [vmem:[%s1 + $0x2d4] sm:$0xf]
  %v214 = vld [vmem:[%s1 + $0x2d8] sm:$0xf]
  %v215 = vld [vmem:[%s1 + $0x2dc] sm:$0xf]
  %v216 = vld [vmem:[%s1 + $0x2e0] sm:$0xf]
  %v217 = vld [vmem:[%s1 + $0x2e4] sm:$0xf]
  %v218 = vld [vmem:[%s1 + $0x2e8] sm:$0xf]
  %v219 = vld [vmem:[%s1 + $0x2ec] sm:$0xf]
  %v220 = vld [vmem:[%s1 + $0x2f0] sm:$0xf]
  %v221 = vld [vmem:[%s1 + $0x2f4] sm:$0xf]
  %v222 = vld [vmem:[%s1 + $0x2f8] sm:$0xf]
  %v223 = vld [vmem:[%s1 + $0x2fc] sm:$0xf]
  %v224 = vld [vmem:[%s1 + $0x300] sm:$0xf]
  %v225 = vld [vmem:[%s1 + $0x304] sm:$0xf]
  %v226 = vld [vmem:[%s1 + $0x308] sm:$0xf]
  %v227 = vld [vmem:[%s1 + $0x30c] sm:$0xf]
  %v228 = vld [vmem:[%s1 + $0x310] sm:$0xf]
  %v229 = vld [vmem:[%s1 + $0x314] sm:$0xf]
  %v230 = vld [vmem:[%s1 + $0x318] sm:$0xf]
  %v231 = vld [vmem:[%s1 + $0x31c] sm:$0xf]
  %v232 = vld [vmem:[%s1 + $0x320] sm:$0xf]
  %v233 = vld [vmem:[%s1 + $0x324] sm:$0xf]
  %v234 = vld [vmem:[%s1 + $0x328] sm:$0xf]
  %v235 = vld [vmem:[%s1 + $0x32c] sm:$0xf]
  %v236 = vld [vmem:[%s1 + $0x330] sm:$0xf]
  %v237 = vld [vmem:[%s1 + $0x334] sm:$0xf]
  %v238 = vld [vmem:[%s1 + $0x338] sm:$0xf]
  %v239 = vld [vmem:[%s1 + $0x33c] sm:$0xf]
  %v240 = vld [vmem:[%s1 + $0x340] sm:$0xf]
  %v241 = vld [vmem:[%s1 + $0x344] sm:$0xf]
  %v242 = vld [vmem:[%s1 + $0x348] sm:$0xf]
  %v243 = vld [vmem:[%s1 + $0x34c] sm:$0xf]
  %v244 = vld [vmem:[%s1 + $0x350] sm:$0xf]
  %v245 = vld [vmem:[%s1 + $0x354] sm:$0xf]
  %v246 = vld [vmem:[%s1 + $0x358] sm:$0xf]
  %v247 = vld [vmem:[%s1 + $0x35c] sm:$0xf]
  %v248 = vld [vmem:[%s1 + $0x360] sm:$0xf]
  %v249 = vld [vmem:[%s1 + $0x364] sm:$0xf]
  %v250 = vld [vmem:[%s1 + $0x368] sm:$0xf]
  %v251 = vld [vmem:[%s1 + $0x36c] sm:$0xf]
  %v252 = vld [vmem:[%s1 + $0x370] sm:$0xf]
  %v253 = vld [vmem:[%s1 + $0x374] sm:$0xf]
  %v254 = vld [vmem:[%s1 + $0x378] sm:$0xf]
  %v255 = vld [vmem:[%s1 + $0x37c] sm:$0xf]
  %v256 = vld [vmem:[%s1 + $0x380] sm:$0xf]
  %v257 = vld [vmem:[%s1 + $0x384] sm:$0xf]
  %v258 = vld [vmem:[%s1 + $0x388] sm:$0xf]
  %v259 = vld [vmem:[%s1 + $0x38c] sm:$0xf]
  %v260 = vld [vmem:[%s1 + $0x390] sm:$0xf]
  %v261 = vld [vmem:[%s1 + $0x394] sm:$0xf]
  %v262 = vld [vmem:[%s1 + $0x398] sm:$0xf]
  %v263 = vld [vmem:[%s1 + $0x39c] sm:$0xf]
  %v264 = vld [vmem:[%s1 + $0x3a0] sm:$0xf]
  %v265 = vld [vmem:[%s1 + $0x3a4] sm:$0xf]
  %v266 = vld [vmem:[%s1 + $0x3a8] sm:$0xf]
  %v267 = vld [vmem:[%s1 + $0x3ac] sm:$0xf]
  %v268 = vld [vmem:[%s1 + $0x3b0] sm:$0xf]
  %v269 = vld [vmem:[%s1 + $0x3b4] sm:$0xf]
  %v270 = vld [vmem:[%s1 + $0x3b8] sm:$0xf]
  %v271 = vld [vmem:[%s1 + $0x3bc] sm:$0xf]
  %v272 = vld [vmem:[%s1 + $0x3c0] sm:$0xf]
  %v273 = vld [vmem:[%s1 + $0x3c4] sm:$0xf]
  %v274 = vld [vmem:[%s1 + $0x3c8] sm:$0xf]
  %v275 = vld [vmem:[%s1 + $0x3cc] sm:$0xf]
  %v276 = vld [vmem:[%s1 + $0x3d0] sm:$0xf]
  %v277 = vld [vmem:[%s1 + $0x3d4] sm:$0xf]
  %v278 = vld [vmem:[%s1 + $0x3d8] sm:$0xf]
  %v279 = vld [vmem:[%s1 + $0x3dc] sm:$0xf]
  %v280 = vld [vmem:[%s1 + $0x3e0] sm:$0xf]
  %v281 = vld [vmem:[%s1 + $0x3e4] sm:$0xf]
  %v282 = vld [vmem:[%s1 + $0x3e8] sm:$0xf]
  %v283 = vld [vmem:[%s1 + $0x3ec] sm:$0xf]
  %v284 = vld [vmem:[%s1 + $0x3f0] sm:$0xf]
  %v285 = vld [vmem:[%s1 + $0x3f4] sm:$0xf]
  %v286 = vld [vmem:[%s1 + $0x3f8] sm:$0xf]
  %v287 = vld [vmem:[%s1 + $0x3fc] sm:$0xf]
  %v288 = vld [vmem:[%s2] sm:$0x1]
  %v290 = vlaneseq
  %v291 = vshrl.u32 %v290, 7
  %v292 = vsub.s32 0, %v291
  %v293 = vrot.slane %v288, %v292
  %v303 = vunpack.c.l.b16 %v24
  %v304 = vunpack.c.h.b16 %v24
  %v305 = vunpack.c.l.b16 %v25
  %v306 = vunpack.c.h.b16 %v25
  %v307 = vunpack.c.l.b16 %v26
  %v308 = vunpack.c.h.b16 %v26
  %v309 = vunpack.c.l.b16 %v27
  %v310 = vunpack.c.h.b16 %v27
  %v311 = vunpack.c.l.b16 %v28
  %v312 = vunpack.c.h.b16 %v28
  %v313 = vunpack.c.l.b16 %v29
  %v314 = vunpack.c.h.b16 %v29
  %v315 = vunpack.c.l.b16 %v30
  %v316 = vunpack.c.h.b16 %v30
  %v317 = vunpack.c.l.b16 %v31
  %v318 = vunpack.c.h.b16 %v31
  %v319 = vpack.c.b16 %v303, %v303
  %v320 = vpack.c.b16 %v304, %v304
  %v321 = vpack.c.b16 %v305, %v305
  %v322 = vpack.c.b16 %v306, %v306
  %v323 = vpack.c.b16 %v307, %v307
  %v324 = vpack.c.b16 %v308, %v308
  %v325 = vpack.c.b16 %v309, %v309
  %v326 = vpack.c.b16 %v310, %v310
  %v327 = vpack.c.b16 %v311, %v311
  %v328 = vpack.c.b16 %v312, %v312
  %v329 = vpack.c.b16 %v313, %v313
  %v330 = vpack.c.b16 %v314, %v314
  %v331 = vpack.c.b16 %v315, %v315
  %v332 = vpack.c.b16 %v316, %v316
  %v333 = vpack.c.b16 %v317, %v317
  %v334 = vpack.c.b16 %v318, %v318
  %v607 = vunpack.c.l.b16 %v32
  %v608 = vunpack.c.l.b16 %v33
  %v609 = vunpack.c.l.b16 %v34
  %v610 = vunpack.c.l.b16 %v35
  %v611 = vunpack.c.l.b16 %v36
  %v612 = vunpack.c.l.b16 %v37
  %v613 = vunpack.c.l.b16 %v38
  %v614 = vunpack.c.l.b16 %v39
  %v615 = vunpack.c.l.b16 %v40
  %v616 = vunpack.c.l.b16 %v41
  %v617 = vunpack.c.l.b16 %v42
  %v618 = vunpack.c.l.b16 %v43
  %v619 = vunpack.c.l.b16 %v44
  %v620 = vunpack.c.l.b16 %v45
  %v621 = vunpack.c.l.b16 %v46
  %v622 = vunpack.c.l.b16 %v47
  %v623 = vunpack.c.l.b16 %v48
  %v624 = vunpack.c.l.b16 %v49
  %v625 = vunpack.c.l.b16 %v50
  %v626 = vunpack.c.l.b16 %v51
  %v627 = vunpack.c.l.b16 %v52
  %v628 = vunpack.c.l.b16 %v53
  %v629 = vunpack.c.l.b16 %v54
  %v630 = vunpack.c.l.b16 %v55
  %v631 = vunpack.c.l.b16 %v56
  %v632 = vunpack.c.l.b16 %v57
  %v633 = vunpack.c.l.b16 %v58
  %v634 = vunpack.c.l.b16 %v59
  %v635 = vunpack.c.l.b16 %v60
  %v636 = vunpack.c.l.b16 %v61
  %v637 = vunpack.c.l.b16 %v62
  %v638 = vunpack.c.l.b16 %v63
  %v639 = vunpack.c.l.b16 %v64
  %v640 = vunpack.c.l.b16 %v65
  %v641 = vunpack.c.l.b16 %v66
  %v642 = vunpack.c.l.b16 %v67
  %v643 = vunpack.c.l.b16 %v68
  %v644 = vunpack.c.l.b16 %v69
  %v645 = vunpack.c.l.b16 %v70
  %v646 = vunpack.c.l.b16 %v71
  %v647 = vunpack.c.l.b16 %v72
  %v648 = vunpack.c.l.b16 %v73
  %v649 = vunpack.c.l.b16 %v74
  %v650 = vunpack.c.l.b16 %v75
  %v651 = vunpack.c.l.b16 %v76
  %v652 = vunpack.c.l.b16 %v77
  %v653 = vunpack.c.l.b16 %v78
  %v654 = vunpack.c.l.b16 %v79
  %v655 = vunpack.c.l.b16 %v80
  %v656 = vunpack.c.l.b16 %v81
  %v657 = vunpack.c.l.b16 %v82
  %v658 = vunpack.c.l.b16 %v83
  %v659 = vunpack.c.l.b16 %v84
  %v660 = vunpack.c.l.b16 %v85
  %v661 = vunpack.c.l.b16 %v86
  %v662 = vunpack.c.l.b16 %v87
  %v663 = vunpack.c.l.b16 %v88
  %v664 = vunpack.c.l.b16 %v89
  %v665 = vunpack.c.l.b16 %v90
  %v666 = vunpack.c.l.b16 %v91
  %v667 = vunpack.c.l.b16 %v92
  %v668 = vunpack.c.l.b16 %v93
  %v669 = vunpack.c.l.b16 %v94
  %v670 = vunpack.c.l.b16 %v95
  %v671 = vunpack.c.l.b16 %v96
  %v672 = vunpack.c.l.b16 %v97
  %v673 = vunpack.c.l.b16 %v98
  %v674 = vunpack.c.l.b16 %v99
  %v675 = vunpack.c.l.b16 %v100
  %v676 = vunpack.c.l.b16 %v101
  %v677 = vunpack.c.l.b16 %v102
  %v678 = vunpack.c.l.b16 %v103
  %v679 = vunpack.c.l.b16 %v104
  %v680 = vunpack.c.l.b16 %v105
  %v681 = vunpack.c.l.b16 %v106
  %v682 = vunpack.c.l.b16 %v107
  %v683 = vunpack.c.l.b16 %v108
  %v684 = vunpack.c.l.b16 %v109
  %v685 = vunpack.c.l.b16 %v110
  %v686 = vunpack.c.l.b16 %v111
  %v687 = vunpack.c.l.b16 %v112
  %v688 = vunpack.c.l.b16 %v113
  %v689 = vunpack.c.l.b16 %v114
  %v690 = vunpack.c.l.b16 %v115
  %v691 = vunpack.c.l.b16 %v116
  %v692 = vunpack.c.l.b16 %v117
  %v693 = vunpack.c.l.b16 %v118
  %v694 = vunpack.c.l.b16 %v119
  %v695 = vunpack.c.l.b16 %v120
  %v696 = vunpack.c.l.b16 %v121
  %v697 = vunpack.c.l.b16 %v122
  %v698 = vunpack.c.l.b16 %v123
  %v699 = vunpack.c.l.b16 %v124
  %v700 = vunpack.c.l.b16 %v125
  %v701 = vunpack.c.l.b16 %v126
  %v702 = vunpack.c.l.b16 %v127
  %v703 = vunpack.c.l.b16 %v128
  %v704 = vunpack.c.l.b16 %v129
  %v705 = vunpack.c.l.b16 %v130
  %v706 = vunpack.c.l.b16 %v131
  %v707 = vunpack.c.l.b16 %v132
  %v708 = vunpack.c.l.b16 %v133
  %v709 = vunpack.c.l.b16 %v134
  %v710 = vunpack.c.l.b16 %v135
  %v711 = vunpack.c.l.b16 %v136
  %v712 = vunpack.c.l.b16 %v137
  %v713 = vunpack.c.l.b16 %v138
  %v714 = vunpack.c.l.b16 %v139
  %v715 = vunpack.c.l.b16 %v140
  %v716 = vunpack.c.l.b16 %v141
  %v717 = vunpack.c.l.b16 %v142
  %v718 = vunpack.c.l.b16 %v143
  %v719 = vunpack.c.l.b16 %v144
  %v720 = vunpack.c.l.b16 %v145
  %v721 = vunpack.c.l.b16 %v146
  %v722 = vunpack.c.l.b16 %v147
  %v723 = vunpack.c.l.b16 %v148
  %v724 = vunpack.c.l.b16 %v149
  %v725 = vunpack.c.l.b16 %v150
  %v726 = vunpack.c.l.b16 %v151
  %v727 = vunpack.c.l.b16 %v152
  %v728 = vunpack.c.l.b16 %v153
  %v729 = vunpack.c.l.b16 %v154
  %v730 = vunpack.c.l.b16 %v155
  %v731 = vunpack.c.l.b16 %v156
  %v732 = vunpack.c.l.b16 %v157
  %v733 = vunpack.c.l.b16 %v158
  %v734 = vunpack.c.l.b16 %v159
  %v735 = vunpack.c.l.b16 %v160
  %v736 = vunpack.c.l.b16 %v161
  %v737 = vunpack.c.l.b16 %v162
  %v738 = vunpack.c.l.b16 %v163
  %v739 = vunpack.c.l.b16 %v164
  %v740 = vunpack.c.l.b16 %v165
  %v741 = vunpack.c.l.b16 %v166
  %v742 = vunpack.c.l.b16 %v167
  %v743 = vunpack.c.l.b16 %v168
  %v744 = vunpack.c.l.b16 %v169
  %v745 = vunpack.c.l.b16 %v170
  %v746 = vunpack.c.l.b16 %v171
  %v747 = vunpack.c.l.b16 %v172
  %v748 = vunpack.c.l.b16 %v173
  %v749 = vunpack.c.l.b16 %v174
  %v750 = vunpack.c.l.b16 %v175
  %v751 = vunpack.c.l.b16 %v176
  %v752 = vunpack.c.l.b16 %v177
  %v753 = vunpack.c.l.b16 %v178
  %v754 = vunpack.c.l.b16 %v179
  %v755 = vunpack.c.l.b16 %v180
  %v756 = vunpack.c.l.b16 %v181
  %v757 = vunpack.c.l.b16 %v182
  %v758 = vunpack.c.l.b16 %v183
  %v759 = vunpack.c.l.b16 %v184
  %v760 = vunpack.c.l.b16 %v185
  %v761 = vunpack.c.l.b16 %v186
  %v762 = vunpack.c.l.b16 %v187
  %v763 = vunpack.c.l.b16 %v188
  %v764 = vunpack.c.l.b16 %v189
  %v765 = vunpack.c.l.b16 %v190
  %v766 = vunpack.c.l.b16 %v191
  %v767 = vunpack.c.l.b16 %v192
  %v768 = vunpack.c.l.b16 %v193
  %v769 = vunpack.c.l.b16 %v194
  %v770 = vunpack.c.l.b16 %v195
  %v771 = vunpack.c.l.b16 %v196
  %v772 = vunpack.c.l.b16 %v197
  %v773 = vunpack.c.l.b16 %v198
  %v774 = vunpack.c.l.b16 %v199
  %v775 = vunpack.c.l.b16 %v200
  %v776 = vunpack.c.l.b16 %v201
  %v777 = vunpack.c.l.b16 %v202
  %v778 = vunpack.c.l.b16 %v203
  %v779 = vunpack.c.l.b16 %v204
  %v780 = vunpack.c.l.b16 %v205
  %v781 = vunpack.c.l.b16 %v206
  %v782 = vunpack.c.l.b16 %v207
  %v783 = vunpack.c.l.b16 %v208
  %v784 = vunpack.c.l.b16 %v209
  %v785 = vunpack.c.l.b16 %v210
  %v786 = vunpack.c.l.b16 %v211
  %v787 = vunpack.c.l.b16 %v212
  %v788 = vunpack.c.l.b16 %v213
  %v789 = vunpack.c.l.b16 %v214
  %v790 = vunpack.c.l.b16 %v215
  %v791 = vunpack.c.l.b16 %v216
  %v792 = vunpack.c.l.b16 %v217
  %v793 = vunpack.c.l.b16 %v218
  %v794 = vunpack.c.l.b16 %v219
  %v795 = vunpack.c.l.b16 %v220
  %v796 = vunpack.c.l.b16 %v221
  %v797 = vunpack.c.l.b16 %v222
  %v798 = vunpack.c.l.b16 %v223
  %v799 = vunpack.c.l.b16 %v224
  %v800 = vunpack.c.l.b16 %v225
  %v801 = vunpack.c.l.b16 %v226
  %v802 = vunpack.c.l.b16 %v227
  %v803 = vunpack.c.l.b16 %v228
  %v804 = vunpack.c.l.b16 %v229
  %v805 = vunpack.c.l.b16 %v230
  %v806 = vunpack.c.l.b16 %v231
  %v807 = vunpack.c.l.b16 %v232
  %v808 = vunpack.c.l.b16 %v233
  %v809 = vunpack.c.l.b16 %v234
  %v810 = vunpack.c.l.b16 %v235
  %v811 = vunpack.c.l.b16 %v236
  %v812 = vunpack.c.l.b16 %v237
  %v813 = vunpack.c.l.b16 %v238
  %v814 = vunpack.c.l.b16 %v239
  %v815 = vunpack.c.l.b16 %v240
  %v816 = vunpack.c.l.b16 %v241
  %v817 = vunpack.c.l.b16 %v242
  %v818 = vunpack.c.l.b16 %v243
  %v819 = vunpack.c.l.b16 %v244
  %v820 = vunpack.c.l.b16 %v245
  %v821 = vunpack.c.l.b16 %v246
  %v822 = vunpack.c.l.b16 %v247
  %v823 = vunpack.c.l.b16 %v248
  %v824 = vunpack.c.l.b16 %v249
  %v825 = vunpack.c.l.b16 %v250
  %v826 = vunpack.c.l.b16 %v251
  %v827 = vunpack.c.l.b16 %v252
  %v828 = vunpack.c.l.b16 %v253
  %v829 = vunpack.c.l.b16 %v254
  %v830 = vunpack.c.l.b16 %v255
  %v831 = vunpack.c.l.b16 %v256
  %v832 = vunpack.c.l.b16 %v257
  %v833 = vunpack.c.l.b16 %v258
  %v834 = vunpack.c.l.b16 %v259
  %v835 = vunpack.c.l.b16 %v260
  %v836 = vunpack.c.l.b16 %v261
  %v837 = vunpack.c.l.b16 %v262
  %v838 = vunpack.c.l.b16 %v263
  %v839 = vunpack.c.l.b16 %v264
  %v840 = vunpack.c.l.b16 %v265
  %v841 = vunpack.c.l.b16 %v266
  %v842 = vunpack.c.l.b16 %v267
  %v843 = vunpack.c.l.b16 %v268
  %v844 = vunpack.c.l.b16 %v269
  %v845 = vunpack.c.l.b16 %v270
  %v846 = vunpack.c.l.b16 %v271
  %v847 = vunpack.c.l.b16 %v272
  %v848 = vunpack.c.l.b16 %v273
  %v849 = vunpack.c.l.b16 %v274
  %v850 = vunpack.c.l.b16 %v275
  %v851 = vunpack.c.l.b16 %v276
  %v852 = vunpack.c.l.b16 %v277
  %v853 = vunpack.c.l.b16 %v278
  %v854 = vunpack.c.l.b16 %v279
  %v855 = vunpack.c.l.b16 %v280
  %v856 = vunpack.c.l.b16 %v281
  %v857 = vunpack.c.l.b16 %v282
  %v858 = vunpack.c.l.b16 %v283
  %v859 = vunpack.c.l.b16 %v284
  %v860 = vunpack.c.l.b16 %v285
  %v861 = vunpack.c.l.b16 %v286
  %v862 = vunpack.c.l.b16 %v287
  %v863 = vpack.c.b16 %v608, %v607
  %v864 = vpack.c.b16 %v610, %v609
  %v865 = vpack.c.b16 %v612, %v611
  %v866 = vpack.c.b16 %v614, %v613
  %v867 = vpack.c.b16 %v616, %v615
  %v868 = vpack.c.b16 %v618, %v617
  %v869 = vpack.c.b16 %v620, %v619
  %v870 = vpack.c.b16 %v622, %v621
  %v871 = vpack.c.b16 %v624, %v623
  %v872 = vpack.c.b16 %v626, %v625
  %v873 = vpack.c.b16 %v628, %v627
  %v874 = vpack.c.b16 %v630, %v629
  %v875 = vpack.c.b16 %v632, %v631
  %v876 = vpack.c.b16 %v634, %v633
  %v877 = vpack.c.b16 %v636, %v635
  %v878 = vpack.c.b16 %v638, %v637
  %v879 = vpack.c.b16 %v640, %v639
  %v880 = vpack.c.b16 %v642, %v641
  %v881 = vpack.c.b16 %v644, %v643
  %v882 = vpack.c.b16 %v646, %v645
  %v883 = vpack.c.b16 %v648, %v647
  %v884 = vpack.c.b16 %v650, %v649
  %v885 = vpack.c.b16 %v652, %v651
  %v886 = vpack.c.b16 %v654, %v653
  %v887 = vpack.c.b16 %v656, %v655
  %v888 = vpack.c.b16 %v658, %v657
  %v889 = vpack.c.b16 %v660, %v659
  %v890 = vpack.c.b16 %v662, %v661
  %v891 = vpack.c.b16 %v664, %v663
  %v892 = vpack.c.b16 %v666, %v665
  %v893 = vpack.c.b16 %v668, %v667
  %v894 = vpack.c.b16 %v670, %v669
  %v895 = vpack.c.b16 %v672, %v671
  %v896 = vpack.c.b16 %v674, %v673
  %v897 = vpack.c.b16 %v676, %v675
  %v898 = vpack.c.b16 %v678, %v677
  %v899 = vpack.c.b16 %v680, %v679
  %v900 = vpack.c.b16 %v682, %v681
  %v901 = vpack.c.b16 %v684, %v683
  %v902 = vpack.c.b16 %v686, %v685
  %v903 = vpack.c.b16 %v688, %v687
  %v904 = vpack.c.b16 %v690, %v689
  %v905 = vpack.c.b16 %v692, %v691
  %v906 = vpack.c.b16 %v694, %v693
  %v907 = vpack.c.b16 %v696, %v695
  %v908 = vpack.c.b16 %v698, %v697
  %v909 = vpack.c.b16 %v700, %v699
  %v910 = vpack.c.b16 %v702, %v701
  %v911 = vpack.c.b16 %v704, %v703
  %v912 = vpack.c.b16 %v706, %v705
  %v913 = vpack.c.b16 %v708, %v707
  %v914 = vpack.c.b16 %v710, %v709
  %v915 = vpack.c.b16 %v712, %v711
  %v916 = vpack.c.b16 %v714, %v713
  %v917 = vpack.c.b16 %v716, %v715
  %v918 = vpack.c.b16 %v718, %v717
  %v919 = vpack.c.b16 %v720, %v719
  %v920 = vpack.c.b16 %v722, %v721
  %v921 = vpack.c.b16 %v724, %v723
  %v922 = vpack.c.b16 %v726, %v725
  %v923 = vpack.c.b16 %v728, %v727
  %v924 = vpack.c.b16 %v730, %v729
  %v925 = vpack.c.b16 %v732, %v731
  %v926 = vpack.c.b16 %v734, %v733
  %v927 = vpack.c.b16 %v736, %v735
  %v928 = vpack.c.b16 %v738, %v737
  %v929 = vpack.c.b16 %v740, %v739
  %v930 = vpack.c.b16 %v742, %v741
  %v931 = vpack.c.b16 %v744, %v743
  %v932 = vpack.c.b16 %v746, %v745
  %v933 = vpack.c.b16 %v748, %v747
  %v934 = vpack.c.b16 %v750, %v749
  %v935 = vpack.c.b16 %v752, %v751
  %v936 = vpack.c.b16 %v754, %v753
  %v937 = vpack.c.b16 %v756, %v755
  %v938 = vpack.c.b16 %v758, %v757
  %v939 = vpack.c.b16 %v760, %v759
  %v940 = vpack.c.b16 %v762, %v761
  %v941 = vpack.c.b16 %v764, %v763
  %v942 = vpack.c.b16 %v766, %v765
  %v943 = vpack.c.b16 %v768, %v767
  %v944 = vpack.c.b16 %v770, %v769
  %v945 = vpack.c.b16 %v772, %v771
  %v946 = vpack.c.b16 %v774, %v773
  %v947 = vpack.c.b16 %v776, %v775
  %v948 = vpack.c.b16 %v778, %v777
  %v949 = vpack.c.b16 %v780, %v779
  %v950 = vpack.c.b16 %v782, %v781
  %v951 = vpack.c.b16 %v784, %v783
  %v952 = vpack.c.b16 %v786, %v785
  %v953 = vpack.c.b16 %v788, %v787
  %v954 = vpack.c.b16 %v790, %v789
  %v955 = vpack.c.b16 %v792, %v791
  %v956 = vpack.c.b16 %v794, %v793
  %v957 = vpack.c.b16 %v796, %v795
  %v958 = vpack.c.b16 %v798, %v797
  %v959 = vpack.c.b16 %v800, %v799
  %v960 = vpack.c.b16 %v802, %v801
  %v961 = vpack.c.b16 %v804, %v803
  %v962 = vpack.c.b16 %v806, %v805
  %v963 = vpack.c.b16 %v808, %v807
  %v964 = vpack.c.b16 %v810, %v809
  %v965 = vpack.c.b16 %v812, %v811
  %v966 = vpack.c.b16 %v814, %v813
  %v967 = vpack.c.b16 %v816, %v815
  %v968 = vpack.c.b16 %v818, %v817
  %v969 = vpack.c.b16 %v820, %v819
  %v970 = vpack.c.b16 %v822, %v821
  %v971 = vpack.c.b16 %v824, %v823
  %v972 = vpack.c.b16 %v826, %v825
  %v973 = vpack.c.b16 %v828, %v827
  %v974 = vpack.c.b16 %v830, %v829
  %v975 = vpack.c.b16 %v832, %v831
  %v976 = vpack.c.b16 %v834, %v833
  %v977 = vpack.c.b16 %v836, %v835
  %v978 = vpack.c.b16 %v838, %v837
  %v979 = vpack.c.b16 %v840, %v839
  %v980 = vpack.c.b16 %v842, %v841
  %v981 = vpack.c.b16 %v844, %v843
  %v982 = vpack.c.b16 %v846, %v845
  %v983 = vpack.c.b16 %v848, %v847
  %v984 = vpack.c.b16 %v850, %v849
  %v985 = vpack.c.b16 %v852, %v851
  %v986 = vpack.c.b16 %v854, %v853
  %v987 = vpack.c.b16 %v856, %v855
  %v988 = vpack.c.b16 %v858, %v857
  %v989 = vpack.c.b16 %v860, %v859
  %v990 = vpack.c.b16 %v862, %v861
  %1119 = vmatprep.subr.bf16.mxu0 0
  %1120 = vmatpush1.bf16.msra.mxu0 %v863
  %1121 = vmatprep.subr.bf16.mxu0 0
  %1122 = vmatpush1.bf16.msra.mxu0 %v864
  %1123 = vmatprep.subr.bf16.mxu0 0
  %1124 = vmatpush1.bf16.msra.mxu0 %v865
  %1125 = vmatprep.subr.bf16.mxu0 0
  %1126 = vmatpush1.bf16.msra.mxu0 %v866
  %1127 = vmatprep.subr.bf16.mxu0 0
  %1128 = vmatpush1.bf16.msra.mxu0 %v867
  %1129 = vmatprep.subr.bf16.mxu0 0
  %1130 = vmatpush1.bf16.msra.mxu0 %v868
  %1131 = vmatprep.subr.bf16.mxu0 0
  %1132 = vmatpush1.bf16.msra.mxu0 %v869
  %1133 = vmatprep.subr.bf16.mxu0 0
  %1134 = vmatpush1.bf16.msra.mxu0 %v870
  %1135 = vmatprep.subr.bf16.mxu0 0
  %1136 = vmatpush1.bf16.msra.mxu0 %v871
  %1137 = vmatprep.subr.bf16.mxu0 0
  %1138 = vmatpush1.bf16.msra.mxu0 %v872
  %1139 = vmatprep.subr.bf16.mxu0 0
  %1140 = vmatpush1.bf16.msra.mxu0 %v873
  %1141 = vmatprep.subr.bf16.mxu0 0
  %1142 = vmatpush1.bf16.msra.mxu0 %v874
  %1143 = vmatprep.subr.bf16.mxu0 0
  %1144 = vmatpush1.bf16.msra.mxu0 %v875
  %1145 = vmatprep.subr.bf16.mxu0 0
  %1146 = vmatpush1.bf16.msra.mxu0 %v876
  %1147 = vmatprep.subr.bf16.mxu0 0
  %1148 = vmatpush1.bf16.msra.mxu0 %v877
  %1149 = vmatprep.subr.bf16.mxu0 0
  %1150 = vmatpush1.bf16.msra.mxu0 %v878
  %1151 = vmatprep.mubr.bf16.mxu0 %v320
  %1152 = vmatmul.mubr.bf16.gmra.mrb[0].mxu0 %v319
  %v1153 = vpop.f32.mrb[0].mxu0
  %v1154 = vadd.f32 %v293, %v1153
  %v1155 = vpop.f32.mrb[0].mxu0
  %v1156 = vpop.f32.mrb[0].mxu0
  %v1157 = vpop.f32.mrb[0].mxu0
  %1158 = vdwg.mxu0
  %1159 = vmatprep.subr.bf16.mxu0 0
  %1160 = vmatpush1.bf16.msra.mxu0 %v879
  %1161 = vmatprep.subr.bf16.mxu0 0
  %1162 = vmatpush1.bf16.msra.mxu0 %v880
  %1163 = vmatprep.subr.bf16.mxu0 0
  %1164 = vmatpush1.bf16.msra.mxu0 %v881
  %1165 = vmatprep.subr.bf16.mxu0 0
  %1166 = vmatpush1.bf16.msra.mxu0 %v882
  %1167 = vmatprep.subr.bf16.mxu0 0
  %1168 = vmatpush1.bf16.msra.mxu0 %v883
  %1169 = vmatprep.subr.bf16.mxu0 0
  %1170 = vmatpush1.bf16.msra.mxu0 %v884
  %1171 = vmatprep.subr.bf16.mxu0 0
  %1172 = vmatpush1.bf16.msra.mxu0 %v885
  %1173 = vmatprep.subr.bf16.mxu0 0
  %1174 = vmatpush1.bf16.msra.mxu0 %v886
  %1175 = vmatprep.subr.bf16.mxu0 0
  %1176 = vmatpush1.bf16.msra.mxu0 %v887
  %1177 = vmatprep.subr.bf16.mxu0 0
  %1178 = vmatpush1.bf16.msra.mxu0 %v888
  %1179 = vmatprep.subr.bf16.mxu0 0
  %1180 = vmatpush1.bf16.msra.mxu0 %v889
  %1181 = vmatprep.subr.bf16.mxu0 0
  %1182 = vmatpush1.bf16.msra.mxu0 %v890
  %1183 = vmatprep.subr.bf16.mxu0 0
  %1184 = vmatpush1.bf16.msra.mxu0 %v891
  %1185 = vmatprep.subr.bf16.mxu0 0
  %1186 = vmatpush1.bf16.msra.mxu0 %v892
  %1187 = vmatprep.subr.bf16.mxu0 0
  %1188 = vmatpush1.bf16.msra.mxu0 %v893
  %1189 = vmatprep.subr.bf16.mxu0 0
  %1190 = vmatpush1.bf16.msra.mxu0 %v894
  %1191 = vmatprep.mubr.bf16.mxu0 %v322
  %1192 = vmatmul.mubr.bf16.gmra.mrb[0].mxu0 %v321
  %v1193 = vpop.f32.mrb[0].mxu0
  %v1194 = vadd.f32 %v1154, %v1193
  %v1195 = vpop.f32.mrb[0].mxu0
  %v1196 = vpop.f32.mrb[0].mxu0
  %v1197 = vpop.f32.mrb[0].mxu0
  %1198 = vdwg.mxu0
  %1199 = vmatprep.subr.bf16.mxu0 0
  %1200 = vmatpush1.bf16.msra.mxu0 %v895
  %1201 = vmatprep.subr.bf16.mxu0 0
  %1202 = vmatpush1.bf16.msra.mxu0 %v896
  %1203 = vmatprep.subr.bf16.mxu0 0
  %1204 = vmatpush1.bf16.msra.mxu0 %v897
  %1205 = vmatprep.subr.bf16.mxu0 0
  %1206 = vmatpush1.bf16.msra.mxu0 %v898
  %1207 = vmatprep.subr.bf16.mxu0 0
  %1208 = vmatpush1.bf16.msra.mxu0 %v899
  %1209 = vmatprep.subr.bf16.mxu0 0
  %1210 = vmatpush1.bf16.msra.mxu0 %v900
  %1211 = vmatprep.subr.bf16.mxu0 0
  %1212 = vmatpush1.bf16.msra.mxu0 %v901
  %1213 = vmatprep.subr.bf16.mxu0 0
  %1214 = vmatpush1.bf16.msra.mxu0 %v902
  %1215 = vmatprep.subr.bf16.mxu0 0
  %1216 = vmatpush1.bf16.msra.mxu0 %v903
  %1217 = vmatprep.subr.bf16.mxu0 0
  %1218 = vmatpush1.bf16.msra.mxu0 %v904
  %1219 = vmatprep.subr.bf16.mxu0 0
  %1220 = vmatpush1.bf16.msra.mxu0 %v905
  %1221 = vmatprep.subr.bf16.mxu0 0
  %1222 = vmatpush1.bf16.msra.mxu0 %v906
  %1223 = vmatprep.subr.bf16.mxu0 0
  %1224 = vmatpush1.bf16.msra.mxu0 %v907
  %1225 = vmatprep.subr.bf16.mxu0 0
  %1226 = vmatpush1.bf16.msra.mxu0 %v908
  %1227 = vmatprep.subr.bf16.mxu0 0
  %1228 = vmatpush1.bf16.msra.mxu0 %v909
  %1229 = vmatprep.subr.bf16.mxu0 0
  %1230 = vmatpush1.bf16.msra.mxu0 %v910
  %1231 = vmatprep.mubr.bf16.mxu0 %v324
  %1232 = vmatmul.mubr.bf16.gmra.mrb[0].mxu0 %v323
  %v1233 = vpop.f32.mrb[0].mxu0
  %v1234 = vadd.f32 %v1194, %v1233
  %v1235 = vpop.f32.mrb[0].mxu0
  %v1236 = vpop.f32.mrb[0].mxu0
  %v1237 = vpop.f32.mrb[0].mxu0
  %1238 = vdwg.mxu0
  %1239 = vmatprep.subr.bf16.mxu0 0
  %1240 = vmatpush1.bf16.msra.mxu0 %v911
  %1241 = vmatprep.subr.bf16.mxu0 0
  %1242 = vmatpush1.bf16.msra.mxu0 %v912
  %1243 = vmatprep.subr.bf16.mxu0 0
  %1244 = vmatpush1.bf16.msra.mxu0 %v913
  %1245 = vmatprep.subr.bf16.mxu0 0
  %1246 = vmatpush1.bf16.msra.mxu0 %v914
  %1247 = vmatprep.subr.bf16.mxu0 0
  %1248 = vmatpush1.bf16.msra.mxu0 %v915
  %1249 = vmatprep.subr.bf16.mxu0 0
  %1250 = vmatpush1.bf16.msra.mxu0 %v916
  %1251 = vmatprep.subr.bf16.mxu0 0
  %1252 = vmatpush1.bf16.msra.mxu0 %v917
  %1253 = vmatprep.subr.bf16.mxu0 0
  %1254 = vmatpush1.bf16.msra.mxu0 %v918
  %1255 = vmatprep.subr.bf16.mxu0 0
  %1256 = vmatpush1.bf16.msra.mxu0 %v919
  %1257 = vmatprep.subr.bf16.mxu0 0
  %1258 = vmatpush1.bf16.msra.mxu0 %v920
  %1259 = vmatprep.subr.bf16.mxu0 0
  %1260 = vmatpush1.bf16.msra.mxu0 %v921
  %1261 = vmatprep.subr.bf16.mxu0 0
  %1262 = vmatpush1.bf16.msra.mxu0 %v922
  %1263 = vmatprep.subr.bf16.mxu0 0
  %1264 = vmatpush1.bf16.msra.mxu0 %v923
  %1265 = vmatprep.subr.bf16.mxu0 0
  %1266 = vmatpush1.bf16.msra.mxu0 %v924
  %1267 = vmatprep.subr.bf16.mxu0 0
  %1268 = vmatpush1.bf16.msra.mxu0 %v925
  %1269 = vmatprep.subr.bf16.mxu0 0
  %1270 = vmatpush1.bf16.msra.mxu0 %v926
  %1271 = vmatprep.mubr.bf16.mxu0 %v326
  %1272 = vmatmul.mubr.bf16.gmra.mrb[0].mxu0 %v325
  %v1273 = vpop.f32.mrb[0].mxu0
  %v1274 = vadd.f32 %v1234, %v1273
  %v1275 = vpop.f32.mrb[0].mxu0
  %v1276 = vpop.f32.mrb[0].mxu0
  %v1277 = vpop.f32.mrb[0].mxu0
  %1278 = vdwg.mxu0
  %1279 = vmatprep.subr.bf16.mxu0 0
  %1280 = vmatpush1.bf16.msra.mxu0 %v927
  %1281 = vmatprep.subr.bf16.mxu0 0
  %1282 = vmatpush1.bf16.msra.mxu0 %v928
  %1283 = vmatprep.subr.bf16.mxu0 0
  %1284 = vmatpush1.bf16.msra.mxu0 %v929
  %1285 = vmatprep.subr.bf16.mxu0 0
  %1286 = vmatpush1.bf16.msra.mxu0 %v930
  %1287 = vmatprep.subr.bf16.mxu0 0
  %1288 = vmatpush1.bf16.msra.mxu0 %v931
  %1289 = vmatprep.subr.bf16.mxu0 0
  %1290 = vmatpush1.bf16.msra.mxu0 %v932
  %1291 = vmatprep.subr.bf16.mxu0 0
  %1292 = vmatpush1.bf16.msra.mxu0 %v933
  %1293 = vmatprep.subr.bf16.mxu0 0
  %1294 = vmatpush1.bf16.msra.mxu0 %v934
  %1295 = vmatprep.subr.bf16.mxu0 0
  %1296 = vmatpush1.bf16.msra.mxu0 %v935
  %1297 = vmatprep.subr.bf16.mxu0 0
  %1298 = vmatpush1.bf16.msra.mxu0 %v936
  %1299 = vmatprep.subr.bf16.mxu0 0
  %1300 = vmatpush1.bf16.msra.mxu0 %v937
  %1301 = vmatprep.subr.bf16.mxu0 0
  %1302 = vmatpush1.bf16.msra.mxu0 %v938
  %1303 = vmatprep.subr.bf16.mxu0 0
  %1304 = vmatpush1.bf16.msra.mxu0 %v939
  %1305 = vmatprep.subr.bf16.mxu0 0
  %1306 = vmatpush1.bf16.msra.mxu0 %v940
  %1307 = vmatprep.subr.bf16.mxu0 0
  %1308 = vmatpush1.bf16.msra.mxu0 %v941
  %1309 = vmatprep.subr.bf16.mxu0 0
  %1310 = vmatpush1.bf16.msra.mxu0 %v942
  %1311 = vmatprep.mubr.bf16.mxu0 %v328
  %1312 = vmatmul.mubr.bf16.gmra.mrb[0].mxu0 %v327
  %v1313 = vpop.f32.mrb[0].mxu0
  %v1314 = vadd.f32 %v1274, %v1313
  %v1315 = vpop.f32.mrb[0].mxu0
  %v1316 = vpop.f32.mrb[0].mxu0
  %v1317 = vpop.f32.mrb[0].mxu0
  %1318 = vdwg.mxu0
  %1319 = vmatprep.subr.bf16.mxu0 0
  %1320 = vmatpush1.bf16.msra.mxu0 %v943
  %1321 = vmatprep.subr.bf16.mxu0 0
  %1322 = vmatpush1.bf16.msra.mxu0 %v944
  %1323 = vmatprep.subr.bf16.mxu0 0
  %1324 = vmatpush1.bf16.msra.mxu0 %v945
  %1325 = vmatprep.subr.bf16.mxu0 0
  %1326 = vmatpush1.bf16.msra.mxu0 %v946
  %1327 = vmatprep.subr.bf16.mxu0 0
  %1328 = vmatpush1.bf16.msra.mxu0 %v947
  %1329 = vmatprep.subr.bf16.mxu0 0
  %1330 = vmatpush1.bf16.msra.mxu0 %v948
  %1331 = vmatprep.subr.bf16.mxu0 0
  %1332 = vmatpush1.bf16.msra.mxu0 %v949
  %1333 = vmatprep.subr.bf16.mxu0 0
  %1334 = vmatpush1.bf16.msra.mxu0 %v950
  %1335 = vmatprep.subr.bf16.mxu0 0
  %1336 = vmatpush1.bf16.msra.mxu0 %v951
  %1337 = vmatprep.subr.bf16.mxu0 0
  %1338 = vmatpush1.bf16.msra.mxu0 %v952
  %1339 = vmatprep.subr.bf16.mxu0 0
  %1340 = vmatpush1.bf16.msra.mxu0 %v953
  %1341 = vmatprep.subr.bf16.mxu0 0
  %1342 = vmatpush1.bf16.msra.mxu0 %v954
  %1343 = vmatprep.subr.bf16.mxu0 0
  %1344 = vmatpush1.bf16.msra.mxu0 %v955
  %1345 = vmatprep.subr.bf16.mxu0 0
  %1346 = vmatpush1.bf16.msra.mxu0 %v956
  %1347 = vmatprep.subr.bf16.mxu0 0
  %1348 = vmatpush1.bf16.msra.mxu0 %v957
  %1349 = vmatprep.subr.bf16.mxu0 0
  %1350 = vmatpush1.bf16.msra.mxu0 %v958
  %1351 = vmatprep.mubr.bf16.mxu0 %v330
  %1352 = vmatmul.mubr.bf16.gmra.mrb[0].mxu0 %v329
  %v1353 = vpop.f32.mrb[0].mxu0
  %v1354 = vadd.f32 %v1314, %v1353
  %v1355 = vpop.f32.mrb[0].mxu0
  %v1356 = vpop.f32.mrb[0].mxu0
  %v1357 = vpop.f32.mrb[0].mxu0
  %1358 = vdwg.mxu0
  %1359 = vmatprep.subr.bf16.mxu0 0
  %1360 = vmatpush1.bf16.msra.mxu0 %v959
  %1361 = vmatprep.subr.bf16.mxu0 0
  %1362 = vmatpush1.bf16.msra.mxu0 %v960
  %1363 = vmatprep.subr.bf16.mxu0 0
  %1364 = vmatpush1.bf16.msra.mxu0 %v961
  %1365 = vmatprep.subr.bf16.mxu0 0
  %1366 = vmatpush1.bf16.msra.mxu0 %v962
  %1367 = vmatprep.subr.bf16.mxu0 0
  %1368 = vmatpush1.bf16.msra.mxu0 %v963
  %1369 = vmatprep.subr.bf16.mxu0 0
  %1370 = vmatpush1.bf16.msra.mxu0 %v964
  %1371 = vmatprep.subr.bf16.mxu0 0
  %1372 = vmatpush1.bf16.msra.mxu0 %v965
  %1373 = vmatprep.subr.bf16.mxu0 0
  %1374 = vmatpush1.bf16.msra.mxu0 %v966
  %1375 = vmatprep.subr.bf16.mxu0 0
  %1376 = vmatpush1.bf16.msra.mxu0 %v967
  %1377 = vmatprep.subr.bf16.mxu0 0
  %1378 = vmatpush1.bf16.msra.mxu0 %v968
  %1379 = vmatprep.subr.bf16.mxu0 0
  %1380 = vmatpush1.bf16.msra.mxu0 %v969
  %1381 = vmatprep.subr.bf16.mxu0 0
  %1382 = vmatpush1.bf16.msra.mxu0 %v970
  %1383 = vmatprep.subr.bf16.mxu0 0
  %1384 = vmatpush1.bf16.msra.mxu0 %v971
  %1385 = vmatprep.subr.bf16.mxu0 0
  %1386 = vmatpush1.bf16.msra.mxu0 %v972
  %1387 = vmatprep.subr.bf16.mxu0 0
  %1388 = vmatpush1.bf16.msra.mxu0 %v973
  %1389 = vmatprep.subr.bf16.mxu0 0
  %1390 = vmatpush1.bf16.msra.mxu0 %v974
  %1391 = vmatprep.mubr.bf16.mxu0 %v332
  %1392 = vmatmul.mubr.bf16.gmra.mrb[0].mxu0 %v331
  %v1393 = vpop.f32.mrb[0].mxu0
  %v1394 = vadd.f32 %v1354, %v1393
  %v1395 = vpop.f32.mrb[0].mxu0
  %v1396 = vpop.f32.mrb[0].mxu0
  %v1397 = vpop.f32.mrb[0].mxu0
  %1398 = vdwg.mxu0
  %1399 = vmatprep.subr.bf16.mxu0 0
  %1400 = vmatpush1.bf16.msra.mxu0 %v975
  %1401 = vmatprep.subr.bf16.mxu0 0
  %1402 = vmatpush1.bf16.msra.mxu0 %v976
  %1403 = vmatprep.subr.bf16.mxu0 0
  %1404 = vmatpush1.bf16.msra.mxu0 %v977
  %1405 = vmatprep.subr.bf16.mxu0 0
  %1406 = vmatpush1.bf16.msra.mxu0 %v978
  %1407 = vmatprep.subr.bf16.mxu0 0
  %1408 = vmatpush1.bf16.msra.mxu0 %v979
  %1409 = vmatprep.subr.bf16.mxu0 0
  %1410 = vmatpush1.bf16.msra.mxu0 %v980
  %1411 = vmatprep.subr.bf16.mxu0 0
  %1412 = vmatpush1.bf16.msra.mxu0 %v981
  %1413 = vmatprep.subr.bf16.mxu0 0
  %1414 = vmatpush1.bf16.msra.mxu0 %v982
  %1415 = vmatprep.subr.bf16.mxu0 0
  %1416 = vmatpush1.bf16.msra.mxu0 %v983
  %1417 = vmatprep.subr.bf16.mxu0 0
  %1418 = vmatpush1.bf16.msra.mxu0 %v984
  %1419 = vmatprep.subr.bf16.mxu0 0
  %1420 = vmatpush1.bf16.msra.mxu0 %v985
  %1421 = vmatprep.subr.bf16.mxu0 0
  %1422 = vmatpush1.bf16.msra.mxu0 %v986
  %1423 = vmatprep.subr.bf16.mxu0 0
  %1424 = vmatpush1.bf16.msra.mxu0 %v987
  %1425 = vmatprep.subr.bf16.mxu0 0
  %1426 = vmatpush1.bf16.msra.mxu0 %v988
  %1427 = vmatprep.subr.bf16.mxu0 0
  %1428 = vmatpush1.bf16.msra.mxu0 %v989
  %1429 = vmatprep.subr.bf16.mxu0 0
  %1430 = vmatpush1.bf16.msra.mxu0 %v990
  %1431 = vmatprep.mubr.bf16.mxu0 %v334
  %1432 = vmatmul.mubr.bf16.gmra.mrb[0].mxu0 %v333
  %v1433 = vpop.f32.mrb[0].mxu0
  %v1434 = vadd.f32 %v1394, %v1433
  %v1435 = vpop.f32.mrb[0].mxu0
  %v1436 = vpop.f32.mrb[0].mxu0
  %v1437 = vpop.f32.mrb[0].mxu0
  %1438 = vdwg.mxu0
  %v1439 = vld [vmem:[%s3] sm:$0xff]
  %v1440 = vadd.f32 %v1434, %v1439
  %vm1441 = vcmask 261120
  %v1442 = vsel %vm1441, %v1440, 0.0
  %1443 = vadd.xlane.f32.xlu0 %v1442
  %v1444 = vpop.xlane.xlu0 %1443
  %v1445 = vrcp.pop 32.0
  %v1446 = vmul.f32 %v1444, %v1445
  %v1447 = vsub.f32 %v1440, %v1446
  %v1448 = vmul.f32 %v1447, %v1447
  %v1449 = vsel %vm1441, %v1448, 0.0
  %1450 = vadd.xlane.f32.xlu0 %v1449
  %v1451 = vpop.xlane.xlu0 %1450
  %v1452 = vmul.f32 %v1451, %v1445
  %v1453 = vadd.f32 %v1452, 1e-05
  %v1454 = vrsqrt.pop %v1453
  %v1455 = vmul.f32 %v1447, %v1454
  %v1456 = vld [vmem:[%s4] sm:$0x1]
  %v1458 = vlaneseq
  %v1459 = vshrl.u32 %v1458, 7
  %v1460 = vsub.s32 0, %v1459
  %v1461 = vrot.slane %v1456, %v1460
  %v1463 = vmul.f32 %v1455, %v1461
  %v1464 = vld [vmem:[%s5] sm:$0x1]
  %v1466 = vlaneseq
  %v1467 = vshrl.u32 %v1466, 7
  %v1468 = vsub.s32 0, %v1467
  %v1469 = vrot.slane %v1464, %v1468
  %v1471 = vadd.f32 %v1463, %v1469
  %1472 = vst.msk [vmem:[%s6] sm:$0xff] %vm1441, %v1471
  // Predicated region
  $region26: #{forward.33} parent=0 // pred_check
    _
  $region27: #{forward.33} parent=0 // pred_check_branch
    %1474 = sbr.rel (0) target = $region29
  $region28: #{forward.33} parent=0 // pred_region
    _
  $region29: #{forward.33} parent=0 // pred_fallthru
    _
  // Predicated region
  $region30: #{forward.33} parent=0 // pred_check
    _
  $region31: #{forward.33} parent=0 // pred_check_branch
    %1476 = sbr.rel (0) target = $region33
  $region32: #{forward.33} parent=0 // pred_region
    _
  $region33: #{forward.33} parent=0 // pred_fallthru
    _

</llo_original>
